<compile_context>
chip_gen: v5e
topology: v5e:2x2
jax: 0.10.0
libtpu: 0.0.40
codegen_flags: <defaults>
</compile_context>

<pallas_src>
import numpy as np
import jax
import jax.numpy as jnp
from jax import lax
from jax.experimental import pallas as pl
from jax.experimental.pallas import tpu as pltpu

N_TARGETS = 6
L_IN = 52          # spectrum length: 52 // 2**4 = 3  ->  64*3 + 9 aux = 201
AUX_DIM = 9
KSIZE = 3
LP = 64            # padded per-sample row budget (power of two >= 52)
# (Cin, Cout, maxpool-after?)
CONV_CFG = [(1, 8, True), (8, 16, True), (16, 32, False),
            (32, 32, True), (32, 64, False), (64, 64, True)]
FLAT_C = 64
FLAT_L = 3


# ---------------------------------------------------------------- kernel ----
def _mm(a, b, precision=None):
    return jnp.dot(a, b, precision=precision,
                   preferred_element_type=jnp.float32)


def make_kernel(batch, n_hiddens):
    n_rows = batch * LP

    def kernel(*refs):
        mean_ref, var_ref = refs[-2], refs[-1]
        ins = refs[:-2]
        x_ref, aux_ref = ins[0], ins[1]
        idx = 2
        conv_refs = []
        for _ in range(len(CONV_CFG)):
            conv_refs.append((ins[idx], ins[idx + 1]))
            idx += 2
        w0_ref, b0_ref = ins[idx], ins[idx + 1]
        idx += 2
        hid_refs = []
        for _ in range(n_hiddens):
            hid_refs.append((ins[idx], ins[idx + 1]))
            idx += 2
        wout_ref, bout_ref = ins[idx], ins[idx + 1]

        x = x_ref[...]                    # (B*LP, 1): samples stacked on sublanes
        aux = aux_ref[...]                # (B, AUX_DIM)

        # Row offset inside each 64-row sample block; built ONCE, reused.
        within = lax.broadcasted_iota(jnp.int32, (n_rows, 1), 0) % LP
        not_first = within != 0           # element 0 of every sample

        # Valid element l of a sample lives at row b*LP + l*stride; padded /
        # stale rows never feed valid rows because boundary taps are masked.
        stride = 1
        length = L_IN
        for (cin, cout, pool), (w_ref, b_ref) in zip(CONV_CFG, conv_refs):
            w_all = w_ref[...]            # (3*cin, cout): taps stacked [l-1, l, l+1]
            # neighbours via sublane roll (XLU) + zero masks at sample edges
            prev = jnp.where(not_first, pltpu.roll(x, stride, 0), 0.0)
            not_last = within != (length - 1) * stride
            nxt = jnp.where(not_last, pltpu.roll(x, n_rows - stride, 0), 0.0)
            y = (_mm(prev, w_all[0:cin, :])
                 + _mm(x, w_all[cin:2 * cin, :])
                 + _mm(nxt, w_all[2 * cin:3 * cin, :])
                 + b_ref[...])
            y = jnp.maximum(y, 0.0)       # ReLU
            if pool:                      # MaxPool1d(2), floor mode: VPU max
                y = jnp.maximum(y, pltpu.roll(y, n_rows - stride, 0))
                stride *= 2
                length //= 2
            x = y
        # final stage: stride == 16, valid rows b*LP + 16*l (l = 0,1,2), C = 64

        # Linear0 on [flatten(cnn), aux]; W0 rows are host-permuted so block l
        # holds the weights for torch flat index c*3 + l.
        w0 = w0_ref[...]                  # (201, n)
        h = _mm(aux, w0[FLAT_L * FLAT_C:, :]) + b0_ref[...]
        row_b = lax.broadcasted_iota(jnp.int32, (batch, n_rows), 0)
        col_r = lax.broadcasted_iota(jnp.int32, (batch, n_rows), 1)
        for l in range(FLAT_L):
            # exact 0/1 gather of row b*LP + stride*l for every sample
            sel = (col_r == row_b * LP + stride * l).astype(jnp.float32)
            xl = _mm(sel, x, precision=lax.Precision.HIGHEST)     # (B, 64)
            h = h + _mm(xl, w0[l * FLAT_C:(l + 1) * FLAT_C, :])
        h = jnp.maximum(h, 0.0)

        for (wr, br) in hid_refs:
            h = jnp.maximum(_mm(h, wr[...]) + br[...], 0.0)

        out = _mm(h, wout_ref[...]) + bout_ref[...]               # (B, 2*N_TARGETS)
        mean_ref[...] = out[:, :N_TARGETS]
        raw = out[:, N_TARGETS:]
        softplus = jnp.maximum(raw, 0.0) + jnp.log(1.0 + jnp.exp(-jnp.abs(raw)))
        var_ref[...] = softplus + 1e-6

    return kernel


# -------------------------------------------------------------- host glue ----
def init_params(key, n_neurons, n_hiddens):
    """Deterministic params in PyTorch layout (Conv1d: (Cout,Cin,K); Linear: (out,in))."""
    conv = []
    for cin, cout, _ in CONV_CFG:
        key, k1, k2 = jax.random.split(key, 3)
        bound = 1.0 / np.sqrt(cin * KSIZE)
        w = jax.random.uniform(k1, (cout, cin, KSIZE), jnp.float32, -bound, bound)
        b = jax.random.uniform(k2, (cout,), jnp.float32, -bound, bound)
        conv.append((w, b))

    def linear(k, fan_in, fan_out):
        k1, k2 = jax.random.split(k)
        bound = 1.0 / np.sqrt(fan_in)
        w = jax.random.uniform(k1, (fan_out, fan_in), jnp.float32, -bound, bound)
        b = jax.random.uniform(k2, (fan_out,), jnp.float32, -bound, bound)
        return w, b

    key, k0 = jax.random.split(key)
    lin0 = linear(k0, FLAT_C * FLAT_L + AUX_DIM, n_neurons)
    hiddens = []
    for _ in range(n_hiddens):
        key, kh = jax.random.split(key)
        hiddens.append(linear(kh, n_neurons, n_neurons))
    key, ko = jax.random.split(key)
    outp = linear(ko, n_neurons, 2 * N_TARGETS)
    return conv, lin0, hiddens, outp


def pack_kernel_inputs(X, aux, params, n_neurons):
    conv, (W0, b0), hiddens, (Wo, bo) = params
    B = X.shape[0]
    # pad each spectrum to LP rows and stack samples along the sublane axis
    Xp = jnp.pad(X.astype(jnp.float32), ((0, 0), (0, LP - L_IN)))
    inputs = [Xp.reshape(B * LP, 1), aux.astype(jnp.float32)]
    for w, b in conv:
        # torch (Cout, Cin, K) -> stacked taps [(Cin,Cout)]*3 -> (3*Cin, Cout)
        wk = jnp.concatenate([w[:, :, k].T for k in range(KSIZE)], axis=0)
        inputs += [wk, b[None, :]]
    # Linear0: permute rows so block l holds weights for torch flat index c*3+l
    W0T = W0.T                                            # (201, n)
    w0_cnn = W0T[:FLAT_C * FLAT_L].reshape(FLAT_C, FLAT_L, n_neurons)
    w0_perm = jnp.concatenate([w0_cnn[:, l, :] for l in range(FLAT_L)]
                              + [W0T[FLAT_C * FLAT_L:]], axis=0)   # (201, n)
    inputs += [w0_perm, b0[None, :]]
    for w, b in hiddens:
        inputs += [w.T, b[None, :]]
    inputs += [Wo.T, bo[None, :]]
    return inputs


def model_forward_pallas(X, aux, params, n_neurons, n_hiddens):
    B = X.shape[0]
    inputs = pack_kernel_inputs(X, aux, params, n_neurons)

    def full_spec(shape):
        nd = len(shape)
        return pl.BlockSpec(shape, lambda i, _nd=nd: (0,) * _nd)

    in_specs = [full_spec(tuple(a.shape)) for a in inputs]
    out_specs = (full_spec((B, N_TARGETS)), full_spec((B, N_TARGETS)))
    out_shape = (jax.ShapeDtypeStruct((B, N_TARGETS), jnp.float32),
                 jax.ShapeDtypeStruct((B, N_TARGETS), jnp.float32))
    fn = pl.pallas_call(
        make_kernel(B, n_hiddens),
        grid=(1,),
        in_specs=in_specs,
        out_specs=out_specs,
        out_shape=out_shape,
        compiler_params=pltpu.CompilerParams(dimension_semantics=("arbitrary",)),
    )
    return fn(*inputs)


# ------------------------------------------------------- pure-JAX reference --
def reference_forward(X, aux, params):
    conv, (W0, b0), hiddens, (Wo, bo) = params
    hi = jax.lax.Precision.HIGHEST
    x = X[:, None, :]                                      # (B, 1, L) NCW
    for (w, b), (_, _, pool) in zip(conv, CONV_CFG):
        x = jax.lax.conv_general_dilated(
            x, w, (1,), [(1, 1)],
            dimension_numbers=('NCH', 'OIH', 'NCH'), precision=hi)
        x = x + b[None, :, None]
        x = jnp.maximum(x, 0.0)
        if pool:
            Bn, C, L = x.shape
            Lo = L // 2
            x = x[:, :, :2 * Lo].reshape(Bn, C, Lo, 2).max(axis=-1)
    feat = x.reshape(x.shape[0], -1)                       # channel-major flatten
    feat = jnp.concatenate([feat, aux], axis=1)
    h = jnp.maximum(jnp.matmul(feat, W0.T, precision=hi) + b0, 0.0)
    for (w, b) in hiddens:
        h = jnp.maximum(jnp.matmul(h, w.T, precision=hi) + b, 0.0)
    out = jnp.matmul(h, Wo.T, precision=hi) + bo
    mean = out[:, :N_TARGETS]
    var = jax.nn.softplus(out[:, N_TARGETS:]) + 1e-6
    return mean, var


# --------------------------------------------------------------------- main --
if __name__ == "__main__":
    B = 4
    N_NEURONS = 64
    N_HIDDENS = 2          # config = {'n_neurons': 64, 'n_hiddens': 2, 'loss': 'crps'}

    key = jax.random.PRNGKey(0)
    kx, ka, kp = jax.random.split(key, 3)
    X = jax.random.normal(kx, (B, L_IN), jnp.float32)
    aux = jax.random.normal(ka, (B, AUX_DIM), jnp.float32)
    params = init_params(kp, N_NEURONS, N_HIDDENS)

    mean, var = model_forward_pallas(X, aux, params, N_NEURONS, N_HIDDENS)
    mean = jax.block_until_ready(mean)
    var = jax.block_until_ready(var)

    # Kernel weight matmuls run at default MXU precision (bf16 multiplies);
    # the reference runs at HIGHEST, hence the slightly relaxed tolerances.
    mean_ref, var_ref = reference_forward(X, aux, params)
    np.testing.assert_allclose(np.asarray(mean), np.asarray(mean_ref),
                               rtol=5e-2, atol=5e-3)
    np.testing.assert_allclose(np.asarray(var), np.asarray(var_ref),
                               rtol=5e-2, atol=5e-3)
    assert mean.shape == (B, N_TARGETS) and var.shape == (B, N_TARGETS)
    assert bool(jnp.all(var > 0.0))

    print("KERNEL_OK")
</pallas_src>

<mosaic_0001>
module attributes {stable_mosaic.version = 11 : i64} {
  func.func @kernel(%arg0: i32, %arg1: memref<256x1xf32, #tpu.memory_space<vmem>>, %arg2: memref<4x9xf32, #tpu.memory_space<vmem>>, %arg3: memref<3x8xf32, #tpu.memory_space<vmem>>, %arg4: memref<1x8xf32, #tpu.memory_space<vmem>>, %arg5: memref<24x16xf32, #tpu.memory_space<vmem>>, %arg6: memref<1x16xf32, #tpu.memory_space<vmem>>, %arg7: memref<48x32xf32, #tpu.memory_space<vmem>>, %arg8: memref<1x32xf32, #tpu.memory_space<vmem>>, %arg9: memref<96x32xf32, #tpu.memory_space<vmem>>, %arg10: memref<1x32xf32, #tpu.memory_space<vmem>>, %arg11: memref<96x64xf32, #tpu.memory_space<vmem>>, %arg12: memref<1x64xf32, #tpu.memory_space<vmem>>, %arg13: memref<192x64xf32, #tpu.memory_space<vmem>>, %arg14: memref<1x64xf32, #tpu.memory_space<vmem>>, %arg15: memref<201x64xf32, #tpu.memory_space<vmem>>, %arg16: memref<1x64xf32, #tpu.memory_space<vmem>>, %arg17: memref<64x64xf32, #tpu.memory_space<vmem>>, %arg18: memref<1x64xf32, #tpu.memory_space<vmem>>, %arg19: memref<64x64xf32, #tpu.memory_space<vmem>>, %arg20: memref<1x64xf32, #tpu.memory_space<vmem>>, %arg21: memref<64x12xf32, #tpu.memory_space<vmem>>, %arg22: memref<1x12xf32, #tpu.memory_space<vmem>>, %arg23: memref<4x6xf32, #tpu.memory_space<vmem>>, %arg24: memref<4x6xf32, #tpu.memory_space<vmem>>) attributes {dimension_semantics = [#tpu.dimension_semantics<arbitrary>], iteration_bounds = array<i64: 1>, scalar_prefetch = 0 : i64, scratch_operands = 0 : i64, tpu.core_type = #tpu.core_type<tc>, window_params = [{pipeline_mode = #tpu.pipeline_mode<synchronous>, transform_indices = @transform_0, window_bounds = array<i64: 256, 1>}, {pipeline_mode = #tpu.pipeline_mode<synchronous>, transform_indices = @transform_1, window_bounds = array<i64: 4, 9>}, {pipeline_mode = #tpu.pipeline_mode<synchronous>, transform_indices = @transform_2, window_bounds = array<i64: 3, 8>}, {pipeline_mode = #tpu.pipeline_mode<synchronous>, transform_indices = @transform_3, window_bounds = array<i64: 1, 8>}, {pipeline_mode = #tpu.pipeline_mode<synchronous>, transform_indices = @transform_4, window_bounds = array<i64: 24, 16>}, {pipeline_mode = #tpu.pipeline_mode<synchronous>, transform_indices = @transform_5, window_bounds = array<i64: 1, 16>}, {pipeline_mode = #tpu.pipeline_mode<synchronous>, transform_indices = @transform_6, window_bounds = array<i64: 48, 32>}, {pipeline_mode = #tpu.pipeline_mode<synchronous>, transform_indices = @transform_7, window_bounds = array<i64: 1, 32>}, {pipeline_mode = #tpu.pipeline_mode<synchronous>, transform_indices = @transform_8, window_bounds = array<i64: 96, 32>}, {pipeline_mode = #tpu.pipeline_mode<synchronous>, transform_indices = @transform_9, window_bounds = array<i64: 1, 32>}, {pipeline_mode = #tpu.pipeline_mode<synchronous>, transform_indices = @transform_10, window_bounds = array<i64: 96, 64>}, {pipeline_mode = #tpu.pipeline_mode<synchronous>, transform_indices = @transform_11, window_bounds = array<i64: 1, 64>}, {pipeline_mode = #tpu.pipeline_mode<synchronous>, transform_indices = @transform_12, window_bounds = array<i64: 192, 64>}, {pipeline_mode = #tpu.pipeline_mode<synchronous>, transform_indices = @transform_13, window_bounds = array<i64: 1, 64>}, {pipeline_mode = #tpu.pipeline_mode<synchronous>, transform_indices = @transform_14, window_bounds = array<i64: 201, 64>}, {pipeline_mode = #tpu.pipeline_mode<synchronous>, transform_indices = @transform_15, window_bounds = array<i64: 1, 64>}, {pipeline_mode = #tpu.pipeline_mode<synchronous>, transform_indices = @transform_16, window_bounds = array<i64: 64, 64>}, {pipeline_mode = #tpu.pipeline_mode<synchronous>, transform_indices = @transform_17, window_bounds = array<i64: 1, 64>}, {pipeline_mode = #tpu.pipeline_mode<synchronous>, transform_indices = @transform_18, window_bounds = array<i64: 64, 64>}, {pipeline_mode = #tpu.pipeline_mode<synchronous>, transform_indices = @transform_19, window_bounds = array<i64: 1, 64>}, {pipeline_mode = #tpu.pipeline_mode<synchronous>, transform_indices = @transform_20, window_bounds = array<i64: 64, 12>}, {pipeline_mode = #tpu.pipeline_mode<synchronous>, transform_indices = @transform_21, window_bounds = array<i64: 1, 12>}, {pipeline_mode = #tpu.pipeline_mode<synchronous>, transform_indices = @transform_22, window_bounds = array<i64: 4, 6>}, {pipeline_mode = #tpu.pipeline_mode<synchronous>, transform_indices = @transform_23, window_bounds = array<i64: 4, 6>}]} {
    %c0 = arith.constant 0 : index
    %c0_0 = arith.constant 0 : index
    %0 = vector.load %arg1[%c0, %c0_0] : memref<256x1xf32, #tpu.memory_space<vmem>>, vector<256x1xf32>
    %c0_1 = arith.constant 0 : index
    %c0_2 = arith.constant 0 : index
    %1 = vector.load %arg2[%c0_1, %c0_2] : memref<4x9xf32, #tpu.memory_space<vmem>>, vector<4x9xf32>
    %2 = tpu.iota {dimensions = array<i32: 0>} : vector<256x1xi32>
    %c64_i32 = arith.constant 64 : i32
    %c0_i32 = arith.constant 0 : i32
    %3 = arith.cmpi eq, %c64_i32, %c0_i32 : i32
    %c1_i32 = arith.constant 1 : i32
    %4 = arith.select %3, %c1_i32, %c64_i32 : i32
    %5 = vector.broadcast %4 : i32 to vector<256x1xi32>
    %6 = arith.remsi %2, %5 : vector<256x1xi32>
    %c0_i32_3 = arith.constant 0 : i32
    %7 = vector.broadcast %c0_i32_3 : i32 to vector<256x1xi32>
    %8 = arith.cmpi ne, %6, %7 : vector<256x1xi32>
    %c0_i32_4 = arith.constant 0 : i32
    %9 = vector.broadcast %c0_i32_4 : i32 to vector<256x1xi32>
    %10 = arith.cmpi slt, %6, %9 : vector<256x1xi32>
    %c0_i32_5 = arith.constant 0 : i32
    %11 = arith.cmpi slt, %4, %c0_i32_5 : i32
    %12 = vector.broadcast %11 : i1 to vector<256x1xi1>
    %13 = vector.broadcast %12 : vector<256x1xi1> to vector<256x1xi1>
    %14 = arith.xori %10, %13 : vector<256x1xi1>
    %15 = arith.andi %14, %8 : vector<256x1xi1>
    %16 = vector.broadcast %4 : i32 to vector<256x1xi32>
    %17 = arith.addi %6, %16 : vector<256x1xi32>
    %18 = arith.select %15, %17, %6 : vector<256x1xi1>, vector<256x1xi32>
    %c0_i32_6 = arith.constant 0 : i32
    %19 = vector.broadcast %c0_i32_6 : i32 to vector<256x1xi32>
    %20 = arith.cmpi ne, %18, %19 : vector<256x1xi32>
    %c0_7 = arith.constant 0 : index
    %c0_8 = arith.constant 0 : index
    %21 = vector.load %arg3[%c0_7, %c0_8] : memref<3x8xf32, #tpu.memory_space<vmem>>, vector<3x8xf32>
    %c1_i32_9 = arith.constant 1 : i32
    %22 = tpu.dynamic_rotate %0 by %c1_i32_9 dim 0 : vector<256x1xf32>, i32 -> vector<256x1xf32>
    %cst = arith.constant 0.000000e+00 : f32
    %23 = vector.broadcast %cst : f32 to vector<256x1xf32>
    %24 = arith.select %20, %22, %23 : vector<256x1xi1>, vector<256x1xf32>
    %c51_i32 = arith.constant 51 : i32
    %25 = vector.broadcast %c51_i32 : i32 to vector<256x1xi32>
    %26 = arith.cmpi ne, %18, %25 : vector<256x1xi32>
    %c255_i32 = arith.constant 255 : i32
    %27 = tpu.dynamic_rotate %0 by %c255_i32 dim 0 : vector<256x1xf32>, i32 -> vector<256x1xf32>
    %cst_10 = arith.constant 0.000000e+00 : f32
    %28 = vector.broadcast %cst_10 : f32 to vector<256x1xf32>
    %29 = arith.select %26, %27, %28 : vector<256x1xi1>, vector<256x1xf32>
    %30 = vector.extract_strided_slice %21 {offsets = [0, 0], sizes = [1, 8], strides = [1, 1]} : vector<3x8xf32> to vector<1x8xf32>
    %cst_11 = arith.constant dense<0.000000e+00> : vector<256x8xf32>
    %31 = tpu.matmul %24, %30, %cst_11 {dimension_numbers = #tpu.dot_dimension_numbers<[1], [0], [0], [1], [0, 0, 1, 1], [], []>} : vector<256x1xf32>, vector<1x8xf32>, vector<256x8xf32> -> vector<256x8xf32>
    %32 = vector.extract_strided_slice %21 {offsets = [1, 0], sizes = [1, 8], strides = [1, 1]} : vector<3x8xf32> to vector<1x8xf32>
    %cst_12 = arith.constant dense<0.000000e+00> : vector<256x8xf32>
    %33 = tpu.matmul %0, %32, %cst_12 {dimension_numbers = #tpu.dot_dimension_numbers<[1], [0], [0], [1], [0, 0, 1, 1], [], []>} : vector<256x1xf32>, vector<1x8xf32>, vector<256x8xf32> -> vector<256x8xf32>
    %34 = arith.addf %31, %33 : vector<256x8xf32>
    %35 = vector.extract_strided_slice %21 {offsets = [2, 0], sizes = [1, 8], strides = [1, 1]} : vector<3x8xf32> to vector<1x8xf32>
    %cst_13 = arith.constant dense<0.000000e+00> : vector<256x8xf32>
    %36 = tpu.matmul %29, %35, %cst_13 {dimension_numbers = #tpu.dot_dimension_numbers<[1], [0], [0], [1], [0, 0, 1, 1], [], []>} : vector<256x1xf32>, vector<1x8xf32>, vector<256x8xf32> -> vector<256x8xf32>
    %37 = arith.addf %34, %36 : vector<256x8xf32>
    %c0_14 = arith.constant 0 : index
    %c0_15 = arith.constant 0 : index
    %38 = vector.load %arg4[%c0_14, %c0_15] : memref<1x8xf32, #tpu.memory_space<vmem>>, vector<1x8xf32>
    %39 = vector.broadcast %38 : vector<1x8xf32> to vector<256x8xf32>
    %40 = arith.addf %37, %39 : vector<256x8xf32>
    %cst_16 = arith.constant 0.000000e+00 : f32
    %41 = vector.broadcast %cst_16 : f32 to vector<256x8xf32>
    %42 = arith.maximumf %40, %41 : vector<256x8xf32>
    %c255_i32_17 = arith.constant 255 : i32
    %43 = tpu.dynamic_rotate %42 by %c255_i32_17 dim 0 : vector<256x8xf32>, i32 -> vector<256x8xf32>
    %44 = arith.maximumf %42, %43 : vector<256x8xf32>
    %c0_18 = arith.constant 0 : index
    %c0_19 = arith.constant 0 : index
    %45 = vector.load %arg5[%c0_18, %c0_19] : memref<24x16xf32, #tpu.memory_space<vmem>>, vector<24x16xf32>
    %c2_i32 = arith.constant 2 : i32
    %46 = tpu.dynamic_rotate %44 by %c2_i32 dim 0 : vector<256x8xf32>, i32 -> vector<256x8xf32>
    %cst_20 = arith.constant 0.000000e+00 : f32
    %47 = vector.shape_cast %20 : vector<256x1xi1> to vector<256x1xi1>
    %48 = vector.broadcast %47 : vector<256x1xi1> to vector<256x8xi1>
    %49 = vector.broadcast %cst_20 : f32 to vector<256x8xf32>
    %50 = arith.select %48, %46, %49 : vector<256x8xi1>, vector<256x8xf32>
    %c50_i32 = arith.constant 50 : i32
    %51 = vector.broadcast %c50_i32 : i32 to vector<256x1xi32>
    %52 = arith.cmpi ne, %18, %51 : vector<256x1xi32>
    %c254_i32 = arith.constant 254 : i32
    %53 = tpu.dynamic_rotate %44 by %c254_i32 dim 0 : vector<256x8xf32>, i32 -> vector<256x8xf32>
    %cst_21 = arith.constant 0.000000e+00 : f32
    %54 = vector.shape_cast %52 : vector<256x1xi1> to vector<256x1xi1>
    %55 = vector.broadcast %54 : vector<256x1xi1> to vector<256x8xi1>
    %56 = vector.broadcast %cst_21 : f32 to vector<256x8xf32>
    %57 = arith.select %55, %53, %56 : vector<256x8xi1>, vector<256x8xf32>
    %58 = vector.extract_strided_slice %45 {offsets = [0, 0], sizes = [8, 16], strides = [1, 1]} : vector<24x16xf32> to vector<8x16xf32>
    %cst_22 = arith.constant dense<0.000000e+00> : vector<256x16xf32>
    %59 = tpu.matmul %50, %58, %cst_22 {dimension_numbers = #tpu.dot_dimension_numbers<[1], [0], [0], [1], [0, 0, 1, 1], [], []>} : vector<256x8xf32>, vector<8x16xf32>, vector<256x16xf32> -> vector<256x16xf32>
    %60 = vector.extract_strided_slice %45 {offsets = [8, 0], sizes = [8, 16], strides = [1, 1]} : vector<24x16xf32> to vector<8x16xf32>
    %cst_23 = arith.constant dense<0.000000e+00> : vector<256x16xf32>
    %61 = tpu.matmul %44, %60, %cst_23 {dimension_numbers = #tpu.dot_dimension_numbers<[1], [0], [0], [1], [0, 0, 1, 1], [], []>} : vector<256x8xf32>, vector<8x16xf32>, vector<256x16xf32> -> vector<256x16xf32>
    %62 = arith.addf %59, %61 : vector<256x16xf32>
    %63 = vector.extract_strided_slice %45 {offsets = [16, 0], sizes = [8, 16], strides = [1, 1]} : vector<24x16xf32> to vector<8x16xf32>
    %cst_24 = arith.constant dense<0.000000e+00> : vector<256x16xf32>
    %64 = tpu.matmul %57, %63, %cst_24 {dimension_numbers = #tpu.dot_dimension_numbers<[1], [0], [0], [1], [0, 0, 1, 1], [], []>} : vector<256x8xf32>, vector<8x16xf32>, vector<256x16xf32> -> vector<256x16xf32>
    %65 = arith.addf %62, %64 : vector<256x16xf32>
    %c0_25 = arith.constant 0 : index
    %c0_26 = arith.constant 0 : index
    %66 = vector.load %arg6[%c0_25, %c0_26] : memref<1x16xf32, #tpu.memory_space<vmem>>, vector<1x16xf32>
    %67 = vector.broadcast %66 : vector<1x16xf32> to vector<256x16xf32>
    %68 = arith.addf %65, %67 : vector<256x16xf32>
    %cst_27 = arith.constant 0.000000e+00 : f32
    %69 = vector.broadcast %cst_27 : f32 to vector<256x16xf32>
    %70 = arith.maximumf %68, %69 : vector<256x16xf32>
    %c254_i32_28 = arith.constant 254 : i32
    %71 = tpu.dynamic_rotate %70 by %c254_i32_28 dim 0 : vector<256x16xf32>, i32 -> vector<256x16xf32>
    %72 = arith.maximumf %70, %71 : vector<256x16xf32>
    %c0_29 = arith.constant 0 : index
    %c0_30 = arith.constant 0 : index
    %73 = vector.load %arg7[%c0_29, %c0_30] : memref<48x32xf32, #tpu.memory_space<vmem>>, vector<48x32xf32>
    %c4_i32 = arith.constant 4 : i32
    %74 = tpu.dynamic_rotate %72 by %c4_i32 dim 0 : vector<256x16xf32>, i32 -> vector<256x16xf32>
    %cst_31 = arith.constant 0.000000e+00 : f32
    %75 = vector.shape_cast %20 : vector<256x1xi1> to vector<256x1xi1>
    %76 = vector.broadcast %75 : vector<256x1xi1> to vector<256x16xi1>
    %77 = vector.broadcast %cst_31 : f32 to vector<256x16xf32>
    %78 = arith.select %76, %74, %77 : vector<256x16xi1>, vector<256x16xf32>
    %c48_i32 = arith.constant 48 : i32
    %79 = vector.broadcast %c48_i32 : i32 to vector<256x1xi32>
    %80 = arith.cmpi ne, %18, %79 : vector<256x1xi32>
    %c252_i32 = arith.constant 252 : i32
    %81 = tpu.dynamic_rotate %72 by %c252_i32 dim 0 : vector<256x16xf32>, i32 -> vector<256x16xf32>
    %cst_32 = arith.constant 0.000000e+00 : f32
    %82 = vector.shape_cast %80 : vector<256x1xi1> to vector<256x1xi1>
    %83 = vector.broadcast %82 : vector<256x1xi1> to vector<256x16xi1>
    %84 = vector.broadcast %cst_32 : f32 to vector<256x16xf32>
    %85 = arith.select %83, %81, %84 : vector<256x16xi1>, vector<256x16xf32>
    %86 = vector.extract_strided_slice %73 {offsets = [0, 0], sizes = [16, 32], strides = [1, 1]} : vector<48x32xf32> to vector<16x32xf32>
    %cst_33 = arith.constant dense<0.000000e+00> : vector<256x32xf32>
    %87 = tpu.matmul %78, %86, %cst_33 {dimension_numbers = #tpu.dot_dimension_numbers<[1], [0], [0], [1], [0, 0, 1, 1], [], []>} : vector<256x16xf32>, vector<16x32xf32>, vector<256x32xf32> -> vector<256x32xf32>
    %88 = vector.extract_strided_slice %73 {offsets = [16, 0], sizes = [16, 32], strides = [1, 1]} : vector<48x32xf32> to vector<16x32xf32>
    %cst_34 = arith.constant dense<0.000000e+00> : vector<256x32xf32>
    %89 = tpu.matmul %72, %88, %cst_34 {dimension_numbers = #tpu.dot_dimension_numbers<[1], [0], [0], [1], [0, 0, 1, 1], [], []>} : vector<256x16xf32>, vector<16x32xf32>, vector<256x32xf32> -> vector<256x32xf32>
    %90 = arith.addf %87, %89 : vector<256x32xf32>
    %91 = vector.extract_strided_slice %73 {offsets = [32, 0], sizes = [16, 32], strides = [1, 1]} : vector<48x32xf32> to vector<16x32xf32>
    %cst_35 = arith.constant dense<0.000000e+00> : vector<256x32xf32>
    %92 = tpu.matmul %85, %91, %cst_35 {dimension_numbers = #tpu.dot_dimension_numbers<[1], [0], [0], [1], [0, 0, 1, 1], [], []>} : vector<256x16xf32>, vector<16x32xf32>, vector<256x32xf32> -> vector<256x32xf32>
    %93 = arith.addf %90, %92 : vector<256x32xf32>
    %c0_36 = arith.constant 0 : index
    %c0_37 = arith.constant 0 : index
    %94 = vector.load %arg8[%c0_36, %c0_37] : memref<1x32xf32, #tpu.memory_space<vmem>>, vector<1x32xf32>
    %95 = vector.broadcast %94 : vector<1x32xf32> to vector<256x32xf32>
    %96 = arith.addf %93, %95 : vector<256x32xf32>
    %cst_38 = arith.constant 0.000000e+00 : f32
    %97 = vector.broadcast %cst_38 : f32 to vector<256x32xf32>
    %98 = arith.maximumf %96, %97 : vector<256x32xf32>
    %c0_39 = arith.constant 0 : index
    %c0_40 = arith.constant 0 : index
    %99 = vector.load %arg9[%c0_39, %c0_40] : memref<96x32xf32, #tpu.memory_space<vmem>>, vector<96x32xf32>
    %c4_i32_41 = arith.constant 4 : i32
    %100 = tpu.dynamic_rotate %98 by %c4_i32_41 dim 0 : vector<256x32xf32>, i32 -> vector<256x32xf32>
    %cst_42 = arith.constant 0.000000e+00 : f32
    %101 = vector.shape_cast %20 : vector<256x1xi1> to vector<256x1xi1>
    %102 = vector.broadcast %101 : vector<256x1xi1> to vector<256x32xi1>
    %103 = vector.broadcast %cst_42 : f32 to vector<256x32xf32>
    %104 = arith.select %102, %100, %103 : vector<256x32xi1>, vector<256x32xf32>
    %c48_i32_43 = arith.constant 48 : i32
    %105 = vector.broadcast %c48_i32_43 : i32 to vector<256x1xi32>
    %106 = arith.cmpi ne, %18, %105 : vector<256x1xi32>
    %c252_i32_44 = arith.constant 252 : i32
    %107 = tpu.dynamic_rotate %98 by %c252_i32_44 dim 0 : vector<256x32xf32>, i32 -> vector<256x32xf32>
    %cst_45 = arith.constant 0.000000e+00 : f32
    %108 = vector.shape_cast %106 : vector<256x1xi1> to vector<256x1xi1>
    %109 = vector.broadcast %108 : vector<256x1xi1> to vector<256x32xi1>
    %110 = vector.broadcast %cst_45 : f32 to vector<256x32xf32>
    %111 = arith.select %109, %107, %110 : vector<256x32xi1>, vector<256x32xf32>
    %112 = vector.extract_strided_slice %99 {offsets = [0, 0], sizes = [32, 32], strides = [1, 1]} : vector<96x32xf32> to vector<32x32xf32>
    %cst_46 = arith.constant dense<0.000000e+00> : vector<256x32xf32>
    %113 = tpu.matmul %104, %112, %cst_46 {dimension_numbers = #tpu.dot_dimension_numbers<[1], [0], [0], [1], [0, 0, 1, 1], [], []>} : vector<256x32xf32>, vector<32x32xf32>, vector<256x32xf32> -> vector<256x32xf32>
    %114 = vector.extract_strided_slice %99 {offsets = [32, 0], sizes = [32, 32], strides = [1, 1]} : vector<96x32xf32> to vector<32x32xf32>
    %cst_47 = arith.constant dense<0.000000e+00> : vector<256x32xf32>
    %115 = tpu.matmul %98, %114, %cst_47 {dimension_numbers = #tpu.dot_dimension_numbers<[1], [0], [0], [1], [0, 0, 1, 1], [], []>} : vector<256x32xf32>, vector<32x32xf32>, vector<256x32xf32> -> vector<256x32xf32>
    %116 = arith.addf %113, %115 : vector<256x32xf32>
    %117 = vector.extract_strided_slice %99 {offsets = [64, 0], sizes = [32, 32], strides = [1, 1]} : vector<96x32xf32> to vector<32x32xf32>
    %cst_48 = arith.constant dense<0.000000e+00> : vector<256x32xf32>
    %118 = tpu.matmul %111, %117, %cst_48 {dimension_numbers = #tpu.dot_dimension_numbers<[1], [0], [0], [1], [0, 0, 1, 1], [], []>} : vector<256x32xf32>, vector<32x32xf32>, vector<256x32xf32> -> vector<256x32xf32>
    %119 = arith.addf %116, %118 : vector<256x32xf32>
    %c0_49 = arith.constant 0 : index
    %c0_50 = arith.constant 0 : index
    %120 = vector.load %arg10[%c0_49, %c0_50] : memref<1x32xf32, #tpu.memory_space<vmem>>, vector<1x32xf32>
    %121 = vector.broadcast %120 : vector<1x32xf32> to vector<256x32xf32>
    %122 = arith.addf %119, %121 : vector<256x32xf32>
    %cst_51 = arith.constant 0.000000e+00 : f32
    %123 = vector.broadcast %cst_51 : f32 to vector<256x32xf32>
    %124 = arith.maximumf %122, %123 : vector<256x32xf32>
    %c252_i32_52 = arith.constant 252 : i32
    %125 = tpu.dynamic_rotate %124 by %c252_i32_52 dim 0 : vector<256x32xf32>, i32 -> vector<256x32xf32>
    %126 = arith.maximumf %124, %125 : vector<256x32xf32>
    %c0_53 = arith.constant 0 : index
    %c0_54 = arith.constant 0 : index
    %127 = vector.load %arg11[%c0_53, %c0_54] : memref<96x64xf32, #tpu.memory_space<vmem>>, vector<96x64xf32>
    %c8_i32 = arith.constant 8 : i32
    %128 = tpu.dynamic_rotate %126 by %c8_i32 dim 0 : vector<256x32xf32>, i32 -> vector<256x32xf32>
    %cst_55 = arith.constant 0.000000e+00 : f32
    %129 = vector.shape_cast %20 : vector<256x1xi1> to vector<256x1xi1>
    %130 = vector.broadcast %129 : vector<256x1xi1> to vector<256x32xi1>
    %131 = vector.broadcast %cst_55 : f32 to vector<256x32xf32>
    %132 = arith.select %130, %128, %131 : vector<256x32xi1>, vector<256x32xf32>
    %c40_i32 = arith.constant 40 : i32
    %133 = vector.broadcast %c40_i32 : i32 to vector<256x1xi32>
    %134 = arith.cmpi ne, %18, %133 : vector<256x1xi32>
    %c248_i32 = arith.constant 248 : i32
    %135 = tpu.dynamic_rotate %126 by %c248_i32 dim 0 : vector<256x32xf32>, i32 -> vector<256x32xf32>
    %cst_56 = arith.constant 0.000000e+00 : f32
    %136 = vector.shape_cast %134 : vector<256x1xi1> to vector<256x1xi1>
    %137 = vector.broadcast %136 : vector<256x1xi1> to vector<256x32xi1>
    %138 = vector.broadcast %cst_56 : f32 to vector<256x32xf32>
    %139 = arith.select %137, %135, %138 : vector<256x32xi1>, vector<256x32xf32>
    %140 = vector.extract_strided_slice %127 {offsets = [0, 0], sizes = [32, 64], strides = [1, 1]} : vector<96x64xf32> to vector<32x64xf32>
    %cst_57 = arith.constant dense<0.000000e+00> : vector<256x64xf32>
    %141 = tpu.matmul %132, %140, %cst_57 {dimension_numbers = #tpu.dot_dimension_numbers<[1], [0], [0], [1], [0, 0, 1, 1], [], []>} : vector<256x32xf32>, vector<32x64xf32>, vector<256x64xf32> -> vector<256x64xf32>
    %142 = vector.extract_strided_slice %127 {offsets = [32, 0], sizes = [32, 64], strides = [1, 1]} : vector<96x64xf32> to vector<32x64xf32>
    %cst_58 = arith.constant dense<0.000000e+00> : vector<256x64xf32>
    %143 = tpu.matmul %126, %142, %cst_58 {dimension_numbers = #tpu.dot_dimension_numbers<[1], [0], [0], [1], [0, 0, 1, 1], [], []>} : vector<256x32xf32>, vector<32x64xf32>, vector<256x64xf32> -> vector<256x64xf32>
    %144 = arith.addf %141, %143 : vector<256x64xf32>
    %145 = vector.extract_strided_slice %127 {offsets = [64, 0], sizes = [32, 64], strides = [1, 1]} : vector<96x64xf32> to vector<32x64xf32>
    %cst_59 = arith.constant dense<0.000000e+00> : vector<256x64xf32>
    %146 = tpu.matmul %139, %145, %cst_59 {dimension_numbers = #tpu.dot_dimension_numbers<[1], [0], [0], [1], [0, 0, 1, 1], [], []>} : vector<256x32xf32>, vector<32x64xf32>, vector<256x64xf32> -> vector<256x64xf32>
    %147 = arith.addf %144, %146 : vector<256x64xf32>
    %c0_60 = arith.constant 0 : index
    %c0_61 = arith.constant 0 : index
    %148 = vector.load %arg12[%c0_60, %c0_61] : memref<1x64xf32, #tpu.memory_space<vmem>>, vector<1x64xf32>
    %149 = vector.broadcast %148 : vector<1x64xf32> to vector<256x64xf32>
    %150 = arith.addf %147, %149 : vector<256x64xf32>
    %cst_62 = arith.constant 0.000000e+00 : f32
    %151 = vector.broadcast %cst_62 : f32 to vector<256x64xf32>
    %152 = arith.maximumf %150, %151 : vector<256x64xf32>
    %c0_63 = arith.constant 0 : index
    %c0_64 = arith.constant 0 : index
    %153 = vector.load %arg13[%c0_63, %c0_64] : memref<192x64xf32, #tpu.memory_space<vmem>>, vector<192x64xf32>
    %c8_i32_65 = arith.constant 8 : i32
    %154 = tpu.dynamic_rotate %152 by %c8_i32_65 dim 0 : vector<256x64xf32>, i32 -> vector<256x64xf32>
    %cst_66 = arith.constant 0.000000e+00 : f32
    %155 = vector.shape_cast %20 : vector<256x1xi1> to vector<256x1xi1>
    %156 = vector.broadcast %155 : vector<256x1xi1> to vector<256x64xi1>
    %157 = vector.broadcast %cst_66 : f32 to vector<256x64xf32>
    %158 = arith.select %156, %154, %157 : vector<256x64xi1>, vector<256x64xf32>
    %c40_i32_67 = arith.constant 40 : i32
    %159 = vector.broadcast %c40_i32_67 : i32 to vector<256x1xi32>
    %160 = arith.cmpi ne, %18, %159 : vector<256x1xi32>
    %c248_i32_68 = arith.constant 248 : i32
    %161 = tpu.dynamic_rotate %152 by %c248_i32_68 dim 0 : vector<256x64xf32>, i32 -> vector<256x64xf32>
    %cst_69 = arith.constant 0.000000e+00 : f32
    %162 = vector.shape_cast %160 : vector<256x1xi1> to vector<256x1xi1>
    %163 = vector.broadcast %162 : vector<256x1xi1> to vector<256x64xi1>
    %164 = vector.broadcast %cst_69 : f32 to vector<256x64xf32>
    %165 = arith.select %163, %161, %164 : vector<256x64xi1>, vector<256x64xf32>
    %166 = vector.extract_strided_slice %153 {offsets = [0, 0], sizes = [64, 64], strides = [1, 1]} : vector<192x64xf32> to vector<64x64xf32>
    %cst_70 = arith.constant dense<0.000000e+00> : vector<256x64xf32>
    %167 = tpu.matmul %158, %166, %cst_70 {dimension_numbers = #tpu.dot_dimension_numbers<[1], [0], [0], [1], [0, 0, 1, 1], [], []>} : vector<256x64xf32>, vector<64x64xf32>, vector<256x64xf32> -> vector<256x64xf32>
    %168 = vector.extract_strided_slice %153 {offsets = [64, 0], sizes = [64, 64], strides = [1, 1]} : vector<192x64xf32> to vector<64x64xf32>
    %cst_71 = arith.constant dense<0.000000e+00> : vector<256x64xf32>
    %169 = tpu.matmul %152, %168, %cst_71 {dimension_numbers = #tpu.dot_dimension_numbers<[1], [0], [0], [1], [0, 0, 1, 1], [], []>} : vector<256x64xf32>, vector<64x64xf32>, vector<256x64xf32> -> vector<256x64xf32>
    %170 = arith.addf %167, %169 : vector<256x64xf32>
    %171 = vector.extract_strided_slice %153 {offsets = [128, 0], sizes = [64, 64], strides = [1, 1]} : vector<192x64xf32> to vector<64x64xf32>
    %cst_72 = arith.constant dense<0.000000e+00> : vector<256x64xf32>
    %172 = tpu.matmul %165, %171, %cst_72 {dimension_numbers = #tpu.dot_dimension_numbers<[1], [0], [0], [1], [0, 0, 1, 1], [], []>} : vector<256x64xf32>, vector<64x64xf32>, vector<256x64xf32> -> vector<256x64xf32>
    %173 = arith.addf %170, %172 : vector<256x64xf32>
    %c0_73 = arith.constant 0 : index
    %c0_74 = arith.constant 0 : index
    %174 = vector.load %arg14[%c0_73, %c0_74] : memref<1x64xf32, #tpu.memory_space<vmem>>, vector<1x64xf32>
    %175 = vector.broadcast %174 : vector<1x64xf32> to vector<256x64xf32>
    %176 = arith.addf %173, %175 : vector<256x64xf32>
    %cst_75 = arith.constant 0.000000e+00 : f32
    %177 = vector.broadcast %cst_75 : f32 to vector<256x64xf32>
    %178 = arith.maximumf %176, %177 : vector<256x64xf32>
    %c248_i32_76 = arith.constant 248 : i32
    %179 = tpu.dynamic_rotate %178 by %c248_i32_76 dim 0 : vector<256x64xf32>, i32 -> vector<256x64xf32>
    %180 = arith.maximumf %178, %179 : vector<256x64xf32>
    %c0_77 = arith.constant 0 : index
    %c0_78 = arith.constant 0 : index
    %181 = vector.load %arg15[%c0_77, %c0_78] : memref<201x64xf32, #tpu.memory_space<vmem>>, vector<201x64xf32>
    %182 = vector.extract_strided_slice %181 {offsets = [192, 0], sizes = [9, 64], strides = [1, 1]} : vector<201x64xf32> to vector<9x64xf32>
    %cst_79 = arith.constant dense<0.000000e+00> : vector<4x64xf32>
    %183 = tpu.matmul %1, %182, %cst_79 {dimension_numbers = #tpu.dot_dimension_numbers<[1], [0], [0], [1], [0, 0, 1, 1], [], []>} : vector<4x9xf32>, vector<9x64xf32>, vector<4x64xf32> -> vector<4x64xf32>
    %c0_80 = arith.constant 0 : index
    %c0_81 = arith.constant 0 : index
    %184 = vector.load %arg16[%c0_80, %c0_81] : memref<1x64xf32, #tpu.memory_space<vmem>>, vector<1x64xf32>
    %185 = vector.broadcast %184 : vector<1x64xf32> to vector<4x64xf32>
    %186 = arith.addf %183, %185 : vector<4x64xf32>
    %187 = tpu.iota {dimensions = array<i32: 0>} : vector<4x256xi32>
    %188 = tpu.iota {dimensions = array<i32: 1>} : vector<4x256xi32>
    %c64_i32_82 = arith.constant 64 : i32
    %189 = vector.broadcast %c64_i32_82 : i32 to vector<4x256xi32>
    %190 = arith.muli %187, %189 : vector<4x256xi32>
    %c0_i32_83 = arith.constant 0 : i32
    %191 = vector.broadcast %c0_i32_83 : i32 to vector<4x256xi32>
    %192 = arith.addi %190, %191 : vector<4x256xi32>
    %193 = arith.cmpi eq, %188, %192 : vector<4x256xi32>
    %194 = arith.extui %193 : vector<4x256xi1> to vector<4x256xi32>
    %195 = arith.sitofp %194 : vector<4x256xi32> to vector<4x256xf32>
    %cst_84 = arith.constant dense<0.000000e+00> : vector<4x64xf32>
    %196 = tpu.matmul %195, %180, %cst_84 {dimension_numbers = #tpu.dot_dimension_numbers<[1], [0], [0], [1], [0, 0, 1, 1], [], []>, precision = #tpu.contract_precision<fp32>} : vector<4x256xf32>, vector<256x64xf32>, vector<4x64xf32> -> vector<4x64xf32>
    %197 = vector.extract_strided_slice %181 {offsets = [0, 0], sizes = [64, 64], strides = [1, 1]} : vector<201x64xf32> to vector<64x64xf32>
    %cst_85 = arith.constant dense<0.000000e+00> : vector<4x64xf32>
    %198 = tpu.matmul %196, %197, %cst_85 {dimension_numbers = #tpu.dot_dimension_numbers<[1], [0], [0], [1], [0, 0, 1, 1], [], []>} : vector<4x64xf32>, vector<64x64xf32>, vector<4x64xf32> -> vector<4x64xf32>
    %199 = arith.addf %186, %198 : vector<4x64xf32>
    %c64_i32_86 = arith.constant 64 : i32
    %200 = vector.broadcast %c64_i32_86 : i32 to vector<4x256xi32>
    %201 = arith.muli %187, %200 : vector<4x256xi32>
    %c16_i32 = arith.constant 16 : i32
    %202 = vector.broadcast %c16_i32 : i32 to vector<4x256xi32>
    %203 = arith.addi %201, %202 : vector<4x256xi32>
    %204 = arith.cmpi eq, %188, %203 : vector<4x256xi32>
    %205 = arith.extui %204 : vector<4x256xi1> to vector<4x256xi32>
    %206 = arith.sitofp %205 : vector<4x256xi32> to vector<4x256xf32>
    %cst_87 = arith.constant dense<0.000000e+00> : vector<4x64xf32>
    %207 = tpu.matmul %206, %180, %cst_87 {dimension_numbers = #tpu.dot_dimension_numbers<[1], [0], [0], [1], [0, 0, 1, 1], [], []>, precision = #tpu.contract_precision<fp32>} : vector<4x256xf32>, vector<256x64xf32>, vector<4x64xf32> -> vector<4x64xf32>
    %208 = vector.extract_strided_slice %181 {offsets = [64, 0], sizes = [64, 64], strides = [1, 1]} : vector<201x64xf32> to vector<64x64xf32>
    %cst_88 = arith.constant dense<0.000000e+00> : vector<4x64xf32>
    %209 = tpu.matmul %207, %208, %cst_88 {dimension_numbers = #tpu.dot_dimension_numbers<[1], [0], [0], [1], [0, 0, 1, 1], [], []>} : vector<4x64xf32>, vector<64x64xf32>, vector<4x64xf32> -> vector<4x64xf32>
    %210 = arith.addf %199, %209 : vector<4x64xf32>
    %c64_i32_89 = arith.constant 64 : i32
    %211 = vector.broadcast %c64_i32_89 : i32 to vector<4x256xi32>
    %212 = arith.muli %187, %211 : vector<4x256xi32>
    %c32_i32 = arith.constant 32 : i32
    %213 = vector.broadcast %c32_i32 : i32 to vector<4x256xi32>
    %214 = arith.addi %212, %213 : vector<4x256xi32>
    %215 = arith.cmpi eq, %188, %214 : vector<4x256xi32>
    %216 = arith.extui %215 : vector<4x256xi1> to vector<4x256xi32>
    %217 = arith.sitofp %216 : vector<4x256xi32> to vector<4x256xf32>
    %cst_90 = arith.constant dense<0.000000e+00> : vector<4x64xf32>
    %218 = tpu.matmul %217, %180, %cst_90 {dimension_numbers = #tpu.dot_dimension_numbers<[1], [0], [0], [1], [0, 0, 1, 1], [], []>, precision = #tpu.contract_precision<fp32>} : vector<4x256xf32>, vector<256x64xf32>, vector<4x64xf32> -> vector<4x64xf32>
    %219 = vector.extract_strided_slice %181 {offsets = [128, 0], sizes = [64, 64], strides = [1, 1]} : vector<201x64xf32> to vector<64x64xf32>
    %cst_91 = arith.constant dense<0.000000e+00> : vector<4x64xf32>
    %220 = tpu.matmul %218, %219, %cst_91 {dimension_numbers = #tpu.dot_dimension_numbers<[1], [0], [0], [1], [0, 0, 1, 1], [], []>} : vector<4x64xf32>, vector<64x64xf32>, vector<4x64xf32> -> vector<4x64xf32>
    %221 = arith.addf %210, %220 : vector<4x64xf32>
    %cst_92 = arith.constant 0.000000e+00 : f32
    %222 = vector.broadcast %cst_92 : f32 to vector<4x64xf32>
    %223 = arith.maximumf %221, %222 : vector<4x64xf32>
    %c0_93 = arith.constant 0 : index
    %c0_94 = arith.constant 0 : index
    %224 = vector.load %arg17[%c0_93, %c0_94] : memref<64x64xf32, #tpu.memory_space<vmem>>, vector<64x64xf32>
    %cst_95 = arith.constant dense<0.000000e+00> : vector<4x64xf32>
    %225 = tpu.matmul %223, %224, %cst_95 {dimension_numbers = #tpu.dot_dimension_numbers<[1], [0], [0], [1], [0, 0, 1, 1], [], []>} : vector<4x64xf32>, vector<64x64xf32>, vector<4x64xf32> -> vector<4x64xf32>
    %c0_96 = arith.constant 0 : index
    %c0_97 = arith.constant 0 : index
    %226 = vector.load %arg18[%c0_96, %c0_97] : memref<1x64xf32, #tpu.memory_space<vmem>>, vector<1x64xf32>
    %227 = vector.broadcast %226 : vector<1x64xf32> to vector<4x64xf32>
    %228 = arith.addf %225, %227 : vector<4x64xf32>
    %cst_98 = arith.constant 0.000000e+00 : f32
    %229 = vector.broadcast %cst_98 : f32 to vector<4x64xf32>
    %230 = arith.maximumf %228, %229 : vector<4x64xf32>
    %c0_99 = arith.constant 0 : index
    %c0_100 = arith.constant 0 : index
    %231 = vector.load %arg19[%c0_99, %c0_100] : memref<64x64xf32, #tpu.memory_space<vmem>>, vector<64x64xf32>
    %cst_101 = arith.constant dense<0.000000e+00> : vector<4x64xf32>
    %232 = tpu.matmul %230, %231, %cst_101 {dimension_numbers = #tpu.dot_dimension_numbers<[1], [0], [0], [1], [0, 0, 1, 1], [], []>} : vector<4x64xf32>, vector<64x64xf32>, vector<4x64xf32> -> vector<4x64xf32>
    %c0_102 = arith.constant 0 : index
    %c0_103 = arith.constant 0 : index
    %233 = vector.load %arg20[%c0_102, %c0_103] : memref<1x64xf32, #tpu.memory_space<vmem>>, vector<1x64xf32>
    %234 = vector.broadcast %233 : vector<1x64xf32> to vector<4x64xf32>
    %235 = arith.addf %232, %234 : vector<4x64xf32>
    %cst_104 = arith.constant 0.000000e+00 : f32
    %236 = vector.broadcast %cst_104 : f32 to vector<4x64xf32>
    %237 = arith.maximumf %235, %236 : vector<4x64xf32>
    %c0_105 = arith.constant 0 : index
    %c0_106 = arith.constant 0 : index
    %238 = vector.load %arg21[%c0_105, %c0_106] : memref<64x12xf32, #tpu.memory_space<vmem>>, vector<64x12xf32>
    %cst_107 = arith.constant dense<0.000000e+00> : vector<4x12xf32>
    %239 = tpu.matmul %237, %238, %cst_107 {dimension_numbers = #tpu.dot_dimension_numbers<[1], [0], [0], [1], [0, 0, 1, 1], [], []>} : vector<4x64xf32>, vector<64x12xf32>, vector<4x12xf32> -> vector<4x12xf32>
    %c0_108 = arith.constant 0 : index
    %c0_109 = arith.constant 0 : index
    %240 = vector.load %arg22[%c0_108, %c0_109] : memref<1x12xf32, #tpu.memory_space<vmem>>, vector<1x12xf32>
    %241 = vector.broadcast %240 : vector<1x12xf32> to vector<4x12xf32>
    %242 = arith.addf %239, %241 : vector<4x12xf32>
    %243 = vector.extract_strided_slice %242 {offsets = [0, 0], sizes = [4, 6], strides = [1, 1]} : vector<4x12xf32> to vector<4x6xf32>
    %c0_110 = arith.constant 0 : index
    %c0_111 = arith.constant 0 : index
    %244 = vector.load %arg23[%c0_110, %c0_111] : memref<4x6xf32, #tpu.memory_space<vmem>>, vector<4x6xf32>
    tpu.vector_store %arg23[%c0_110, %c0_111], %243 {strides = array<i32>} : memref<4x6xf32, #tpu.memory_space<vmem>>, vector<4x6xf32>,
    %245 = vector.extract_strided_slice %242 {offsets = [0, 6], sizes = [4, 6], strides = [1, 1]} : vector<4x12xf32> to vector<4x6xf32>
    %cst_112 = arith.constant 0.000000e+00 : f32
    %246 = vector.broadcast %cst_112 : f32 to vector<4x6xf32>
    %247 = arith.maximumf %245, %246 : vector<4x6xf32>
    %248 = math.absf %245 : vector<4x6xf32>
    %cst_113 = arith.constant 0.000000e+00 : f32
    %249 = vector.broadcast %cst_113 : f32 to vector<4x6xf32>
    %250 = arith.subf %249, %248 : vector<4x6xf32>
    %251 = math.exp %250 : vector<4x6xf32>
    %cst_114 = arith.constant 1.000000e+00 : f32
    %252 = vector.broadcast %cst_114 : f32 to vector<4x6xf32>
    %253 = arith.addf %252, %251 : vector<4x6xf32>
    %254 = math.log %253 : vector<4x6xf32>
    %255 = arith.addf %247, %254 : vector<4x6xf32>
    %cst_115 = arith.constant 9.99999997E-7 : f32
    %256 = vector.broadcast %cst_115 : f32 to vector<4x6xf32>
    %257 = arith.addf %255, %256 : vector<4x6xf32>
    %c0_116 = arith.constant 0 : index
    %c0_117 = arith.constant 0 : index
    %258 = vector.load %arg24[%c0_116, %c0_117] : memref<4x6xf32, #tpu.memory_space<vmem>>, vector<4x6xf32>
    tpu.vector_store %arg24[%c0_116, %c0_117], %257 {strides = array<i32>} : memref<4x6xf32, #tpu.memory_space<vmem>>, vector<4x6xf32>,
    return
  }
  func.func @transform_0(%arg0: i32) -> (i32, i32) {
    %c0_i32 = arith.constant 0 : i32
    %c0_i32_0 = arith.constant 0 : i32
    %c0_i32_1 = arith.constant 0 : i32
    return %c0_i32, %c0_i32_0 : i32, i32
  }
  func.func @transform_1(%arg0: i32) -> (i32, i32) {
    %c0_i32 = arith.constant 0 : i32
    %c0_i32_0 = arith.constant 0 : i32
    %c0_i32_1 = arith.constant 0 : i32
    return %c0_i32, %c0_i32_0 : i32, i32
  }
  func.func @transform_2(%arg0: i32) -> (i32, i32) {
    %c0_i32 = arith.constant 0 : i32
    %c0_i32_0 = arith.constant 0 : i32
    %c0_i32_1 = arith.constant 0 : i32
    return %c0_i32, %c0_i32_0 : i32, i32
  }
  func.func @transform_3(%arg0: i32) -> (i32, i32) {
    %c0_i32 = arith.constant 0 : i32
    %c0_i32_0 = arith.constant 0 : i32
    %c0_i32_1 = arith.constant 0 : i32
    return %c0_i32, %c0_i32_0 : i32, i32
  }
  func.func @transform_4(%arg0: i32) -> (i32, i32) {
    %c0_i32 = arith.constant 0 : i32
    %c0_i32_0 = arith.constant 0 : i32
    %c0_i32_1 = arith.constant 0 : i32
    return %c0_i32, %c0_i32_0 : i32, i32
  }
  func.func @transform_5(%arg0: i32) -> (i32, i32) {
    %c0_i32 = arith.constant 0 : i32
    %c0_i32_0 = arith.constant 0 : i32
    %c0_i32_1 = arith.constant 0 : i32
    return %c0_i32, %c0_i32_0 : i32, i32
  }
  func.func @transform_6(%arg0: i32) -> (i32, i32) {
    %c0_i32 = arith.constant 0 : i32
    %c0_i32_0 = arith.constant 0 : i32
    %c0_i32_1 = arith.constant 0 : i32
    return %c0_i32, %c0_i32_0 : i32, i32
  }
  func.func @transform_7(%arg0: i32) -> (i32, i32) {
    %c0_i32 = arith.constant 0 : i32
    %c0_i32_0 = arith.constant 0 : i32
    %c0_i32_1 = arith.constant 0 : i32
    return %c0_i32, %c0_i32_0 : i32, i32
  }
  func.func @transform_8(%arg0: i32) -> (i32, i32) {
    %c0_i32 = arith.constant 0 : i32
    %c0_i32_0 = arith.constant 0 : i32
    %c0_i32_1 = arith.constant 0 : i32
    return %c0_i32, %c0_i32_0 : i32, i32
  }
  func.func @transform_9(%arg0: i32) -> (i32, i32) {
    %c0_i32 = arith.constant 0 : i32
    %c0_i32_0 = arith.constant 0 : i32
    %c0_i32_1 = arith.constant 0 : i32
    return %c0_i32, %c0_i32_0 : i32, i32
  }
  func.func @transform_10(%arg0: i32) -> (i32, i32) {
    %c0_i32 = arith.constant 0 : i32
    %c0_i32_0 = arith.constant 0 : i32
    %c0_i32_1 = arith.constant 0 : i32
    return %c0_i32, %c0_i32_0 : i32, i32
  }
  func.func @transform_11(%arg0: i32) -> (i32, i32) {
    %c0_i32 = arith.constant 0 : i32
    %c0_i32_0 = arith.constant 0 : i32
    %c0_i32_1 = arith.constant 0 : i32
    return %c0_i32, %c0_i32_0 : i32, i32
  }
  func.func @transform_12(%arg0: i32) -> (i32, i32) {
    %c0_i32 = arith.constant 0 : i32
    %c0_i32_0 = arith.constant 0 : i32
    %c0_i32_1 = arith.constant 0 : i32
    return %c0_i32, %c0_i32_0 : i32, i32
  }
  func.func @transform_13(%arg0: i32) -> (i32, i32) {
    %c0_i32 = arith.constant 0 : i32
    %c0_i32_0 = arith.constant 0 : i32
    %c0_i32_1 = arith.constant 0 : i32
    return %c0_i32, %c0_i32_0 : i32, i32
  }
  func.func @transform_14(%arg0: i32) -> (i32, i32) {
    %c0_i32 = arith.constant 0 : i32
    %c0_i32_0 = arith.constant 0 : i32
    %c0_i32_1 = arith.constant 0 : i32
    return %c0_i32, %c0_i32_0 : i32, i32
  }
  func.func @transform_15(%arg0: i32) -> (i32, i32) {
    %c0_i32 = arith.constant 0 : i32
    %c0_i32_0 = arith.constant 0 : i32
    %c0_i32_1 = arith.constant 0 : i32
    return %c0_i32, %c0_i32_0 : i32, i32
  }
  func.func @transform_16(%arg0: i32) -> (i32, i32) {
    %c0_i32 = arith.constant 0 : i32
    %c0_i32_0 = arith.constant 0 : i32
    %c0_i32_1 = arith.constant 0 : i32
    return %c0_i32, %c0_i32_0 : i32, i32
  }
  func.func @transform_17(%arg0: i32) -> (i32, i32) {
    %c0_i32 = arith.constant 0 : i32
    %c0_i32_0 = arith.constant 0 : i32
    %c0_i32_1 = arith.constant 0 : i32
    return %c0_i32, %c0_i32_0 : i32, i32
  }
  func.func @transform_18(%arg0: i32) -> (i32, i32) {
    %c0_i32 = arith.constant 0 : i32
    %c0_i32_0 = arith.constant 0 : i32
    %c0_i32_1 = arith.constant 0 : i32
    return %c0_i32, %c0_i32_0 : i32, i32
  }
  func.func @transform_19(%arg0: i32) -> (i32, i32) {
    %c0_i32 = arith.constant 0 : i32
    %c0_i32_0 = arith.constant 0 : i32
    %c0_i32_1 = arith.constant 0 : i32
    return %c0_i32, %c0_i32_0 : i32, i32
  }
  func.func @transform_20(%arg0: i32) -> (i32, i32) {
    %c0_i32 = arith.constant 0 : i32
    %c0_i32_0 = arith.constant 0 : i32
    %c0_i32_1 = arith.constant 0 : i32
    return %c0_i32, %c0_i32_0 : i32, i32
  }
  func.func @transform_21(%arg0: i32) -> (i32, i32) {
    %c0_i32 = arith.constant 0 : i32
    %c0_i32_0 = arith.constant 0 : i32
    %c0_i32_1 = arith.constant 0 : i32
    return %c0_i32, %c0_i32_0 : i32, i32
  }
  func.func @transform_22(%arg0: i32) -> (i32, i32) {
    %c0_i32 = arith.constant 0 : i32
    %c0_i32_0 = arith.constant 0 : i32
    %c0_i32_1 = arith.constant 0 : i32
    return %c0_i32, %c0_i32_0 : i32, i32
  }
  func.func @transform_23(%arg0: i32) -> (i32, i32) {
    %c0_i32 = arith.constant 0 : i32
    %c0_i32_0 = arith.constant 0 : i32
    %c0_i32_1 = arith.constant 0 : i32
    return %c0_i32, %c0_i32_0 : i32, i32
  }
}

</mosaic_0001>

<llo_original>
// kernel: tpu_custom_call.1
$region0: #{tpu_custom_call.1}
  #allocation0 [shape = 'u32[]', space=smem, size = 0x4, offset = 0x4, fixed_abs, tag = 'smem constant byte address 0x4 - core index']
  #allocation1 [shape = 'u32[72,128]{1,0:T(1,128)}', space=vmem, size = 0x9000, scoped, tag = 'internal scratch']
  %s0 = inlined_call_operand.vmem [shape: f32[256,1], index: 0, kind: input, shape index: {}]
  %s1 = inlined_call_operand.vmem [shape: f32[4,9], index: 1, kind: input, shape index: {}]
  %s2 = inlined_call_operand.vmem [shape: f32[3,8], index: 2, kind: input, shape index: {}]
  %s3 = inlined_call_operand.vmem [shape: f32[1,8], index: 3, kind: input, shape index: {}]
  %s4 = inlined_call_operand.vmem [shape: f32[24,16], index: 4, kind: input, shape index: {}]
  %s5 = inlined_call_operand.vmem [shape: f32[1,16], index: 5, kind: input, shape index: {}]
  %s6 = inlined_call_operand.vmem [shape: f32[48,32], index: 6, kind: input, shape index: {}]
  %s7 = inlined_call_operand.vmem [shape: f32[1,32], index: 7, kind: input, shape index: {}]
  %s8 = inlined_call_operand.vmem [shape: f32[96,32], index: 8, kind: input, shape index: {}]
  %s9 = inlined_call_operand.vmem [shape: f32[1,32], index: 9, kind: input, shape index: {}]
  %s10 = inlined_call_operand.vmem [shape: f32[96,64], index: 10, kind: input, shape index: {}]
  %s11 = inlined_call_operand.vmem [shape: f32[1,64], index: 11, kind: input, shape index: {}]
  %s12 = inlined_call_operand.vmem [shape: f32[192,64], index: 12, kind: input, shape index: {}]
  %s13 = inlined_call_operand.vmem [shape: f32[1,64], index: 13, kind: input, shape index: {}]
  %s14 = inlined_call_operand.vmem [shape: f32[201,64], index: 14, kind: input, shape index: {}]
  %s15 = inlined_call_operand.vmem [shape: f32[1,64], index: 15, kind: input, shape index: {}]
  %s16 = inlined_call_operand.vmem [shape: f32[64,64], index: 16, kind: input, shape index: {}]
  %s17 = inlined_call_operand.vmem [shape: f32[1,64], index: 17, kind: input, shape index: {}]
  %s18 = inlined_call_operand.vmem [shape: f32[64,64], index: 18, kind: input, shape index: {}]
  %s19 = inlined_call_operand.vmem [shape: f32[1,64], index: 19, kind: input, shape index: {}]
  %s20 = inlined_call_operand.vmem [shape: f32[64,12], index: 20, kind: input, shape index: {}]
  %s21 = inlined_call_operand.vmem [shape: f32[1,12], index: 21, kind: input, shape index: {}]
  %s22 = inlined_call_operand.hbm [shape: f32[4,6], index: 22, kind: output, shape index: {0}]
  %s23 = inlined_call_operand.hbm [shape: f32[4,6], index: 23, kind: output, shape index: {1}]
  %24 = xla_tuple %s22, %s23
  %s25 = sld [smem:[#allocation0]]
  $region106: #{tpu_custom_call.1} parent=0
    _
  %s27 = ssub.s32 1, %s25
  %s28 = scalar_select 0, %s27, %s25
  $region1: #{tpu_custom_call.1} parent=0
    #allocation2 [shape = 'u8[2048]{0}', space=vmem, size = 0x800, scoped, tag = 'output window, operand 0, single buffered']
    #allocation3 [shape = 's32[1]{0}', space=sflag, size = 0x4, scoped, tag = 'scoped memory for tpu_custom_call.1']
    #allocation4 [shape = 'u8[2048]{0}', space=vmem, size = 0x800, scoped, tag = 'output window, operand 1, single buffered']
    #allocation5 [shape = 's32[1]{0}', space=sflag, size = 0x4, scoped, tag = 'scoped memory for tpu_custom_call.1']
    %29 = vsyncpa [#allocation3], 0
    %30 = vsyncpa [#allocation5], 0
    // Predicated region
    $region2: #{tpu_custom_call.1} parent=1 // pred_check
      _
    $region3: #{tpu_custom_call.1} parent=1 // pred_check_branch
      %32 = sbr.rel (0) target = $region5
    $region4: #{tpu_custom_call.1} parent=1 // pred_region
      _
    $region5: #{tpu_custom_call.1} parent=1 // pred_fallthru
      _
    // Predicated region
    $region6: #{tpu_custom_call.1} parent=1 // pred_check
      _
    $region7: #{tpu_custom_call.1} parent=1 // pred_check_branch
      %34 = sbr.rel (0) target = $region9
    $region8: #{tpu_custom_call.1} parent=1 // pred_region
      _
    $region9: #{tpu_custom_call.1} parent=1 // pred_fallthru
      _
    // Predicated region
    $region10: #{tpu_custom_call.1} parent=1 // pred_check
      _
    $region11: #{tpu_custom_call.1} parent=1 // pred_check_branch
      %36 = sbr.rel (0) target = $region13
    $region12: #{tpu_custom_call.1} parent=1 // pred_region
      _
    $region13: #{tpu_custom_call.1} parent=1 // pred_fallthru
      _
    // Predicated region
    $region14: #{tpu_custom_call.1} parent=1 // pred_check
      _
    $region15: #{tpu_custom_call.1} parent=1 // pred_check_branch
      %38 = sbr.rel (0) target = $region17
    $region16: #{tpu_custom_call.1} parent=1 // pred_region
      _
    $region17: #{tpu_custom_call.1} parent=1 // pred_fallthru
      _
    // Predicated region
    $region18: #{tpu_custom_call.1} parent=1 // pred_check
      _
    $region19: #{tpu_custom_call.1} parent=1 // pred_check_branch
      %40 = sbr.rel (0) target = $region21
    $region20: #{tpu_custom_call.1} parent=1 // pred_region
      _
    $region21: #{tpu_custom_call.1} parent=1 // pred_fallthru
      _
    // Predicated region
    $region22: #{tpu_custom_call.1} parent=1 // pred_check
      _
    $region23: #{tpu_custom_call.1} parent=1 // pred_check_branch
      %42 = sbr.rel (0) target = $region25
    $region24: #{tpu_custom_call.1} parent=1 // pred_region
      _
    $region25: #{tpu_custom_call.1} parent=1 // pred_fallthru
      _
    // Predicated region
    $region26: #{tpu_custom_call.1} parent=1 // pred_check
      _
    $region27: #{tpu_custom_call.1} parent=1 // pred_check_branch
      %44 = sbr.rel (0) target = $region29
    $region28: #{tpu_custom_call.1} parent=1 // pred_region
      _
    $region29: #{tpu_custom_call.1} parent=1 // pred_fallthru
      _
    // Predicated region
    $region30: #{tpu_custom_call.1} parent=1 // pred_check
      _
    $region31: #{tpu_custom_call.1} parent=1 // pred_check_branch
      %46 = sbr.rel (0) target = $region33
    $region32: #{tpu_custom_call.1} parent=1 // pred_region
      _
    $region33: #{tpu_custom_call.1} parent=1 // pred_fallthru
      _
    // Predicated region
    $region34: #{tpu_custom_call.1} parent=1 // pred_check
      _
    $region35: #{tpu_custom_call.1} parent=1 // pred_check_branch
      %48 = sbr.rel (0) target = $region37
    $region36: #{tpu_custom_call.1} parent=1 // pred_region
      _
    $region37: #{tpu_custom_call.1} parent=1 // pred_fallthru
      _
    // Predicated region
    $region38: #{tpu_custom_call.1} parent=1 // pred_check
      _
    $region39: #{tpu_custom_call.1} parent=1 // pred_check_branch
      %50 = sbr.rel (0) target = $region41
    $region40: #{tpu_custom_call.1} parent=1 // pred_region
      _
    $region41: #{tpu_custom_call.1} parent=1 // pred_fallthru
      _
    // Predicated region
    $region42: #{tpu_custom_call.1} parent=1 // pred_check
      _
    $region43: #{tpu_custom_call.1} parent=1 // pred_check_branch
      %52 = sbr.rel (0) target = $region45
    $region44: #{tpu_custom_call.1} parent=1 // pred_region
      _
    $region45: #{tpu_custom_call.1} parent=1 // pred_fallthru
      _
    // Predicated region
    $region46: #{tpu_custom_call.1} parent=1 // pred_check
      _
    $region47: #{tpu_custom_call.1} parent=1 // pred_check_branch
      %54 = sbr.rel (0) target = $region49
    $region48: #{tpu_custom_call.1} parent=1 // pred_region
      _
    $region49: #{tpu_custom_call.1} parent=1 // pred_fallthru
      _
    // Predicated region
    $region50: #{tpu_custom_call.1} parent=1 // pred_check
      _
    $region51: #{tpu_custom_call.1} parent=1 // pred_check_branch
      %56 = sbr.rel (0) target = $region53
    $region52: #{tpu_custom_call.1} parent=1 // pred_region
      _
    $region53: #{tpu_custom_call.1} parent=1 // pred_fallthru
      _
    // Predicated region
    $region54: #{tpu_custom_call.1} parent=1 // pred_check
      _
    $region55: #{tpu_custom_call.1} parent=1 // pred_check_branch
      %58 = sbr.rel (0) target = $region57
    $region56: #{tpu_custom_call.1} parent=1 // pred_region
      _
    $region57: #{tpu_custom_call.1} parent=1 // pred_fallthru
      _
    // Predicated region
    $region58: #{tpu_custom_call.1} parent=1 // pred_check
      _
    $region59: #{tpu_custom_call.1} parent=1 // pred_check_branch
      %60 = sbr.rel (0) target = $region61
    $region60: #{tpu_custom_call.1} parent=1 // pred_region
      _
    $region61: #{tpu_custom_call.1} parent=1 // pred_fallthru
      _
    // Predicated region
    $region62: #{tpu_custom_call.1} parent=1 // pred_check
      _
    $region63: #{tpu_custom_call.1} parent=1 // pred_check_branch
      %62 = sbr.rel (0) target = $region65
    $region64: #{tpu_custom_call.1} parent=1 // pred_region
      _
    $region65: #{tpu_custom_call.1} parent=1 // pred_fallthru
      _
    // Predicated region
    $region66: #{tpu_custom_call.1} parent=1 // pred_check
      _
    $region67: #{tpu_custom_call.1} parent=1 // pred_check_branch
      %64 = sbr.rel (0) target = $region69
    $region68: #{tpu_custom_call.1} parent=1 // pred_region
      _
    $region69: #{tpu_custom_call.1} parent=1 // pred_fallthru
      _
    // Predicated region
    $region70: #{tpu_custom_call.1} parent=1 // pred_check
      _
    $region71: #{tpu_custom_call.1} parent=1 // pred_check_branch
      %66 = sbr.rel (0) target = $region73
    $region72: #{tpu_custom_call.1} parent=1 // pred_region
      _
    $region73: #{tpu_custom_call.1} parent=1 // pred_fallthru
      _
    // Predicated region
    $region74: #{tpu_custom_call.1} parent=1 // pred_check
      _
    $region75: #{tpu_custom_call.1} parent=1 // pred_check_branch
      %68 = sbr.rel (0) target = $region77
    $region76: #{tpu_custom_call.1} parent=1 // pred_region
      _
    $region77: #{tpu_custom_call.1} parent=1 // pred_fallthru
      _
    // Predicated region
    $region78: #{tpu_custom_call.1} parent=1 // pred_check
      _
    $region79: #{tpu_custom_call.1} parent=1 // pred_check_branch
      %70 = sbr.rel (0) target = $region81
    $region80: #{tpu_custom_call.1} parent=1 // pred_region
      _
    $region81: #{tpu_custom_call.1} parent=1 // pred_fallthru
      _
    // Predicated region
    $region82: #{tpu_custom_call.1} parent=1 // pred_check
      _
    $region83: #{tpu_custom_call.1} parent=1 // pred_check_branch
      %72 = sbr.rel (0) target = $region85
    $region84: #{tpu_custom_call.1} parent=1 // pred_region
      _
    $region85: #{tpu_custom_call.1} parent=1 // pred_fallthru
      _
    // Predicated region
    $region86: #{tpu_custom_call.1} parent=1 // pred_check
      _
    $region87: #{tpu_custom_call.1} parent=1 // pred_check_branch
      %74 = sbr.rel (0) target = $region89
    $region88: #{tpu_custom_call.1} parent=1 // pred_region
      _
    $region89: #{tpu_custom_call.1} parent=1 // pred_fallthru
      _
    %v75 = vld [vmem:[%s0] sm:$0xff]
    %v76 = vld [vmem:[%s0 + $0x8] sm:$0xff]
    %v77 = vld [vmem:[%s0 + $0x10] sm:$0xff]
    %v78 = vld [vmem:[%s0 + $0x18] sm:$0xff]
    %v79 = vld [vmem:[%s0 + $0x20] sm:$0xff]
    %v80 = vld [vmem:[%s0 + $0x28] sm:$0xff]
    %v81 = vld [vmem:[%s0 + $0x30] sm:$0xff]
    %v82 = vld [vmem:[%s0 + $0x38] sm:$0xff]
    %v83 = vld [vmem:[%s0 + $0x40] sm:$0xff]
    %v84 = vld [vmem:[%s0 + $0x48] sm:$0xff]
    %v85 = vld [vmem:[%s0 + $0x50] sm:$0xff]
    %v86 = vld [vmem:[%s0 + $0x58] sm:$0xff]
    %v87 = vld [vmem:[%s0 + $0x60] sm:$0xff]
    %v88 = vld [vmem:[%s0 + $0x68] sm:$0xff]
    %v89 = vld [vmem:[%s0 + $0x70] sm:$0xff]
    %v90 = vld [vmem:[%s0 + $0x78] sm:$0xff]
    %v91 = vld [vmem:[%s0 + $0x80] sm:$0xff]
    %v92 = vld [vmem:[%s0 + $0x88] sm:$0xff]
    %v93 = vld [vmem:[%s0 + $0x90] sm:$0xff]
    %v94 = vld [vmem:[%s0 + $0x98] sm:$0xff]
    %v95 = vld [vmem:[%s0 + $0xa0] sm:$0xff]
    %v96 = vld [vmem:[%s0 + $0xa8] sm:$0xff]
    %v97 = vld [vmem:[%s0 + $0xb0] sm:$0xff]
    %v98 = vld [vmem:[%s0 + $0xb8] sm:$0xff]
    %v99 = vld [vmem:[%s0 + $0xc0] sm:$0xff]
    %v100 = vld [vmem:[%s0 + $0xc8] sm:$0xff]
    %v101 = vld [vmem:[%s0 + $0xd0] sm:$0xff]
    %v102 = vld [vmem:[%s0 + $0xd8] sm:$0xff]
    %v103 = vld [vmem:[%s0 + $0xe0] sm:$0xff]
    %v104 = vld [vmem:[%s0 + $0xe8] sm:$0xff]
    %v105 = vld [vmem:[%s0 + $0xf0] sm:$0xff]
    %v106 = vld [vmem:[%s0 + $0xf8] sm:$0xff]
    %v107 = vld [vmem:[%s1] sm:$0xf]
    %v108 = vlaneseq
    %v109 = vshrl.u32 %v108, 7
    %v110 = vadd.s32 %v109, 8
    %v111 = vadd.s32 %v109, 16
    %v112 = vadd.s32 %v109, 24
    %v113 = vadd.s32 %v109, 32
    %v114 = vadd.s32 %v109, 40
    %v115 = vadd.s32 %v109, 48
    %v116 = vadd.s32 %v109, 56
    %v117 = vadd.s32 %v109, 64
    %v118 = vadd.s32 %v109, 72
    %v119 = vadd.s32 %v109, 80
    %v120 = vadd.s32 %v109, 88
    %v121 = vadd.s32 %v109, 96
    %v122 = vadd.s32 %v109, 104
    %v123 = vadd.s32 %v109, 112
    %v124 = vadd.s32 %v109, 120
    %v125 = vadd.s32 %v109, 128
    %v126 = vadd.s32 %v109, 136
    %v127 = vadd.s32 %v109, 144
    %v128 = vadd.s32 %v109, 152
    %v129 = vadd.s32 %v109, 160
    %v130 = vadd.s32 %v109, 168
    %v131 = vadd.s32 %v109, 176
    %v132 = vadd.s32 %v109, 184
    %v133 = vadd.s32 %v109, 192
    %v134 = vadd.s32 %v109, 200
    %v135 = vadd.s32 %v109, 208
    %v136 = vadd.s32 %v109, 216
    %v137 = vadd.s32 %v109, 224
    %v138 = vadd.s32 %v109, 232
    %v139 = vadd.s32 %v109, 240
    %v140 = vadd.s32 %v109, 248
    %vm141 = vcmp.lt.s32.totalorder %v109, 0
    %v142 = vsub.s32 0, %v109
    %v143 = vsel %vm141, %v142, %v109
    %v144 = vshrl.u32 %v143, 6
    %v145 = vand.u32 %v143, 63
    %v146 = vsub.s32 0, %v145
    %v147 = vsel %vm141, %v146, %v145
    %vm148 = vcmp.lt.s32.totalorder %v110, 0
    %v149 = vsub.s32 0, %v110
    %v150 = vsel %vm148, %v149, %v110
    %v151 = vshrl.u32 %v150, 6
    %v152 = vand.u32 %v150, 63
    %v153 = vsub.s32 0, %v152
    %v154 = vsel %vm148, %v153, %v152
    %vm155 = vcmp.lt.s32.totalorder %v111, 0
    %v156 = vsub.s32 0, %v111
    %v157 = vsel %vm155, %v156, %v111
    %v158 = vshrl.u32 %v157, 6
    %v159 = vand.u32 %v157, 63
    %v160 = vsub.s32 0, %v159
    %v161 = vsel %vm155, %v160, %v159
    %vm162 = vcmp.lt.s32.totalorder %v112, 0
    %v163 = vsub.s32 0, %v112
    %v164 = vsel %vm162, %v163, %v112
    %v165 = vshrl.u32 %v164, 6
    %v166 = vand.u32 %v164, 63
    %v167 = vsub.s32 0, %v166
    %v168 = vsel %vm162, %v167, %v166
    %vm169 = vcmp.lt.s32.totalorder %v113, 0
    %v170 = vsub.s32 0, %v113
    %v171 = vsel %vm169, %v170, %v113
    %v172 = vshrl.u32 %v171, 6
    %v173 = vand.u32 %v171, 63
    %v174 = vsub.s32 0, %v173
    %v175 = vsel %vm169, %v174, %v173
    %vm176 = vcmp.lt.s32.totalorder %v114, 0
    %v177 = vsub.s32 0, %v114
    %v178 = vsel %vm176, %v177, %v114
    %v179 = vshrl.u32 %v178, 6
    %v180 = vand.u32 %v178, 63
    %v181 = vsub.s32 0, %v180
    %v182 = vsel %vm176, %v181, %v180
    %vm183 = vcmp.lt.s32.totalorder %v115, 0
    %v184 = vsub.s32 0, %v115
    %v185 = vsel %vm183, %v184, %v115
    %v186 = vshrl.u32 %v185, 6
    %v187 = vand.u32 %v185, 63
    %v188 = vsub.s32 0, %v187
    %v189 = vsel %vm183, %v188, %v187
    %vm190 = vcmp.lt.s32.totalorder %v116, 0
    %v191 = vsub.s32 0, %v116
    %v192 = vsel %vm190, %v191, %v116
    %v193 = vshrl.u32 %v192, 6
    %v194 = vand.u32 %v192, 63
    %v195 = vsub.s32 0, %v194
    %v196 = vsel %vm190, %v195, %v194
    %vm197 = vcmp.lt.s32.totalorder %v117, 0
    %v198 = vsub.s32 0, %v117
    %v199 = vsel %vm197, %v198, %v117
    %v200 = vshrl.u32 %v199, 6
    %v201 = vand.u32 %v199, 63
    %v202 = vsub.s32 0, %v201
    %v203 = vsel %vm197, %v202, %v201
    %vm204 = vcmp.lt.s32.totalorder %v118, 0
    %v205 = vsub.s32 0, %v118
    %v206 = vsel %vm204, %v205, %v118
    %v207 = vshrl.u32 %v206, 6
    %v208 = vand.u32 %v206, 63
    %v209 = vsub.s32 0, %v208
    %v210 = vsel %vm204, %v209, %v208
    %vm211 = vcmp.lt.s32.totalorder %v119, 0
    %v212 = vsub.s32 0, %v119
    %v213 = vsel %vm211, %v212, %v119
    %v214 = vshrl.u32 %v213, 6
    %v215 = vand.u32 %v213, 63
    %v216 = vsub.s32 0, %v215
    %v217 = vsel %vm211, %v216, %v215
    %vm218 = vcmp.lt.s32.totalorder %v120, 0
    %v219 = vsub.s32 0, %v120
    %v220 = vsel %vm218, %v219, %v120
    %v221 = vshrl.u32 %v220, 6
    %v222 = vand.u32 %v220, 63
    %v223 = vsub.s32 0, %v222
    %v224 = vsel %vm218, %v223, %v222
    %vm225 = vcmp.lt.s32.totalorder %v121, 0
    %v226 = vsub.s32 0, %v121
    %v227 = vsel %vm225, %v226, %v121
    %v228 = vshrl.u32 %v227, 6
    %v229 = vand.u32 %v227, 63
    %v230 = vsub.s32 0, %v229
    %v231 = vsel %vm225, %v230, %v229
    %vm232 = vcmp.lt.s32.totalorder %v122, 0
    %v233 = vsub.s32 0, %v122
    %v234 = vsel %vm232, %v233, %v122
    %v235 = vshrl.u32 %v234, 6
    %v236 = vand.u32 %v234, 63
    %v237 = vsub.s32 0, %v236
    %v238 = vsel %vm232, %v237, %v236
    %vm239 = vcmp.lt.s32.totalorder %v123, 0
    %v240 = vsub.s32 0, %v123
    %v241 = vsel %vm239, %v240, %v123
    %v242 = vshrl.u32 %v241, 6
    %v243 = vand.u32 %v241, 63
    %v244 = vsub.s32 0, %v243
    %v245 = vsel %vm239, %v244, %v243
    %vm246 = vcmp.lt.s32.totalorder %v124, 0
    %v247 = vsub.s32 0, %v124
    %v248 = vsel %vm246, %v247, %v124
    %v249 = vshrl.u32 %v248, 6
    %v250 = vand.u32 %v248, 63
    %v251 = vsub.s32 0, %v250
    %v252 = vsel %vm246, %v251, %v250
    %vm253 = vcmp.lt.s32.totalorder %v125, 0
    %v254 = vsub.s32 0, %v125
    %v255 = vsel %vm253, %v254, %v125
    %v256 = vshrl.u32 %v255, 6
    %v257 = vand.u32 %v255, 63
    %v258 = vsub.s32 0, %v257
    %v259 = vsel %vm253, %v258, %v257
    %vm260 = vcmp.lt.s32.totalorder %v126, 0
    %v261 = vsub.s32 0, %v126
    %v262 = vsel %vm260, %v261, %v126
    %v263 = vshrl.u32 %v262, 6
    %v264 = vand.u32 %v262, 63
    %v265 = vsub.s32 0, %v264
    %v266 = vsel %vm260, %v265, %v264
    %vm267 = vcmp.lt.s32.totalorder %v127, 0
    %v268 = vsub.s32 0, %v127
    %v269 = vsel %vm267, %v268, %v127
    %v270 = vshrl.u32 %v269, 6
    %v271 = vand.u32 %v269, 63
    %v272 = vsub.s32 0, %v271
    %v273 = vsel %vm267, %v272, %v271
    %vm274 = vcmp.lt.s32.totalorder %v128, 0
    %v275 = vsub.s32 0, %v128
    %v276 = vsel %vm274, %v275, %v128
    %v277 = vshrl.u32 %v276, 6
    %v278 = vand.u32 %v276, 63
    %v279 = vsub.s32 0, %v278
    %v280 = vsel %vm274, %v279, %v278
    %vm281 = vcmp.lt.s32.totalorder %v129, 0
    %v282 = vsub.s32 0, %v129
    %v283 = vsel %vm281, %v282, %v129
    %v284 = vshrl.u32 %v283, 6
    %v285 = vand.u32 %v283, 63
    %v286 = vsub.s32 0, %v285
    %v287 = vsel %vm281, %v286, %v285
    %vm288 = vcmp.lt.s32.totalorder %v130, 0
    %v289 = vsub.s32 0, %v130
    %v290 = vsel %vm288, %v289, %v130
    %v291 = vshrl.u32 %v290, 6
    %v292 = vand.u32 %v290, 63
    %v293 = vsub.s32 0, %v292
    %v294 = vsel %vm288, %v293, %v292
    %vm295 = vcmp.lt.s32.totalorder %v131, 0
    %v296 = vsub.s32 0, %v131
    %v297 = vsel %vm295, %v296, %v131
    %v298 = vshrl.u32 %v297, 6
    %v299 = vand.u32 %v297, 63
    %v300 = vsub.s32 0, %v299
    %v301 = vsel %vm295, %v300, %v299
    %vm302 = vcmp.lt.s32.totalorder %v132, 0
    %v303 = vsub.s32 0, %v132
    %v304 = vsel %vm302, %v303, %v132
    %v305 = vshrl.u32 %v304, 6
    %v306 = vand.u32 %v304, 63
    %v307 = vsub.s32 0, %v306
    %v308 = vsel %vm302, %v307, %v306
    %vm309 = vcmp.lt.s32.totalorder %v133, 0
    %v310 = vsub.s32 0, %v133
    %v311 = vsel %vm309, %v310, %v133
    %v312 = vshrl.u32 %v311, 6
    %v313 = vand.u32 %v311, 63
    %v314 = vsub.s32 0, %v313
    %v315 = vsel %vm309, %v314, %v313
    %vm316 = vcmp.lt.s32.totalorder %v134, 0
    %v317 = vsub.s32 0, %v134
    %v318 = vsel %vm316, %v317, %v134
    %v319 = vshrl.u32 %v318, 6
    %v320 = vand.u32 %v318, 63
    %v321 = vsub.s32 0, %v320
    %v322 = vsel %vm316, %v321, %v320
    %vm323 = vcmp.lt.s32.totalorder %v135, 0
    %v324 = vsub.s32 0, %v135
    %v325 = vsel %vm323, %v324, %v135
    %v326 = vshrl.u32 %v325, 6
    %v327 = vand.u32 %v325, 63
    %v328 = vsub.s32 0, %v327
    %v329 = vsel %vm323, %v328, %v327
    %vm330 = vcmp.lt.s32.totalorder %v136, 0
    %v331 = vsub.s32 0, %v136
    %v332 = vsel %vm330, %v331, %v136
    %v333 = vshrl.u32 %v332, 6
    %v334 = vand.u32 %v332, 63
    %v335 = vsub.s32 0, %v334
    %v336 = vsel %vm330, %v335, %v334
    %vm337 = vcmp.lt.s32.totalorder %v137, 0
    %v338 = vsub.s32 0, %v137
    %v339 = vsel %vm337, %v338, %v137
    %v340 = vshrl.u32 %v339, 6
    %v341 = vand.u32 %v339, 63
    %v342 = vsub.s32 0, %v341
    %v343 = vsel %vm337, %v342, %v341
    %vm344 = vcmp.lt.s32.totalorder %v138, 0
    %v345 = vsub.s32 0, %v138
    %v346 = vsel %vm344, %v345, %v138
    %v347 = vshrl.u32 %v346, 6
    %v348 = vand.u32 %v346, 63
    %v349 = vsub.s32 0, %v348
    %v350 = vsel %vm344, %v349, %v348
    %vm351 = vcmp.lt.s32.totalorder %v139, 0
    %v352 = vsub.s32 0, %v139
    %v353 = vsel %vm351, %v352, %v139
    %v354 = vshrl.u32 %v353, 6
    %v355 = vand.u32 %v353, 63
    %v356 = vsub.s32 0, %v355
    %v357 = vsel %vm351, %v356, %v355
    %vm358 = vcmp.lt.s32.totalorder %v140, 0
    %v359 = vsub.s32 0, %v140
    %v360 = vsel %vm358, %v359, %v140
    %v361 = vshrl.u32 %v360, 6
    %v362 = vand.u32 %v360, 63
    %v363 = vsub.s32 0, %v362
    %v364 = vsel %vm358, %v363, %v362
    %vm365 = vcmp.ne.s32.totalorder %v147, 0
    %vm366 = vcmp.ne.s32.totalorder %v154, 0
    %vm367 = vcmp.ne.s32.totalorder %v161, 0
    %vm368 = vcmp.ne.s32.totalorder %v168, 0
    %vm369 = vcmp.ne.s32.totalorder %v175, 0
    %vm370 = vcmp.ne.s32.totalorder %v182, 0
    %vm371 = vcmp.ne.s32.totalorder %v189, 0
    %vm372 = vcmp.ne.s32.totalorder %v196, 0
    %vm373 = vcmp.ne.s32.totalorder %v203, 0
    %vm374 = vcmp.ne.s32.totalorder %v210, 0
    %vm375 = vcmp.ne.s32.totalorder %v217, 0
    %vm376 = vcmp.ne.s32.totalorder %v224, 0
    %vm377 = vcmp.ne.s32.totalorder %v231, 0
    %vm378 = vcmp.ne.s32.totalorder %v238, 0
    %vm379 = vcmp.ne.s32.totalorder %v245, 0
    %vm380 = vcmp.ne.s32.totalorder %v252, 0
    %vm381 = vcmp.ne.s32.totalorder %v259, 0
    %vm382 = vcmp.ne.s32.totalorder %v266, 0
    %vm383 = vcmp.ne.s32.totalorder %v273, 0
    %vm384 = vcmp.ne.s32.totalorder %v280, 0
    %vm385 = vcmp.ne.s32.totalorder %v287, 0
    %vm386 = vcmp.ne.s32.totalorder %v294, 0
    %vm387 = vcmp.ne.s32.totalorder %v301, 0
    %vm388 = vcmp.ne.s32.totalorder %v308, 0
    %vm389 = vcmp.ne.s32.totalorder %v315, 0
    %vm390 = vcmp.ne.s32.totalorder %v322, 0
    %vm391 = vcmp.ne.s32.totalorder %v329, 0
    %vm392 = vcmp.ne.s32.totalorder %v336, 0
    %vm393 = vcmp.ne.s32.totalorder %v343, 0
    %vm394 = vcmp.ne.s32.totalorder %v350, 0
    %vm395 = vcmp.ne.s32.totalorder %v357, 0
    %vm396 = vcmp.ne.s32.totalorder %v364, 0
    %vm397 = vcmp.lt.s32.totalorder %v147, 0
    %vm398 = vcmp.lt.s32.totalorder %v154, 0
    %vm399 = vcmp.lt.s32.totalorder %v161, 0
    %vm400 = vcmp.lt.s32.totalorder %v168, 0
    %vm401 = vcmp.lt.s32.totalorder %v175, 0
    %vm402 = vcmp.lt.s32.totalorder %v182, 0
    %vm403 = vcmp.lt.s32.totalorder %v189, 0
    %vm404 = vcmp.lt.s32.totalorder %v196, 0
    %vm405 = vcmp.lt.s32.totalorder %v203, 0
    %vm406 = vcmp.lt.s32.totalorder %v210, 0
    %vm407 = vcmp.lt.s32.totalorder %v217, 0
    %vm408 = vcmp.lt.s32.totalorder %v224, 0
    %vm409 = vcmp.lt.s32.totalorder %v231, 0
    %vm410 = vcmp.lt.s32.totalorder %v238, 0
    %vm411 = vcmp.lt.s32.totalorder %v245, 0
    %vm412 = vcmp.lt.s32.totalorder %v252, 0
    %vm413 = vcmp.lt.s32.totalorder %v259, 0
    %vm414 = vcmp.lt.s32.totalorder %v266, 0
    %vm415 = vcmp.lt.s32.totalorder %v273, 0
    %vm416 = vcmp.lt.s32.totalorder %v280, 0
    %vm417 = vcmp.lt.s32.totalorder %v287, 0
    %vm418 = vcmp.lt.s32.totalorder %v294, 0
    %vm419 = vcmp.lt.s32.totalorder %v301, 0
    %vm420 = vcmp.lt.s32.totalorder %v308, 0
    %vm421 = vcmp.lt.s32.totalorder %v315, 0
    %vm422 = vcmp.lt.s32.totalorder %v322, 0
    %vm423 = vcmp.lt.s32.totalorder %v329, 0
    %vm424 = vcmp.lt.s32.totalorder %v336, 0
    %vm425 = vcmp.lt.s32.totalorder %v343, 0
    %vm426 = vcmp.lt.s32.totalorder %v350, 0
    %vm427 = vcmp.lt.s32.totalorder %v357, 0
    %vm428 = vcmp.lt.s32.totalorder %v364, 0
    %vm429 = vmand %vm397, %vm365
    %vm430 = vmand %vm398, %vm366
    %vm431 = vmand %vm399, %vm367
    %vm432 = vmand %vm400, %vm368
    %vm433 = vmand %vm401, %vm369
    %vm434 = vmand %vm402, %vm370
    %vm435 = vmand %vm403, %vm371
    %vm436 = vmand %vm404, %vm372
    %vm437 = vmand %vm405, %vm373
    %vm438 = vmand %vm406, %vm374
    %vm439 = vmand %vm407, %vm375
    %vm440 = vmand %vm408, %vm376
    %vm441 = vmand %vm409, %vm377
    %vm442 = vmand %vm410, %vm378
    %vm443 = vmand %vm411, %vm379
    %vm444 = vmand %vm412, %vm380
    %vm445 = vmand %vm413, %vm381
    %vm446 = vmand %vm414, %vm382
    %vm447 = vmand %vm415, %vm383
    %vm448 = vmand %vm416, %vm384
    %vm449 = vmand %vm417, %vm385
    %vm450 = vmand %vm418, %vm386
    %vm451 = vmand %vm419, %vm387
    %vm452 = vmand %vm420, %vm388
    %vm453 = vmand %vm421, %vm389
    %vm454 = vmand %vm422, %vm390
    %vm455 = vmand %vm423, %vm391
    %vm456 = vmand %vm424, %vm392
    %vm457 = vmand %vm425, %vm393
    %vm458 = vmand %vm426, %vm394
    %vm459 = vmand %vm427, %vm395
    %vm460 = vmand %vm428, %vm396
    %v461 = vadd.s32 %v147, 64
    %v462 = vadd.s32 %v154, 64
    %v463 = vadd.s32 %v161, 64
    %v464 = vadd.s32 %v168, 64
    %v465 = vadd.s32 %v175, 64
    %v466 = vadd.s32 %v182, 64
    %v467 = vadd.s32 %v189, 64
    %v468 = vadd.s32 %v196, 64
    %v469 = vadd.s32 %v203, 64
    %v470 = vadd.s32 %v210, 64
    %v471 = vadd.s32 %v217, 64
    %v472 = vadd.s32 %v224, 64
    %v473 = vadd.s32 %v231, 64
    %v474 = vadd.s32 %v238, 64
    %v475 = vadd.s32 %v245, 64
    %v476 = vadd.s32 %v252, 64
    %v477 = vadd.s32 %v259, 64
    %v478 = vadd.s32 %v266, 64
    %v479 = vadd.s32 %v273, 64
    %v480 = vadd.s32 %v280, 64
    %v481 = vadd.s32 %v287, 64
    %v482 = vadd.s32 %v294, 64
    %v483 = vadd.s32 %v301, 64
    %v484 = vadd.s32 %v308, 64
    %v485 = vadd.s32 %v315, 64
    %v486 = vadd.s32 %v322, 64
    %v487 = vadd.s32 %v329, 64
    %v488 = vadd.s32 %v336, 64
    %v489 = vadd.s32 %v343, 64
    %v490 = vadd.s32 %v350, 64
    %v491 = vadd.s32 %v357, 64
    %v492 = vadd.s32 %v364, 64
    %v493 = vsel %vm429, %v461, %v147
    %v494 = vsel %vm430, %v462, %v154
    %v495 = vsel %vm431, %v463, %v161
    %v496 = vsel %vm432, %v464, %v168
    %v497 = vsel %vm433, %v465, %v175
    %v498 = vsel %vm434, %v466, %v182
    %v499 = vsel %vm435, %v467, %v189
    %v500 = vsel %vm436, %v468, %v196
    %v501 = vsel %vm437, %v469, %v203
    %v502 = vsel %vm438, %v470, %v210
    %v503 = vsel %vm439, %v471, %v217
    %v504 = vsel %vm440, %v472, %v224
    %v505 = vsel %vm441, %v473, %v231
    %v506 = vsel %vm442, %v474, %v238
    %v507 = vsel %vm443, %v475, %v245
    %v508 = vsel %vm444, %v476, %v252
    %v509 = vsel %vm445, %v477, %v259
    %v510 = vsel %vm446, %v478, %v266
    %v511 = vsel %vm447, %v479, %v273
    %v512 = vsel %vm448, %v480, %v280
    %v513 = vsel %vm449, %v481, %v287
    %v514 = vsel %vm450, %v482, %v294
    %v515 = vsel %vm451, %v483, %v301
    %v516 = vsel %vm452, %v484, %v308
    %v517 = vsel %vm453, %v485, %v315
    %v518 = vsel %vm454, %v486, %v322
    %v519 = vsel %vm455, %v487, %v329
    %v520 = vsel %vm456, %v488, %v336
    %v521 = vsel %vm457, %v489, %v343
    %v522 = vsel %vm458, %v490, %v350
    %v523 = vsel %vm459, %v491, %v357
    %v524 = vsel %vm460, %v492, %v364
    %vm525 = vcmp.ne.s32.totalorder %v493, 0
    %vm526 = vcmp.ne.s32.totalorder %v494, 0
    %vm527 = vcmp.ne.s32.totalorder %v495, 0
    %vm528 = vcmp.ne.s32.totalorder %v496, 0
    %vm529 = vcmp.ne.s32.totalorder %v497, 0
    %vm530 = vcmp.ne.s32.totalorder %v498, 0
    %vm531 = vcmp.ne.s32.totalorder %v499, 0
    %vm532 = vcmp.ne.s32.totalorder %v500, 0
    %vm533 = vcmp.ne.s32.totalorder %v501, 0
    %vm534 = vcmp.ne.s32.totalorder %v502, 0
    %vm535 = vcmp.ne.s32.totalorder %v503, 0
    %vm536 = vcmp.ne.s32.totalorder %v504, 0
    %vm537 = vcmp.ne.s32.totalorder %v505, 0
    %vm538 = vcmp.ne.s32.totalorder %v506, 0
    %vm539 = vcmp.ne.s32.totalorder %v507, 0
    %vm540 = vcmp.ne.s32.totalorder %v508, 0
    %vm541 = vcmp.ne.s32.totalorder %v509, 0
    %vm542 = vcmp.ne.s32.totalorder %v510, 0
    %vm543 = vcmp.ne.s32.totalorder %v511, 0
    %vm544 = vcmp.ne.s32.totalorder %v512, 0
    %vm545 = vcmp.ne.s32.totalorder %v513, 0
    %vm546 = vcmp.ne.s32.totalorder %v514, 0
    %vm547 = vcmp.ne.s32.totalorder %v515, 0
    %vm548 = vcmp.ne.s32.totalorder %v516, 0
    %vm549 = vcmp.ne.s32.totalorder %v517, 0
    %vm550 = vcmp.ne.s32.totalorder %v518, 0
    %vm551 = vcmp.ne.s32.totalorder %v519, 0
    %vm552 = vcmp.ne.s32.totalorder %v520, 0
    %vm553 = vcmp.ne.s32.totalorder %v521, 0
    %vm554 = vcmp.ne.s32.totalorder %v522, 0
    %vm555 = vcmp.ne.s32.totalorder %v523, 0
    %vm556 = vcmp.ne.s32.totalorder %v524, 0
    %v557 = vld [vmem:[%s2] sm:$0x7]
    %v558 = vrot.slane %v75, 7
    %v559 = vrot.slane %v76, 7
    %v560 = vrot.slane %v77, 7
    %v561 = vrot.slane %v78, 7
    %v562 = vrot.slane %v79, 7
    %v563 = vrot.slane %v80, 7
    %v564 = vrot.slane %v81, 7
    %v565 = vrot.slane %v82, 7
    %v566 = vrot.slane %v83, 7
    %v567 = vrot.slane %v84, 7
    %v568 = vrot.slane %v85, 7
    %v569 = vrot.slane %v86, 7
    %v570 = vrot.slane %v87, 7
    %v571 = vrot.slane %v88, 7
    %v572 = vrot.slane %v89, 7
    %v573 = vrot.slane %v90, 7
    %v574 = vrot.slane %v91, 7
    %v575 = vrot.slane %v92, 7
    %v576 = vrot.slane %v93, 7
    %v577 = vrot.slane %v94, 7
    %v578 = vrot.slane %v95, 7
    %v579 = vrot.slane %v96, 7
    %v580 = vrot.slane %v97, 7
    %v581 = vrot.slane %v98, 7
    %v582 = vrot.slane %v99, 7
    %v583 = vrot.slane %v100, 7
    %v584 = vrot.slane %v101, 7
    %v585 = vrot.slane %v102, 7
    %v586 = vrot.slane %v103, 7
    %v587 = vrot.slane %v104, 7
    %v588 = vrot.slane %v105, 7
    %v589 = vrot.slane %v106, 7
    %vm590 = vcmp.lt.s32.totalorder %v109, 1
    %v591 = vsel %vm590, %v588, %v589
    %v592 = vsel %vm590, %v587, %v588
    %v593 = vsel %vm590, %v586, %v587
    %v594 = vsel %vm590, %v585, %v586
    %v595 = vsel %vm590, %v584, %v585
    %v596 = vsel %vm590, %v583, %v584
    %v597 = vsel %vm590, %v582, %v583
    %v598 = vsel %vm590, %v581, %v582
    %v599 = vsel %vm590, %v580, %v581
    %v600 = vsel %vm590, %v579, %v580
    %v601 = vsel %vm590, %v578, %v579
    %v602 = vsel %vm590, %v577, %v578
    %v603 = vsel %vm590, %v576, %v577
    %v604 = vsel %vm590, %v575, %v576
    %v605 = vsel %vm590, %v574, %v575
    %v606 = vsel %vm590, %v573, %v574
    %v607 = vsel %vm590, %v572, %v573
    %v608 = vsel %vm590, %v571, %v572
    %v609 = vsel %vm590, %v570, %v571
    %v610 = vsel %vm590, %v569, %v570
    %v611 = vsel %vm590, %v568, %v569
    %v612 = vsel %vm590, %v567, %v568
    %v613 = vsel %vm590, %v566, %v567
    %v614 = vsel %vm590, %v565, %v566
    %v615 = vsel %vm590, %v564, %v565
    %v616 = vsel %vm590, %v563, %v564
    %v617 = vsel %vm590, %v562, %v563
    %v618 = vsel %vm590, %v561, %v562
    %v619 = vsel %vm590, %v560, %v561
    %v620 = vsel %vm590, %v559, %v560
    %v621 = vsel %vm590, %v558, %v559
    %v622 = vsel %vm590, %v589, %v558
    %v623 = vsel %vm525, %v622, 0.0
    %v624 = vsel %vm526, %v621, 0.0
    %v625 = vsel %vm527, %v620, 0.0
    %v626 = vsel %vm528, %v619, 0.0
    %v627 = vsel %vm529, %v618, 0.0
    %v628 = vsel %vm530, %v617, 0.0
    %v629 = vsel %vm531, %v616, 0.0
    %v630 = vsel %vm532, %v615, 0.0
    %v631 = vsel %vm533, %v614, 0.0
    %v632 = vsel %vm534, %v613, 0.0
    %v633 = vsel %vm535, %v612, 0.0
    %v634 = vsel %vm536, %v611, 0.0
    %v635 = vsel %vm537, %v610, 0.0
    %v636 = vsel %vm538, %v609, 0.0
    %v637 = vsel %vm539, %v608, 0.0
    %v638 = vsel %vm540, %v607, 0.0
    %v639 = vsel %vm541, %v606, 0.0
    %v640 = vsel %vm542, %v605, 0.0
    %v641 = vsel %vm543, %v604, 0.0
    %v642 = vsel %vm544, %v603, 0.0
    %v643 = vsel %vm545, %v602, 0.0
    %v644 = vsel %vm546, %v601, 0.0
    %v645 = vsel %vm547, %v600, 0.0
    %v646 = vsel %vm548, %v599, 0.0
    %v647 = vsel %vm549, %v598, 0.0
    %v648 = vsel %vm550, %v597, 0.0
    %v649 = vsel %vm551, %v596, 0.0
    %v650 = vsel %vm552, %v595, 0.0
    %v651 = vsel %vm553, %v594, 0.0
    %v652 = vsel %vm554, %v593, 0.0
    %v653 = vsel %vm555, %v592, 0.0
    %v654 = vsel %vm556, %v591, 0.0
    %vm655 = vcmp.ne.s32.totalorder %v493, 51
    %vm656 = vcmp.ne.s32.totalorder %v494, 51
    %vm657 = vcmp.ne.s32.totalorder %v495, 51
    %vm658 = vcmp.ne.s32.totalorder %v496, 51
    %vm659 = vcmp.ne.s32.totalorder %v497, 51
    %vm660 = vcmp.ne.s32.totalorder %v498, 51
    %vm661 = vcmp.ne.s32.totalorder %v499, 51
    %vm662 = vcmp.ne.s32.totalorder %v500, 51
    %vm663 = vcmp.ne.s32.totalorder %v501, 51
    %vm664 = vcmp.ne.s32.totalorder %v502, 51
    %vm665 = vcmp.ne.s32.totalorder %v503, 51
    %vm666 = vcmp.ne.s32.totalorder %v504, 51
    %vm667 = vcmp.ne.s32.totalorder %v505, 51
    %vm668 = vcmp.ne.s32.totalorder %v506, 51
    %vm669 = vcmp.ne.s32.totalorder %v507, 51
    %vm670 = vcmp.ne.s32.totalorder %v508, 51
    %vm671 = vcmp.ne.s32.totalorder %v509, 51
    %vm672 = vcmp.ne.s32.totalorder %v510, 51
    %vm673 = vcmp.ne.s32.totalorder %v511, 51
    %vm674 = vcmp.ne.s32.totalorder %v512, 51
    %vm675 = vcmp.ne.s32.totalorder %v513, 51
    %vm676 = vcmp.ne.s32.totalorder %v514, 51
    %vm677 = vcmp.ne.s32.totalorder %v515, 51
    %vm678 = vcmp.ne.s32.totalorder %v516, 51
    %vm679 = vcmp.ne.s32.totalorder %v517, 51
    %vm680 = vcmp.ne.s32.totalorder %v518, 51
    %vm681 = vcmp.ne.s32.totalorder %v519, 51
    %vm682 = vcmp.ne.s32.totalorder %v520, 51
    %vm683 = vcmp.ne.s32.totalorder %v521, 51
    %vm684 = vcmp.ne.s32.totalorder %v522, 51
    %vm685 = vcmp.ne.s32.totalorder %v523, 51
    %vm686 = vcmp.ne.s32.totalorder %v524, 51
    %v687 = vrot.slane %v75, 1
    %v688 = vrot.slane %v76, 1
    %v689 = vrot.slane %v77, 1
    %v690 = vrot.slane %v78, 1
    %v691 = vrot.slane %v79, 1
    %v692 = vrot.slane %v80, 1
    %v693 = vrot.slane %v81, 1
    %v694 = vrot.slane %v82, 1
    %v695 = vrot.slane %v83, 1
    %v696 = vrot.slane %v84, 1
    %v697 = vrot.slane %v85, 1
    %v698 = vrot.slane %v86, 1
    %v699 = vrot.slane %v87, 1
    %v700 = vrot.slane %v88, 1
    %v701 = vrot.slane %v89, 1
    %v702 = vrot.slane %v90, 1
    %v703 = vrot.slane %v91, 1
    %v704 = vrot.slane %v92, 1
    %v705 = vrot.slane %v93, 1
    %v706 = vrot.slane %v94, 1
    %v707 = vrot.slane %v95, 1
    %v708 = vrot.slane %v96, 1
    %v709 = vrot.slane %v97, 1
    %v710 = vrot.slane %v98, 1
    %v711 = vrot.slane %v99, 1
    %v712 = vrot.slane %v100, 1
    %v713 = vrot.slane %v101, 1
    %v714 = vrot.slane %v102, 1
    %v715 = vrot.slane %v103, 1
    %v716 = vrot.slane %v104, 1
    %v717 = vrot.slane %v105, 1
    %v718 = vrot.slane %v106, 1
    %vm719 = vcmp.lt.s32.totalorder %v109, 7
    %v720 = vsel %vm719, %v717, %v718
    %v721 = vsel %vm719, %v716, %v717
    %v722 = vsel %vm719, %v715, %v716
    %v723 = vsel %vm719, %v714, %v715
    %v724 = vsel %vm719, %v713, %v714
    %v725 = vsel %vm719, %v712, %v713
    %v726 = vsel %vm719, %v711, %v712
    %v727 = vsel %vm719, %v710, %v711
    %v728 = vsel %vm719, %v709, %v710
    %v729 = vsel %vm719, %v708, %v709
    %v730 = vsel %vm719, %v707, %v708
    %v731 = vsel %vm719, %v706, %v707
    %v732 = vsel %vm719, %v705, %v706
    %v733 = vsel %vm719, %v704, %v705
    %v734 = vsel %vm719, %v703, %v704
    %v735 = vsel %vm719, %v702, %v703
    %v736 = vsel %vm719, %v701, %v702
    %v737 = vsel %vm719, %v700, %v701
    %v738 = vsel %vm719, %v699, %v700
    %v739 = vsel %vm719, %v698, %v699
    %v740 = vsel %vm719, %v697, %v698
    %v741 = vsel %vm719, %v696, %v697
    %v742 = vsel %vm719, %v695, %v696
    %v743 = vsel %vm719, %v694, %v695
    %v744 = vsel %vm719, %v693, %v694
    %v745 = vsel %vm719, %v692, %v693
    %v746 = vsel %vm719, %v691, %v692
    %v747 = vsel %vm719, %v690, %v691
    %v748 = vsel %vm719, %v689, %v690
    %v749 = vsel %vm719, %v688, %v689
    %v750 = vsel %vm719, %v687, %v688
    %v751 = vsel %vm719, %v718, %v687
    %v752 = vsel %vm655, %v750, 0.0
    %v753 = vsel %vm656, %v749, 0.0
    %v754 = vsel %vm657, %v748, 0.0
    %v755 = vsel %vm658, %v747, 0.0
    %v756 = vsel %vm659, %v746, 0.0
    %v757 = vsel %vm660, %v745, 0.0
    %v758 = vsel %vm661, %v744, 0.0
    %v759 = vsel %vm662, %v743, 0.0
    %v760 = vsel %vm663, %v742, 0.0
    %v761 = vsel %vm664, %v741, 0.0
    %v762 = vsel %vm665, %v740, 0.0
    %v763 = vsel %vm666, %v739, 0.0
    %v764 = vsel %vm667, %v738, 0.0
    %v765 = vsel %vm668, %v737, 0.0
    %v766 = vsel %vm669, %v736, 0.0
    %v767 = vsel %vm670, %v735, 0.0
    %v768 = vsel %vm671, %v734, 0.0
    %v769 = vsel %vm672, %v733, 0.0
    %v770 = vsel %vm673, %v732, 0.0
    %v771 = vsel %vm674, %v731, 0.0
    %v772 = vsel %vm675, %v730, 0.0
    %v773 = vsel %vm676, %v729, 0.0
    %v774 = vsel %vm677, %v728, 0.0
    %v775 = vsel %vm678, %v727, 0.0
    %v776 = vsel %vm679, %v726, 0.0
    %v777 = vsel %vm680, %v725, 0.0
    %v778 = vsel %vm681, %v724, 0.0
    %v779 = vsel %vm682, %v723, 0.0
    %v780 = vsel %vm683, %v722, 0.0
    %v781 = vsel %vm684, %v721, 0.0
    %v782 = vsel %vm685, %v720, 0.0
    %v783 = vsel %vm686, %v751, 0.0
    %v785 = vrot.slane %v557, 1
    %vm786 = vcmask 7168
    %v788 = vsel %vm786, %v75, 0
    %v791 = vsel %vm786, %v76, 0
    %v794 = vsel %vm786, %v77, 0
    %v797 = vsel %vm786, %v78, 0
    %v800 = vsel %vm786, %v79, 0
    %v803 = vsel %vm786, %v80, 0
    %v806 = vsel %vm786, %v81, 0
    %v809 = vsel %vm786, %v82, 0
    %v812 = vsel %vm786, %v83, 0
    %v815 = vsel %vm786, %v84, 0
    %v818 = vsel %vm786, %v85, 0
    %v821 = vsel %vm786, %v86, 0
    %v824 = vsel %vm786, %v87, 0
    %v827 = vsel %vm786, %v88, 0
    %v830 = vsel %vm786, %v89, 0
    %v833 = vsel %vm786, %v90, 0
    %v836 = vsel %vm786, %v91, 0
    %v839 = vsel %vm786, %v92, 0
    %v842 = vsel %vm786, %v93, 0
    %v845 = vsel %vm786, %v94, 0
    %v848 = vsel %vm786, %v95, 0
    %v851 = vsel %vm786, %v96, 0
    %v854 = vsel %vm786, %v97, 0
    %v857 = vsel %vm786, %v98, 0
    %v860 = vsel %vm786, %v99, 0
    %v863 = vsel %vm786, %v100, 0
    %v866 = vsel %vm786, %v101, 0
    %v869 = vsel %vm786, %v102, 0
    %v872 = vsel %vm786, %v103, 0
    %v875 = vsel %vm786, %v104, 0
    %v878 = vsel %vm786, %v105, 0
    %v881 = vsel %vm786, %v106, 0
    %vm883 = vcmask 1040384
    %v884 = vsel %vm883, %v785, 0
    %886 = vmatpush.msra.mxu0 0.0
    %887 = vmatpush.msra.mxu0 0.0
    %888 = vmatpush.msra.mxu0 0.0
    %889 = vmatpush.msra.mxu0 0.0
    %890 = vmatpush.msra.mxu0 0.0
    %891 = vmatpush.msra.mxu0 0.0
    %892 = vmatpush.msra.mxu0 0.0
    %893 = vmatpush.msra.mxu0 0.0
    %894 = vmatpush.msra.mxu0 0.0
    %895 = vmatpush.msra.mxu0 0.0
    %896 = vmatpush.msra.mxu0 0.0
    %897 = vmatpush.msra.mxu0 0.0
    %898 = vmatpush.msra.mxu0 0.0
    %899 = vmatpush.msra.mxu0 0.0
    %900 = vmatpush.msra.mxu0 0.0
    %901 = vmatpush.msra.mxu0 %v884
    %902 = vmatmul.f32.gmra.mxu0 %v788
    %v903 = vpop.f32.mrf.mxu0
    %v904 = vadd.f32 0.0, %v903
    %905 = vmatmul.f32.gmra.mxu0 %v791
    %v906 = vpop.f32.mrf.mxu0
    %v907 = vadd.f32 0.0, %v906
    %908 = vmatmul.f32.gmra.mxu0 %v794
    %v909 = vpop.f32.mrf.mxu0
    %v910 = vadd.f32 0.0, %v909
    %911 = vmatmul.f32.gmra.mxu0 %v797
    %v912 = vpop.f32.mrf.mxu0
    %v913 = vadd.f32 0.0, %v912
    %914 = vmatmul.f32.gmra.mxu0 %v800
    %v915 = vpop.f32.mrf.mxu0
    %v916 = vadd.f32 0.0, %v915
    %917 = vmatmul.f32.gmra.mxu0 %v803
    %v918 = vpop.f32.mrf.mxu0
    %v919 = vadd.f32 0.0, %v918
    %920 = vmatmul.f32.gmra.mxu0 %v806
    %v921 = vpop.f32.mrf.mxu0
    %v922 = vadd.f32 0.0, %v921
    %923 = vmatmul.f32.gmra.mxu0 %v809
    %v924 = vpop.f32.mrf.mxu0
    %v925 = vadd.f32 0.0, %v924
    %926 = vmatmul.f32.gmra.mxu0 %v812
    %v927 = vpop.f32.mrf.mxu0
    %v928 = vadd.f32 0.0, %v927
    %929 = vmatmul.f32.gmra.mxu0 %v815
    %v930 = vpop.f32.mrf.mxu0
    %v931 = vadd.f32 0.0, %v930
    %932 = vmatmul.f32.gmra.mxu0 %v818
    %v933 = vpop.f32.mrf.mxu0
    %v934 = vadd.f32 0.0, %v933
    %935 = vmatmul.f32.gmra.mxu0 %v821
    %v936 = vpop.f32.mrf.mxu0
    %v937 = vadd.f32 0.0, %v936
    %938 = vmatmul.f32.gmra.mxu0 %v824
    %v939 = vpop.f32.mrf.mxu0
    %v940 = vadd.f32 0.0, %v939
    %941 = vmatmul.f32.gmra.mxu0 %v827
    %v942 = vpop.f32.mrf.mxu0
    %v943 = vadd.f32 0.0, %v942
    %944 = vmatmul.f32.gmra.mxu0 %v830
    %v945 = vpop.f32.mrf.mxu0
    %v946 = vadd.f32 0.0, %v945
    %947 = vmatmul.f32.gmra.mxu0 %v833
    %v948 = vpop.f32.mrf.mxu0
    %v949 = vadd.f32 0.0, %v948
    %950 = vmatmul.f32.gmra.mxu0 %v836
    %v951 = vpop.f32.mrf.mxu0
    %v952 = vadd.f32 0.0, %v951
    %953 = vmatmul.f32.gmra.mxu0 %v839
    %v954 = vpop.f32.mrf.mxu0
    %v955 = vadd.f32 0.0, %v954
    %956 = vmatmul.f32.gmra.mxu0 %v842
    %v957 = vpop.f32.mrf.mxu0
    %v958 = vadd.f32 0.0, %v957
    %959 = vmatmul.f32.gmra.mxu0 %v845
    %v960 = vpop.f32.mrf.mxu0
    %v961 = vadd.f32 0.0, %v960
    %962 = vmatmul.f32.gmra.mxu0 %v848
    %v963 = vpop.f32.mrf.mxu0
    %v964 = vadd.f32 0.0, %v963
    %965 = vmatmul.f32.gmra.mxu0 %v851
    %v966 = vpop.f32.mrf.mxu0
    %v967 = vadd.f32 0.0, %v966
    %968 = vmatmul.f32.gmra.mxu0 %v854
    %v969 = vpop.f32.mrf.mxu0
    %v970 = vadd.f32 0.0, %v969
    %971 = vmatmul.f32.gmra.mxu0 %v857
    %v972 = vpop.f32.mrf.mxu0
    %v973 = vadd.f32 0.0, %v972
    %974 = vmatmul.f32.gmra.mxu0 %v860
    %v975 = vpop.f32.mrf.mxu0
    %v976 = vadd.f32 0.0, %v975
    %977 = vmatmul.f32.gmra.mxu0 %v863
    %v978 = vpop.f32.mrf.mxu0
    %v979 = vadd.f32 0.0, %v978
    %980 = vmatmul.f32.gmra.mxu0 %v866
    %v981 = vpop.f32.mrf.mxu0
    %v982 = vadd.f32 0.0, %v981
    %983 = vmatmul.f32.gmra.mxu0 %v869
    %v984 = vpop.f32.mrf.mxu0
    %v985 = vadd.f32 0.0, %v984
    %986 = vmatmul.f32.gmra.mxu0 %v872
    %v987 = vpop.f32.mrf.mxu0
    %v988 = vadd.f32 0.0, %v987
    %989 = vmatmul.f32.gmra.mxu0 %v875
    %v990 = vpop.f32.mrf.mxu0
    %v991 = vadd.f32 0.0, %v990
    %992 = vmatmul.f32.gmra.mxu0 %v878
    %v993 = vpop.f32.mrf.mxu0
    %v994 = vadd.f32 0.0, %v993
    %995 = vmatmul.f32.gmra.mxu0 %v881
    %v996 = vpop.f32.mrf.mxu0
    %v997 = vadd.f32 0.0, %v996
    %998 = vdwg.mxu0
    %v1000 = vsel %vm786, %v623, 0
    %v1003 = vsel %vm786, %v624, 0
    %v1006 = vsel %vm786, %v625, 0
    %v1009 = vsel %vm786, %v626, 0
    %v1012 = vsel %vm786, %v627, 0
    %v1015 = vsel %vm786, %v628, 0
    %v1018 = vsel %vm786, %v629, 0
    %v1021 = vsel %vm786, %v630, 0
    %v1024 = vsel %vm786, %v631, 0
    %v1027 = vsel %vm786, %v632, 0
    %v1030 = vsel %vm786, %v633, 0
    %v1033 = vsel %vm786, %v634, 0
    %v1036 = vsel %vm786, %v635, 0
    %v1039 = vsel %vm786, %v636, 0
    %v1042 = vsel %vm786, %v637, 0
    %v1045 = vsel %vm786, %v638, 0
    %v1048 = vsel %vm786, %v639, 0
    %v1051 = vsel %vm786, %v640, 0
    %v1054 = vsel %vm786, %v641, 0
    %v1057 = vsel %vm786, %v642, 0
    %v1060 = vsel %vm786, %v643, 0
    %v1063 = vsel %vm786, %v644, 0
    %v1066 = vsel %vm786, %v645, 0
    %v1069 = vsel %vm786, %v646, 0
    %v1072 = vsel %vm786, %v647, 0
    %v1075 = vsel %vm786, %v648, 0
    %v1078 = vsel %vm786, %v649, 0
    %v1081 = vsel %vm786, %v650, 0
    %v1084 = vsel %vm786, %v651, 0
    %v1087 = vsel %vm786, %v652, 0
    %v1090 = vsel %vm786, %v653, 0
    %v1093 = vsel %vm786, %v654, 0
    %v1095 = vsel %vm883, %v557, 0
    %1097 = vmatpush.msra.mxu0 0.0
    %1098 = vmatpush.msra.mxu0 0.0
    %1099 = vmatpush.msra.mxu0 0.0
    %1100 = vmatpush.msra.mxu0 0.0
    %1101 = vmatpush.msra.mxu0 0.0
    %1102 = vmatpush.msra.mxu0 0.0
    %1103 = vmatpush.msra.mxu0 0.0
    %1104 = vmatpush.msra.mxu0 0.0
    %1105 = vmatpush.msra.mxu0 0.0
    %1106 = vmatpush.msra.mxu0 0.0
    %1107 = vmatpush.msra.mxu0 0.0
    %1108 = vmatpush.msra.mxu0 0.0
    %1109 = vmatpush.msra.mxu0 0.0
    %1110 = vmatpush.msra.mxu0 0.0
    %1111 = vmatpush.msra.mxu0 0.0
    %1112 = vmatpush.msra.mxu0 %v1095
    %1113 = vmatmul.f32.gmra.mxu0 %v1000
    %v1114 = vpop.f32.mrf.mxu0
    %v1115 = vadd.f32 %v904, %v1114
    %1116 = vmatmul.f32.gmra.mxu0 %v1003
    %v1117 = vpop.f32.mrf.mxu0
    %v1118 = vadd.f32 %v907, %v1117
    %1119 = vmatmul.f32.gmra.mxu0 %v1006
    %v1120 = vpop.f32.mrf.mxu0
    %v1121 = vadd.f32 %v910, %v1120
    %1122 = vmatmul.f32.gmra.mxu0 %v1009
    %v1123 = vpop.f32.mrf.mxu0
    %v1124 = vadd.f32 %v913, %v1123
    %1125 = vmatmul.f32.gmra.mxu0 %v1012
    %v1126 = vpop.f32.mrf.mxu0
    %v1127 = vadd.f32 %v916, %v1126
    %1128 = vmatmul.f32.gmra.mxu0 %v1015
    %v1129 = vpop.f32.mrf.mxu0
    %v1130 = vadd.f32 %v919, %v1129
    %1131 = vmatmul.f32.gmra.mxu0 %v1018
    %v1132 = vpop.f32.mrf.mxu0
    %v1133 = vadd.f32 %v922, %v1132
    %1134 = vmatmul.f32.gmra.mxu0 %v1021
    %v1135 = vpop.f32.mrf.mxu0
    %v1136 = vadd.f32 %v925, %v1135
    %1137 = vmatmul.f32.gmra.mxu0 %v1024
    %v1138 = vpop.f32.mrf.mxu0
    %v1139 = vadd.f32 %v928, %v1138
    %1140 = vmatmul.f32.gmra.mxu0 %v1027
    %v1141 = vpop.f32.mrf.mxu0
    %v1142 = vadd.f32 %v931, %v1141
    %1143 = vmatmul.f32.gmra.mxu0 %v1030
    %v1144 = vpop.f32.mrf.mxu0
    %v1145 = vadd.f32 %v934, %v1144
    %1146 = vmatmul.f32.gmra.mxu0 %v1033
    %v1147 = vpop.f32.mrf.mxu0
    %v1148 = vadd.f32 %v937, %v1147
    %1149 = vmatmul.f32.gmra.mxu0 %v1036
    %v1150 = vpop.f32.mrf.mxu0
    %v1151 = vadd.f32 %v940, %v1150
    %1152 = vmatmul.f32.gmra.mxu0 %v1039
    %v1153 = vpop.f32.mrf.mxu0
    %v1154 = vadd.f32 %v943, %v1153
    %1155 = vmatmul.f32.gmra.mxu0 %v1042
    %v1156 = vpop.f32.mrf.mxu0
    %v1157 = vadd.f32 %v946, %v1156
    %1158 = vmatmul.f32.gmra.mxu0 %v1045
    %v1159 = vpop.f32.mrf.mxu0
    %v1160 = vadd.f32 %v949, %v1159
    %1161 = vmatmul.f32.gmra.mxu0 %v1048
    %v1162 = vpop.f32.mrf.mxu0
    %v1163 = vadd.f32 %v952, %v1162
    %1164 = vmatmul.f32.gmra.mxu0 %v1051
    %v1165 = vpop.f32.mrf.mxu0
    %v1166 = vadd.f32 %v955, %v1165
    %1167 = vmatmul.f32.gmra.mxu0 %v1054
    %v1168 = vpop.f32.mrf.mxu0
    %v1169 = vadd.f32 %v958, %v1168
    %1170 = vmatmul.f32.gmra.mxu0 %v1057
    %v1171 = vpop.f32.mrf.mxu0
    %v1172 = vadd.f32 %v961, %v1171
    %1173 = vmatmul.f32.gmra.mxu0 %v1060
    %v1174 = vpop.f32.mrf.mxu0
    %v1175 = vadd.f32 %v964, %v1174
    %1176 = vmatmul.f32.gmra.mxu0 %v1063
    %v1177 = vpop.f32.mrf.mxu0
    %v1178 = vadd.f32 %v967, %v1177
    %1179 = vmatmul.f32.gmra.mxu0 %v1066
    %v1180 = vpop.f32.mrf.mxu0
    %v1181 = vadd.f32 %v970, %v1180
    %1182 = vmatmul.f32.gmra.mxu0 %v1069
    %v1183 = vpop.f32.mrf.mxu0
    %v1184 = vadd.f32 %v973, %v1183
    %1185 = vmatmul.f32.gmra.mxu0 %v1072
    %v1186 = vpop.f32.mrf.mxu0
    %v1187 = vadd.f32 %v976, %v1186
    %1188 = vmatmul.f32.gmra.mxu0 %v1075
    %v1189 = vpop.f32.mrf.mxu0
    %v1190 = vadd.f32 %v979, %v1189
    %1191 = vmatmul.f32.gmra.mxu0 %v1078
    %v1192 = vpop.f32.mrf.mxu0
    %v1193 = vadd.f32 %v982, %v1192
    %1194 = vmatmul.f32.gmra.mxu0 %v1081
    %v1195 = vpop.f32.mrf.mxu0
    %v1196 = vadd.f32 %v985, %v1195
    %1197 = vmatmul.f32.gmra.mxu0 %v1084
    %v1198 = vpop.f32.mrf.mxu0
    %v1199 = vadd.f32 %v988, %v1198
    %1200 = vmatmul.f32.gmra.mxu0 %v1087
    %v1201 = vpop.f32.mrf.mxu0
    %v1202 = vadd.f32 %v991, %v1201
    %1203 = vmatmul.f32.gmra.mxu0 %v1090
    %v1204 = vpop.f32.mrf.mxu0
    %v1205 = vadd.f32 %v994, %v1204
    %1206 = vmatmul.f32.gmra.mxu0 %v1093
    %v1207 = vpop.f32.mrf.mxu0
    %v1208 = vadd.f32 %v997, %v1207
    %1209 = vdwg.mxu0
    %v1210 = vrot.slane %v557, 2
    %v1212 = vsel %vm786, %v752, 0
    %v1215 = vsel %vm786, %v753, 0
    %v1218 = vsel %vm786, %v754, 0
    %v1221 = vsel %vm786, %v755, 0
    %v1224 = vsel %vm786, %v756, 0
    %v1227 = vsel %vm786, %v757, 0
    %v1230 = vsel %vm786, %v758, 0
    %v1233 = vsel %vm786, %v759, 0
    %v1236 = vsel %vm786, %v760, 0
    %v1239 = vsel %vm786, %v761, 0
    %v1242 = vsel %vm786, %v762, 0
    %v1245 = vsel %vm786, %v763, 0
    %v1248 = vsel %vm786, %v764, 0
    %v1251 = vsel %vm786, %v765, 0
    %v1254 = vsel %vm786, %v766, 0
    %v1257 = vsel %vm786, %v767, 0
    %v1260 = vsel %vm786, %v768, 0
    %v1263 = vsel %vm786, %v769, 0
    %v1266 = vsel %vm786, %v770, 0
    %v1269 = vsel %vm786, %v771, 0
    %v1272 = vsel %vm786, %v772, 0
    %v1275 = vsel %vm786, %v773, 0
    %v1278 = vsel %vm786, %v774, 0
    %v1281 = vsel %vm786, %v775, 0
    %v1284 = vsel %vm786, %v776, 0
    %v1287 = vsel %vm786, %v777, 0
    %v1290 = vsel %vm786, %v778, 0
    %v1293 = vsel %vm786, %v779, 0
    %v1296 = vsel %vm786, %v780, 0
    %v1299 = vsel %vm786, %v781, 0
    %v1302 = vsel %vm786, %v782, 0
    %v1305 = vsel %vm786, %v783, 0
    %v1307 = vsel %vm883, %v1210, 0
    %1309 = vmatpush.msra.mxu0 0.0
    %1310 = vmatpush.msra.mxu0 0.0
    %1311 = vmatpush.msra.mxu0 0.0
    %1312 = vmatpush.msra.mxu0 0.0
    %1313 = vmatpush.msra.mxu0 0.0
    %1314 = vmatpush.msra.mxu0 0.0
    %1315 = vmatpush.msra.mxu0 0.0
    %1316 = vmatpush.msra.mxu0 0.0
    %1317 = vmatpush.msra.mxu0 0.0
    %1318 = vmatpush.msra.mxu0 0.0
    %1319 = vmatpush.msra.mxu0 0.0
    %1320 = vmatpush.msra.mxu0 0.0
    %1321 = vmatpush.msra.mxu0 0.0
    %1322 = vmatpush.msra.mxu0 0.0
    %1323 = vmatpush.msra.mxu0 0.0
    %1324 = vmatpush.msra.mxu0 %v1307
    %1325 = vmatmul.f32.gmra.mxu0 %v1212
    %v1326 = vpop.f32.mrf.mxu0
    %v1327 = vadd.f32 0.0, %v1326
    %1328 = vmatmul.f32.gmra.mxu0 %v1215
    %v1329 = vpop.f32.mrf.mxu0
    %v1330 = vadd.f32 0.0, %v1329
    %1331 = vmatmul.f32.gmra.mxu0 %v1218
    %v1332 = vpop.f32.mrf.mxu0
    %v1333 = vadd.f32 0.0, %v1332
    %1334 = vmatmul.f32.gmra.mxu0 %v1221
    %v1335 = vpop.f32.mrf.mxu0
    %v1336 = vadd.f32 0.0, %v1335
    %1337 = vmatmul.f32.gmra.mxu0 %v1224
    %v1338 = vpop.f32.mrf.mxu0
    %v1339 = vadd.f32 0.0, %v1338
    %1340 = vmatmul.f32.gmra.mxu0 %v1227
    %v1341 = vpop.f32.mrf.mxu0
    %v1342 = vadd.f32 0.0, %v1341
    %1343 = vmatmul.f32.gmra.mxu0 %v1230
    %v1344 = vpop.f32.mrf.mxu0
    %v1345 = vadd.f32 0.0, %v1344
    %1346 = vmatmul.f32.gmra.mxu0 %v1233
    %v1347 = vpop.f32.mrf.mxu0
    %v1348 = vadd.f32 0.0, %v1347
    %1349 = vmatmul.f32.gmra.mxu0 %v1236
    %v1350 = vpop.f32.mrf.mxu0
    %v1351 = vadd.f32 0.0, %v1350
    %1352 = vmatmul.f32.gmra.mxu0 %v1239
    %v1353 = vpop.f32.mrf.mxu0
    %v1354 = vadd.f32 0.0, %v1353
    %1355 = vmatmul.f32.gmra.mxu0 %v1242
    %v1356 = vpop.f32.mrf.mxu0
    %v1357 = vadd.f32 0.0, %v1356
    %1358 = vmatmul.f32.gmra.mxu0 %v1245
    %v1359 = vpop.f32.mrf.mxu0
    %v1360 = vadd.f32 0.0, %v1359
    %1361 = vmatmul.f32.gmra.mxu0 %v1248
    %v1362 = vpop.f32.mrf.mxu0
    %v1363 = vadd.f32 0.0, %v1362
    %1364 = vmatmul.f32.gmra.mxu0 %v1251
    %v1365 = vpop.f32.mrf.mxu0
    %v1366 = vadd.f32 0.0, %v1365
    %1367 = vmatmul.f32.gmra.mxu0 %v1254
    %v1368 = vpop.f32.mrf.mxu0
    %v1369 = vadd.f32 0.0, %v1368
    %1370 = vmatmul.f32.gmra.mxu0 %v1257
    %v1371 = vpop.f32.mrf.mxu0
    %v1372 = vadd.f32 0.0, %v1371
    %1373 = vmatmul.f32.gmra.mxu0 %v1260
    %v1374 = vpop.f32.mrf.mxu0
    %v1375 = vadd.f32 0.0, %v1374
    %1376 = vmatmul.f32.gmra.mxu0 %v1263
    %v1377 = vpop.f32.mrf.mxu0
    %v1378 = vadd.f32 0.0, %v1377
    %1379 = vmatmul.f32.gmra.mxu0 %v1266
    %v1380 = vpop.f32.mrf.mxu0
    %v1381 = vadd.f32 0.0, %v1380
    %1382 = vmatmul.f32.gmra.mxu0 %v1269
    %v1383 = vpop.f32.mrf.mxu0
    %v1384 = vadd.f32 0.0, %v1383
    %1385 = vmatmul.f32.gmra.mxu0 %v1272
    %v1386 = vpop.f32.mrf.mxu0
    %v1387 = vadd.f32 0.0, %v1386
    %1388 = vmatmul.f32.gmra.mxu0 %v1275
    %v1389 = vpop.f32.mrf.mxu0
    %v1390 = vadd.f32 0.0, %v1389
    %1391 = vmatmul.f32.gmra.mxu0 %v1278
    %v1392 = vpop.f32.mrf.mxu0
    %v1393 = vadd.f32 0.0, %v1392
    %1394 = vmatmul.f32.gmra.mxu0 %v1281
    %v1395 = vpop.f32.mrf.mxu0
    %v1396 = vadd.f32 0.0, %v1395
    %1397 = vmatmul.f32.gmra.mxu0 %v1284
    %v1398 = vpop.f32.mrf.mxu0
    %v1399 = vadd.f32 0.0, %v1398
    %1400 = vmatmul.f32.gmra.mxu0 %v1287
    %v1401 = vpop.f32.mrf.mxu0
    %v1402 = vadd.f32 0.0, %v1401
    %1403 = vmatmul.f32.gmra.mxu0 %v1290
    %v1404 = vpop.f32.mrf.mxu0
    %v1405 = vadd.f32 0.0, %v1404
    %1406 = vmatmul.f32.gmra.mxu0 %v1293
    %v1407 = vpop.f32.mrf.mxu0
    %v1408 = vadd.f32 0.0, %v1407
    %1409 = vmatmul.f32.gmra.mxu0 %v1296
    %v1410 = vpop.f32.mrf.mxu0
    %v1411 = vadd.f32 0.0, %v1410
    %1412 = vmatmul.f32.gmra.mxu0 %v1299
    %v1413 = vpop.f32.mrf.mxu0
    %v1414 = vadd.f32 0.0, %v1413
    %1415 = vmatmul.f32.gmra.mxu0 %v1302
    %v1416 = vpop.f32.mrf.mxu0
    %v1417 = vadd.f32 0.0, %v1416
    %1418 = vmatmul.f32.gmra.mxu0 %v1305
    %v1419 = vpop.f32.mrf.mxu0
    %v1420 = vadd.f32 0.0, %v1419
    %1421 = vdwg.mxu0
    %v1422 = vadd.f32 %v1115, %v1327
    %v1423 = vadd.f32 %v1118, %v1330
    %v1424 = vadd.f32 %v1121, %v1333
    %v1425 = vadd.f32 %v1124, %v1336
    %v1426 = vadd.f32 %v1127, %v1339
    %v1427 = vadd.f32 %v1130, %v1342
    %v1428 = vadd.f32 %v1133, %v1345
    %v1429 = vadd.f32 %v1136, %v1348
    %v1430 = vadd.f32 %v1139, %v1351
    %v1431 = vadd.f32 %v1142, %v1354
    %v1432 = vadd.f32 %v1145, %v1357
    %v1433 = vadd.f32 %v1148, %v1360
    %v1434 = vadd.f32 %v1151, %v1363
    %v1435 = vadd.f32 %v1154, %v1366
    %v1436 = vadd.f32 %v1157, %v1369
    %v1437 = vadd.f32 %v1160, %v1372
    %v1438 = vadd.f32 %v1163, %v1375
    %v1439 = vadd.f32 %v1166, %v1378
    %v1440 = vadd.f32 %v1169, %v1381
    %v1441 = vadd.f32 %v1172, %v1384
    %v1442 = vadd.f32 %v1175, %v1387
    %v1443 = vadd.f32 %v1178, %v1390
    %v1444 = vadd.f32 %v1181, %v1393
    %v1445 = vadd.f32 %v1184, %v1396
    %v1446 = vadd.f32 %v1187, %v1399
    %v1447 = vadd.f32 %v1190, %v1402
    %v1448 = vadd.f32 %v1193, %v1405
    %v1449 = vadd.f32 %v1196, %v1408
    %v1450 = vadd.f32 %v1199, %v1411
    %v1451 = vadd.f32 %v1202, %v1414
    %v1452 = vadd.f32 %v1205, %v1417
    %v1453 = vadd.f32 %v1208, %v1420
    %v1454 = vld [vmem:[%s3] sm:$0x1]
    %v1456 = vperm.slane %v1454, 0
    %v1458 = vadd.f32 %v1422, %v1456
    %v1459 = vadd.f32 %v1423, %v1456
    %v1460 = vadd.f32 %v1424, %v1456
    %v1461 = vadd.f32 %v1425, %v1456
    %v1462 = vadd.f32 %v1426, %v1456
    %v1463 = vadd.f32 %v1427, %v1456
    %v1464 = vadd.f32 %v1428, %v1456
    %v1465 = vadd.f32 %v1429, %v1456
    %v1466 = vadd.f32 %v1430, %v1456
    %v1467 = vadd.f32 %v1431, %v1456
    %v1468 = vadd.f32 %v1432, %v1456
    %v1469 = vadd.f32 %v1433, %v1456
    %v1470 = vadd.f32 %v1434, %v1456
    %v1471 = vadd.f32 %v1435, %v1456
    %v1472 = vadd.f32 %v1436, %v1456
    %v1473 = vadd.f32 %v1437, %v1456
    %v1474 = vadd.f32 %v1438, %v1456
    %v1475 = vadd.f32 %v1439, %v1456
    %v1476 = vadd.f32 %v1440, %v1456
    %v1477 = vadd.f32 %v1441, %v1456
    %v1478 = vadd.f32 %v1442, %v1456
    %v1479 = vadd.f32 %v1443, %v1456
    %v1480 = vadd.f32 %v1444, %v1456
    %v1481 = vadd.f32 %v1445, %v1456
    %v1482 = vadd.f32 %v1446, %v1456
    %v1483 = vadd.f32 %v1447, %v1456
    %v1484 = vadd.f32 %v1448, %v1456
    %v1485 = vadd.f32 %v1449, %v1456
    %v1486 = vadd.f32 %v1450, %v1456
    %v1487 = vadd.f32 %v1451, %v1456
    %v1488 = vadd.f32 %v1452, %v1456
    %v1489 = vadd.f32 %v1453, %v1456
    %v1490 = vmax.f32 %v1458, 0.0
    %v1491 = vmax.f32 %v1459, 0.0
    %v1492 = vmax.f32 %v1460, 0.0
    %v1493 = vmax.f32 %v1461, 0.0
    %v1494 = vmax.f32 %v1462, 0.0
    %v1495 = vmax.f32 %v1463, 0.0
    %v1496 = vmax.f32 %v1464, 0.0
    %v1497 = vmax.f32 %v1465, 0.0
    %v1498 = vmax.f32 %v1466, 0.0
    %v1499 = vmax.f32 %v1467, 0.0
    %v1500 = vmax.f32 %v1468, 0.0
    %v1501 = vmax.f32 %v1469, 0.0
    %v1502 = vmax.f32 %v1470, 0.0
    %v1503 = vmax.f32 %v1471, 0.0
    %v1504 = vmax.f32 %v1472, 0.0
    %v1505 = vmax.f32 %v1473, 0.0
    %v1506 = vmax.f32 %v1474, 0.0
    %v1507 = vmax.f32 %v1475, 0.0
    %v1508 = vmax.f32 %v1476, 0.0
    %v1509 = vmax.f32 %v1477, 0.0
    %v1510 = vmax.f32 %v1478, 0.0
    %v1511 = vmax.f32 %v1479, 0.0
    %v1512 = vmax.f32 %v1480, 0.0
    %v1513 = vmax.f32 %v1481, 0.0
    %v1514 = vmax.f32 %v1482, 0.0
    %v1515 = vmax.f32 %v1483, 0.0
    %v1516 = vmax.f32 %v1484, 0.0
    %v1517 = vmax.f32 %v1485, 0.0
    %v1518 = vmax.f32 %v1486, 0.0
    %v1519 = vmax.f32 %v1487, 0.0
    %v1520 = vmax.f32 %v1488, 0.0
    %v1521 = vmax.f32 %v1489, 0.0
    %v1522 = vrot.slane %v1490, 1
    %v1523 = vrot.slane %v1491, 1
    %v1524 = vrot.slane %v1492, 1
    %v1525 = vrot.slane %v1493, 1
    %v1526 = vrot.slane %v1494, 1
    %v1527 = vrot.slane %v1495, 1
    %v1528 = vrot.slane %v1496, 1
    %v1529 = vrot.slane %v1497, 1
    %v1530 = vrot.slane %v1498, 1
    %v1531 = vrot.slane %v1499, 1
    %v1532 = vrot.slane %v1500, 1
    %v1533 = vrot.slane %v1501, 1
    %v1534 = vrot.slane %v1502, 1
    %v1535 = vrot.slane %v1503, 1
    %v1536 = vrot.slane %v1504, 1
    %v1537 = vrot.slane %v1505, 1
    %v1538 = vrot.slane %v1506, 1
    %v1539 = vrot.slane %v1507, 1
    %v1540 = vrot.slane %v1508, 1
    %v1541 = vrot.slane %v1509, 1
    %v1542 = vrot.slane %v1510, 1
    %v1543 = vrot.slane %v1511, 1
    %v1544 = vrot.slane %v1512, 1
    %v1545 = vrot.slane %v1513, 1
    %v1546 = vrot.slane %v1514, 1
    %v1547 = vrot.slane %v1515, 1
    %v1548 = vrot.slane %v1516, 1
    %v1549 = vrot.slane %v1517, 1
    %v1550 = vrot.slane %v1518, 1
    %v1551 = vrot.slane %v1519, 1
    %v1552 = vrot.slane %v1520, 1
    %v1553 = vrot.slane %v1521, 1
    %v1554 = vsel %vm719, %v1552, %v1553
    %v1555 = vsel %vm719, %v1551, %v1552
    %v1556 = vsel %vm719, %v1550, %v1551
    %v1557 = vsel %vm719, %v1549, %v1550
    %v1558 = vsel %vm719, %v1548, %v1549
    %v1559 = vsel %vm719, %v1547, %v1548
    %v1560 = vsel %vm719, %v1546, %v1547
    %v1561 = vsel %vm719, %v1545, %v1546
    %v1562 = vsel %vm719, %v1544, %v1545
    %v1563 = vsel %vm719, %v1543, %v1544
    %v1564 = vsel %vm719, %v1542, %v1543
    %v1565 = vsel %vm719, %v1541, %v1542
    %v1566 = vsel %vm719, %v1540, %v1541
    %v1567 = vsel %vm719, %v1539, %v1540
    %v1568 = vsel %vm719, %v1538, %v1539
    %v1569 = vsel %vm719, %v1537, %v1538
    %v1570 = vsel %vm719, %v1536, %v1537
    %v1571 = vsel %vm719, %v1535, %v1536
    %v1572 = vsel %vm719, %v1534, %v1535
    %v1573 = vsel %vm719, %v1533, %v1534
    %v1574 = vsel %vm719, %v1532, %v1533
    %v1575 = vsel %vm719, %v1531, %v1532
    %v1576 = vsel %vm719, %v1530, %v1531
    %v1577 = vsel %vm719, %v1529, %v1530
    %v1578 = vsel %vm719, %v1528, %v1529
    %v1579 = vsel %vm719, %v1527, %v1528
    %v1580 = vsel %vm719, %v1526, %v1527
    %v1581 = vsel %vm719, %v1525, %v1526
    %v1582 = vsel %vm719, %v1524, %v1525
    %v1583 = vsel %vm719, %v1523, %v1524
    %v1584 = vsel %vm719, %v1522, %v1523
    %v1585 = vsel %vm719, %v1553, %v1522
    %v1586 = vmax.f32 %v1490, %v1584
    %v1587 = vmax.f32 %v1491, %v1583
    %v1588 = vmax.f32 %v1492, %v1582
    %v1589 = vmax.f32 %v1493, %v1581
    %v1590 = vmax.f32 %v1494, %v1580
    %v1591 = vmax.f32 %v1495, %v1579
    %v1592 = vmax.f32 %v1496, %v1578
    %v1593 = vmax.f32 %v1497, %v1577
    %v1594 = vmax.f32 %v1498, %v1576
    %v1595 = vmax.f32 %v1499, %v1575
    %v1596 = vmax.f32 %v1500, %v1574
    %v1597 = vmax.f32 %v1501, %v1573
    %v1598 = vmax.f32 %v1502, %v1572
    %v1599 = vmax.f32 %v1503, %v1571
    %v1600 = vmax.f32 %v1504, %v1570
    %v1601 = vmax.f32 %v1505, %v1569
    %v1602 = vmax.f32 %v1506, %v1568
    %v1603 = vmax.f32 %v1507, %v1567
    %v1604 = vmax.f32 %v1508, %v1566
    %v1605 = vmax.f32 %v1509, %v1565
    %v1606 = vmax.f32 %v1510, %v1564
    %v1607 = vmax.f32 %v1511, %v1563
    %v1608 = vmax.f32 %v1512, %v1562
    %v1609 = vmax.f32 %v1513, %v1561
    %v1610 = vmax.f32 %v1514, %v1560
    %v1611 = vmax.f32 %v1515, %v1559
    %v1612 = vmax.f32 %v1516, %v1558
    %v1613 = vmax.f32 %v1517, %v1557
    %v1614 = vmax.f32 %v1518, %v1556
    %v1615 = vmax.f32 %v1519, %v1555
    %v1616 = vmax.f32 %v1520, %v1554
    %v1617 = vmax.f32 %v1521, %v1585
    %v1618 = vld [vmem:[%s4] sm:$0xff]
    %v1619 = vld [vmem:[%s4 + $0x8] sm:$0xff]
    %v1620 = vld [vmem:[%s4 + $0x10] sm:$0xff]
    %v1621 = vrot.slane %v1586, 6
    %v1622 = vrot.slane %v1587, 6
    %v1623 = vrot.slane %v1588, 6
    %v1624 = vrot.slane %v1589, 6
    %v1625 = vrot.slane %v1590, 6
    %v1626 = vrot.slane %v1591, 6
    %v1627 = vrot.slane %v1592, 6
    %v1628 = vrot.slane %v1593, 6
    %v1629 = vrot.slane %v1594, 6
    %v1630 = vrot.slane %v1595, 6
    %v1631 = vrot.slane %v1596, 6
    %v1632 = vrot.slane %v1597, 6
    %v1633 = vrot.slane %v1598, 6
    %v1634 = vrot.slane %v1599, 6
    %v1635 = vrot.slane %v1600, 6
    %v1636 = vrot.slane %v1601, 6
    %v1637 = vrot.slane %v1602, 6
    %v1638 = vrot.slane %v1603, 6
    %v1639 = vrot.slane %v1604, 6
    %v1640 = vrot.slane %v1605, 6
    %v1641 = vrot.slane %v1606, 6
    %v1642 = vrot.slane %v1607, 6
    %v1643 = vrot.slane %v1608, 6
    %v1644 = vrot.slane %v1609, 6
    %v1645 = vrot.slane %v1610, 6
    %v1646 = vrot.slane %v1611, 6
    %v1647 = vrot.slane %v1612, 6
    %v1648 = vrot.slane %v1613, 6
    %v1649 = vrot.slane %v1614, 6
    %v1650 = vrot.slane %v1615, 6
    %v1651 = vrot.slane %v1616, 6
    %v1652 = vrot.slane %v1617, 6
    %vm1653 = vcmp.lt.s32.totalorder %v109, 2
    %v1654 = vsel %vm1653, %v1651, %v1652
    %v1655 = vsel %vm1653, %v1650, %v1651
    %v1656 = vsel %vm1653, %v1649, %v1650
    %v1657 = vsel %vm1653, %v1648, %v1649
    %v1658 = vsel %vm1653, %v1647, %v1648
    %v1659 = vsel %vm1653, %v1646, %v1647
    %v1660 = vsel %vm1653, %v1645, %v1646
    %v1661 = vsel %vm1653, %v1644, %v1645
    %v1662 = vsel %vm1653, %v1643, %v1644
    %v1663 = vsel %vm1653, %v1642, %v1643
    %v1664 = vsel %vm1653, %v1641, %v1642
    %v1665 = vsel %vm1653, %v1640, %v1641
    %v1666 = vsel %vm1653, %v1639, %v1640
    %v1667 = vsel %vm1653, %v1638, %v1639
    %v1668 = vsel %vm1653, %v1637, %v1638
    %v1669 = vsel %vm1653, %v1636, %v1637
    %v1670 = vsel %vm1653, %v1635, %v1636
    %v1671 = vsel %vm1653, %v1634, %v1635
    %v1672 = vsel %vm1653, %v1633, %v1634
    %v1673 = vsel %vm1653, %v1632, %v1633
    %v1674 = vsel %vm1653, %v1631, %v1632
    %v1675 = vsel %vm1653, %v1630, %v1631
    %v1676 = vsel %vm1653, %v1629, %v1630
    %v1677 = vsel %vm1653, %v1628, %v1629
    %v1678 = vsel %vm1653, %v1627, %v1628
    %v1679 = vsel %vm1653, %v1626, %v1627
    %v1680 = vsel %vm1653, %v1625, %v1626
    %v1681 = vsel %vm1653, %v1624, %v1625
    %v1682 = vsel %vm1653, %v1623, %v1624
    %v1683 = vsel %vm1653, %v1622, %v1623
    %v1684 = vsel %vm1653, %v1621, %v1622
    %v1685 = vsel %vm1653, %v1652, %v1621
    %v1686 = vsel %vm525, 1, 0
    %v1687 = vsel %vm526, 1, 0
    %v1688 = vsel %vm527, 1, 0
    %v1689 = vsel %vm528, 1, 0
    %v1690 = vsel %vm529, 1, 0
    %v1691 = vsel %vm530, 1, 0
    %v1692 = vsel %vm531, 1, 0
    %v1693 = vsel %vm532, 1, 0
    %v1694 = vsel %vm533, 1, 0
    %v1695 = vsel %vm534, 1, 0
    %v1696 = vsel %vm535, 1, 0
    %v1697 = vsel %vm536, 1, 0
    %v1698 = vsel %vm537, 1, 0
    %v1699 = vsel %vm538, 1, 0
    %v1700 = vsel %vm539, 1, 0
    %v1701 = vsel %vm540, 1, 0
    %v1702 = vsel %vm541, 1, 0
    %v1703 = vsel %vm542, 1, 0
    %v1704 = vsel %vm543, 1, 0
    %v1705 = vsel %vm544, 1, 0
    %v1706 = vsel %vm545, 1, 0
    %v1707 = vsel %vm546, 1, 0
    %v1708 = vsel %vm547, 1, 0
    %v1709 = vsel %vm548, 1, 0
    %v1710 = vsel %vm549, 1, 0
    %v1711 = vsel %vm550, 1, 0
    %v1712 = vsel %vm551, 1, 0
    %v1713 = vsel %vm552, 1, 0
    %v1714 = vsel %vm553, 1, 0
    %v1715 = vsel %vm554, 1, 0
    %v1716 = vsel %vm555, 1, 0
    %v1717 = vsel %vm556, 1, 0
    %vm1718 = vcmp.eq.s32.totalorder %v1686, 1
    %vm1719 = vcmp.eq.s32.totalorder %v1687, 1
    %vm1720 = vcmp.eq.s32.totalorder %v1688, 1
    %vm1721 = vcmp.eq.s32.totalorder %v1689, 1
    %vm1722 = vcmp.eq.s32.totalorder %v1690, 1
    %vm1723 = vcmp.eq.s32.totalorder %v1691, 1
    %vm1724 = vcmp.eq.s32.totalorder %v1692, 1
    %vm1725 = vcmp.eq.s32.totalorder %v1693, 1
    %vm1726 = vcmp.eq.s32.totalorder %v1694, 1
    %vm1727 = vcmp.eq.s32.totalorder %v1695, 1
    %vm1728 = vcmp.eq.s32.totalorder %v1696, 1
    %vm1729 = vcmp.eq.s32.totalorder %v1697, 1
    %vm1730 = vcmp.eq.s32.totalorder %v1698, 1
    %vm1731 = vcmp.eq.s32.totalorder %v1699, 1
    %vm1732 = vcmp.eq.s32.totalorder %v1700, 1
    %vm1733 = vcmp.eq.s32.totalorder %v1701, 1
    %vm1734 = vcmp.eq.s32.totalorder %v1702, 1
    %vm1735 = vcmp.eq.s32.totalorder %v1703, 1
    %vm1736 = vcmp.eq.s32.totalorder %v1704, 1
    %vm1737 = vcmp.eq.s32.totalorder %v1705, 1
    %vm1738 = vcmp.eq.s32.totalorder %v1706, 1
    %vm1739 = vcmp.eq.s32.totalorder %v1707, 1
    %vm1740 = vcmp.eq.s32.totalorder %v1708, 1
    %vm1741 = vcmp.eq.s32.totalorder %v1709, 1
    %vm1742 = vcmp.eq.s32.totalorder %v1710, 1
    %vm1743 = vcmp.eq.s32.totalorder %v1711, 1
    %vm1744 = vcmp.eq.s32.totalorder %v1712, 1
    %vm1745 = vcmp.eq.s32.totalorder %v1713, 1
    %vm1746 = vcmp.eq.s32.totalorder %v1714, 1
    %vm1747 = vcmp.eq.s32.totalorder %v1715, 1
    %vm1748 = vcmp.eq.s32.totalorder %v1716, 1
    %vm1749 = vcmp.eq.s32.totalorder %v1717, 1
    %v1750 = vsel %vm1718, %v1685, 0.0
    %v1751 = vsel %vm1719, %v1684, 0.0
    %v1752 = vsel %vm1720, %v1683, 0.0
    %v1753 = vsel %vm1721, %v1682, 0.0
    %v1754 = vsel %vm1722, %v1681, 0.0
    %v1755 = vsel %vm1723, %v1680, 0.0
    %v1756 = vsel %vm1724, %v1679, 0.0
    %v1757 = vsel %vm1725, %v1678, 0.0
    %v1758 = vsel %vm1726, %v1677, 0.0
    %v1759 = vsel %vm1727, %v1676, 0.0
    %v1760 = vsel %vm1728, %v1675, 0.0
    %v1761 = vsel %vm1729, %v1674, 0.0
    %v1762 = vsel %vm1730, %v1673, 0.0
    %v1763 = vsel %vm1731, %v1672, 0.0
    %v1764 = vsel %vm1732, %v1671, 0.0
    %v1765 = vsel %vm1733, %v1670, 0.0
    %v1766 = vsel %vm1734, %v1669, 0.0
    %v1767 = vsel %vm1735, %v1668, 0.0
    %v1768 = vsel %vm1736, %v1667, 0.0
    %v1769 = vsel %vm1737, %v1666, 0.0
    %v1770 = vsel %vm1738, %v1665, 0.0
    %v1771 = vsel %vm1739, %v1664, 0.0
    %v1772 = vsel %vm1740, %v1663, 0.0
    %v1773 = vsel %vm1741, %v1662, 0.0
    %v1774 = vsel %vm1742, %v1661, 0.0
    %v1775 = vsel %vm1743, %v1660, 0.0
    %v1776 = vsel %vm1744, %v1659, 0.0
    %v1777 = vsel %vm1745, %v1658, 0.0
    %v1778 = vsel %vm1746, %v1657, 0.0
    %v1779 = vsel %vm1747, %v1656, 0.0
    %v1780 = vsel %vm1748, %v1655, 0.0
    %v1781 = vsel %vm1749, %v1654, 0.0
    %vm1782 = vcmp.ne.s32.totalorder %v493, 50
    %vm1783 = vcmp.ne.s32.totalorder %v494, 50
    %vm1784 = vcmp.ne.s32.totalorder %v495, 50
    %vm1785 = vcmp.ne.s32.totalorder %v496, 50
    %vm1786 = vcmp.ne.s32.totalorder %v497, 50
    %vm1787 = vcmp.ne.s32.totalorder %v498, 50
    %vm1788 = vcmp.ne.s32.totalorder %v499, 50
    %vm1789 = vcmp.ne.s32.totalorder %v500, 50
    %vm1790 = vcmp.ne.s32.totalorder %v501, 50
    %vm1791 = vcmp.ne.s32.totalorder %v502, 50
    %vm1792 = vcmp.ne.s32.totalorder %v503, 50
    %vm1793 = vcmp.ne.s32.totalorder %v504, 50
    %vm1794 = vcmp.ne.s32.totalorder %v505, 50
    %vm1795 = vcmp.ne.s32.totalorder %v506, 50
    %vm1796 = vcmp.ne.s32.totalorder %v507, 50
    %vm1797 = vcmp.ne.s32.totalorder %v508, 50
    %vm1798 = vcmp.ne.s32.totalorder %v509, 50
    %vm1799 = vcmp.ne.s32.totalorder %v510, 50
    %vm1800 = vcmp.ne.s32.totalorder %v511, 50
    %vm1801 = vcmp.ne.s32.totalorder %v512, 50
    %vm1802 = vcmp.ne.s32.totalorder %v513, 50
    %vm1803 = vcmp.ne.s32.totalorder %v514, 50
    %vm1804 = vcmp.ne.s32.totalorder %v515, 50
    %vm1805 = vcmp.ne.s32.totalorder %v516, 50
    %vm1806 = vcmp.ne.s32.totalorder %v517, 50
    %vm1807 = vcmp.ne.s32.totalorder %v518, 50
    %vm1808 = vcmp.ne.s32.totalorder %v519, 50
    %vm1809 = vcmp.ne.s32.totalorder %v520, 50
    %vm1810 = vcmp.ne.s32.totalorder %v521, 50
    %vm1811 = vcmp.ne.s32.totalorder %v522, 50
    %vm1812 = vcmp.ne.s32.totalorder %v523, 50
    %vm1813 = vcmp.ne.s32.totalorder %v524, 50
    %v1814 = vrot.slane %v1586, 2
    %v1815 = vrot.slane %v1587, 2
    %v1816 = vrot.slane %v1588, 2
    %v1817 = vrot.slane %v1589, 2
    %v1818 = vrot.slane %v1590, 2
    %v1819 = vrot.slane %v1591, 2
    %v1820 = vrot.slane %v1592, 2
    %v1821 = vrot.slane %v1593, 2
    %v1822 = vrot.slane %v1594, 2
    %v1823 = vrot.slane %v1595, 2
    %v1824 = vrot.slane %v1596, 2
    %v1825 = vrot.slane %v1597, 2
    %v1826 = vrot.slane %v1598, 2
    %v1827 = vrot.slane %v1599, 2
    %v1828 = vrot.slane %v1600, 2
    %v1829 = vrot.slane %v1601, 2
    %v1830 = vrot.slane %v1602, 2
    %v1831 = vrot.slane %v1603, 2
    %v1832 = vrot.slane %v1604, 2
    %v1833 = vrot.slane %v1605, 2
    %v1834 = vrot.slane %v1606, 2
    %v1835 = vrot.slane %v1607, 2
    %v1836 = vrot.slane %v1608, 2
    %v1837 = vrot.slane %v1609, 2
    %v1838 = vrot.slane %v1610, 2
    %v1839 = vrot.slane %v1611, 2
    %v1840 = vrot.slane %v1612, 2
    %v1841 = vrot.slane %v1613, 2
    %v1842 = vrot.slane %v1614, 2
    %v1843 = vrot.slane %v1615, 2
    %v1844 = vrot.slane %v1616, 2
    %v1845 = vrot.slane %v1617, 2
    %vm1846 = vcmp.lt.s32.totalorder %v109, 6
    %v1847 = vsel %vm1846, %v1844, %v1845
    %v1848 = vsel %vm1846, %v1843, %v1844
    %v1849 = vsel %vm1846, %v1842, %v1843
    %v1850 = vsel %vm1846, %v1841, %v1842
    %v1851 = vsel %vm1846, %v1840, %v1841
    %v1852 = vsel %vm1846, %v1839, %v1840
    %v1853 = vsel %vm1846, %v1838, %v1839
    %v1854 = vsel %vm1846, %v1837, %v1838
    %v1855 = vsel %vm1846, %v1836, %v1837
    %v1856 = vsel %vm1846, %v1835, %v1836
    %v1857 = vsel %vm1846, %v1834, %v1835
    %v1858 = vsel %vm1846, %v1833, %v1834
    %v1859 = vsel %vm1846, %v1832, %v1833
    %v1860 = vsel %vm1846, %v1831, %v1832
    %v1861 = vsel %vm1846, %v1830, %v1831
    %v1862 = vsel %vm1846, %v1829, %v1830
    %v1863 = vsel %vm1846, %v1828, %v1829
    %v1864 = vsel %vm1846, %v1827, %v1828
    %v1865 = vsel %vm1846, %v1826, %v1827
    %v1866 = vsel %vm1846, %v1825, %v1826
    %v1867 = vsel %vm1846, %v1824, %v1825
    %v1868 = vsel %vm1846, %v1823, %v1824
    %v1869 = vsel %vm1846, %v1822, %v1823
    %v1870 = vsel %vm1846, %v1821, %v1822
    %v1871 = vsel %vm1846, %v1820, %v1821
    %v1872 = vsel %vm1846, %v1819, %v1820
    %v1873 = vsel %vm1846, %v1818, %v1819
    %v1874 = vsel %vm1846, %v1817, %v1818
    %v1875 = vsel %vm1846, %v1816, %v1817
    %v1876 = vsel %vm1846, %v1815, %v1816
    %v1877 = vsel %vm1846, %v1814, %v1815
    %v1878 = vsel %vm1846, %v1845, %v1814
    %v1879 = vsel %vm1782, 1, 0
    %v1880 = vsel %vm1783, 1, 0
    %v1881 = vsel %vm1784, 1, 0
    %v1882 = vsel %vm1785, 1, 0
    %v1883 = vsel %vm1786, 1, 0
    %v1884 = vsel %vm1787, 1, 0
    %v1885 = vsel %vm1788, 1, 0
    %v1886 = vsel %vm1789, 1, 0
    %v1887 = vsel %vm1790, 1, 0
    %v1888 = vsel %vm1791, 1, 0
    %v1889 = vsel %vm1792, 1, 0
    %v1890 = vsel %vm1793, 1, 0
    %v1891 = vsel %vm1794, 1, 0
    %v1892 = vsel %vm1795, 1, 0
    %v1893 = vsel %vm1796, 1, 0
    %v1894 = vsel %vm1797, 1, 0
    %v1895 = vsel %vm1798, 1, 0
    %v1896 = vsel %vm1799, 1, 0
    %v1897 = vsel %vm1800, 1, 0
    %v1898 = vsel %vm1801, 1, 0
    %v1899 = vsel %vm1802, 1, 0
    %v1900 = vsel %vm1803, 1, 0
    %v1901 = vsel %vm1804, 1, 0
    %v1902 = vsel %vm1805, 1, 0
    %v1903 = vsel %vm1806, 1, 0
    %v1904 = vsel %vm1807, 1, 0
    %v1905 = vsel %vm1808, 1, 0
    %v1906 = vsel %vm1809, 1, 0
    %v1907 = vsel %vm1810, 1, 0
    %v1908 = vsel %vm1811, 1, 0
    %v1909 = vsel %vm1812, 1, 0
    %v1910 = vsel %vm1813, 1, 0
    %vm1911 = vcmp.eq.s32.totalorder %v1879, 1
    %vm1912 = vcmp.eq.s32.totalorder %v1880, 1
    %vm1913 = vcmp.eq.s32.totalorder %v1881, 1
    %vm1914 = vcmp.eq.s32.totalorder %v1882, 1
    %vm1915 = vcmp.eq.s32.totalorder %v1883, 1
    %vm1916 = vcmp.eq.s32.totalorder %v1884, 1
    %vm1917 = vcmp.eq.s32.totalorder %v1885, 1
    %vm1918 = vcmp.eq.s32.totalorder %v1886, 1
    %vm1919 = vcmp.eq.s32.totalorder %v1887, 1
    %vm1920 = vcmp.eq.s32.totalorder %v1888, 1
    %vm1921 = vcmp.eq.s32.totalorder %v1889, 1
    %vm1922 = vcmp.eq.s32.totalorder %v1890, 1
    %vm1923 = vcmp.eq.s32.totalorder %v1891, 1
    %vm1924 = vcmp.eq.s32.totalorder %v1892, 1
    %vm1925 = vcmp.eq.s32.totalorder %v1893, 1
    %vm1926 = vcmp.eq.s32.totalorder %v1894, 1
    %vm1927 = vcmp.eq.s32.totalorder %v1895, 1
    %vm1928 = vcmp.eq.s32.totalorder %v1896, 1
    %vm1929 = vcmp.eq.s32.totalorder %v1897, 1
    %vm1930 = vcmp.eq.s32.totalorder %v1898, 1
    %vm1931 = vcmp.eq.s32.totalorder %v1899, 1
    %vm1932 = vcmp.eq.s32.totalorder %v1900, 1
    %vm1933 = vcmp.eq.s32.totalorder %v1901, 1
    %vm1934 = vcmp.eq.s32.totalorder %v1902, 1
    %vm1935 = vcmp.eq.s32.totalorder %v1903, 1
    %vm1936 = vcmp.eq.s32.totalorder %v1904, 1
    %vm1937 = vcmp.eq.s32.totalorder %v1905, 1
    %vm1938 = vcmp.eq.s32.totalorder %v1906, 1
    %vm1939 = vcmp.eq.s32.totalorder %v1907, 1
    %vm1940 = vcmp.eq.s32.totalorder %v1908, 1
    %vm1941 = vcmp.eq.s32.totalorder %v1909, 1
    %vm1942 = vcmp.eq.s32.totalorder %v1910, 1
    %v1943 = vsel %vm1911, %v1877, 0.0
    %v1944 = vsel %vm1912, %v1876, 0.0
    %v1945 = vsel %vm1913, %v1875, 0.0
    %v1946 = vsel %vm1914, %v1874, 0.0
    %v1947 = vsel %vm1915, %v1873, 0.0
    %v1948 = vsel %vm1916, %v1872, 0.0
    %v1949 = vsel %vm1917, %v1871, 0.0
    %v1950 = vsel %vm1918, %v1870, 0.0
    %v1951 = vsel %vm1919, %v1869, 0.0
    %v1952 = vsel %vm1920, %v1868, 0.0
    %v1953 = vsel %vm1921, %v1867, 0.0
    %v1954 = vsel %vm1922, %v1866, 0.0
    %v1955 = vsel %vm1923, %v1865, 0.0
    %v1956 = vsel %vm1924, %v1864, 0.0
    %v1957 = vsel %vm1925, %v1863, 0.0
    %v1958 = vsel %vm1926, %v1862, 0.0
    %v1959 = vsel %vm1927, %v1861, 0.0
    %v1960 = vsel %vm1928, %v1860, 0.0
    %v1961 = vsel %vm1929, %v1859, 0.0
    %v1962 = vsel %vm1930, %v1858, 0.0
    %v1963 = vsel %vm1931, %v1857, 0.0
    %v1964 = vsel %vm1932, %v1856, 0.0
    %v1965 = vsel %vm1933, %v1855, 0.0
    %v1966 = vsel %vm1934, %v1854, 0.0
    %v1967 = vsel %vm1935, %v1853, 0.0
    %v1968 = vsel %vm1936, %v1852, 0.0
    %v1969 = vsel %vm1937, %v1851, 0.0
    %v1970 = vsel %vm1938, %v1850, 0.0
    %v1971 = vsel %vm1939, %v1849, 0.0
    %v1972 = vsel %vm1940, %v1848, 0.0
    %v1973 = vsel %vm1941, %v1847, 0.0
    %v1974 = vsel %vm1942, %v1878, 0.0
    %vm1975 = vcmask 64512
    %v1977 = vsel %vm1975, %v1586, 0
    %v1980 = vsel %vm1975, %v1587, 0
    %v1983 = vsel %vm1975, %v1588, 0
    %v1986 = vsel %vm1975, %v1589, 0
    %v1989 = vsel %vm1975, %v1590, 0
    %v1992 = vsel %vm1975, %v1591, 0
    %v1995 = vsel %vm1975, %v1592, 0
    %v1998 = vsel %vm1975, %v1593, 0
    %v2001 = vsel %vm1975, %v1594, 0
    %v2004 = vsel %vm1975, %v1595, 0
    %v2007 = vsel %vm1975, %v1596, 0
    %v2010 = vsel %vm1975, %v1597, 0
    %v2013 = vsel %vm1975, %v1598, 0
    %v2016 = vsel %vm1975, %v1599, 0
    %v2019 = vsel %vm1975, %v1600, 0
    %v2022 = vsel %vm1975, %v1601, 0
    %v2025 = vsel %vm1975, %v1602, 0
    %v2028 = vsel %vm1975, %v1603, 0
    %v2031 = vsel %vm1975, %v1604, 0
    %v2034 = vsel %vm1975, %v1605, 0
    %v2037 = vsel %vm1975, %v1606, 0
    %v2040 = vsel %vm1975, %v1607, 0
    %v2043 = vsel %vm1975, %v1608, 0
    %v2046 = vsel %vm1975, %v1609, 0
    %v2049 = vsel %vm1975, %v1610, 0
    %v2052 = vsel %vm1975, %v1611, 0
    %v2055 = vsel %vm1975, %v1612, 0
    %v2058 = vsel %vm1975, %v1613, 0
    %v2061 = vsel %vm1975, %v1614, 0
    %v2064 = vsel %vm1975, %v1615, 0
    %v2067 = vsel %vm1975, %v1616, 0
    %v2070 = vsel %vm1975, %v1617, 0
    %2072 = vmatpush.msra.mxu0 0.0
    %2073 = vmatpush.msra.mxu0 0.0
    %2074 = vmatpush.msra.mxu0 0.0
    %2075 = vmatpush.msra.mxu0 0.0
    %2076 = vmatpush.msra.mxu0 0.0
    %2077 = vmatpush.msra.mxu0 0.0
    %2078 = vmatpush.msra.mxu0 0.0
    %2079 = vmatpush.msra.mxu0 0.0
    %2080 = vmatpush.msra.mxu0 0.0
    %2081 = vmatpush.msra.mxu0 0.0
    %2082 = vmatpush.msra.mxu0 0.0
    %2083 = vmatpush.msra.mxu0 0.0
    %2084 = vmatpush.msra.mxu0 0.0
    %2085 = vmatpush.msra.mxu0 0.0
    %2086 = vmatpush.msra.mxu0 0.0
    %2087 = vmatpush.msra.mxu0 %v1619
    %2088 = vmatmul.f32.gmra.mxu0 %v1977
    %v2089 = vpop.f32.mrf.mxu0
    %v2090 = vadd.f32 0.0, %v2089
    %2091 = vmatmul.f32.gmra.mxu0 %v1980
    %v2092 = vpop.f32.mrf.mxu0
    %v2093 = vadd.f32 0.0, %v2092
    %2094 = vmatmul.f32.gmra.mxu0 %v1983
    %v2095 = vpop.f32.mrf.mxu0
    %v2096 = vadd.f32 0.0, %v2095
    %2097 = vmatmul.f32.gmra.mxu0 %v1986
    %v2098 = vpop.f32.mrf.mxu0
    %v2099 = vadd.f32 0.0, %v2098
    %2100 = vmatmul.f32.gmra.mxu0 %v1989
    %v2101 = vpop.f32.mrf.mxu0
    %v2102 = vadd.f32 0.0, %v2101
    %2103 = vmatmul.f32.gmra.mxu0 %v1992
    %v2104 = vpop.f32.mrf.mxu0
    %v2105 = vadd.f32 0.0, %v2104
    %2106 = vmatmul.f32.gmra.mxu0 %v1995
    %v2107 = vpop.f32.mrf.mxu0
    %v2108 = vadd.f32 0.0, %v2107
    %2109 = vmatmul.f32.gmra.mxu0 %v1998
    %v2110 = vpop.f32.mrf.mxu0
    %v2111 = vadd.f32 0.0, %v2110
    %2112 = vmatmul.f32.gmra.mxu0 %v2001
    %v2113 = vpop.f32.mrf.mxu0
    %v2114 = vadd.f32 0.0, %v2113
    %2115 = vmatmul.f32.gmra.mxu0 %v2004
    %v2116 = vpop.f32.mrf.mxu0
    %v2117 = vadd.f32 0.0, %v2116
    %2118 = vmatmul.f32.gmra.mxu0 %v2007
    %v2119 = vpop.f32.mrf.mxu0
    %v2120 = vadd.f32 0.0, %v2119
    %2121 = vmatmul.f32.gmra.mxu0 %v2010
    %v2122 = vpop.f32.mrf.mxu0
    %v2123 = vadd.f32 0.0, %v2122
    %2124 = vmatmul.f32.gmra.mxu0 %v2013
    %v2125 = vpop.f32.mrf.mxu0
    %v2126 = vadd.f32 0.0, %v2125
    %2127 = vmatmul.f32.gmra.mxu0 %v2016
    %v2128 = vpop.f32.mrf.mxu0
    %v2129 = vadd.f32 0.0, %v2128
    %2130 = vmatmul.f32.gmra.mxu0 %v2019
    %v2131 = vpop.f32.mrf.mxu0
    %v2132 = vadd.f32 0.0, %v2131
    %2133 = vmatmul.f32.gmra.mxu0 %v2022
    %v2134 = vpop.f32.mrf.mxu0
    %v2135 = vadd.f32 0.0, %v2134
    %2136 = vmatmul.f32.gmra.mxu0 %v2025
    %v2137 = vpop.f32.mrf.mxu0
    %v2138 = vadd.f32 0.0, %v2137
    %2139 = vmatmul.f32.gmra.mxu0 %v2028
    %v2140 = vpop.f32.mrf.mxu0
    %v2141 = vadd.f32 0.0, %v2140
    %2142 = vmatmul.f32.gmra.mxu0 %v2031
    %v2143 = vpop.f32.mrf.mxu0
    %v2144 = vadd.f32 0.0, %v2143
    %2145 = vmatmul.f32.gmra.mxu0 %v2034
    %v2146 = vpop.f32.mrf.mxu0
    %v2147 = vadd.f32 0.0, %v2146
    %2148 = vmatmul.f32.gmra.mxu0 %v2037
    %v2149 = vpop.f32.mrf.mxu0
    %v2150 = vadd.f32 0.0, %v2149
    %2151 = vmatmul.f32.gmra.mxu0 %v2040
    %v2152 = vpop.f32.mrf.mxu0
    %v2153 = vadd.f32 0.0, %v2152
    %2154 = vmatmul.f32.gmra.mxu0 %v2043
    %v2155 = vpop.f32.mrf.mxu0
    %v2156 = vadd.f32 0.0, %v2155
    %2157 = vmatmul.f32.gmra.mxu0 %v2046
    %v2158 = vpop.f32.mrf.mxu0
    %v2159 = vadd.f32 0.0, %v2158
    %2160 = vmatmul.f32.gmra.mxu0 %v2049
    %v2161 = vpop.f32.mrf.mxu0
    %v2162 = vadd.f32 0.0, %v2161
    %2163 = vmatmul.f32.gmra.mxu0 %v2052
    %v2164 = vpop.f32.mrf.mxu0
    %v2165 = vadd.f32 0.0, %v2164
    %2166 = vmatmul.f32.gmra.mxu0 %v2055
    %v2167 = vpop.f32.mrf.mxu0
    %v2168 = vadd.f32 0.0, %v2167
    %2169 = vmatmul.f32.gmra.mxu0 %v2058
    %v2170 = vpop.f32.mrf.mxu0
    %v2171 = vadd.f32 0.0, %v2170
    %2172 = vmatmul.f32.gmra.mxu0 %v2061
    %v2173 = vpop.f32.mrf.mxu0
    %v2174 = vadd.f32 0.0, %v2173
    %2175 = vmatmul.f32.gmra.mxu0 %v2064
    %v2176 = vpop.f32.mrf.mxu0
    %v2177 = vadd.f32 0.0, %v2176
    %2178 = vmatmul.f32.gmra.mxu0 %v2067
    %v2179 = vpop.f32.mrf.mxu0
    %v2180 = vadd.f32 0.0, %v2179
    %2181 = vmatmul.f32.gmra.mxu0 %v2070
    %v2182 = vpop.f32.mrf.mxu0
    %v2183 = vadd.f32 0.0, %v2182
    %2184 = vdwg.mxu0
    %v2186 = vsel %vm1975, %v1750, 0
    %v2189 = vsel %vm1975, %v1751, 0
    %v2192 = vsel %vm1975, %v1752, 0
    %v2195 = vsel %vm1975, %v1753, 0
    %v2198 = vsel %vm1975, %v1754, 0
    %v2201 = vsel %vm1975, %v1755, 0
    %v2204 = vsel %vm1975, %v1756, 0
    %v2207 = vsel %vm1975, %v1757, 0
    %v2210 = vsel %vm1975, %v1758, 0
    %v2213 = vsel %vm1975, %v1759, 0
    %v2216 = vsel %vm1975, %v1760, 0
    %v2219 = vsel %vm1975, %v1761, 0
    %v2222 = vsel %vm1975, %v1762, 0
    %v2225 = vsel %vm1975, %v1763, 0
    %v2228 = vsel %vm1975, %v1764, 0
    %v2231 = vsel %vm1975, %v1765, 0
    %v2234 = vsel %vm1975, %v1766, 0
    %v2237 = vsel %vm1975, %v1767, 0
    %v2240 = vsel %vm1975, %v1768, 0
    %v2243 = vsel %vm1975, %v1769, 0
    %v2246 = vsel %vm1975, %v1770, 0
    %v2249 = vsel %vm1975, %v1771, 0
    %v2252 = vsel %vm1975, %v1772, 0
    %v2255 = vsel %vm1975, %v1773, 0
    %v2258 = vsel %vm1975, %v1774, 0
    %v2261 = vsel %vm1975, %v1775, 0
    %v2264 = vsel %vm1975, %v1776, 0
    %v2267 = vsel %vm1975, %v1777, 0
    %v2270 = vsel %vm1975, %v1778, 0
    %v2273 = vsel %vm1975, %v1779, 0
    %v2276 = vsel %vm1975, %v1780, 0
    %v2279 = vsel %vm1975, %v1781, 0
    %2281 = vmatpush.msra.mxu0 0.0
    %2282 = vmatpush.msra.mxu0 0.0
    %2283 = vmatpush.msra.mxu0 0.0
    %2284 = vmatpush.msra.mxu0 0.0
    %2285 = vmatpush.msra.mxu0 0.0
    %2286 = vmatpush.msra.mxu0 0.0
    %2287 = vmatpush.msra.mxu0 0.0
    %2288 = vmatpush.msra.mxu0 0.0
    %2289 = vmatpush.msra.mxu0 0.0
    %2290 = vmatpush.msra.mxu0 0.0
    %2291 = vmatpush.msra.mxu0 0.0
    %2292 = vmatpush.msra.mxu0 0.0
    %2293 = vmatpush.msra.mxu0 0.0
    %2294 = vmatpush.msra.mxu0 0.0
    %2295 = vmatpush.msra.mxu0 0.0
    %2296 = vmatpush.msra.mxu0 %v1618
    %2297 = vmatmul.f32.gmra.mxu0 %v2186
    %v2298 = vpop.f32.mrf.mxu0
    %v2299 = vadd.f32 %v2090, %v2298
    %2300 = vmatmul.f32.gmra.mxu0 %v2189
    %v2301 = vpop.f32.mrf.mxu0
    %v2302 = vadd.f32 %v2093, %v2301
    %2303 = vmatmul.f32.gmra.mxu0 %v2192
    %v2304 = vpop.f32.mrf.mxu0
    %v2305 = vadd.f32 %v2096, %v2304
    %2306 = vmatmul.f32.gmra.mxu0 %v2195
    %v2307 = vpop.f32.mrf.mxu0
    %v2308 = vadd.f32 %v2099, %v2307
    %2309 = vmatmul.f32.gmra.mxu0 %v2198
    %v2310 = vpop.f32.mrf.mxu0
    %v2311 = vadd.f32 %v2102, %v2310
    %2312 = vmatmul.f32.gmra.mxu0 %v2201
    %v2313 = vpop.f32.mrf.mxu0
    %v2314 = vadd.f32 %v2105, %v2313
    %2315 = vmatmul.f32.gmra.mxu0 %v2204
    %v2316 = vpop.f32.mrf.mxu0
    %v2317 = vadd.f32 %v2108, %v2316
    %2318 = vmatmul.f32.gmra.mxu0 %v2207
    %v2319 = vpop.f32.mrf.mxu0
    %v2320 = vadd.f32 %v2111, %v2319
    %2321 = vmatmul.f32.gmra.mxu0 %v2210
    %v2322 = vpop.f32.mrf.mxu0
    %v2323 = vadd.f32 %v2114, %v2322
    %2324 = vmatmul.f32.gmra.mxu0 %v2213
    %v2325 = vpop.f32.mrf.mxu0
    %v2326 = vadd.f32 %v2117, %v2325
    %2327 = vmatmul.f32.gmra.mxu0 %v2216
    %v2328 = vpop.f32.mrf.mxu0
    %v2329 = vadd.f32 %v2120, %v2328
    %2330 = vmatmul.f32.gmra.mxu0 %v2219
    %v2331 = vpop.f32.mrf.mxu0
    %v2332 = vadd.f32 %v2123, %v2331
    %2333 = vmatmul.f32.gmra.mxu0 %v2222
    %v2334 = vpop.f32.mrf.mxu0
    %v2335 = vadd.f32 %v2126, %v2334
    %2336 = vmatmul.f32.gmra.mxu0 %v2225
    %v2337 = vpop.f32.mrf.mxu0
    %v2338 = vadd.f32 %v2129, %v2337
    %2339 = vmatmul.f32.gmra.mxu0 %v2228
    %v2340 = vpop.f32.mrf.mxu0
    %v2341 = vadd.f32 %v2132, %v2340
    %2342 = vmatmul.f32.gmra.mxu0 %v2231
    %v2343 = vpop.f32.mrf.mxu0
    %v2344 = vadd.f32 %v2135, %v2343
    %2345 = vmatmul.f32.gmra.mxu0 %v2234
    %v2346 = vpop.f32.mrf.mxu0
    %v2347 = vadd.f32 %v2138, %v2346
    %2348 = vmatmul.f32.gmra.mxu0 %v2237
    %v2349 = vpop.f32.mrf.mxu0
    %v2350 = vadd.f32 %v2141, %v2349
    %2351 = vmatmul.f32.gmra.mxu0 %v2240
    %v2352 = vpop.f32.mrf.mxu0
    %v2353 = vadd.f32 %v2144, %v2352
    %2354 = vmatmul.f32.gmra.mxu0 %v2243
    %v2355 = vpop.f32.mrf.mxu0
    %v2356 = vadd.f32 %v2147, %v2355
    %2357 = vmatmul.f32.gmra.mxu0 %v2246
    %v2358 = vpop.f32.mrf.mxu0
    %v2359 = vadd.f32 %v2150, %v2358
    %2360 = vmatmul.f32.gmra.mxu0 %v2249
    %v2361 = vpop.f32.mrf.mxu0
    %v2362 = vadd.f32 %v2153, %v2361
    %2363 = vmatmul.f32.gmra.mxu0 %v2252
    %v2364 = vpop.f32.mrf.mxu0
    %v2365 = vadd.f32 %v2156, %v2364
    %2366 = vmatmul.f32.gmra.mxu0 %v2255
    %v2367 = vpop.f32.mrf.mxu0
    %v2368 = vadd.f32 %v2159, %v2367
    %2369 = vmatmul.f32.gmra.mxu0 %v2258
    %v2370 = vpop.f32.mrf.mxu0
    %v2371 = vadd.f32 %v2162, %v2370
    %2372 = vmatmul.f32.gmra.mxu0 %v2261
    %v2373 = vpop.f32.mrf.mxu0
    %v2374 = vadd.f32 %v2165, %v2373
    %2375 = vmatmul.f32.gmra.mxu0 %v2264
    %v2376 = vpop.f32.mrf.mxu0
    %v2377 = vadd.f32 %v2168, %v2376
    %2378 = vmatmul.f32.gmra.mxu0 %v2267
    %v2379 = vpop.f32.mrf.mxu0
    %v2380 = vadd.f32 %v2171, %v2379
    %2381 = vmatmul.f32.gmra.mxu0 %v2270
    %v2382 = vpop.f32.mrf.mxu0
    %v2383 = vadd.f32 %v2174, %v2382
    %2384 = vmatmul.f32.gmra.mxu0 %v2273
    %v2385 = vpop.f32.mrf.mxu0
    %v2386 = vadd.f32 %v2177, %v2385
    %2387 = vmatmul.f32.gmra.mxu0 %v2276
    %v2388 = vpop.f32.mrf.mxu0
    %v2389 = vadd.f32 %v2180, %v2388
    %2390 = vmatmul.f32.gmra.mxu0 %v2279
    %v2391 = vpop.f32.mrf.mxu0
    %v2392 = vadd.f32 %v2183, %v2391
    %2393 = vdwg.mxu0
    %v2395 = vsel %vm1975, %v1943, 0
    %v2398 = vsel %vm1975, %v1944, 0
    %v2401 = vsel %vm1975, %v1945, 0
    %v2404 = vsel %vm1975, %v1946, 0
    %v2407 = vsel %vm1975, %v1947, 0
    %v2410 = vsel %vm1975, %v1948, 0
    %v2413 = vsel %vm1975, %v1949, 0
    %v2416 = vsel %vm1975, %v1950, 0
    %v2419 = vsel %vm1975, %v1951, 0
    %v2422 = vsel %vm1975, %v1952, 0
    %v2425 = vsel %vm1975, %v1953, 0
    %v2428 = vsel %vm1975, %v1954, 0
    %v2431 = vsel %vm1975, %v1955, 0
    %v2434 = vsel %vm1975, %v1956, 0
    %v2437 = vsel %vm1975, %v1957, 0
    %v2440 = vsel %vm1975, %v1958, 0
    %v2443 = vsel %vm1975, %v1959, 0
    %v2446 = vsel %vm1975, %v1960, 0
    %v2449 = vsel %vm1975, %v1961, 0
    %v2452 = vsel %vm1975, %v1962, 0
    %v2455 = vsel %vm1975, %v1963, 0
    %v2458 = vsel %vm1975, %v1964, 0
    %v2461 = vsel %vm1975, %v1965, 0
    %v2464 = vsel %vm1975, %v1966, 0
    %v2467 = vsel %vm1975, %v1967, 0
    %v2470 = vsel %vm1975, %v1968, 0
    %v2473 = vsel %vm1975, %v1969, 0
    %v2476 = vsel %vm1975, %v1970, 0
    %v2479 = vsel %vm1975, %v1971, 0
    %v2482 = vsel %vm1975, %v1972, 0
    %v2485 = vsel %vm1975, %v1973, 0
    %v2488 = vsel %vm1975, %v1974, 0
    %2490 = vmatpush.msra.mxu0 0.0
    %2491 = vmatpush.msra.mxu0 0.0
    %2492 = vmatpush.msra.mxu0 0.0
    %2493 = vmatpush.msra.mxu0 0.0
    %2494 = vmatpush.msra.mxu0 0.0
    %2495 = vmatpush.msra.mxu0 0.0
    %2496 = vmatpush.msra.mxu0 0.0
    %2497 = vmatpush.msra.mxu0 0.0
    %2498 = vmatpush.msra.mxu0 0.0
    %2499 = vmatpush.msra.mxu0 0.0
    %2500 = vmatpush.msra.mxu0 0.0
    %2501 = vmatpush.msra.mxu0 0.0
    %2502 = vmatpush.msra.mxu0 0.0
    %2503 = vmatpush.msra.mxu0 0.0
    %2504 = vmatpush.msra.mxu0 0.0
    %2505 = vmatpush.msra.mxu0 %v1620
    %2506 = vmatmul.f32.gmra.mxu0 %v2395
    %v2507 = vpop.f32.mrf.mxu0
    %v2508 = vadd.f32 0.0, %v2507
    %2509 = vmatmul.f32.gmra.mxu0 %v2398
    %v2510 = vpop.f32.mrf.mxu0
    %v2511 = vadd.f32 0.0, %v2510
    %2512 = vmatmul.f32.gmra.mxu0 %v2401
    %v2513 = vpop.f32.mrf.mxu0
    %v2514 = vadd.f32 0.0, %v2513
    %2515 = vmatmul.f32.gmra.mxu0 %v2404
    %v2516 = vpop.f32.mrf.mxu0
    %v2517 = vadd.f32 0.0, %v2516
    %2518 = vmatmul.f32.gmra.mxu0 %v2407
    %v2519 = vpop.f32.mrf.mxu0
    %v2520 = vadd.f32 0.0, %v2519
    %2521 = vmatmul.f32.gmra.mxu0 %v2410
    %v2522 = vpop.f32.mrf.mxu0
    %v2523 = vadd.f32 0.0, %v2522
    %2524 = vmatmul.f32.gmra.mxu0 %v2413
    %v2525 = vpop.f32.mrf.mxu0
    %v2526 = vadd.f32 0.0, %v2525
    %2527 = vmatmul.f32.gmra.mxu0 %v2416
    %v2528 = vpop.f32.mrf.mxu0
    %v2529 = vadd.f32 0.0, %v2528
    %2530 = vmatmul.f32.gmra.mxu0 %v2419
    %v2531 = vpop.f32.mrf.mxu0
    %v2532 = vadd.f32 0.0, %v2531
    %2533 = vmatmul.f32.gmra.mxu0 %v2422
    %v2534 = vpop.f32.mrf.mxu0
    %v2535 = vadd.f32 0.0, %v2534
    %2536 = vmatmul.f32.gmra.mxu0 %v2425
    %v2537 = vpop.f32.mrf.mxu0
    %v2538 = vadd.f32 0.0, %v2537
    %2539 = vmatmul.f32.gmra.mxu0 %v2428
    %v2540 = vpop.f32.mrf.mxu0
    %v2541 = vadd.f32 0.0, %v2540
    %2542 = vmatmul.f32.gmra.mxu0 %v2431
    %v2543 = vpop.f32.mrf.mxu0
    %v2544 = vadd.f32 0.0, %v2543
    %2545 = vmatmul.f32.gmra.mxu0 %v2434
    %v2546 = vpop.f32.mrf.mxu0
    %v2547 = vadd.f32 0.0, %v2546
    %2548 = vmatmul.f32.gmra.mxu0 %v2437
    %v2549 = vpop.f32.mrf.mxu0
    %v2550 = vadd.f32 0.0, %v2549
    %2551 = vmatmul.f32.gmra.mxu0 %v2440
    %v2552 = vpop.f32.mrf.mxu0
    %v2553 = vadd.f32 0.0, %v2552
    %2554 = vmatmul.f32.gmra.mxu0 %v2443
    %v2555 = vpop.f32.mrf.mxu0
    %v2556 = vadd.f32 0.0, %v2555
    %2557 = vmatmul.f32.gmra.mxu0 %v2446
    %v2558 = vpop.f32.mrf.mxu0
    %v2559 = vadd.f32 0.0, %v2558
    %2560 = vmatmul.f32.gmra.mxu0 %v2449
    %v2561 = vpop.f32.mrf.mxu0
    %v2562 = vadd.f32 0.0, %v2561
    %2563 = vmatmul.f32.gmra.mxu0 %v2452
    %v2564 = vpop.f32.mrf.mxu0
    %v2565 = vadd.f32 0.0, %v2564
    %2566 = vmatmul.f32.gmra.mxu0 %v2455
    %v2567 = vpop.f32.mrf.mxu0
    %v2568 = vadd.f32 0.0, %v2567
    %2569 = vmatmul.f32.gmra.mxu0 %v2458
    %v2570 = vpop.f32.mrf.mxu0
    %v2571 = vadd.f32 0.0, %v2570
    %2572 = vmatmul.f32.gmra.mxu0 %v2461
    %v2573 = vpop.f32.mrf.mxu0
    %v2574 = vadd.f32 0.0, %v2573
    %2575 = vmatmul.f32.gmra.mxu0 %v2464
    %v2576 = vpop.f32.mrf.mxu0
    %v2577 = vadd.f32 0.0, %v2576
    %2578 = vmatmul.f32.gmra.mxu0 %v2467
    %v2579 = vpop.f32.mrf.mxu0
    %v2580 = vadd.f32 0.0, %v2579
    %2581 = vmatmul.f32.gmra.mxu0 %v2470
    %v2582 = vpop.f32.mrf.mxu0
    %v2583 = vadd.f32 0.0, %v2582
    %2584 = vmatmul.f32.gmra.mxu0 %v2473
    %v2585 = vpop.f32.mrf.mxu0
    %v2586 = vadd.f32 0.0, %v2585
    %2587 = vmatmul.f32.gmra.mxu0 %v2476
    %v2588 = vpop.f32.mrf.mxu0
    %v2589 = vadd.f32 0.0, %v2588
    %2590 = vmatmul.f32.gmra.mxu0 %v2479
    %v2591 = vpop.f32.mrf.mxu0
    %v2592 = vadd.f32 0.0, %v2591
    %2593 = vmatmul.f32.gmra.mxu0 %v2482
    %v2594 = vpop.f32.mrf.mxu0
    %v2595 = vadd.f32 0.0, %v2594
    %2596 = vmatmul.f32.gmra.mxu0 %v2485
    %v2597 = vpop.f32.mrf.mxu0
    %v2598 = vadd.f32 0.0, %v2597
    %2599 = vmatmul.f32.gmra.mxu0 %v2488
    %v2600 = vpop.f32.mrf.mxu0
    %v2601 = vadd.f32 0.0, %v2600
    %2602 = vdwg.mxu0
    %v2603 = vadd.f32 %v2299, %v2508
    %v2604 = vadd.f32 %v2302, %v2511
    %v2605 = vadd.f32 %v2305, %v2514
    %v2606 = vadd.f32 %v2308, %v2517
    %v2607 = vadd.f32 %v2311, %v2520
    %v2608 = vadd.f32 %v2314, %v2523
    %v2609 = vadd.f32 %v2317, %v2526
    %v2610 = vadd.f32 %v2320, %v2529
    %v2611 = vadd.f32 %v2323, %v2532
    %v2612 = vadd.f32 %v2326, %v2535
    %v2613 = vadd.f32 %v2329, %v2538
    %v2614 = vadd.f32 %v2332, %v2541
    %v2615 = vadd.f32 %v2335, %v2544
    %v2616 = vadd.f32 %v2338, %v2547
    %v2617 = vadd.f32 %v2341, %v2550
    %v2618 = vadd.f32 %v2344, %v2553
    %v2619 = vadd.f32 %v2347, %v2556
    %v2620 = vadd.f32 %v2350, %v2559
    %v2621 = vadd.f32 %v2353, %v2562
    %v2622 = vadd.f32 %v2356, %v2565
    %v2623 = vadd.f32 %v2359, %v2568
    %v2624 = vadd.f32 %v2362, %v2571
    %v2625 = vadd.f32 %v2365, %v2574
    %v2626 = vadd.f32 %v2368, %v2577
    %v2627 = vadd.f32 %v2371, %v2580
    %v2628 = vadd.f32 %v2374, %v2583
    %v2629 = vadd.f32 %v2377, %v2586
    %v2630 = vadd.f32 %v2380, %v2589
    %v2631 = vadd.f32 %v2383, %v2592
    %v2632 = vadd.f32 %v2386, %v2595
    %v2633 = vadd.f32 %v2389, %v2598
    %v2634 = vadd.f32 %v2392, %v2601
    %v2635 = vld [vmem:[%s5] sm:$0x1]
    %v2637 = vperm.slane %v2635, 0
    %v2639 = vadd.f32 %v2603, %v2637
    %v2640 = vadd.f32 %v2604, %v2637
    %v2641 = vadd.f32 %v2605, %v2637
    %v2642 = vadd.f32 %v2606, %v2637
    %v2643 = vadd.f32 %v2607, %v2637
    %v2644 = vadd.f32 %v2608, %v2637
    %v2645 = vadd.f32 %v2609, %v2637
    %v2646 = vadd.f32 %v2610, %v2637
    %v2647 = vadd.f32 %v2611, %v2637
    %v2648 = vadd.f32 %v2612, %v2637
    %v2649 = vadd.f32 %v2613, %v2637
    %v2650 = vadd.f32 %v2614, %v2637
    %v2651 = vadd.f32 %v2615, %v2637
    %v2652 = vadd.f32 %v2616, %v2637
    %v2653 = vadd.f32 %v2617, %v2637
    %v2654 = vadd.f32 %v2618, %v2637
    %v2655 = vadd.f32 %v2619, %v2637
    %v2656 = vadd.f32 %v2620, %v2637
    %v2657 = vadd.f32 %v2621, %v2637
    %v2658 = vadd.f32 %v2622, %v2637
    %v2659 = vadd.f32 %v2623, %v2637
    %v2660 = vadd.f32 %v2624, %v2637
    %v2661 = vadd.f32 %v2625, %v2637
    %v2662 = vadd.f32 %v2626, %v2637
    %v2663 = vadd.f32 %v2627, %v2637
    %v2664 = vadd.f32 %v2628, %v2637
    %v2665 = vadd.f32 %v2629, %v2637
    %v2666 = vadd.f32 %v2630, %v2637
    %v2667 = vadd.f32 %v2631, %v2637
    %v2668 = vadd.f32 %v2632, %v2637
    %v2669 = vadd.f32 %v2633, %v2637
    %v2670 = vadd.f32 %v2634, %v2637
    %v2671 = vmax.f32 %v2639, 0.0
    %v2672 = vmax.f32 %v2640, 0.0
    %v2673 = vmax.f32 %v2641, 0.0
    %v2674 = vmax.f32 %v2642, 0.0
    %v2675 = vmax.f32 %v2643, 0.0
    %v2676 = vmax.f32 %v2644, 0.0
    %v2677 = vmax.f32 %v2645, 0.0
    %v2678 = vmax.f32 %v2646, 0.0
    %v2679 = vmax.f32 %v2647, 0.0
    %v2680 = vmax.f32 %v2648, 0.0
    %v2681 = vmax.f32 %v2649, 0.0
    %v2682 = vmax.f32 %v2650, 0.0
    %v2683 = vmax.f32 %v2651, 0.0
    %v2684 = vmax.f32 %v2652, 0.0
    %v2685 = vmax.f32 %v2653, 0.0
    %v2686 = vmax.f32 %v2654, 0.0
    %v2687 = vmax.f32 %v2655, 0.0
    %v2688 = vmax.f32 %v2656, 0.0
    %v2689 = vmax.f32 %v2657, 0.0
    %v2690 = vmax.f32 %v2658, 0.0
    %v2691 = vmax.f32 %v2659, 0.0
    %v2692 = vmax.f32 %v2660, 0.0
    %v2693 = vmax.f32 %v2661, 0.0
    %v2694 = vmax.f32 %v2662, 0.0
    %v2695 = vmax.f32 %v2663, 0.0
    %v2696 = vmax.f32 %v2664, 0.0
    %v2697 = vmax.f32 %v2665, 0.0
    %v2698 = vmax.f32 %v2666, 0.0
    %v2699 = vmax.f32 %v2667, 0.0
    %v2700 = vmax.f32 %v2668, 0.0
    %v2701 = vmax.f32 %v2669, 0.0
    %v2702 = vmax.f32 %v2670, 0.0
    %v2703 = vrot.slane %v2671, 2
    %v2704 = vrot.slane %v2672, 2
    %v2705 = vrot.slane %v2673, 2
    %v2706 = vrot.slane %v2674, 2
    %v2707 = vrot.slane %v2675, 2
    %v2708 = vrot.slane %v2676, 2
    %v2709 = vrot.slane %v2677, 2
    %v2710 = vrot.slane %v2678, 2
    %v2711 = vrot.slane %v2679, 2
    %v2712 = vrot.slane %v2680, 2
    %v2713 = vrot.slane %v2681, 2
    %v2714 = vrot.slane %v2682, 2
    %v2715 = vrot.slane %v2683, 2
    %v2716 = vrot.slane %v2684, 2
    %v2717 = vrot.slane %v2685, 2
    %v2718 = vrot.slane %v2686, 2
    %v2719 = vrot.slane %v2687, 2
    %v2720 = vrot.slane %v2688, 2
    %v2721 = vrot.slane %v2689, 2
    %v2722 = vrot.slane %v2690, 2
    %v2723 = vrot.slane %v2691, 2
    %v2724 = vrot.slane %v2692, 2
    %v2725 = vrot.slane %v2693, 2
    %v2726 = vrot.slane %v2694, 2
    %v2727 = vrot.slane %v2695, 2
    %v2728 = vrot.slane %v2696, 2
    %v2729 = vrot.slane %v2697, 2
    %v2730 = vrot.slane %v2698, 2
    %v2731 = vrot.slane %v2699, 2
    %v2732 = vrot.slane %v2700, 2
    %v2733 = vrot.slane %v2701, 2
    %v2734 = vrot.slane %v2702, 2
    %v2735 = vsel %vm1846, %v2733, %v2734
    %v2736 = vsel %vm1846, %v2732, %v2733
    %v2737 = vsel %vm1846, %v2731, %v2732
    %v2738 = vsel %vm1846, %v2730, %v2731
    %v2739 = vsel %vm1846, %v2729, %v2730
    %v2740 = vsel %vm1846, %v2728, %v2729
    %v2741 = vsel %vm1846, %v2727, %v2728
    %v2742 = vsel %vm1846, %v2726, %v2727
    %v2743 = vsel %vm1846, %v2725, %v2726
    %v2744 = vsel %vm1846, %v2724, %v2725
    %v2745 = vsel %vm1846, %v2723, %v2724
    %v2746 = vsel %vm1846, %v2722, %v2723
    %v2747 = vsel %vm1846, %v2721, %v2722
    %v2748 = vsel %vm1846, %v2720, %v2721
    %v2749 = vsel %vm1846, %v2719, %v2720
    %v2750 = vsel %vm1846, %v2718, %v2719
    %v2751 = vsel %vm1846, %v2717, %v2718
    %v2752 = vsel %vm1846, %v2716, %v2717
    %v2753 = vsel %vm1846, %v2715, %v2716
    %v2754 = vsel %vm1846, %v2714, %v2715
    %v2755 = vsel %vm1846, %v2713, %v2714
    %v2756 = vsel %vm1846, %v2712, %v2713
    %v2757 = vsel %vm1846, %v2711, %v2712
    %v2758 = vsel %vm1846, %v2710, %v2711
    %v2759 = vsel %vm1846, %v2709, %v2710
    %v2760 = vsel %vm1846, %v2708, %v2709
    %v2761 = vsel %vm1846, %v2707, %v2708
    %v2762 = vsel %vm1846, %v2706, %v2707
    %v2763 = vsel %vm1846, %v2705, %v2706
    %v2764 = vsel %vm1846, %v2704, %v2705
    %v2765 = vsel %vm1846, %v2703, %v2704
    %v2766 = vsel %vm1846, %v2734, %v2703
    %v2767 = vmax.f32 %v2671, %v2765
    %v2768 = vmax.f32 %v2672, %v2764
    %v2769 = vmax.f32 %v2673, %v2763
    %v2770 = vmax.f32 %v2674, %v2762
    %v2771 = vmax.f32 %v2675, %v2761
    %v2772 = vmax.f32 %v2676, %v2760
    %v2773 = vmax.f32 %v2677, %v2759
    %v2774 = vmax.f32 %v2678, %v2758
    %v2775 = vmax.f32 %v2679, %v2757
    %v2776 = vmax.f32 %v2680, %v2756
    %v2777 = vmax.f32 %v2681, %v2755
    %v2778 = vmax.f32 %v2682, %v2754
    %v2779 = vmax.f32 %v2683, %v2753
    %v2780 = vmax.f32 %v2684, %v2752
    %v2781 = vmax.f32 %v2685, %v2751
    %v2782 = vmax.f32 %v2686, %v2750
    %v2783 = vmax.f32 %v2687, %v2749
    %v2784 = vmax.f32 %v2688, %v2748
    %v2785 = vmax.f32 %v2689, %v2747
    %v2786 = vmax.f32 %v2690, %v2746
    %v2787 = vmax.f32 %v2691, %v2745
    %v2788 = vmax.f32 %v2692, %v2744
    %v2789 = vmax.f32 %v2693, %v2743
    %v2790 = vmax.f32 %v2694, %v2742
    %v2791 = vmax.f32 %v2695, %v2741
    %v2792 = vmax.f32 %v2696, %v2740
    %v2793 = vmax.f32 %v2697, %v2739
    %v2794 = vmax.f32 %v2698, %v2738
    %v2795 = vmax.f32 %v2699, %v2737
    %v2796 = vmax.f32 %v2700, %v2736
    %v2797 = vmax.f32 %v2701, %v2735
    %v2798 = vmax.f32 %v2702, %v2766
    %v2799 = vld [vmem:[%s6] sm:$0xff]
    %v2800 = vld [vmem:[%s6 + $0x8] sm:$0xff]
    %v2801 = vld [vmem:[%s6 + $0x10] sm:$0xff]
    %v2802 = vld [vmem:[%s6 + $0x18] sm:$0xff]
    %v2803 = vld [vmem:[%s6 + $0x20] sm:$0xff]
    %v2804 = vld [vmem:[%s6 + $0x28] sm:$0xff]
    %v2805 = vrot.slane %v2767, 4
    %v2806 = vrot.slane %v2768, 4
    %v2807 = vrot.slane %v2769, 4
    %v2808 = vrot.slane %v2770, 4
    %v2809 = vrot.slane %v2771, 4
    %v2810 = vrot.slane %v2772, 4
    %v2811 = vrot.slane %v2773, 4
    %v2812 = vrot.slane %v2774, 4
    %v2813 = vrot.slane %v2775, 4
    %v2814 = vrot.slane %v2776, 4
    %v2815 = vrot.slane %v2777, 4
    %v2816 = vrot.slane %v2778, 4
    %v2817 = vrot.slane %v2779, 4
    %v2818 = vrot.slane %v2780, 4
    %v2819 = vrot.slane %v2781, 4
    %v2820 = vrot.slane %v2782, 4
    %v2821 = vrot.slane %v2783, 4
    %v2822 = vrot.slane %v2784, 4
    %v2823 = vrot.slane %v2785, 4
    %v2824 = vrot.slane %v2786, 4
    %v2825 = vrot.slane %v2787, 4
    %v2826 = vrot.slane %v2788, 4
    %v2827 = vrot.slane %v2789, 4
    %v2828 = vrot.slane %v2790, 4
    %v2829 = vrot.slane %v2791, 4
    %v2830 = vrot.slane %v2792, 4
    %v2831 = vrot.slane %v2793, 4
    %v2832 = vrot.slane %v2794, 4
    %v2833 = vrot.slane %v2795, 4
    %v2834 = vrot.slane %v2796, 4
    %v2835 = vrot.slane %v2797, 4
    %v2836 = vrot.slane %v2798, 4
    %vm2837 = vcmp.lt.s32.totalorder %v109, 4
    %v2838 = vsel %vm2837, %v2835, %v2836
    %v2839 = vsel %vm2837, %v2834, %v2835
    %v2840 = vsel %vm2837, %v2833, %v2834
    %v2841 = vsel %vm2837, %v2832, %v2833
    %v2842 = vsel %vm2837, %v2831, %v2832
    %v2843 = vsel %vm2837, %v2830, %v2831
    %v2844 = vsel %vm2837, %v2829, %v2830
    %v2845 = vsel %vm2837, %v2828, %v2829
    %v2846 = vsel %vm2837, %v2827, %v2828
    %v2847 = vsel %vm2837, %v2826, %v2827
    %v2848 = vsel %vm2837, %v2825, %v2826
    %v2849 = vsel %vm2837, %v2824, %v2825
    %v2850 = vsel %vm2837, %v2823, %v2824
    %v2851 = vsel %vm2837, %v2822, %v2823
    %v2852 = vsel %vm2837, %v2821, %v2822
    %v2853 = vsel %vm2837, %v2820, %v2821
    %v2854 = vsel %vm2837, %v2819, %v2820
    %v2855 = vsel %vm2837, %v2818, %v2819
    %v2856 = vsel %vm2837, %v2817, %v2818
    %v2857 = vsel %vm2837, %v2816, %v2817
    %v2858 = vsel %vm2837, %v2815, %v2816
    %v2859 = vsel %vm2837, %v2814, %v2815
    %v2860 = vsel %vm2837, %v2813, %v2814
    %v2861 = vsel %vm2837, %v2812, %v2813
    %v2862 = vsel %vm2837, %v2811, %v2812
    %v2863 = vsel %vm2837, %v2810, %v2811
    %v2864 = vsel %vm2837, %v2809, %v2810
    %v2865 = vsel %vm2837, %v2808, %v2809
    %v2866 = vsel %vm2837, %v2807, %v2808
    %v2867 = vsel %vm2837, %v2806, %v2807
    %v2868 = vsel %vm2837, %v2805, %v2806
    %v2869 = vsel %vm2837, %v2836, %v2805
    %v2870 = vsel %vm1718, %v2869, 0.0
    %v2871 = vsel %vm1719, %v2868, 0.0
    %v2872 = vsel %vm1720, %v2867, 0.0
    %v2873 = vsel %vm1721, %v2866, 0.0
    %v2874 = vsel %vm1722, %v2865, 0.0
    %v2875 = vsel %vm1723, %v2864, 0.0
    %v2876 = vsel %vm1724, %v2863, 0.0
    %v2877 = vsel %vm1725, %v2862, 0.0
    %v2878 = vsel %vm1726, %v2861, 0.0
    %v2879 = vsel %vm1727, %v2860, 0.0
    %v2880 = vsel %vm1728, %v2859, 0.0
    %v2881 = vsel %vm1729, %v2858, 0.0
    %v2882 = vsel %vm1730, %v2857, 0.0
    %v2883 = vsel %vm1731, %v2856, 0.0
    %v2884 = vsel %vm1732, %v2855, 0.0
    %v2885 = vsel %vm1733, %v2854, 0.0
    %v2886 = vsel %vm1734, %v2853, 0.0
    %v2887 = vsel %vm1735, %v2852, 0.0
    %v2888 = vsel %vm1736, %v2851, 0.0
    %v2889 = vsel %vm1737, %v2850, 0.0
    %v2890 = vsel %vm1738, %v2849, 0.0
    %v2891 = vsel %vm1739, %v2848, 0.0
    %v2892 = vsel %vm1740, %v2847, 0.0
    %v2893 = vsel %vm1741, %v2846, 0.0
    %v2894 = vsel %vm1742, %v2845, 0.0
    %v2895 = vsel %vm1743, %v2844, 0.0
    %v2896 = vsel %vm1744, %v2843, 0.0
    %v2897 = vsel %vm1745, %v2842, 0.0
    %v2898 = vsel %vm1746, %v2841, 0.0
    %v2899 = vsel %vm1747, %v2840, 0.0
    %v2900 = vsel %vm1748, %v2839, 0.0
    %v2901 = vsel %vm1749, %v2838, 0.0
    %vm2902 = vcmp.ne.s32.totalorder %v493, 48
    %vm2903 = vcmp.ne.s32.totalorder %v494, 48
    %vm2904 = vcmp.ne.s32.totalorder %v495, 48
    %vm2905 = vcmp.ne.s32.totalorder %v496, 48
    %vm2906 = vcmp.ne.s32.totalorder %v497, 48
    %vm2907 = vcmp.ne.s32.totalorder %v498, 48
    %vm2908 = vcmp.ne.s32.totalorder %v499, 48
    %vm2909 = vcmp.ne.s32.totalorder %v500, 48
    %vm2910 = vcmp.ne.s32.totalorder %v501, 48
    %vm2911 = vcmp.ne.s32.totalorder %v502, 48
    %vm2912 = vcmp.ne.s32.totalorder %v503, 48
    %vm2913 = vcmp.ne.s32.totalorder %v504, 48
    %vm2914 = vcmp.ne.s32.totalorder %v505, 48
    %vm2915 = vcmp.ne.s32.totalorder %v506, 48
    %vm2916 = vcmp.ne.s32.totalorder %v507, 48
    %vm2917 = vcmp.ne.s32.totalorder %v508, 48
    %vm2918 = vcmp.ne.s32.totalorder %v509, 48
    %vm2919 = vcmp.ne.s32.totalorder %v510, 48
    %vm2920 = vcmp.ne.s32.totalorder %v511, 48
    %vm2921 = vcmp.ne.s32.totalorder %v512, 48
    %vm2922 = vcmp.ne.s32.totalorder %v513, 48
    %vm2923 = vcmp.ne.s32.totalorder %v514, 48
    %vm2924 = vcmp.ne.s32.totalorder %v515, 48
    %vm2925 = vcmp.ne.s32.totalorder %v516, 48
    %vm2926 = vcmp.ne.s32.totalorder %v517, 48
    %vm2927 = vcmp.ne.s32.totalorder %v518, 48
    %vm2928 = vcmp.ne.s32.totalorder %v519, 48
    %vm2929 = vcmp.ne.s32.totalorder %v520, 48
    %vm2930 = vcmp.ne.s32.totalorder %v521, 48
    %vm2931 = vcmp.ne.s32.totalorder %v522, 48
    %vm2932 = vcmp.ne.s32.totalorder %v523, 48
    %vm2933 = vcmp.ne.s32.totalorder %v524, 48
    %v2934 = vsel %vm2902, 1, 0
    %v2935 = vsel %vm2903, 1, 0
    %v2936 = vsel %vm2904, 1, 0
    %v2937 = vsel %vm2905, 1, 0
    %v2938 = vsel %vm2906, 1, 0
    %v2939 = vsel %vm2907, 1, 0
    %v2940 = vsel %vm2908, 1, 0
    %v2941 = vsel %vm2909, 1, 0
    %v2942 = vsel %vm2910, 1, 0
    %v2943 = vsel %vm2911, 1, 0
    %v2944 = vsel %vm2912, 1, 0
    %v2945 = vsel %vm2913, 1, 0
    %v2946 = vsel %vm2914, 1, 0
    %v2947 = vsel %vm2915, 1, 0
    %v2948 = vsel %vm2916, 1, 0
    %v2949 = vsel %vm2917, 1, 0
    %v2950 = vsel %vm2918, 1, 0
    %v2951 = vsel %vm2919, 1, 0
    %v2952 = vsel %vm2920, 1, 0
    %v2953 = vsel %vm2921, 1, 0
    %v2954 = vsel %vm2922, 1, 0
    %v2955 = vsel %vm2923, 1, 0
    %v2956 = vsel %vm2924, 1, 0
    %v2957 = vsel %vm2925, 1, 0
    %v2958 = vsel %vm2926, 1, 0
    %v2959 = vsel %vm2927, 1, 0
    %v2960 = vsel %vm2928, 1, 0
    %v2961 = vsel %vm2929, 1, 0
    %v2962 = vsel %vm2930, 1, 0
    %v2963 = vsel %vm2931, 1, 0
    %v2964 = vsel %vm2932, 1, 0
    %v2965 = vsel %vm2933, 1, 0
    %vm2966 = vcmp.eq.s32.totalorder %v2934, 1
    %vm2967 = vcmp.eq.s32.totalorder %v2935, 1
    %vm2968 = vcmp.eq.s32.totalorder %v2936, 1
    %vm2969 = vcmp.eq.s32.totalorder %v2937, 1
    %vm2970 = vcmp.eq.s32.totalorder %v2938, 1
    %vm2971 = vcmp.eq.s32.totalorder %v2939, 1
    %vm2972 = vcmp.eq.s32.totalorder %v2940, 1
    %vm2973 = vcmp.eq.s32.totalorder %v2941, 1
    %vm2974 = vcmp.eq.s32.totalorder %v2942, 1
    %vm2975 = vcmp.eq.s32.totalorder %v2943, 1
    %vm2976 = vcmp.eq.s32.totalorder %v2944, 1
    %vm2977 = vcmp.eq.s32.totalorder %v2945, 1
    %vm2978 = vcmp.eq.s32.totalorder %v2946, 1
    %vm2979 = vcmp.eq.s32.totalorder %v2947, 1
    %vm2980 = vcmp.eq.s32.totalorder %v2948, 1
    %vm2981 = vcmp.eq.s32.totalorder %v2949, 1
    %vm2982 = vcmp.eq.s32.totalorder %v2950, 1
    %vm2983 = vcmp.eq.s32.totalorder %v2951, 1
    %vm2984 = vcmp.eq.s32.totalorder %v2952, 1
    %vm2985 = vcmp.eq.s32.totalorder %v2953, 1
    %vm2986 = vcmp.eq.s32.totalorder %v2954, 1
    %vm2987 = vcmp.eq.s32.totalorder %v2955, 1
    %vm2988 = vcmp.eq.s32.totalorder %v2956, 1
    %vm2989 = vcmp.eq.s32.totalorder %v2957, 1
    %vm2990 = vcmp.eq.s32.totalorder %v2958, 1
    %vm2991 = vcmp.eq.s32.totalorder %v2959, 1
    %vm2992 = vcmp.eq.s32.totalorder %v2960, 1
    %vm2993 = vcmp.eq.s32.totalorder %v2961, 1
    %vm2994 = vcmp.eq.s32.totalorder %v2962, 1
    %vm2995 = vcmp.eq.s32.totalorder %v2963, 1
    %vm2996 = vcmp.eq.s32.totalorder %v2964, 1
    %vm2997 = vcmp.eq.s32.totalorder %v2965, 1
    %v2998 = vsel %vm2966, %v2868, 0.0
    %v2999 = vsel %vm2967, %v2867, 0.0
    %v3000 = vsel %vm2968, %v2866, 0.0
    %v3001 = vsel %vm2969, %v2865, 0.0
    %v3002 = vsel %vm2970, %v2864, 0.0
    %v3003 = vsel %vm2971, %v2863, 0.0
    %v3004 = vsel %vm2972, %v2862, 0.0
    %v3005 = vsel %vm2973, %v2861, 0.0
    %v3006 = vsel %vm2974, %v2860, 0.0
    %v3007 = vsel %vm2975, %v2859, 0.0
    %v3008 = vsel %vm2976, %v2858, 0.0
    %v3009 = vsel %vm2977, %v2857, 0.0
    %v3010 = vsel %vm2978, %v2856, 0.0
    %v3011 = vsel %vm2979, %v2855, 0.0
    %v3012 = vsel %vm2980, %v2854, 0.0
    %v3013 = vsel %vm2981, %v2853, 0.0
    %v3014 = vsel %vm2982, %v2852, 0.0
    %v3015 = vsel %vm2983, %v2851, 0.0
    %v3016 = vsel %vm2984, %v2850, 0.0
    %v3017 = vsel %vm2985, %v2849, 0.0
    %v3018 = vsel %vm2986, %v2848, 0.0
    %v3019 = vsel %vm2987, %v2847, 0.0
    %v3020 = vsel %vm2988, %v2846, 0.0
    %v3021 = vsel %vm2989, %v2845, 0.0
    %v3022 = vsel %vm2990, %v2844, 0.0
    %v3023 = vsel %vm2991, %v2843, 0.0
    %v3024 = vsel %vm2992, %v2842, 0.0
    %v3025 = vsel %vm2993, %v2841, 0.0
    %v3026 = vsel %vm2994, %v2840, 0.0
    %v3027 = vsel %vm2995, %v2839, 0.0
    %v3028 = vsel %vm2996, %v2838, 0.0
    %v3029 = vsel %vm2997, %v2869, 0.0
    %vm3030 = vcmask 130048
    %v3032 = vsel %vm3030, %v2767, 0
    %v3035 = vsel %vm3030, %v2768, 0
    %v3038 = vsel %vm3030, %v2769, 0
    %v3041 = vsel %vm3030, %v2770, 0
    %v3044 = vsel %vm3030, %v2771, 0
    %v3047 = vsel %vm3030, %v2772, 0
    %v3050 = vsel %vm3030, %v2773, 0
    %v3053 = vsel %vm3030, %v2774, 0
    %v3056 = vsel %vm3030, %v2775, 0
    %v3059 = vsel %vm3030, %v2776, 0
    %v3062 = vsel %vm3030, %v2777, 0
    %v3065 = vsel %vm3030, %v2778, 0
    %v3068 = vsel %vm3030, %v2779, 0
    %v3071 = vsel %vm3030, %v2780, 0
    %v3074 = vsel %vm3030, %v2781, 0
    %v3077 = vsel %vm3030, %v2782, 0
    %v3080 = vsel %vm3030, %v2783, 0
    %v3083 = vsel %vm3030, %v2784, 0
    %v3086 = vsel %vm3030, %v2785, 0
    %v3089 = vsel %vm3030, %v2786, 0
    %v3092 = vsel %vm3030, %v2787, 0
    %v3095 = vsel %vm3030, %v2788, 0
    %v3098 = vsel %vm3030, %v2789, 0
    %v3101 = vsel %vm3030, %v2790, 0
    %v3104 = vsel %vm3030, %v2791, 0
    %v3107 = vsel %vm3030, %v2792, 0
    %v3110 = vsel %vm3030, %v2793, 0
    %v3113 = vsel %vm3030, %v2794, 0
    %v3116 = vsel %vm3030, %v2795, 0
    %v3119 = vsel %vm3030, %v2796, 0
    %v3122 = vsel %vm3030, %v2797, 0
    %v3125 = vsel %vm3030, %v2798, 0
    %3127 = vmatpush.msra.mxu0 0.0
    %3128 = vmatpush.msra.mxu0 0.0
    %3129 = vmatpush.msra.mxu0 0.0
    %3130 = vmatpush.msra.mxu0 0.0
    %3131 = vmatpush.msra.mxu0 0.0
    %3132 = vmatpush.msra.mxu0 0.0
    %3133 = vmatpush.msra.mxu0 0.0
    %3134 = vmatpush.msra.mxu0 0.0
    %3135 = vmatpush.msra.mxu0 0.0
    %3136 = vmatpush.msra.mxu0 0.0
    %3137 = vmatpush.msra.mxu0 0.0
    %3138 = vmatpush.msra.mxu0 0.0
    %3139 = vmatpush.msra.mxu0 0.0
    %3140 = vmatpush.msra.mxu0 0.0
    %3141 = vmatpush.msra.mxu0 %v2802
    %3142 = vmatpush.msra.mxu0 %v2801
    %3143 = vmatmul.f32.gmra.mxu0 %v3032
    %v3144 = vpop.f32.mrf.mxu0
    %v3145 = vadd.f32 0.0, %v3144
    %3146 = vmatmul.f32.gmra.mxu0 %v3035
    %v3147 = vpop.f32.mrf.mxu0
    %v3148 = vadd.f32 0.0, %v3147
    %3149 = vmatmul.f32.gmra.mxu0 %v3038
    %v3150 = vpop.f32.mrf.mxu0
    %v3151 = vadd.f32 0.0, %v3150
    %3152 = vmatmul.f32.gmra.mxu0 %v3041
    %v3153 = vpop.f32.mrf.mxu0
    %v3154 = vadd.f32 0.0, %v3153
    %3155 = vmatmul.f32.gmra.mxu0 %v3044
    %v3156 = vpop.f32.mrf.mxu0
    %v3157 = vadd.f32 0.0, %v3156
    %3158 = vmatmul.f32.gmra.mxu0 %v3047
    %v3159 = vpop.f32.mrf.mxu0
    %v3160 = vadd.f32 0.0, %v3159
    %3161 = vmatmul.f32.gmra.mxu0 %v3050
    %v3162 = vpop.f32.mrf.mxu0
    %v3163 = vadd.f32 0.0, %v3162
    %3164 = vmatmul.f32.gmra.mxu0 %v3053
    %v3165 = vpop.f32.mrf.mxu0
    %v3166 = vadd.f32 0.0, %v3165
    %3167 = vmatmul.f32.gmra.mxu0 %v3056
    %v3168 = vpop.f32.mrf.mxu0
    %v3169 = vadd.f32 0.0, %v3168
    %3170 = vmatmul.f32.gmra.mxu0 %v3059
    %v3171 = vpop.f32.mrf.mxu0
    %v3172 = vadd.f32 0.0, %v3171
    %3173 = vmatmul.f32.gmra.mxu0 %v3062
    %v3174 = vpop.f32.mrf.mxu0
    %v3175 = vadd.f32 0.0, %v3174
    %3176 = vmatmul.f32.gmra.mxu0 %v3065
    %v3177 = vpop.f32.mrf.mxu0
    %v3178 = vadd.f32 0.0, %v3177
    %3179 = vmatmul.f32.gmra.mxu0 %v3068
    %v3180 = vpop.f32.mrf.mxu0
    %v3181 = vadd.f32 0.0, %v3180
    %3182 = vmatmul.f32.gmra.mxu0 %v3071
    %v3183 = vpop.f32.mrf.mxu0
    %v3184 = vadd.f32 0.0, %v3183
    %3185 = vmatmul.f32.gmra.mxu0 %v3074
    %v3186 = vpop.f32.mrf.mxu0
    %v3187 = vadd.f32 0.0, %v3186
    %3188 = vmatmul.f32.gmra.mxu0 %v3077
    %v3189 = vpop.f32.mrf.mxu0
    %v3190 = vadd.f32 0.0, %v3189
    %3191 = vmatmul.f32.gmra.mxu0 %v3080
    %v3192 = vpop.f32.mrf.mxu0
    %v3193 = vadd.f32 0.0, %v3192
    %3194 = vmatmul.f32.gmra.mxu0 %v3083
    %v3195 = vpop.f32.mrf.mxu0
    %v3196 = vadd.f32 0.0, %v3195
    %3197 = vmatmul.f32.gmra.mxu0 %v3086
    %v3198 = vpop.f32.mrf.mxu0
    %v3199 = vadd.f32 0.0, %v3198
    %3200 = vmatmul.f32.gmra.mxu0 %v3089
    %v3201 = vpop.f32.mrf.mxu0
    %v3202 = vadd.f32 0.0, %v3201
    %3203 = vmatmul.f32.gmra.mxu0 %v3092
    %v3204 = vpop.f32.mrf.mxu0
    %v3205 = vadd.f32 0.0, %v3204
    %3206 = vmatmul.f32.gmra.mxu0 %v3095
    %v3207 = vpop.f32.mrf.mxu0
    %v3208 = vadd.f32 0.0, %v3207
    %3209 = vmatmul.f32.gmra.mxu0 %v3098
    %v3210 = vpop.f32.mrf.mxu0
    %v3211 = vadd.f32 0.0, %v3210
    %3212 = vmatmul.f32.gmra.mxu0 %v3101
    %v3213 = vpop.f32.mrf.mxu0
    %v3214 = vadd.f32 0.0, %v3213
    %3215 = vmatmul.f32.gmra.mxu0 %v3104
    %v3216 = vpop.f32.mrf.mxu0
    %v3217 = vadd.f32 0.0, %v3216
    %3218 = vmatmul.f32.gmra.mxu0 %v3107
    %v3219 = vpop.f32.mrf.mxu0
    %v3220 = vadd.f32 0.0, %v3219
    %3221 = vmatmul.f32.gmra.mxu0 %v3110
    %v3222 = vpop.f32.mrf.mxu0
    %v3223 = vadd.f32 0.0, %v3222
    %3224 = vmatmul.f32.gmra.mxu0 %v3113
    %v3225 = vpop.f32.mrf.mxu0
    %v3226 = vadd.f32 0.0, %v3225
    %3227 = vmatmul.f32.gmra.mxu0 %v3116
    %v3228 = vpop.f32.mrf.mxu0
    %v3229 = vadd.f32 0.0, %v3228
    %3230 = vmatmul.f32.gmra.mxu0 %v3119
    %v3231 = vpop.f32.mrf.mxu0
    %v3232 = vadd.f32 0.0, %v3231
    %3233 = vmatmul.f32.gmra.mxu0 %v3122
    %v3234 = vpop.f32.mrf.mxu0
    %v3235 = vadd.f32 0.0, %v3234
    %3236 = vmatmul.f32.gmra.mxu0 %v3125
    %v3237 = vpop.f32.mrf.mxu0
    %v3238 = vadd.f32 0.0, %v3237
    %3239 = vdwg.mxu0
    %v3241 = vsel %vm3030, %v2870, 0
    %v3244 = vsel %vm3030, %v2871, 0
    %v3247 = vsel %vm3030, %v2872, 0
    %v3250 = vsel %vm3030, %v2873, 0
    %v3253 = vsel %vm3030, %v2874, 0
    %v3256 = vsel %vm3030, %v2875, 0
    %v3259 = vsel %vm3030, %v2876, 0
    %v3262 = vsel %vm3030, %v2877, 0
    %v3265 = vsel %vm3030, %v2878, 0
    %v3268 = vsel %vm3030, %v2879, 0
    %v3271 = vsel %vm3030, %v2880, 0
    %v3274 = vsel %vm3030, %v2881, 0
    %v3277 = vsel %vm3030, %v2882, 0
    %v3280 = vsel %vm3030, %v2883, 0
    %v3283 = vsel %vm3030, %v2884, 0
    %v3286 = vsel %vm3030, %v2885, 0
    %v3289 = vsel %vm3030, %v2886, 0
    %v3292 = vsel %vm3030, %v2887, 0
    %v3295 = vsel %vm3030, %v2888, 0
    %v3298 = vsel %vm3030, %v2889, 0
    %v3301 = vsel %vm3030, %v2890, 0
    %v3304 = vsel %vm3030, %v2891, 0
    %v3307 = vsel %vm3030, %v2892, 0
    %v3310 = vsel %vm3030, %v2893, 0
    %v3313 = vsel %vm3030, %v2894, 0
    %v3316 = vsel %vm3030, %v2895, 0
    %v3319 = vsel %vm3030, %v2896, 0
    %v3322 = vsel %vm3030, %v2897, 0
    %v3325 = vsel %vm3030, %v2898, 0
    %v3328 = vsel %vm3030, %v2899, 0
    %v3331 = vsel %vm3030, %v2900, 0
    %v3334 = vsel %vm3030, %v2901, 0
    %3336 = vmatpush.msra.mxu0 0.0
    %3337 = vmatpush.msra.mxu0 0.0
    %3338 = vmatpush.msra.mxu0 0.0
    %3339 = vmatpush.msra.mxu0 0.0
    %3340 = vmatpush.msra.mxu0 0.0
    %3341 = vmatpush.msra.mxu0 0.0
    %3342 = vmatpush.msra.mxu0 0.0
    %3343 = vmatpush.msra.mxu0 0.0
    %3344 = vmatpush.msra.mxu0 0.0
    %3345 = vmatpush.msra.mxu0 0.0
    %3346 = vmatpush.msra.mxu0 0.0
    %3347 = vmatpush.msra.mxu0 0.0
    %3348 = vmatpush.msra.mxu0 0.0
    %3349 = vmatpush.msra.mxu0 0.0
    %3350 = vmatpush.msra.mxu0 %v2800
    %3351 = vmatpush.msra.mxu0 %v2799
    %3352 = vmatmul.f32.gmra.mxu0 %v3241
    %v3353 = vpop.f32.mrf.mxu0
    %v3354 = vadd.f32 %v3145, %v3353
    %3355 = vmatmul.f32.gmra.mxu0 %v3244
    %v3356 = vpop.f32.mrf.mxu0
    %v3357 = vadd.f32 %v3148, %v3356
    %3358 = vmatmul.f32.gmra.mxu0 %v3247
    %v3359 = vpop.f32.mrf.mxu0
    %v3360 = vadd.f32 %v3151, %v3359
    %3361 = vmatmul.f32.gmra.mxu0 %v3250
    %v3362 = vpop.f32.mrf.mxu0
    %v3363 = vadd.f32 %v3154, %v3362
    %3364 = vmatmul.f32.gmra.mxu0 %v3253
    %v3365 = vpop.f32.mrf.mxu0
    %v3366 = vadd.f32 %v3157, %v3365
    %3367 = vmatmul.f32.gmra.mxu0 %v3256
    %v3368 = vpop.f32.mrf.mxu0
    %v3369 = vadd.f32 %v3160, %v3368
    %3370 = vmatmul.f32.gmra.mxu0 %v3259
    %v3371 = vpop.f32.mrf.mxu0
    %v3372 = vadd.f32 %v3163, %v3371
    %3373 = vmatmul.f32.gmra.mxu0 %v3262
    %v3374 = vpop.f32.mrf.mxu0
    %v3375 = vadd.f32 %v3166, %v3374
    %3376 = vmatmul.f32.gmra.mxu0 %v3265
    %v3377 = vpop.f32.mrf.mxu0
    %v3378 = vadd.f32 %v3169, %v3377
    %3379 = vmatmul.f32.gmra.mxu0 %v3268
    %v3380 = vpop.f32.mrf.mxu0
    %v3381 = vadd.f32 %v3172, %v3380
    %3382 = vmatmul.f32.gmra.mxu0 %v3271
    %v3383 = vpop.f32.mrf.mxu0
    %v3384 = vadd.f32 %v3175, %v3383
    %3385 = vmatmul.f32.gmra.mxu0 %v3274
    %v3386 = vpop.f32.mrf.mxu0
    %v3387 = vadd.f32 %v3178, %v3386
    %3388 = vmatmul.f32.gmra.mxu0 %v3277
    %v3389 = vpop.f32.mrf.mxu0
    %v3390 = vadd.f32 %v3181, %v3389
    %3391 = vmatmul.f32.gmra.mxu0 %v3280
    %v3392 = vpop.f32.mrf.mxu0
    %v3393 = vadd.f32 %v3184, %v3392
    %3394 = vmatmul.f32.gmra.mxu0 %v3283
    %v3395 = vpop.f32.mrf.mxu0
    %v3396 = vadd.f32 %v3187, %v3395
    %3397 = vmatmul.f32.gmra.mxu0 %v3286
    %v3398 = vpop.f32.mrf.mxu0
    %v3399 = vadd.f32 %v3190, %v3398
    %3400 = vmatmul.f32.gmra.mxu0 %v3289
    %v3401 = vpop.f32.mrf.mxu0
    %v3402 = vadd.f32 %v3193, %v3401
    %3403 = vmatmul.f32.gmra.mxu0 %v3292
    %v3404 = vpop.f32.mrf.mxu0
    %v3405 = vadd.f32 %v3196, %v3404
    %3406 = vmatmul.f32.gmra.mxu0 %v3295
    %v3407 = vpop.f32.mrf.mxu0
    %v3408 = vadd.f32 %v3199, %v3407
    %3409 = vmatmul.f32.gmra.mxu0 %v3298
    %v3410 = vpop.f32.mrf.mxu0
    %v3411 = vadd.f32 %v3202, %v3410
    %3412 = vmatmul.f32.gmra.mxu0 %v3301
    %v3413 = vpop.f32.mrf.mxu0
    %v3414 = vadd.f32 %v3205, %v3413
    %3415 = vmatmul.f32.gmra.mxu0 %v3304
    %v3416 = vpop.f32.mrf.mxu0
    %v3417 = vadd.f32 %v3208, %v3416
    %3418 = vmatmul.f32.gmra.mxu0 %v3307
    %v3419 = vpop.f32.mrf.mxu0
    %v3420 = vadd.f32 %v3211, %v3419
    %3421 = vmatmul.f32.gmra.mxu0 %v3310
    %v3422 = vpop.f32.mrf.mxu0
    %v3423 = vadd.f32 %v3214, %v3422
    %3424 = vmatmul.f32.gmra.mxu0 %v3313
    %v3425 = vpop.f32.mrf.mxu0
    %v3426 = vadd.f32 %v3217, %v3425
    %3427 = vmatmul.f32.gmra.mxu0 %v3316
    %v3428 = vpop.f32.mrf.mxu0
    %v3429 = vadd.f32 %v3220, %v3428
    %3430 = vmatmul.f32.gmra.mxu0 %v3319
    %v3431 = vpop.f32.mrf.mxu0
    %v3432 = vadd.f32 %v3223, %v3431
    %3433 = vmatmul.f32.gmra.mxu0 %v3322
    %v3434 = vpop.f32.mrf.mxu0
    %v3435 = vadd.f32 %v3226, %v3434
    %3436 = vmatmul.f32.gmra.mxu0 %v3325
    %v3437 = vpop.f32.mrf.mxu0
    %v3438 = vadd.f32 %v3229, %v3437
    %3439 = vmatmul.f32.gmra.mxu0 %v3328
    %v3440 = vpop.f32.mrf.mxu0
    %v3441 = vadd.f32 %v3232, %v3440
    %3442 = vmatmul.f32.gmra.mxu0 %v3331
    %v3443 = vpop.f32.mrf.mxu0
    %v3444 = vadd.f32 %v3235, %v3443
    %3445 = vmatmul.f32.gmra.mxu0 %v3334
    %v3446 = vpop.f32.mrf.mxu0
    %v3447 = vadd.f32 %v3238, %v3446
    %3448 = vdwg.mxu0
    %v3450 = vsel %vm3030, %v2998, 0
    %v3453 = vsel %vm3030, %v2999, 0
    %v3456 = vsel %vm3030, %v3000, 0
    %v3459 = vsel %vm3030, %v3001, 0
    %v3462 = vsel %vm3030, %v3002, 0
    %v3465 = vsel %vm3030, %v3003, 0
    %v3468 = vsel %vm3030, %v3004, 0
    %v3471 = vsel %vm3030, %v3005, 0
    %v3474 = vsel %vm3030, %v3006, 0
    %v3477 = vsel %vm3030, %v3007, 0
    %v3480 = vsel %vm3030, %v3008, 0
    %v3483 = vsel %vm3030, %v3009, 0
    %v3486 = vsel %vm3030, %v3010, 0
    %v3489 = vsel %vm3030, %v3011, 0
    %v3492 = vsel %vm3030, %v3012, 0
    %v3495 = vsel %vm3030, %v3013, 0
    %v3498 = vsel %vm3030, %v3014, 0
    %v3501 = vsel %vm3030, %v3015, 0
    %v3504 = vsel %vm3030, %v3016, 0
    %v3507 = vsel %vm3030, %v3017, 0
    %v3510 = vsel %vm3030, %v3018, 0
    %v3513 = vsel %vm3030, %v3019, 0
    %v3516 = vsel %vm3030, %v3020, 0
    %v3519 = vsel %vm3030, %v3021, 0
    %v3522 = vsel %vm3030, %v3022, 0
    %v3525 = vsel %vm3030, %v3023, 0
    %v3528 = vsel %vm3030, %v3024, 0
    %v3531 = vsel %vm3030, %v3025, 0
    %v3534 = vsel %vm3030, %v3026, 0
    %v3537 = vsel %vm3030, %v3027, 0
    %v3540 = vsel %vm3030, %v3028, 0
    %v3543 = vsel %vm3030, %v3029, 0
    %3545 = vmatpush.msra.mxu0 0.0
    %3546 = vmatpush.msra.mxu0 0.0
    %3547 = vmatpush.msra.mxu0 0.0
    %3548 = vmatpush.msra.mxu0 0.0
    %3549 = vmatpush.msra.mxu0 0.0
    %3550 = vmatpush.msra.mxu0 0.0
    %3551 = vmatpush.msra.mxu0 0.0
    %3552 = vmatpush.msra.mxu0 0.0
    %3553 = vmatpush.msra.mxu0 0.0
    %3554 = vmatpush.msra.mxu0 0.0
    %3555 = vmatpush.msra.mxu0 0.0
    %3556 = vmatpush.msra.mxu0 0.0
    %3557 = vmatpush.msra.mxu0 0.0
    %3558 = vmatpush.msra.mxu0 0.0
    %3559 = vmatpush.msra.mxu0 %v2804
    %3560 = vmatpush.msra.mxu0 %v2803
    %3561 = vmatmul.f32.gmra.mxu0 %v3450
    %v3562 = vpop.f32.mrf.mxu0
    %v3563 = vadd.f32 0.0, %v3562
    %3564 = vmatmul.f32.gmra.mxu0 %v3453
    %v3565 = vpop.f32.mrf.mxu0
    %v3566 = vadd.f32 0.0, %v3565
    %3567 = vmatmul.f32.gmra.mxu0 %v3456
    %v3568 = vpop.f32.mrf.mxu0
    %v3569 = vadd.f32 0.0, %v3568
    %3570 = vmatmul.f32.gmra.mxu0 %v3459
    %v3571 = vpop.f32.mrf.mxu0
    %v3572 = vadd.f32 0.0, %v3571
    %3573 = vmatmul.f32.gmra.mxu0 %v3462
    %v3574 = vpop.f32.mrf.mxu0
    %v3575 = vadd.f32 0.0, %v3574
    %3576 = vmatmul.f32.gmra.mxu0 %v3465
    %v3577 = vpop.f32.mrf.mxu0
    %v3578 = vadd.f32 0.0, %v3577
    %3579 = vmatmul.f32.gmra.mxu0 %v3468
    %v3580 = vpop.f32.mrf.mxu0
    %v3581 = vadd.f32 0.0, %v3580
    %3582 = vmatmul.f32.gmra.mxu0 %v3471
    %v3583 = vpop.f32.mrf.mxu0
    %v3584 = vadd.f32 0.0, %v3583
    %3585 = vmatmul.f32.gmra.mxu0 %v3474
    %v3586 = vpop.f32.mrf.mxu0
    %v3587 = vadd.f32 0.0, %v3586
    %3588 = vmatmul.f32.gmra.mxu0 %v3477
    %v3589 = vpop.f32.mrf.mxu0
    %v3590 = vadd.f32 0.0, %v3589
    %3591 = vmatmul.f32.gmra.mxu0 %v3480
    %v3592 = vpop.f32.mrf.mxu0
    %v3593 = vadd.f32 0.0, %v3592
    %3594 = vmatmul.f32.gmra.mxu0 %v3483
    %v3595 = vpop.f32.mrf.mxu0
    %v3596 = vadd.f32 0.0, %v3595
    %3597 = vmatmul.f32.gmra.mxu0 %v3486
    %v3598 = vpop.f32.mrf.mxu0
    %v3599 = vadd.f32 0.0, %v3598
    %3600 = vmatmul.f32.gmra.mxu0 %v3489
    %v3601 = vpop.f32.mrf.mxu0
    %v3602 = vadd.f32 0.0, %v3601
    %3603 = vmatmul.f32.gmra.mxu0 %v3492
    %v3604 = vpop.f32.mrf.mxu0
    %v3605 = vadd.f32 0.0, %v3604
    %3606 = vmatmul.f32.gmra.mxu0 %v3495
    %v3607 = vpop.f32.mrf.mxu0
    %v3608 = vadd.f32 0.0, %v3607
    %3609 = vmatmul.f32.gmra.mxu0 %v3498
    %v3610 = vpop.f32.mrf.mxu0
    %v3611 = vadd.f32 0.0, %v3610
    %3612 = vmatmul.f32.gmra.mxu0 %v3501
    %v3613 = vpop.f32.mrf.mxu0
    %v3614 = vadd.f32 0.0, %v3613
    %3615 = vmatmul.f32.gmra.mxu0 %v3504
    %v3616 = vpop.f32.mrf.mxu0
    %v3617 = vadd.f32 0.0, %v3616
    %3618 = vmatmul.f32.gmra.mxu0 %v3507
    %v3619 = vpop.f32.mrf.mxu0
    %v3620 = vadd.f32 0.0, %v3619
    %3621 = vmatmul.f32.gmra.mxu0 %v3510
    %v3622 = vpop.f32.mrf.mxu0
    %v3623 = vadd.f32 0.0, %v3622
    %3624 = vmatmul.f32.gmra.mxu0 %v3513
    %v3625 = vpop.f32.mrf.mxu0
    %v3626 = vadd.f32 0.0, %v3625
    %3627 = vmatmul.f32.gmra.mxu0 %v3516
    %v3628 = vpop.f32.mrf.mxu0
    %v3629 = vadd.f32 0.0, %v3628
    %3630 = vmatmul.f32.gmra.mxu0 %v3519
    %v3631 = vpop.f32.mrf.mxu0
    %v3632 = vadd.f32 0.0, %v3631
    %3633 = vmatmul.f32.gmra.mxu0 %v3522
    %v3634 = vpop.f32.mrf.mxu0
    %v3635 = vadd.f32 0.0, %v3634
    %3636 = vmatmul.f32.gmra.mxu0 %v3525
    %v3637 = vpop.f32.mrf.mxu0
    %v3638 = vadd.f32 0.0, %v3637
    %3639 = vmatmul.f32.gmra.mxu0 %v3528
    %v3640 = vpop.f32.mrf.mxu0
    %v3641 = vadd.f32 0.0, %v3640
    %3642 = vmatmul.f32.gmra.mxu0 %v3531
    %v3643 = vpop.f32.mrf.mxu0
    %v3644 = vadd.f32 0.0, %v3643
    %3645 = vmatmul.f32.gmra.mxu0 %v3534
    %v3646 = vpop.f32.mrf.mxu0
    %v3647 = vadd.f32 0.0, %v3646
    %3648 = vmatmul.f32.gmra.mxu0 %v3537
    %v3649 = vpop.f32.mrf.mxu0
    %v3650 = vadd.f32 0.0, %v3649
    %3651 = vmatmul.f32.gmra.mxu0 %v3540
    %v3652 = vpop.f32.mrf.mxu0
    %v3653 = vadd.f32 0.0, %v3652
    %3654 = vmatmul.f32.gmra.mxu0 %v3543
    %v3655 = vpop.f32.mrf.mxu0
    %v3656 = vadd.f32 0.0, %v3655
    %3657 = vdwg.mxu0
    %v3658 = vadd.f32 %v3354, %v3563
    %v3659 = vadd.f32 %v3357, %v3566
    %v3660 = vadd.f32 %v3360, %v3569
    %v3661 = vadd.f32 %v3363, %v3572
    %v3662 = vadd.f32 %v3366, %v3575
    %v3663 = vadd.f32 %v3369, %v3578
    %v3664 = vadd.f32 %v3372, %v3581
    %v3665 = vadd.f32 %v3375, %v3584
    %v3666 = vadd.f32 %v3378, %v3587
    %v3667 = vadd.f32 %v3381, %v3590
    %v3668 = vadd.f32 %v3384, %v3593
    %v3669 = vadd.f32 %v3387, %v3596
    %v3670 = vadd.f32 %v3390, %v3599
    %v3671 = vadd.f32 %v3393, %v3602
    %v3672 = vadd.f32 %v3396, %v3605
    %v3673 = vadd.f32 %v3399, %v3608
    %v3674 = vadd.f32 %v3402, %v3611
    %v3675 = vadd.f32 %v3405, %v3614
    %v3676 = vadd.f32 %v3408, %v3617
    %v3677 = vadd.f32 %v3411, %v3620
    %v3678 = vadd.f32 %v3414, %v3623
    %v3679 = vadd.f32 %v3417, %v3626
    %v3680 = vadd.f32 %v3420, %v3629
    %v3681 = vadd.f32 %v3423, %v3632
    %v3682 = vadd.f32 %v3426, %v3635
    %v3683 = vadd.f32 %v3429, %v3638
    %v3684 = vadd.f32 %v3432, %v3641
    %v3685 = vadd.f32 %v3435, %v3644
    %v3686 = vadd.f32 %v3438, %v3647
    %v3687 = vadd.f32 %v3441, %v3650
    %v3688 = vadd.f32 %v3444, %v3653
    %v3689 = vadd.f32 %v3447, %v3656
    %v3690 = vld [vmem:[%s7] sm:$0x1]
    %v3692 = vperm.slane %v3690, 0
    %v3694 = vadd.f32 %v3658, %v3692
    %v3695 = vadd.f32 %v3659, %v3692
    %v3696 = vadd.f32 %v3660, %v3692
    %v3697 = vadd.f32 %v3661, %v3692
    %v3698 = vadd.f32 %v3662, %v3692
    %v3699 = vadd.f32 %v3663, %v3692
    %v3700 = vadd.f32 %v3664, %v3692
    %v3701 = vadd.f32 %v3665, %v3692
    %v3702 = vadd.f32 %v3666, %v3692
    %v3703 = vadd.f32 %v3667, %v3692
    %v3704 = vadd.f32 %v3668, %v3692
    %v3705 = vadd.f32 %v3669, %v3692
    %v3706 = vadd.f32 %v3670, %v3692
    %v3707 = vadd.f32 %v3671, %v3692
    %v3708 = vadd.f32 %v3672, %v3692
    %v3709 = vadd.f32 %v3673, %v3692
    %v3710 = vadd.f32 %v3674, %v3692
    %v3711 = vadd.f32 %v3675, %v3692
    %v3712 = vadd.f32 %v3676, %v3692
    %v3713 = vadd.f32 %v3677, %v3692
    %v3714 = vadd.f32 %v3678, %v3692
    %v3715 = vadd.f32 %v3679, %v3692
    %v3716 = vadd.f32 %v3680, %v3692
    %v3717 = vadd.f32 %v3681, %v3692
    %v3718 = vadd.f32 %v3682, %v3692
    %v3719 = vadd.f32 %v3683, %v3692
    %v3720 = vadd.f32 %v3684, %v3692
    %v3721 = vadd.f32 %v3685, %v3692
    %v3722 = vadd.f32 %v3686, %v3692
    %v3723 = vadd.f32 %v3687, %v3692
    %v3724 = vadd.f32 %v3688, %v3692
    %v3725 = vadd.f32 %v3689, %v3692
    %v3726 = vmax.f32 %v3694, 0.0
    %v3727 = vmax.f32 %v3695, 0.0
    %v3728 = vmax.f32 %v3696, 0.0
    %v3729 = vmax.f32 %v3697, 0.0
    %v3730 = vmax.f32 %v3698, 0.0
    %v3731 = vmax.f32 %v3699, 0.0
    %v3732 = vmax.f32 %v3700, 0.0
    %v3733 = vmax.f32 %v3701, 0.0
    %v3734 = vmax.f32 %v3702, 0.0
    %v3735 = vmax.f32 %v3703, 0.0
    %v3736 = vmax.f32 %v3704, 0.0
    %v3737 = vmax.f32 %v3705, 0.0
    %v3738 = vmax.f32 %v3706, 0.0
    %v3739 = vmax.f32 %v3707, 0.0
    %v3740 = vmax.f32 %v3708, 0.0
    %v3741 = vmax.f32 %v3709, 0.0
    %v3742 = vmax.f32 %v3710, 0.0
    %v3743 = vmax.f32 %v3711, 0.0
    %v3744 = vmax.f32 %v3712, 0.0
    %v3745 = vmax.f32 %v3713, 0.0
    %v3746 = vmax.f32 %v3714, 0.0
    %v3747 = vmax.f32 %v3715, 0.0
    %v3748 = vmax.f32 %v3716, 0.0
    %v3749 = vmax.f32 %v3717, 0.0
    %v3750 = vmax.f32 %v3718, 0.0
    %v3751 = vmax.f32 %v3719, 0.0
    %v3752 = vmax.f32 %v3720, 0.0
    %v3753 = vmax.f32 %v3721, 0.0
    %v3754 = vmax.f32 %v3722, 0.0
    %v3755 = vmax.f32 %v3723, 0.0
    %v3756 = vmax.f32 %v3724, 0.0
    %v3757 = vmax.f32 %v3725, 0.0
    %v3758 = vld [vmem:[%s8] sm:$0xff]
    %v3759 = vld [vmem:[%s8 + $0x8] sm:$0xff]
    %v3760 = vld [vmem:[%s8 + $0x10] sm:$0xff]
    %v3761 = vld [vmem:[%s8 + $0x18] sm:$0xff]
    %v3762 = vld [vmem:[%s8 + $0x20] sm:$0xff]
    %v3763 = vld [vmem:[%s8 + $0x28] sm:$0xff]
    %v3764 = vld [vmem:[%s8 + $0x30] sm:$0xff]
    %v3765 = vld [vmem:[%s8 + $0x38] sm:$0xff]
    %v3766 = vld [vmem:[%s8 + $0x40] sm:$0xff]
    %v3767 = vld [vmem:[%s8 + $0x48] sm:$0xff]
    %v3768 = vld [vmem:[%s8 + $0x50] sm:$0xff]
    %v3769 = vld [vmem:[%s8 + $0x58] sm:$0xff]
    %v3770 = vrot.slane %v3726, 4
    %v3771 = vrot.slane %v3727, 4
    %v3772 = vrot.slane %v3728, 4
    %v3773 = vrot.slane %v3729, 4
    %v3774 = vrot.slane %v3730, 4
    %v3775 = vrot.slane %v3731, 4
    %v3776 = vrot.slane %v3732, 4
    %v3777 = vrot.slane %v3733, 4
    %v3778 = vrot.slane %v3734, 4
    %v3779 = vrot.slane %v3735, 4
    %v3780 = vrot.slane %v3736, 4
    %v3781 = vrot.slane %v3737, 4
    %v3782 = vrot.slane %v3738, 4
    %v3783 = vrot.slane %v3739, 4
    %v3784 = vrot.slane %v3740, 4
    %v3785 = vrot.slane %v3741, 4
    %v3786 = vrot.slane %v3742, 4
    %v3787 = vrot.slane %v3743, 4
    %v3788 = vrot.slane %v3744, 4
    %v3789 = vrot.slane %v3745, 4
    %v3790 = vrot.slane %v3746, 4
    %v3791 = vrot.slane %v3747, 4
    %v3792 = vrot.slane %v3748, 4
    %v3793 = vrot.slane %v3749, 4
    %v3794 = vrot.slane %v3750, 4
    %v3795 = vrot.slane %v3751, 4
    %v3796 = vrot.slane %v3752, 4
    %v3797 = vrot.slane %v3753, 4
    %v3798 = vrot.slane %v3754, 4
    %v3799 = vrot.slane %v3755, 4
    %v3800 = vrot.slane %v3756, 4
    %v3801 = vrot.slane %v3757, 4
    %v3802 = vsel %vm2837, %v3800, %v3801
    %v3803 = vsel %vm2837, %v3799, %v3800
    %v3804 = vsel %vm2837, %v3798, %v3799
    %v3805 = vsel %vm2837, %v3797, %v3798
    %v3806 = vsel %vm2837, %v3796, %v3797
    %v3807 = vsel %vm2837, %v3795, %v3796
    %v3808 = vsel %vm2837, %v3794, %v3795
    %v3809 = vsel %vm2837, %v3793, %v3794
    %v3810 = vsel %vm2837, %v3792, %v3793
    %v3811 = vsel %vm2837, %v3791, %v3792
    %v3812 = vsel %vm2837, %v3790, %v3791
    %v3813 = vsel %vm2837, %v3789, %v3790
    %v3814 = vsel %vm2837, %v3788, %v3789
    %v3815 = vsel %vm2837, %v3787, %v3788
    %v3816 = vsel %vm2837, %v3786, %v3787
    %v3817 = vsel %vm2837, %v3785, %v3786
    %v3818 = vsel %vm2837, %v3784, %v3785
    %v3819 = vsel %vm2837, %v3783, %v3784
    %v3820 = vsel %vm2837, %v3782, %v3783
    %v3821 = vsel %vm2837, %v3781, %v3782
    %v3822 = vsel %vm2837, %v3780, %v3781
    %v3823 = vsel %vm2837, %v3779, %v3780
    %v3824 = vsel %vm2837, %v3778, %v3779
    %v3825 = vsel %vm2837, %v3777, %v3778
    %v3826 = vsel %vm2837, %v3776, %v3777
    %v3827 = vsel %vm2837, %v3775, %v3776
    %v3828 = vsel %vm2837, %v3774, %v3775
    %v3829 = vsel %vm2837, %v3773, %v3774
    %v3830 = vsel %vm2837, %v3772, %v3773
    %v3831 = vsel %vm2837, %v3771, %v3772
    %v3832 = vsel %vm2837, %v3770, %v3771
    %v3833 = vsel %vm2837, %v3801, %v3770
    %v3834 = vsel %vm1718, %v3833, 0.0
    %v3835 = vsel %vm1719, %v3832, 0.0
    %v3836 = vsel %vm1720, %v3831, 0.0
    %v3837 = vsel %vm1721, %v3830, 0.0
    %v3838 = vsel %vm1722, %v3829, 0.0
    %v3839 = vsel %vm1723, %v3828, 0.0
    %v3840 = vsel %vm1724, %v3827, 0.0
    %v3841 = vsel %vm1725, %v3826, 0.0
    %v3842 = vsel %vm1726, %v3825, 0.0
    %v3843 = vsel %vm1727, %v3824, 0.0
    %v3844 = vsel %vm1728, %v3823, 0.0
    %v3845 = vsel %vm1729, %v3822, 0.0
    %v3846 = vsel %vm1730, %v3821, 0.0
    %v3847 = vsel %vm1731, %v3820, 0.0
    %v3848 = vsel %vm1732, %v3819, 0.0
    %v3849 = vsel %vm1733, %v3818, 0.0
    %v3850 = vsel %vm1734, %v3817, 0.0
    %v3851 = vsel %vm1735, %v3816, 0.0
    %v3852 = vsel %vm1736, %v3815, 0.0
    %v3853 = vsel %vm1737, %v3814, 0.0
    %v3854 = vsel %vm1738, %v3813, 0.0
    %v3855 = vsel %vm1739, %v3812, 0.0
    %v3856 = vsel %vm1740, %v3811, 0.0
    %v3857 = vsel %vm1741, %v3810, 0.0
    %v3858 = vsel %vm1742, %v3809, 0.0
    %v3859 = vsel %vm1743, %v3808, 0.0
    %v3860 = vsel %vm1744, %v3807, 0.0
    %v3861 = vsel %vm1745, %v3806, 0.0
    %v3862 = vsel %vm1746, %v3805, 0.0
    %v3863 = vsel %vm1747, %v3804, 0.0
    %v3864 = vsel %vm1748, %v3803, 0.0
    %v3865 = vsel %vm1749, %v3802, 0.0
    %v3866 = vsel %vm2966, %v3832, 0.0
    %v3867 = vsel %vm2967, %v3831, 0.0
    %v3868 = vsel %vm2968, %v3830, 0.0
    %v3869 = vsel %vm2969, %v3829, 0.0
    %v3870 = vsel %vm2970, %v3828, 0.0
    %v3871 = vsel %vm2971, %v3827, 0.0
    %v3872 = vsel %vm2972, %v3826, 0.0
    %v3873 = vsel %vm2973, %v3825, 0.0
    %v3874 = vsel %vm2974, %v3824, 0.0
    %v3875 = vsel %vm2975, %v3823, 0.0
    %v3876 = vsel %vm2976, %v3822, 0.0
    %v3877 = vsel %vm2977, %v3821, 0.0
    %v3878 = vsel %vm2978, %v3820, 0.0
    %v3879 = vsel %vm2979, %v3819, 0.0
    %v3880 = vsel %vm2980, %v3818, 0.0
    %v3881 = vsel %vm2981, %v3817, 0.0
    %v3882 = vsel %vm2982, %v3816, 0.0
    %v3883 = vsel %vm2983, %v3815, 0.0
    %v3884 = vsel %vm2984, %v3814, 0.0
    %v3885 = vsel %vm2985, %v3813, 0.0
    %v3886 = vsel %vm2986, %v3812, 0.0
    %v3887 = vsel %vm2987, %v3811, 0.0
    %v3888 = vsel %vm2988, %v3810, 0.0
    %v3889 = vsel %vm2989, %v3809, 0.0
    %v3890 = vsel %vm2990, %v3808, 0.0
    %v3891 = vsel %vm2991, %v3807, 0.0
    %v3892 = vsel %vm2992, %v3806, 0.0
    %v3893 = vsel %vm2993, %v3805, 0.0
    %v3894 = vsel %vm2994, %v3804, 0.0
    %v3895 = vsel %vm2995, %v3803, 0.0
    %v3896 = vsel %vm2996, %v3802, 0.0
    %v3897 = vsel %vm2997, %v3833, 0.0
    %vm3898 = vcmask 261120
    %v3900 = vsel %vm3898, %v3726, 0
    %v3903 = vsel %vm3898, %v3727, 0
    %v3906 = vsel %vm3898, %v3728, 0
    %v3909 = vsel %vm3898, %v3729, 0
    %v3912 = vsel %vm3898, %v3730, 0
    %v3915 = vsel %vm3898, %v3731, 0
    %v3918 = vsel %vm3898, %v3732, 0
    %v3921 = vsel %vm3898, %v3733, 0
    %v3924 = vsel %vm3898, %v3734, 0
    %v3927 = vsel %vm3898, %v3735, 0
    %v3930 = vsel %vm3898, %v3736, 0
    %v3933 = vsel %vm3898, %v3737, 0
    %v3936 = vsel %vm3898, %v3738, 0
    %v3939 = vsel %vm3898, %v3739, 0
    %v3942 = vsel %vm3898, %v3740, 0
    %v3945 = vsel %vm3898, %v3741, 0
    %v3948 = vsel %vm3898, %v3742, 0
    %v3951 = vsel %vm3898, %v3743, 0
    %v3954 = vsel %vm3898, %v3744, 0
    %v3957 = vsel %vm3898, %v3745, 0
    %v3960 = vsel %vm3898, %v3746, 0
    %v3963 = vsel %vm3898, %v3747, 0
    %v3966 = vsel %vm3898, %v3748, 0
    %v3969 = vsel %vm3898, %v3749, 0
    %v3972 = vsel %vm3898, %v3750, 0
    %v3975 = vsel %vm3898, %v3751, 0
    %v3978 = vsel %vm3898, %v3752, 0
    %v3981 = vsel %vm3898, %v3753, 0
    %v3984 = vsel %vm3898, %v3754, 0
    %v3987 = vsel %vm3898, %v3755, 0
    %v3990 = vsel %vm3898, %v3756, 0
    %v3993 = vsel %vm3898, %v3757, 0
    %3995 = vmatpush.msra.mxu0 0.0
    %3996 = vmatpush.msra.mxu0 0.0
    %3997 = vmatpush.msra.mxu0 0.0
    %3998 = vmatpush.msra.mxu0 0.0
    %3999 = vmatpush.msra.mxu0 0.0
    %4000 = vmatpush.msra.mxu0 0.0
    %4001 = vmatpush.msra.mxu0 0.0
    %4002 = vmatpush.msra.mxu0 0.0
    %4003 = vmatpush.msra.mxu0 0.0
    %4004 = vmatpush.msra.mxu0 0.0
    %4005 = vmatpush.msra.mxu0 0.0
    %4006 = vmatpush.msra.mxu0 0.0
    %4007 = vmatpush.msra.mxu0 %v3765
    %4008 = vmatpush.msra.mxu0 %v3764
    %4009 = vmatpush.msra.mxu0 %v3763
    %4010 = vmatpush.msra.mxu0 %v3762
    %4011 = vmatmul.f32.gmra.mxu0 %v3900
    %v4012 = vpop.f32.mrf.mxu0
    %v4013 = vadd.f32 0.0, %v4012
    %4014 = vmatmul.f32.gmra.mxu0 %v3903
    %v4015 = vpop.f32.mrf.mxu0
    %v4016 = vadd.f32 0.0, %v4015
    %4017 = vmatmul.f32.gmra.mxu0 %v3906
    %v4018 = vpop.f32.mrf.mxu0
    %v4019 = vadd.f32 0.0, %v4018
    %4020 = vmatmul.f32.gmra.mxu0 %v3909
    %v4021 = vpop.f32.mrf.mxu0
    %v4022 = vadd.f32 0.0, %v4021
    %4023 = vmatmul.f32.gmra.mxu0 %v3912
    %v4024 = vpop.f32.mrf.mxu0
    %v4025 = vadd.f32 0.0, %v4024
    %4026 = vmatmul.f32.gmra.mxu0 %v3915
    %v4027 = vpop.f32.mrf.mxu0
    %v4028 = vadd.f32 0.0, %v4027
    %4029 = vmatmul.f32.gmra.mxu0 %v3918
    %v4030 = vpop.f32.mrf.mxu0
    %v4031 = vadd.f32 0.0, %v4030
    %4032 = vmatmul.f32.gmra.mxu0 %v3921
    %v4033 = vpop.f32.mrf.mxu0
    %v4034 = vadd.f32 0.0, %v4033
    %4035 = vmatmul.f32.gmra.mxu0 %v3924
    %v4036 = vpop.f32.mrf.mxu0
    %v4037 = vadd.f32 0.0, %v4036
    %4038 = vmatmul.f32.gmra.mxu0 %v3927
    %v4039 = vpop.f32.mrf.mxu0
    %v4040 = vadd.f32 0.0, %v4039
    %4041 = vmatmul.f32.gmra.mxu0 %v3930
    %v4042 = vpop.f32.mrf.mxu0
    %v4043 = vadd.f32 0.0, %v4042
    %4044 = vmatmul.f32.gmra.mxu0 %v3933
    %v4045 = vpop.f32.mrf.mxu0
    %v4046 = vadd.f32 0.0, %v4045
    %4047 = vmatmul.f32.gmra.mxu0 %v3936
    %v4048 = vpop.f32.mrf.mxu0
    %v4049 = vadd.f32 0.0, %v4048
    %4050 = vmatmul.f32.gmra.mxu0 %v3939
    %v4051 = vpop.f32.mrf.mxu0
    %v4052 = vadd.f32 0.0, %v4051
    %4053 = vmatmul.f32.gmra.mxu0 %v3942
    %v4054 = vpop.f32.mrf.mxu0
    %v4055 = vadd.f32 0.0, %v4054
    %4056 = vmatmul.f32.gmra.mxu0 %v3945
    %v4057 = vpop.f32.mrf.mxu0
    %v4058 = vadd.f32 0.0, %v4057
    %4059 = vmatmul.f32.gmra.mxu0 %v3948
    %v4060 = vpop.f32.mrf.mxu0
    %v4061 = vadd.f32 0.0, %v4060
    %4062 = vmatmul.f32.gmra.mxu0 %v3951
    %v4063 = vpop.f32.mrf.mxu0
    %v4064 = vadd.f32 0.0, %v4063
    %4065 = vmatmul.f32.gmra.mxu0 %v3954
    %v4066 = vpop.f32.mrf.mxu0
    %v4067 = vadd.f32 0.0, %v4066
    %4068 = vmatmul.f32.gmra.mxu0 %v3957
    %v4069 = vpop.f32.mrf.mxu0
    %v4070 = vadd.f32 0.0, %v4069
    %4071 = vmatmul.f32.gmra.mxu0 %v3960
    %v4072 = vpop.f32.mrf.mxu0
    %v4073 = vadd.f32 0.0, %v4072
    %4074 = vmatmul.f32.gmra.mxu0 %v3963
    %v4075 = vpop.f32.mrf.mxu0
    %v4076 = vadd.f32 0.0, %v4075
    %4077 = vmatmul.f32.gmra.mxu0 %v3966
    %v4078 = vpop.f32.mrf.mxu0
    %v4079 = vadd.f32 0.0, %v4078
    %4080 = vmatmul.f32.gmra.mxu0 %v3969
    %v4081 = vpop.f32.mrf.mxu0
    %v4082 = vadd.f32 0.0, %v4081
    %4083 = vmatmul.f32.gmra.mxu0 %v3972
    %v4084 = vpop.f32.mrf.mxu0
    %v4085 = vadd.f32 0.0, %v4084
    %4086 = vmatmul.f32.gmra.mxu0 %v3975
    %v4087 = vpop.f32.mrf.mxu0
    %v4088 = vadd.f32 0.0, %v4087
    %4089 = vmatmul.f32.gmra.mxu0 %v3978
    %v4090 = vpop.f32.mrf.mxu0
    %v4091 = vadd.f32 0.0, %v4090
    %4092 = vmatmul.f32.gmra.mxu0 %v3981
    %v4093 = vpop.f32.mrf.mxu0
    %v4094 = vadd.f32 0.0, %v4093
    %4095 = vmatmul.f32.gmra.mxu0 %v3984
    %v4096 = vpop.f32.mrf.mxu0
    %v4097 = vadd.f32 0.0, %v4096
    %4098 = vmatmul.f32.gmra.mxu0 %v3987
    %v4099 = vpop.f32.mrf.mxu0
    %v4100 = vadd.f32 0.0, %v4099
    %4101 = vmatmul.f32.gmra.mxu0 %v3990
    %v4102 = vpop.f32.mrf.mxu0
    %v4103 = vadd.f32 0.0, %v4102
    %4104 = vmatmul.f32.gmra.mxu0 %v3993
    %v4105 = vpop.f32.mrf.mxu0
    %v4106 = vadd.f32 0.0, %v4105
    %4107 = vdwg.mxu0
    %v4109 = vsel %vm3898, %v3834, 0
    %v4112 = vsel %vm3898, %v3835, 0
    %v4115 = vsel %vm3898, %v3836, 0
    %v4118 = vsel %vm3898, %v3837, 0
    %v4121 = vsel %vm3898, %v3838, 0
    %v4124 = vsel %vm3898, %v3839, 0
    %v4127 = vsel %vm3898, %v3840, 0
    %v4130 = vsel %vm3898, %v3841, 0
    %v4133 = vsel %vm3898, %v3842, 0
    %v4136 = vsel %vm3898, %v3843, 0
    %v4139 = vsel %vm3898, %v3844, 0
    %v4142 = vsel %vm3898, %v3845, 0
    %v4145 = vsel %vm3898, %v3846, 0
    %v4148 = vsel %vm3898, %v3847, 0
    %v4151 = vsel %vm3898, %v3848, 0
    %v4154 = vsel %vm3898, %v3849, 0
    %v4157 = vsel %vm3898, %v3850, 0
    %v4160 = vsel %vm3898, %v3851, 0
    %v4163 = vsel %vm3898, %v3852, 0
    %v4166 = vsel %vm3898, %v3853, 0
    %v4169 = vsel %vm3898, %v3854, 0
    %v4172 = vsel %vm3898, %v3855, 0
    %v4175 = vsel %vm3898, %v3856, 0
    %v4178 = vsel %vm3898, %v3857, 0
    %v4181 = vsel %vm3898, %v3858, 0
    %v4184 = vsel %vm3898, %v3859, 0
    %v4187 = vsel %vm3898, %v3860, 0
    %v4190 = vsel %vm3898, %v3861, 0
    %v4193 = vsel %vm3898, %v3862, 0
    %v4196 = vsel %vm3898, %v3863, 0
    %v4199 = vsel %vm3898, %v3864, 0
    %v4202 = vsel %vm3898, %v3865, 0
    %4204 = vmatpush.msra.mxu0 0.0
    %4205 = vmatpush.msra.mxu0 0.0
    %4206 = vmatpush.msra.mxu0 0.0
    %4207 = vmatpush.msra.mxu0 0.0
    %4208 = vmatpush.msra.mxu0 0.0
    %4209 = vmatpush.msra.mxu0 0.0
    %4210 = vmatpush.msra.mxu0 0.0
    %4211 = vmatpush.msra.mxu0 0.0
    %4212 = vmatpush.msra.mxu0 0.0
    %4213 = vmatpush.msra.mxu0 0.0
    %4214 = vmatpush.msra.mxu0 0.0
    %4215 = vmatpush.msra.mxu0 0.0
    %4216 = vmatpush.msra.mxu0 %v3761
    %4217 = vmatpush.msra.mxu0 %v3760
    %4218 = vmatpush.msra.mxu0 %v3759
    %4219 = vmatpush.msra.mxu0 %v3758
    %4220 = vmatmul.f32.gmra.mxu0 %v4109
    %v4221 = vpop.f32.mrf.mxu0
    %v4222 = vadd.f32 %v4013, %v4221
    %4223 = vmatmul.f32.gmra.mxu0 %v4112
    %v4224 = vpop.f32.mrf.mxu0
    %v4225 = vadd.f32 %v4016, %v4224
    %4226 = vmatmul.f32.gmra.mxu0 %v4115
    %v4227 = vpop.f32.mrf.mxu0
    %v4228 = vadd.f32 %v4019, %v4227
    %4229 = vmatmul.f32.gmra.mxu0 %v4118
    %v4230 = vpop.f32.mrf.mxu0
    %v4231 = vadd.f32 %v4022, %v4230
    %4232 = vmatmul.f32.gmra.mxu0 %v4121
    %v4233 = vpop.f32.mrf.mxu0
    %v4234 = vadd.f32 %v4025, %v4233
    %4235 = vmatmul.f32.gmra.mxu0 %v4124
    %v4236 = vpop.f32.mrf.mxu0
    %v4237 = vadd.f32 %v4028, %v4236
    %4238 = vmatmul.f32.gmra.mxu0 %v4127
    %v4239 = vpop.f32.mrf.mxu0
    %v4240 = vadd.f32 %v4031, %v4239
    %4241 = vmatmul.f32.gmra.mxu0 %v4130
    %v4242 = vpop.f32.mrf.mxu0
    %v4243 = vadd.f32 %v4034, %v4242
    %4244 = vmatmul.f32.gmra.mxu0 %v4133
    %v4245 = vpop.f32.mrf.mxu0
    %v4246 = vadd.f32 %v4037, %v4245
    %4247 = vmatmul.f32.gmra.mxu0 %v4136
    %v4248 = vpop.f32.mrf.mxu0
    %v4249 = vadd.f32 %v4040, %v4248
    %4250 = vmatmul.f32.gmra.mxu0 %v4139
    %v4251 = vpop.f32.mrf.mxu0
    %v4252 = vadd.f32 %v4043, %v4251
    %4253 = vmatmul.f32.gmra.mxu0 %v4142
    %v4254 = vpop.f32.mrf.mxu0
    %v4255 = vadd.f32 %v4046, %v4254
    %4256 = vmatmul.f32.gmra.mxu0 %v4145
    %v4257 = vpop.f32.mrf.mxu0
    %v4258 = vadd.f32 %v4049, %v4257
    %4259 = vmatmul.f32.gmra.mxu0 %v4148
    %v4260 = vpop.f32.mrf.mxu0
    %v4261 = vadd.f32 %v4052, %v4260
    %4262 = vmatmul.f32.gmra.mxu0 %v4151
    %v4263 = vpop.f32.mrf.mxu0
    %v4264 = vadd.f32 %v4055, %v4263
    %4265 = vmatmul.f32.gmra.mxu0 %v4154
    %v4266 = vpop.f32.mrf.mxu0
    %v4267 = vadd.f32 %v4058, %v4266
    %4268 = vmatmul.f32.gmra.mxu0 %v4157
    %v4269 = vpop.f32.mrf.mxu0
    %v4270 = vadd.f32 %v4061, %v4269
    %4271 = vmatmul.f32.gmra.mxu0 %v4160
    %v4272 = vpop.f32.mrf.mxu0
    %v4273 = vadd.f32 %v4064, %v4272
    %4274 = vmatmul.f32.gmra.mxu0 %v4163
    %v4275 = vpop.f32.mrf.mxu0
    %v4276 = vadd.f32 %v4067, %v4275
    %4277 = vmatmul.f32.gmra.mxu0 %v4166
    %v4278 = vpop.f32.mrf.mxu0
    %v4279 = vadd.f32 %v4070, %v4278
    %4280 = vmatmul.f32.gmra.mxu0 %v4169
    %v4281 = vpop.f32.mrf.mxu0
    %v4282 = vadd.f32 %v4073, %v4281
    %4283 = vmatmul.f32.gmra.mxu0 %v4172
    %v4284 = vpop.f32.mrf.mxu0
    %v4285 = vadd.f32 %v4076, %v4284
    %4286 = vmatmul.f32.gmra.mxu0 %v4175
    %v4287 = vpop.f32.mrf.mxu0
    %v4288 = vadd.f32 %v4079, %v4287
    %4289 = vmatmul.f32.gmra.mxu0 %v4178
    %v4290 = vpop.f32.mrf.mxu0
    %v4291 = vadd.f32 %v4082, %v4290
    %4292 = vmatmul.f32.gmra.mxu0 %v4181
    %v4293 = vpop.f32.mrf.mxu0
    %v4294 = vadd.f32 %v4085, %v4293
    %4295 = vmatmul.f32.gmra.mxu0 %v4184
    %v4296 = vpop.f32.mrf.mxu0
    %v4297 = vadd.f32 %v4088, %v4296
    %4298 = vmatmul.f32.gmra.mxu0 %v4187
    %v4299 = vpop.f32.mrf.mxu0
    %v4300 = vadd.f32 %v4091, %v4299
    %4301 = vmatmul.f32.gmra.mxu0 %v4190
    %v4302 = vpop.f32.mrf.mxu0
    %v4303 = vadd.f32 %v4094, %v4302
    %4304 = vmatmul.f32.gmra.mxu0 %v4193
    %v4305 = vpop.f32.mrf.mxu0
    %v4306 = vadd.f32 %v4097, %v4305
    %4307 = vmatmul.f32.gmra.mxu0 %v4196
    %v4308 = vpop.f32.mrf.mxu0
    %v4309 = vadd.f32 %v4100, %v4308
    %4310 = vmatmul.f32.gmra.mxu0 %v4199
    %v4311 = vpop.f32.mrf.mxu0
    %v4312 = vadd.f32 %v4103, %v4311
    %4313 = vmatmul.f32.gmra.mxu0 %v4202
    %v4314 = vpop.f32.mrf.mxu0
    %v4315 = vadd.f32 %v4106, %v4314
    %4316 = vdwg.mxu0
    %v4318 = vsel %vm3898, %v3866, 0
    %v4321 = vsel %vm3898, %v3867, 0
    %v4324 = vsel %vm3898, %v3868, 0
    %v4327 = vsel %vm3898, %v3869, 0
    %v4330 = vsel %vm3898, %v3870, 0
    %v4333 = vsel %vm3898, %v3871, 0
    %v4336 = vsel %vm3898, %v3872, 0
    %v4339 = vsel %vm3898, %v3873, 0
    %v4342 = vsel %vm3898, %v3874, 0
    %v4345 = vsel %vm3898, %v3875, 0
    %v4348 = vsel %vm3898, %v3876, 0
    %v4351 = vsel %vm3898, %v3877, 0
    %v4354 = vsel %vm3898, %v3878, 0
    %v4357 = vsel %vm3898, %v3879, 0
    %v4360 = vsel %vm3898, %v3880, 0
    %v4363 = vsel %vm3898, %v3881, 0
    %v4366 = vsel %vm3898, %v3882, 0
    %v4369 = vsel %vm3898, %v3883, 0
    %v4372 = vsel %vm3898, %v3884, 0
    %v4375 = vsel %vm3898, %v3885, 0
    %v4378 = vsel %vm3898, %v3886, 0
    %v4381 = vsel %vm3898, %v3887, 0
    %v4384 = vsel %vm3898, %v3888, 0
    %v4387 = vsel %vm3898, %v3889, 0
    %v4390 = vsel %vm3898, %v3890, 0
    %v4393 = vsel %vm3898, %v3891, 0
    %v4396 = vsel %vm3898, %v3892, 0
    %v4399 = vsel %vm3898, %v3893, 0
    %v4402 = vsel %vm3898, %v3894, 0
    %v4405 = vsel %vm3898, %v3895, 0
    %v4408 = vsel %vm3898, %v3896, 0
    %v4411 = vsel %vm3898, %v3897, 0
    %4413 = vmatpush.msra.mxu0 0.0
    %4414 = vmatpush.msra.mxu0 0.0
    %4415 = vmatpush.msra.mxu0 0.0
    %4416 = vmatpush.msra.mxu0 0.0
    %4417 = vmatpush.msra.mxu0 0.0
    %4418 = vmatpush.msra.mxu0 0.0
    %4419 = vmatpush.msra.mxu0 0.0
    %4420 = vmatpush.msra.mxu0 0.0
    %4421 = vmatpush.msra.mxu0 0.0
    %4422 = vmatpush.msra.mxu0 0.0
    %4423 = vmatpush.msra.mxu0 0.0
    %4424 = vmatpush.msra.mxu0 0.0
    %4425 = vmatpush.msra.mxu0 %v3769
    %4426 = vmatpush.msra.mxu0 %v3768
    %4427 = vmatpush.msra.mxu0 %v3767
    %4428 = vmatpush.msra.mxu0 %v3766
    %4429 = vmatmul.f32.gmra.mxu0 %v4318
    %v4430 = vpop.f32.mrf.mxu0
    %v4431 = vadd.f32 0.0, %v4430
    %4432 = vmatmul.f32.gmra.mxu0 %v4321
    %v4433 = vpop.f32.mrf.mxu0
    %v4434 = vadd.f32 0.0, %v4433
    %4435 = vmatmul.f32.gmra.mxu0 %v4324
    %v4436 = vpop.f32.mrf.mxu0
    %v4437 = vadd.f32 0.0, %v4436
    %4438 = vmatmul.f32.gmra.mxu0 %v4327
    %v4439 = vpop.f32.mrf.mxu0
    %v4440 = vadd.f32 0.0, %v4439
    %4441 = vmatmul.f32.gmra.mxu0 %v4330
    %v4442 = vpop.f32.mrf.mxu0
    %v4443 = vadd.f32 0.0, %v4442
    %4444 = vmatmul.f32.gmra.mxu0 %v4333
    %v4445 = vpop.f32.mrf.mxu0
    %v4446 = vadd.f32 0.0, %v4445
    %4447 = vmatmul.f32.gmra.mxu0 %v4336
    %v4448 = vpop.f32.mrf.mxu0
    %v4449 = vadd.f32 0.0, %v4448
    %4450 = vmatmul.f32.gmra.mxu0 %v4339
    %v4451 = vpop.f32.mrf.mxu0
    %v4452 = vadd.f32 0.0, %v4451
    %4453 = vmatmul.f32.gmra.mxu0 %v4342
    %v4454 = vpop.f32.mrf.mxu0
    %v4455 = vadd.f32 0.0, %v4454
    %4456 = vmatmul.f32.gmra.mxu0 %v4345
    %v4457 = vpop.f32.mrf.mxu0
    %v4458 = vadd.f32 0.0, %v4457
    %4459 = vmatmul.f32.gmra.mxu0 %v4348
    %v4460 = vpop.f32.mrf.mxu0
    %v4461 = vadd.f32 0.0, %v4460
    %4462 = vmatmul.f32.gmra.mxu0 %v4351
    %v4463 = vpop.f32.mrf.mxu0
    %v4464 = vadd.f32 0.0, %v4463
    %4465 = vmatmul.f32.gmra.mxu0 %v4354
    %v4466 = vpop.f32.mrf.mxu0
    %v4467 = vadd.f32 0.0, %v4466
    %4468 = vmatmul.f32.gmra.mxu0 %v4357
    %v4469 = vpop.f32.mrf.mxu0
    %v4470 = vadd.f32 0.0, %v4469
    %4471 = vmatmul.f32.gmra.mxu0 %v4360
    %v4472 = vpop.f32.mrf.mxu0
    %v4473 = vadd.f32 0.0, %v4472
    %4474 = vmatmul.f32.gmra.mxu0 %v4363
    %v4475 = vpop.f32.mrf.mxu0
    %v4476 = vadd.f32 0.0, %v4475
    %4477 = vmatmul.f32.gmra.mxu0 %v4366
    %v4478 = vpop.f32.mrf.mxu0
    %v4479 = vadd.f32 0.0, %v4478
    %4480 = vmatmul.f32.gmra.mxu0 %v4369
    %v4481 = vpop.f32.mrf.mxu0
    %v4482 = vadd.f32 0.0, %v4481
    %4483 = vmatmul.f32.gmra.mxu0 %v4372
    %v4484 = vpop.f32.mrf.mxu0
    %v4485 = vadd.f32 0.0, %v4484
    %4486 = vmatmul.f32.gmra.mxu0 %v4375
    %v4487 = vpop.f32.mrf.mxu0
    %v4488 = vadd.f32 0.0, %v4487
    %4489 = vmatmul.f32.gmra.mxu0 %v4378
    %v4490 = vpop.f32.mrf.mxu0
    %v4491 = vadd.f32 0.0, %v4490
    %4492 = vmatmul.f32.gmra.mxu0 %v4381
    %v4493 = vpop.f32.mrf.mxu0
    %v4494 = vadd.f32 0.0, %v4493
    %4495 = vmatmul.f32.gmra.mxu0 %v4384
    %v4496 = vpop.f32.mrf.mxu0
    %v4497 = vadd.f32 0.0, %v4496
    %4498 = vmatmul.f32.gmra.mxu0 %v4387
    %v4499 = vpop.f32.mrf.mxu0
    %v4500 = vadd.f32 0.0, %v4499
    %4501 = vmatmul.f32.gmra.mxu0 %v4390
    %v4502 = vpop.f32.mrf.mxu0
    %v4503 = vadd.f32 0.0, %v4502
    %4504 = vmatmul.f32.gmra.mxu0 %v4393
    %v4505 = vpop.f32.mrf.mxu0
    %v4506 = vadd.f32 0.0, %v4505
    %4507 = vmatmul.f32.gmra.mxu0 %v4396
    %v4508 = vpop.f32.mrf.mxu0
    %v4509 = vadd.f32 0.0, %v4508
    %4510 = vmatmul.f32.gmra.mxu0 %v4399
    %v4511 = vpop.f32.mrf.mxu0
    %v4512 = vadd.f32 0.0, %v4511
    %4513 = vmatmul.f32.gmra.mxu0 %v4402
    %v4514 = vpop.f32.mrf.mxu0
    %v4515 = vadd.f32 0.0, %v4514
    %4516 = vmatmul.f32.gmra.mxu0 %v4405
    %v4517 = vpop.f32.mrf.mxu0
    %v4518 = vadd.f32 0.0, %v4517
    %4519 = vmatmul.f32.gmra.mxu0 %v4408
    %v4520 = vpop.f32.mrf.mxu0
    %v4521 = vadd.f32 0.0, %v4520
    %4522 = vmatmul.f32.gmra.mxu0 %v4411
    %v4523 = vpop.f32.mrf.mxu0
    %v4524 = vadd.f32 0.0, %v4523
    %4525 = vdwg.mxu0
    %v4526 = vadd.f32 %v4222, %v4431
    %v4527 = vadd.f32 %v4225, %v4434
    %v4528 = vadd.f32 %v4228, %v4437
    %v4529 = vadd.f32 %v4231, %v4440
    %v4530 = vadd.f32 %v4234, %v4443
    %v4531 = vadd.f32 %v4237, %v4446
    %v4532 = vadd.f32 %v4240, %v4449
    %v4533 = vadd.f32 %v4243, %v4452
    %v4534 = vadd.f32 %v4246, %v4455
    %v4535 = vadd.f32 %v4249, %v4458
    %v4536 = vadd.f32 %v4252, %v4461
    %v4537 = vadd.f32 %v4255, %v4464
    %v4538 = vadd.f32 %v4258, %v4467
    %v4539 = vadd.f32 %v4261, %v4470
    %v4540 = vadd.f32 %v4264, %v4473
    %v4541 = vadd.f32 %v4267, %v4476
    %v4542 = vadd.f32 %v4270, %v4479
    %v4543 = vadd.f32 %v4273, %v4482
    %v4544 = vadd.f32 %v4276, %v4485
    %v4545 = vadd.f32 %v4279, %v4488
    %v4546 = vadd.f32 %v4282, %v4491
    %v4547 = vadd.f32 %v4285, %v4494
    %v4548 = vadd.f32 %v4288, %v4497
    %v4549 = vadd.f32 %v4291, %v4500
    %v4550 = vadd.f32 %v4294, %v4503
    %v4551 = vadd.f32 %v4297, %v4506
    %v4552 = vadd.f32 %v4300, %v4509
    %v4553 = vadd.f32 %v4303, %v4512
    %v4554 = vadd.f32 %v4306, %v4515
    %v4555 = vadd.f32 %v4309, %v4518
    %v4556 = vadd.f32 %v4312, %v4521
    %v4557 = vadd.f32 %v4315, %v4524
    %v4558 = vld [vmem:[%s9] sm:$0x1]
    %v4560 = vperm.slane %v4558, 0
    %v4562 = vadd.f32 %v4526, %v4560
    %v4563 = vadd.f32 %v4527, %v4560
    %v4564 = vadd.f32 %v4528, %v4560
    %v4565 = vadd.f32 %v4529, %v4560
    %v4566 = vadd.f32 %v4530, %v4560
    %v4567 = vadd.f32 %v4531, %v4560
    %v4568 = vadd.f32 %v4532, %v4560
    %v4569 = vadd.f32 %v4533, %v4560
    %v4570 = vadd.f32 %v4534, %v4560
    %v4571 = vadd.f32 %v4535, %v4560
    %v4572 = vadd.f32 %v4536, %v4560
    %v4573 = vadd.f32 %v4537, %v4560
    %v4574 = vadd.f32 %v4538, %v4560
    %v4575 = vadd.f32 %v4539, %v4560
    %v4576 = vadd.f32 %v4540, %v4560
    %v4577 = vadd.f32 %v4541, %v4560
    %v4578 = vadd.f32 %v4542, %v4560
    %v4579 = vadd.f32 %v4543, %v4560
    %v4580 = vadd.f32 %v4544, %v4560
    %v4581 = vadd.f32 %v4545, %v4560
    %v4582 = vadd.f32 %v4546, %v4560
    %v4583 = vadd.f32 %v4547, %v4560
    %v4584 = vadd.f32 %v4548, %v4560
    %v4585 = vadd.f32 %v4549, %v4560
    %v4586 = vadd.f32 %v4550, %v4560
    %v4587 = vadd.f32 %v4551, %v4560
    %v4588 = vadd.f32 %v4552, %v4560
    %v4589 = vadd.f32 %v4553, %v4560
    %v4590 = vadd.f32 %v4554, %v4560
    %v4591 = vadd.f32 %v4555, %v4560
    %v4592 = vadd.f32 %v4556, %v4560
    %v4593 = vadd.f32 %v4557, %v4560
    %v4594 = vmax.f32 %v4562, 0.0
    %v4595 = vmax.f32 %v4563, 0.0
    %v4596 = vmax.f32 %v4564, 0.0
    %v4597 = vmax.f32 %v4565, 0.0
    %v4598 = vmax.f32 %v4566, 0.0
    %v4599 = vmax.f32 %v4567, 0.0
    %v4600 = vmax.f32 %v4568, 0.0
    %v4601 = vmax.f32 %v4569, 0.0
    %v4602 = vmax.f32 %v4570, 0.0
    %v4603 = vmax.f32 %v4571, 0.0
    %v4604 = vmax.f32 %v4572, 0.0
    %v4605 = vmax.f32 %v4573, 0.0
    %v4606 = vmax.f32 %v4574, 0.0
    %v4607 = vmax.f32 %v4575, 0.0
    %v4608 = vmax.f32 %v4576, 0.0
    %v4609 = vmax.f32 %v4577, 0.0
    %v4610 = vmax.f32 %v4578, 0.0
    %v4611 = vmax.f32 %v4579, 0.0
    %v4612 = vmax.f32 %v4580, 0.0
    %v4613 = vmax.f32 %v4581, 0.0
    %v4614 = vmax.f32 %v4582, 0.0
    %v4615 = vmax.f32 %v4583, 0.0
    %v4616 = vmax.f32 %v4584, 0.0
    %v4617 = vmax.f32 %v4585, 0.0
    %v4618 = vmax.f32 %v4586, 0.0
    %v4619 = vmax.f32 %v4587, 0.0
    %v4620 = vmax.f32 %v4588, 0.0
    %v4621 = vmax.f32 %v4589, 0.0
    %v4622 = vmax.f32 %v4590, 0.0
    %v4623 = vmax.f32 %v4591, 0.0
    %v4624 = vmax.f32 %v4592, 0.0
    %v4625 = vmax.f32 %v4593, 0.0
    %v4626 = vrot.slane %v4594, 4
    %v4627 = vrot.slane %v4595, 4
    %v4628 = vrot.slane %v4596, 4
    %v4629 = vrot.slane %v4597, 4
    %v4630 = vrot.slane %v4598, 4
    %v4631 = vrot.slane %v4599, 4
    %v4632 = vrot.slane %v4600, 4
    %v4633 = vrot.slane %v4601, 4
    %v4634 = vrot.slane %v4602, 4
    %v4635 = vrot.slane %v4603, 4
    %v4636 = vrot.slane %v4604, 4
    %v4637 = vrot.slane %v4605, 4
    %v4638 = vrot.slane %v4606, 4
    %v4639 = vrot.slane %v4607, 4
    %v4640 = vrot.slane %v4608, 4
    %v4641 = vrot.slane %v4609, 4
    %v4642 = vrot.slane %v4610, 4
    %v4643 = vrot.slane %v4611, 4
    %v4644 = vrot.slane %v4612, 4
    %v4645 = vrot.slane %v4613, 4
    %v4646 = vrot.slane %v4614, 4
    %v4647 = vrot.slane %v4615, 4
    %v4648 = vrot.slane %v4616, 4
    %v4649 = vrot.slane %v4617, 4
    %v4650 = vrot.slane %v4618, 4
    %v4651 = vrot.slane %v4619, 4
    %v4652 = vrot.slane %v4620, 4
    %v4653 = vrot.slane %v4621, 4
    %v4654 = vrot.slane %v4622, 4
    %v4655 = vrot.slane %v4623, 4
    %v4656 = vrot.slane %v4624, 4
    %v4657 = vrot.slane %v4625, 4
    %v4658 = vsel %vm2837, %v4656, %v4657
    %v4659 = vsel %vm2837, %v4655, %v4656
    %v4660 = vsel %vm2837, %v4654, %v4655
    %v4661 = vsel %vm2837, %v4653, %v4654
    %v4662 = vsel %vm2837, %v4652, %v4653
    %v4663 = vsel %vm2837, %v4651, %v4652
    %v4664 = vsel %vm2837, %v4650, %v4651
    %v4665 = vsel %vm2837, %v4649, %v4650
    %v4666 = vsel %vm2837, %v4648, %v4649
    %v4667 = vsel %vm2837, %v4647, %v4648
    %v4668 = vsel %vm2837, %v4646, %v4647
    %v4669 = vsel %vm2837, %v4645, %v4646
    %v4670 = vsel %vm2837, %v4644, %v4645
    %v4671 = vsel %vm2837, %v4643, %v4644
    %v4672 = vsel %vm2837, %v4642, %v4643
    %v4673 = vsel %vm2837, %v4641, %v4642
    %v4674 = vsel %vm2837, %v4640, %v4641
    %v4675 = vsel %vm2837, %v4639, %v4640
    %v4676 = vsel %vm2837, %v4638, %v4639
    %v4677 = vsel %vm2837, %v4637, %v4638
    %v4678 = vsel %vm2837, %v4636, %v4637
    %v4679 = vsel %vm2837, %v4635, %v4636
    %v4680 = vsel %vm2837, %v4634, %v4635
    %v4681 = vsel %vm2837, %v4633, %v4634
    %v4682 = vsel %vm2837, %v4632, %v4633
    %v4683 = vsel %vm2837, %v4631, %v4632
    %v4684 = vsel %vm2837, %v4630, %v4631
    %v4685 = vsel %vm2837, %v4629, %v4630
    %v4686 = vsel %vm2837, %v4628, %v4629
    %v4687 = vsel %vm2837, %v4627, %v4628
    %v4688 = vsel %vm2837, %v4626, %v4627
    %v4689 = vsel %vm2837, %v4657, %v4626
    %v4690 = vmax.f32 %v4594, %v4688
    %v4691 = vmax.f32 %v4595, %v4687
    %v4692 = vmax.f32 %v4596, %v4686
    %v4693 = vmax.f32 %v4597, %v4685
    %v4694 = vmax.f32 %v4598, %v4684
    %v4695 = vmax.f32 %v4599, %v4683
    %v4696 = vmax.f32 %v4600, %v4682
    %v4697 = vmax.f32 %v4601, %v4681
    %v4698 = vmax.f32 %v4602, %v4680
    %v4699 = vmax.f32 %v4603, %v4679
    %v4700 = vmax.f32 %v4604, %v4678
    %v4701 = vmax.f32 %v4605, %v4677
    %v4702 = vmax.f32 %v4606, %v4676
    %v4703 = vmax.f32 %v4607, %v4675
    %v4704 = vmax.f32 %v4608, %v4674
    %v4705 = vmax.f32 %v4609, %v4673
    %v4706 = vmax.f32 %v4610, %v4672
    %v4707 = vmax.f32 %v4611, %v4671
    %v4708 = vmax.f32 %v4612, %v4670
    %v4709 = vmax.f32 %v4613, %v4669
    %v4710 = vmax.f32 %v4614, %v4668
    %v4711 = vmax.f32 %v4615, %v4667
    %v4712 = vmax.f32 %v4616, %v4666
    %v4713 = vmax.f32 %v4617, %v4665
    %v4714 = vmax.f32 %v4618, %v4664
    %v4715 = vmax.f32 %v4619, %v4663
    %v4716 = vmax.f32 %v4620, %v4662
    %v4717 = vmax.f32 %v4621, %v4661
    %v4718 = vmax.f32 %v4622, %v4660
    %v4719 = vmax.f32 %v4623, %v4659
    %v4720 = vmax.f32 %v4624, %v4658
    %v4721 = vmax.f32 %v4625, %v4689
    %v4722 = vld [vmem:[%s10] sm:$0xff]
    %v4723 = vld [vmem:[%s10 + $0x8] sm:$0xff]
    %v4724 = vld [vmem:[%s10 + $0x10] sm:$0xff]
    %v4725 = vld [vmem:[%s10 + $0x18] sm:$0xff]
    %v4726 = vld [vmem:[%s10 + $0x20] sm:$0xff]
    %v4727 = vld [vmem:[%s10 + $0x28] sm:$0xff]
    %v4728 = vld [vmem:[%s10 + $0x30] sm:$0xff]
    %v4729 = vld [vmem:[%s10 + $0x38] sm:$0xff]
    %v4730 = vld [vmem:[%s10 + $0x40] sm:$0xff]
    %v4731 = vld [vmem:[%s10 + $0x48] sm:$0xff]
    %v4732 = vld [vmem:[%s10 + $0x50] sm:$0xff]
    %v4733 = vld [vmem:[%s10 + $0x58] sm:$0xff]
    %v4734 = vsel %vm1718, %v4721, 0.0
    %v4735 = vsel %vm1719, %v4690, 0.0
    %v4736 = vsel %vm1720, %v4691, 0.0
    %v4737 = vsel %vm1721, %v4692, 0.0
    %v4738 = vsel %vm1722, %v4693, 0.0
    %v4739 = vsel %vm1723, %v4694, 0.0
    %v4740 = vsel %vm1724, %v4695, 0.0
    %v4741 = vsel %vm1725, %v4696, 0.0
    %v4742 = vsel %vm1726, %v4697, 0.0
    %v4743 = vsel %vm1727, %v4698, 0.0
    %v4744 = vsel %vm1728, %v4699, 0.0
    %v4745 = vsel %vm1729, %v4700, 0.0
    %v4746 = vsel %vm1730, %v4701, 0.0
    %v4747 = vsel %vm1731, %v4702, 0.0
    %v4748 = vsel %vm1732, %v4703, 0.0
    %v4749 = vsel %vm1733, %v4704, 0.0
    %v4750 = vsel %vm1734, %v4705, 0.0
    %v4751 = vsel %vm1735, %v4706, 0.0
    %v4752 = vsel %vm1736, %v4707, 0.0
    %v4753 = vsel %vm1737, %v4708, 0.0
    %v4754 = vsel %vm1738, %v4709, 0.0
    %v4755 = vsel %vm1739, %v4710, 0.0
    %v4756 = vsel %vm1740, %v4711, 0.0
    %v4757 = vsel %vm1741, %v4712, 0.0
    %v4758 = vsel %vm1742, %v4713, 0.0
    %v4759 = vsel %vm1743, %v4714, 0.0
    %v4760 = vsel %vm1744, %v4715, 0.0
    %v4761 = vsel %vm1745, %v4716, 0.0
    %v4762 = vsel %vm1746, %v4717, 0.0
    %v4763 = vsel %vm1747, %v4718, 0.0
    %v4764 = vsel %vm1748, %v4719, 0.0
    %v4765 = vsel %vm1749, %v4720, 0.0
    %vm4766 = vcmp.ne.s32.totalorder %v493, 40
    %vm4767 = vcmp.ne.s32.totalorder %v494, 40
    %vm4768 = vcmp.ne.s32.totalorder %v495, 40
    %vm4769 = vcmp.ne.s32.totalorder %v496, 40
    %vm4770 = vcmp.ne.s32.totalorder %v497, 40
    %vm4771 = vcmp.ne.s32.totalorder %v498, 40
    %vm4772 = vcmp.ne.s32.totalorder %v499, 40
    %vm4773 = vcmp.ne.s32.totalorder %v500, 40
    %vm4774 = vcmp.ne.s32.totalorder %v501, 40
    %vm4775 = vcmp.ne.s32.totalorder %v502, 40
    %vm4776 = vcmp.ne.s32.totalorder %v503, 40
    %vm4777 = vcmp.ne.s32.totalorder %v504, 40
    %vm4778 = vcmp.ne.s32.totalorder %v505, 40
    %vm4779 = vcmp.ne.s32.totalorder %v506, 40
    %vm4780 = vcmp.ne.s32.totalorder %v507, 40
    %vm4781 = vcmp.ne.s32.totalorder %v508, 40
    %vm4782 = vcmp.ne.s32.totalorder %v509, 40
    %vm4783 = vcmp.ne.s32.totalorder %v510, 40
    %vm4784 = vcmp.ne.s32.totalorder %v511, 40
    %vm4785 = vcmp.ne.s32.totalorder %v512, 40
    %vm4786 = vcmp.ne.s32.totalorder %v513, 40
    %vm4787 = vcmp.ne.s32.totalorder %v514, 40
    %vm4788 = vcmp.ne.s32.totalorder %v515, 40
    %vm4789 = vcmp.ne.s32.totalorder %v516, 40
    %vm4790 = vcmp.ne.s32.totalorder %v517, 40
    %vm4791 = vcmp.ne.s32.totalorder %v518, 40
    %vm4792 = vcmp.ne.s32.totalorder %v519, 40
    %vm4793 = vcmp.ne.s32.totalorder %v520, 40
    %vm4794 = vcmp.ne.s32.totalorder %v521, 40
    %vm4795 = vcmp.ne.s32.totalorder %v522, 40
    %vm4796 = vcmp.ne.s32.totalorder %v523, 40
    %vm4797 = vcmp.ne.s32.totalorder %v524, 40
    %v4798 = vsel %vm4766, 1, 0
    %v4799 = vsel %vm4767, 1, 0
    %v4800 = vsel %vm4768, 1, 0
    %v4801 = vsel %vm4769, 1, 0
    %v4802 = vsel %vm4770, 1, 0
    %v4803 = vsel %vm4771, 1, 0
    %v4804 = vsel %vm4772, 1, 0
    %v4805 = vsel %vm4773, 1, 0
    %v4806 = vsel %vm4774, 1, 0
    %v4807 = vsel %vm4775, 1, 0
    %v4808 = vsel %vm4776, 1, 0
    %v4809 = vsel %vm4777, 1, 0
    %v4810 = vsel %vm4778, 1, 0
    %v4811 = vsel %vm4779, 1, 0
    %v4812 = vsel %vm4780, 1, 0
    %v4813 = vsel %vm4781, 1, 0
    %v4814 = vsel %vm4782, 1, 0
    %v4815 = vsel %vm4783, 1, 0
    %v4816 = vsel %vm4784, 1, 0
    %v4817 = vsel %vm4785, 1, 0
    %v4818 = vsel %vm4786, 1, 0
    %v4819 = vsel %vm4787, 1, 0
    %v4820 = vsel %vm4788, 1, 0
    %v4821 = vsel %vm4789, 1, 0
    %v4822 = vsel %vm4790, 1, 0
    %v4823 = vsel %vm4791, 1, 0
    %v4824 = vsel %vm4792, 1, 0
    %v4825 = vsel %vm4793, 1, 0
    %v4826 = vsel %vm4794, 1, 0
    %v4827 = vsel %vm4795, 1, 0
    %v4828 = vsel %vm4796, 1, 0
    %v4829 = vsel %vm4797, 1, 0
    %vm4830 = vcmp.eq.s32.totalorder %v4798, 1
    %vm4831 = vcmp.eq.s32.totalorder %v4799, 1
    %vm4832 = vcmp.eq.s32.totalorder %v4800, 1
    %vm4833 = vcmp.eq.s32.totalorder %v4801, 1
    %vm4834 = vcmp.eq.s32.totalorder %v4802, 1
    %vm4835 = vcmp.eq.s32.totalorder %v4803, 1
    %vm4836 = vcmp.eq.s32.totalorder %v4804, 1
    %vm4837 = vcmp.eq.s32.totalorder %v4805, 1
    %vm4838 = vcmp.eq.s32.totalorder %v4806, 1
    %vm4839 = vcmp.eq.s32.totalorder %v4807, 1
    %vm4840 = vcmp.eq.s32.totalorder %v4808, 1
    %vm4841 = vcmp.eq.s32.totalorder %v4809, 1
    %vm4842 = vcmp.eq.s32.totalorder %v4810, 1
    %vm4843 = vcmp.eq.s32.totalorder %v4811, 1
    %vm4844 = vcmp.eq.s32.totalorder %v4812, 1
    %vm4845 = vcmp.eq.s32.totalorder %v4813, 1
    %vm4846 = vcmp.eq.s32.totalorder %v4814, 1
    %vm4847 = vcmp.eq.s32.totalorder %v4815, 1
    %vm4848 = vcmp.eq.s32.totalorder %v4816, 1
    %vm4849 = vcmp.eq.s32.totalorder %v4817, 1
    %vm4850 = vcmp.eq.s32.totalorder %v4818, 1
    %vm4851 = vcmp.eq.s32.totalorder %v4819, 1
    %vm4852 = vcmp.eq.s32.totalorder %v4820, 1
    %vm4853 = vcmp.eq.s32.totalorder %v4821, 1
    %vm4854 = vcmp.eq.s32.totalorder %v4822, 1
    %vm4855 = vcmp.eq.s32.totalorder %v4823, 1
    %vm4856 = vcmp.eq.s32.totalorder %v4824, 1
    %vm4857 = vcmp.eq.s32.totalorder %v4825, 1
    %vm4858 = vcmp.eq.s32.totalorder %v4826, 1
    %vm4859 = vcmp.eq.s32.totalorder %v4827, 1
    %vm4860 = vcmp.eq.s32.totalorder %v4828, 1
    %vm4861 = vcmp.eq.s32.totalorder %v4829, 1
    %v4862 = vsel %vm4830, %v4691, 0.0
    %v4863 = vsel %vm4831, %v4692, 0.0
    %v4864 = vsel %vm4832, %v4693, 0.0
    %v4865 = vsel %vm4833, %v4694, 0.0
    %v4866 = vsel %vm4834, %v4695, 0.0
    %v4867 = vsel %vm4835, %v4696, 0.0
    %v4868 = vsel %vm4836, %v4697, 0.0
    %v4869 = vsel %vm4837, %v4698, 0.0
    %v4870 = vsel %vm4838, %v4699, 0.0
    %v4871 = vsel %vm4839, %v4700, 0.0
    %v4872 = vsel %vm4840, %v4701, 0.0
    %v4873 = vsel %vm4841, %v4702, 0.0
    %v4874 = vsel %vm4842, %v4703, 0.0
    %v4875 = vsel %vm4843, %v4704, 0.0
    %v4876 = vsel %vm4844, %v4705, 0.0
    %v4877 = vsel %vm4845, %v4706, 0.0
    %v4878 = vsel %vm4846, %v4707, 0.0
    %v4879 = vsel %vm4847, %v4708, 0.0
    %v4880 = vsel %vm4848, %v4709, 0.0
    %v4881 = vsel %vm4849, %v4710, 0.0
    %v4882 = vsel %vm4850, %v4711, 0.0
    %v4883 = vsel %vm4851, %v4712, 0.0
    %v4884 = vsel %vm4852, %v4713, 0.0
    %v4885 = vsel %vm4853, %v4714, 0.0
    %v4886 = vsel %vm4854, %v4715, 0.0
    %v4887 = vsel %vm4855, %v4716, 0.0
    %v4888 = vsel %vm4856, %v4717, 0.0
    %v4889 = vsel %vm4857, %v4718, 0.0
    %v4890 = vsel %vm4858, %v4719, 0.0
    %v4891 = vsel %vm4859, %v4720, 0.0
    %v4892 = vsel %vm4860, %v4721, 0.0
    %v4893 = vsel %vm4861, %v4690, 0.0
    %v4895 = vsel %vm3898, %v4690, 0
    %v4898 = vsel %vm3898, %v4691, 0
    %v4901 = vsel %vm3898, %v4692, 0
    %v4904 = vsel %vm3898, %v4693, 0
    %v4907 = vsel %vm3898, %v4694, 0
    %v4910 = vsel %vm3898, %v4695, 0
    %v4913 = vsel %vm3898, %v4696, 0
    %v4916 = vsel %vm3898, %v4697, 0
    %v4919 = vsel %vm3898, %v4698, 0
    %v4922 = vsel %vm3898, %v4699, 0
    %v4925 = vsel %vm3898, %v4700, 0
    %v4928 = vsel %vm3898, %v4701, 0
    %v4931 = vsel %vm3898, %v4702, 0
    %v4934 = vsel %vm3898, %v4703, 0
    %v4937 = vsel %vm3898, %v4704, 0
    %v4940 = vsel %vm3898, %v4705, 0
    %v4943 = vsel %vm3898, %v4706, 0
    %v4946 = vsel %vm3898, %v4707, 0
    %v4949 = vsel %vm3898, %v4708, 0
    %v4952 = vsel %vm3898, %v4709, 0
    %v4955 = vsel %vm3898, %v4710, 0
    %v4958 = vsel %vm3898, %v4711, 0
    %v4961 = vsel %vm3898, %v4712, 0
    %v4964 = vsel %vm3898, %v4713, 0
    %v4967 = vsel %vm3898, %v4714, 0
    %v4970 = vsel %vm3898, %v4715, 0
    %v4973 = vsel %vm3898, %v4716, 0
    %v4976 = vsel %vm3898, %v4717, 0
    %v4979 = vsel %vm3898, %v4718, 0
    %v4982 = vsel %vm3898, %v4719, 0
    %v4985 = vsel %vm3898, %v4720, 0
    %v4988 = vsel %vm3898, %v4721, 0
    %4990 = vmatpush.msra.mxu0 0.0
    %4991 = vmatpush.msra.mxu0 0.0
    %4992 = vmatpush.msra.mxu0 0.0
    %4993 = vmatpush.msra.mxu0 0.0
    %4994 = vmatpush.msra.mxu0 0.0
    %4995 = vmatpush.msra.mxu0 0.0
    %4996 = vmatpush.msra.mxu0 0.0
    %4997 = vmatpush.msra.mxu0 0.0
    %4998 = vmatpush.msra.mxu0 0.0
    %4999 = vmatpush.msra.mxu0 0.0
    %5000 = vmatpush.msra.mxu0 0.0
    %5001 = vmatpush.msra.mxu0 0.0
    %5002 = vmatpush.msra.mxu0 %v4729
    %5003 = vmatpush.msra.mxu0 %v4728
    %5004 = vmatpush.msra.mxu0 %v4727
    %5005 = vmatpush.msra.mxu0 %v4726
    %5006 = vmatmul.f32.gmra.mxu0 %v4895
    %v5007 = vpop.f32.mrf.mxu0
    %v5008 = vadd.f32 0.0, %v5007
    %5009 = vmatmul.f32.gmra.mxu0 %v4898
    %v5010 = vpop.f32.mrf.mxu0
    %v5011 = vadd.f32 0.0, %v5010
    %5012 = vmatmul.f32.gmra.mxu0 %v4901
    %v5013 = vpop.f32.mrf.mxu0
    %v5014 = vadd.f32 0.0, %v5013
    %5015 = vmatmul.f32.gmra.mxu0 %v4904
    %v5016 = vpop.f32.mrf.mxu0
    %v5017 = vadd.f32 0.0, %v5016
    %5018 = vmatmul.f32.gmra.mxu0 %v4907
    %v5019 = vpop.f32.mrf.mxu0
    %v5020 = vadd.f32 0.0, %v5019
    %5021 = vmatmul.f32.gmra.mxu0 %v4910
    %v5022 = vpop.f32.mrf.mxu0
    %v5023 = vadd.f32 0.0, %v5022
    %5024 = vmatmul.f32.gmra.mxu0 %v4913
    %v5025 = vpop.f32.mrf.mxu0
    %v5026 = vadd.f32 0.0, %v5025
    %5027 = vmatmul.f32.gmra.mxu0 %v4916
    %v5028 = vpop.f32.mrf.mxu0
    %v5029 = vadd.f32 0.0, %v5028
    %5030 = vmatmul.f32.gmra.mxu0 %v4919
    %v5031 = vpop.f32.mrf.mxu0
    %v5032 = vadd.f32 0.0, %v5031
    %5033 = vmatmul.f32.gmra.mxu0 %v4922
    %v5034 = vpop.f32.mrf.mxu0
    %v5035 = vadd.f32 0.0, %v5034
    %5036 = vmatmul.f32.gmra.mxu0 %v4925
    %v5037 = vpop.f32.mrf.mxu0
    %v5038 = vadd.f32 0.0, %v5037
    %5039 = vmatmul.f32.gmra.mxu0 %v4928
    %v5040 = vpop.f32.mrf.mxu0
    %v5041 = vadd.f32 0.0, %v5040
    %5042 = vmatmul.f32.gmra.mxu0 %v4931
    %v5043 = vpop.f32.mrf.mxu0
    %v5044 = vadd.f32 0.0, %v5043
    %5045 = vmatmul.f32.gmra.mxu0 %v4934
    %v5046 = vpop.f32.mrf.mxu0
    %v5047 = vadd.f32 0.0, %v5046
    %5048 = vmatmul.f32.gmra.mxu0 %v4937
    %v5049 = vpop.f32.mrf.mxu0
    %v5050 = vadd.f32 0.0, %v5049
    %5051 = vmatmul.f32.gmra.mxu0 %v4940
    %v5052 = vpop.f32.mrf.mxu0
    %v5053 = vadd.f32 0.0, %v5052
    %5054 = vmatmul.f32.gmra.mxu0 %v4943
    %v5055 = vpop.f32.mrf.mxu0
    %v5056 = vadd.f32 0.0, %v5055
    %5057 = vmatmul.f32.gmra.mxu0 %v4946
    %v5058 = vpop.f32.mrf.mxu0
    %v5059 = vadd.f32 0.0, %v5058
    %5060 = vmatmul.f32.gmra.mxu0 %v4949
    %v5061 = vpop.f32.mrf.mxu0
    %v5062 = vadd.f32 0.0, %v5061
    %5063 = vmatmul.f32.gmra.mxu0 %v4952
    %v5064 = vpop.f32.mrf.mxu0
    %v5065 = vadd.f32 0.0, %v5064
    %5066 = vmatmul.f32.gmra.mxu0 %v4955
    %v5067 = vpop.f32.mrf.mxu0
    %v5068 = vadd.f32 0.0, %v5067
    %5069 = vmatmul.f32.gmra.mxu0 %v4958
    %v5070 = vpop.f32.mrf.mxu0
    %v5071 = vadd.f32 0.0, %v5070
    %5072 = vmatmul.f32.gmra.mxu0 %v4961
    %v5073 = vpop.f32.mrf.mxu0
    %v5074 = vadd.f32 0.0, %v5073
    %5075 = vmatmul.f32.gmra.mxu0 %v4964
    %v5076 = vpop.f32.mrf.mxu0
    %v5077 = vadd.f32 0.0, %v5076
    %5078 = vmatmul.f32.gmra.mxu0 %v4967
    %v5079 = vpop.f32.mrf.mxu0
    %v5080 = vadd.f32 0.0, %v5079
    %5081 = vmatmul.f32.gmra.mxu0 %v4970
    %v5082 = vpop.f32.mrf.mxu0
    %v5083 = vadd.f32 0.0, %v5082
    %5084 = vmatmul.f32.gmra.mxu0 %v4973
    %v5085 = vpop.f32.mrf.mxu0
    %v5086 = vadd.f32 0.0, %v5085
    %5087 = vmatmul.f32.gmra.mxu0 %v4976
    %v5088 = vpop.f32.mrf.mxu0
    %v5089 = vadd.f32 0.0, %v5088
    %5090 = vmatmul.f32.gmra.mxu0 %v4979
    %v5091 = vpop.f32.mrf.mxu0
    %v5092 = vadd.f32 0.0, %v5091
    %5093 = vmatmul.f32.gmra.mxu0 %v4982
    %v5094 = vpop.f32.mrf.mxu0
    %v5095 = vadd.f32 0.0, %v5094
    %5096 = vmatmul.f32.gmra.mxu0 %v4985
    %v5097 = vpop.f32.mrf.mxu0
    %v5098 = vadd.f32 0.0, %v5097
    %5099 = vmatmul.f32.gmra.mxu0 %v4988
    %v5100 = vpop.f32.mrf.mxu0
    %v5101 = vadd.f32 0.0, %v5100
    %5102 = vdwg.mxu0
    %v5104 = vsel %vm3898, %v4734, 0
    %v5107 = vsel %vm3898, %v4735, 0
    %v5110 = vsel %vm3898, %v4736, 0
    %v5113 = vsel %vm3898, %v4737, 0
    %v5116 = vsel %vm3898, %v4738, 0
    %v5119 = vsel %vm3898, %v4739, 0
    %v5122 = vsel %vm3898, %v4740, 0
    %v5125 = vsel %vm3898, %v4741, 0
    %v5128 = vsel %vm3898, %v4742, 0
    %v5131 = vsel %vm3898, %v4743, 0
    %v5134 = vsel %vm3898, %v4744, 0
    %v5137 = vsel %vm3898, %v4745, 0
    %v5140 = vsel %vm3898, %v4746, 0
    %v5143 = vsel %vm3898, %v4747, 0
    %v5146 = vsel %vm3898, %v4748, 0
    %v5149 = vsel %vm3898, %v4749, 0
    %v5152 = vsel %vm3898, %v4750, 0
    %v5155 = vsel %vm3898, %v4751, 0
    %v5158 = vsel %vm3898, %v4752, 0
    %v5161 = vsel %vm3898, %v4753, 0
    %v5164 = vsel %vm3898, %v4754, 0
    %v5167 = vsel %vm3898, %v4755, 0
    %v5170 = vsel %vm3898, %v4756, 0
    %v5173 = vsel %vm3898, %v4757, 0
    %v5176 = vsel %vm3898, %v4758, 0
    %v5179 = vsel %vm3898, %v4759, 0
    %v5182 = vsel %vm3898, %v4760, 0
    %v5185 = vsel %vm3898, %v4761, 0
    %v5188 = vsel %vm3898, %v4762, 0
    %v5191 = vsel %vm3898, %v4763, 0
    %v5194 = vsel %vm3898, %v4764, 0
    %v5197 = vsel %vm3898, %v4765, 0
    %5199 = vmatpush.msra.mxu0 0.0
    %5200 = vmatpush.msra.mxu0 0.0
    %5201 = vmatpush.msra.mxu0 0.0
    %5202 = vmatpush.msra.mxu0 0.0
    %5203 = vmatpush.msra.mxu0 0.0
    %5204 = vmatpush.msra.mxu0 0.0
    %5205 = vmatpush.msra.mxu0 0.0
    %5206 = vmatpush.msra.mxu0 0.0
    %5207 = vmatpush.msra.mxu0 0.0
    %5208 = vmatpush.msra.mxu0 0.0
    %5209 = vmatpush.msra.mxu0 0.0
    %5210 = vmatpush.msra.mxu0 0.0
    %5211 = vmatpush.msra.mxu0 %v4725
    %5212 = vmatpush.msra.mxu0 %v4724
    %5213 = vmatpush.msra.mxu0 %v4723
    %5214 = vmatpush.msra.mxu0 %v4722
    %5215 = vmatmul.f32.gmra.mxu0 %v5104
    %v5216 = vpop.f32.mrf.mxu0
    %v5217 = vadd.f32 %v5008, %v5216
    %5218 = vmatmul.f32.gmra.mxu0 %v5107
    %v5219 = vpop.f32.mrf.mxu0
    %v5220 = vadd.f32 %v5011, %v5219
    %5221 = vmatmul.f32.gmra.mxu0 %v5110
    %v5222 = vpop.f32.mrf.mxu0
    %v5223 = vadd.f32 %v5014, %v5222
    %5224 = vmatmul.f32.gmra.mxu0 %v5113
    %v5225 = vpop.f32.mrf.mxu0
    %v5226 = vadd.f32 %v5017, %v5225
    %5227 = vmatmul.f32.gmra.mxu0 %v5116
    %v5228 = vpop.f32.mrf.mxu0
    %v5229 = vadd.f32 %v5020, %v5228
    %5230 = vmatmul.f32.gmra.mxu0 %v5119
    %v5231 = vpop.f32.mrf.mxu0
    %v5232 = vadd.f32 %v5023, %v5231
    %5233 = vmatmul.f32.gmra.mxu0 %v5122
    %v5234 = vpop.f32.mrf.mxu0
    %v5235 = vadd.f32 %v5026, %v5234
    %5236 = vmatmul.f32.gmra.mxu0 %v5125
    %v5237 = vpop.f32.mrf.mxu0
    %v5238 = vadd.f32 %v5029, %v5237
    %5239 = vmatmul.f32.gmra.mxu0 %v5128
    %v5240 = vpop.f32.mrf.mxu0
    %v5241 = vadd.f32 %v5032, %v5240
    %5242 = vmatmul.f32.gmra.mxu0 %v5131
    %v5243 = vpop.f32.mrf.mxu0
    %v5244 = vadd.f32 %v5035, %v5243
    %5245 = vmatmul.f32.gmra.mxu0 %v5134
    %v5246 = vpop.f32.mrf.mxu0
    %v5247 = vadd.f32 %v5038, %v5246
    %5248 = vmatmul.f32.gmra.mxu0 %v5137
    %v5249 = vpop.f32.mrf.mxu0
    %v5250 = vadd.f32 %v5041, %v5249
    %5251 = vmatmul.f32.gmra.mxu0 %v5140
    %v5252 = vpop.f32.mrf.mxu0
    %v5253 = vadd.f32 %v5044, %v5252
    %5254 = vmatmul.f32.gmra.mxu0 %v5143
    %v5255 = vpop.f32.mrf.mxu0
    %v5256 = vadd.f32 %v5047, %v5255
    %5257 = vmatmul.f32.gmra.mxu0 %v5146
    %v5258 = vpop.f32.mrf.mxu0
    %v5259 = vadd.f32 %v5050, %v5258
    %5260 = vmatmul.f32.gmra.mxu0 %v5149
    %v5261 = vpop.f32.mrf.mxu0
    %v5262 = vadd.f32 %v5053, %v5261
    %5263 = vmatmul.f32.gmra.mxu0 %v5152
    %v5264 = vpop.f32.mrf.mxu0
    %v5265 = vadd.f32 %v5056, %v5264
    %5266 = vmatmul.f32.gmra.mxu0 %v5155
    %v5267 = vpop.f32.mrf.mxu0
    %v5268 = vadd.f32 %v5059, %v5267
    %5269 = vmatmul.f32.gmra.mxu0 %v5158
    %v5270 = vpop.f32.mrf.mxu0
    %v5271 = vadd.f32 %v5062, %v5270
    %5272 = vmatmul.f32.gmra.mxu0 %v5161
    %v5273 = vpop.f32.mrf.mxu0
    %v5274 = vadd.f32 %v5065, %v5273
    %5275 = vmatmul.f32.gmra.mxu0 %v5164
    %v5276 = vpop.f32.mrf.mxu0
    %v5277 = vadd.f32 %v5068, %v5276
    %5278 = vmatmul.f32.gmra.mxu0 %v5167
    %v5279 = vpop.f32.mrf.mxu0
    %v5280 = vadd.f32 %v5071, %v5279
    %5281 = vmatmul.f32.gmra.mxu0 %v5170
    %v5282 = vpop.f32.mrf.mxu0
    %v5283 = vadd.f32 %v5074, %v5282
    %5284 = vmatmul.f32.gmra.mxu0 %v5173
    %v5285 = vpop.f32.mrf.mxu0
    %v5286 = vadd.f32 %v5077, %v5285
    %5287 = vmatmul.f32.gmra.mxu0 %v5176
    %v5288 = vpop.f32.mrf.mxu0
    %v5289 = vadd.f32 %v5080, %v5288
    %5290 = vmatmul.f32.gmra.mxu0 %v5179
    %v5291 = vpop.f32.mrf.mxu0
    %v5292 = vadd.f32 %v5083, %v5291
    %5293 = vmatmul.f32.gmra.mxu0 %v5182
    %v5294 = vpop.f32.mrf.mxu0
    %v5295 = vadd.f32 %v5086, %v5294
    %5296 = vmatmul.f32.gmra.mxu0 %v5185
    %v5297 = vpop.f32.mrf.mxu0
    %v5298 = vadd.f32 %v5089, %v5297
    %5299 = vmatmul.f32.gmra.mxu0 %v5188
    %v5300 = vpop.f32.mrf.mxu0
    %v5301 = vadd.f32 %v5092, %v5300
    %5302 = vmatmul.f32.gmra.mxu0 %v5191
    %v5303 = vpop.f32.mrf.mxu0
    %v5304 = vadd.f32 %v5095, %v5303
    %5305 = vmatmul.f32.gmra.mxu0 %v5194
    %v5306 = vpop.f32.mrf.mxu0
    %v5307 = vadd.f32 %v5098, %v5306
    %5308 = vmatmul.f32.gmra.mxu0 %v5197
    %v5309 = vpop.f32.mrf.mxu0
    %v5310 = vadd.f32 %v5101, %v5309
    %5311 = vdwg.mxu0
    %v5313 = vsel %vm3898, %v4862, 0
    %v5316 = vsel %vm3898, %v4863, 0
    %v5319 = vsel %vm3898, %v4864, 0
    %v5322 = vsel %vm3898, %v4865, 0
    %v5325 = vsel %vm3898, %v4866, 0
    %v5328 = vsel %vm3898, %v4867, 0
    %v5331 = vsel %vm3898, %v4868, 0
    %v5334 = vsel %vm3898, %v4869, 0
    %v5337 = vsel %vm3898, %v4870, 0
    %v5340 = vsel %vm3898, %v4871, 0
    %v5343 = vsel %vm3898, %v4872, 0
    %v5346 = vsel %vm3898, %v4873, 0
    %v5349 = vsel %vm3898, %v4874, 0
    %v5352 = vsel %vm3898, %v4875, 0
    %v5355 = vsel %vm3898, %v4876, 0
    %v5358 = vsel %vm3898, %v4877, 0
    %v5361 = vsel %vm3898, %v4878, 0
    %v5364 = vsel %vm3898, %v4879, 0
    %v5367 = vsel %vm3898, %v4880, 0
    %v5370 = vsel %vm3898, %v4881, 0
    %v5373 = vsel %vm3898, %v4882, 0
    %v5376 = vsel %vm3898, %v4883, 0
    %v5379 = vsel %vm3898, %v4884, 0
    %v5382 = vsel %vm3898, %v4885, 0
    %v5385 = vsel %vm3898, %v4886, 0
    %v5388 = vsel %vm3898, %v4887, 0
    %v5391 = vsel %vm3898, %v4888, 0
    %v5394 = vsel %vm3898, %v4889, 0
    %v5397 = vsel %vm3898, %v4890, 0
    %v5400 = vsel %vm3898, %v4891, 0
    %v5403 = vsel %vm3898, %v4892, 0
    %v5406 = vsel %vm3898, %v4893, 0
    %5408 = vmatpush.msra.mxu0 0.0
    %5409 = vmatpush.msra.mxu0 0.0
    %5410 = vmatpush.msra.mxu0 0.0
    %5411 = vmatpush.msra.mxu0 0.0
    %5412 = vmatpush.msra.mxu0 0.0
    %5413 = vmatpush.msra.mxu0 0.0
    %5414 = vmatpush.msra.mxu0 0.0
    %5415 = vmatpush.msra.mxu0 0.0
    %5416 = vmatpush.msra.mxu0 0.0
    %5417 = vmatpush.msra.mxu0 0.0
    %5418 = vmatpush.msra.mxu0 0.0
    %5419 = vmatpush.msra.mxu0 0.0
    %5420 = vmatpush.msra.mxu0 %v4733
    %5421 = vmatpush.msra.mxu0 %v4732
    %5422 = vmatpush.msra.mxu0 %v4731
    %5423 = vmatpush.msra.mxu0 %v4730
    %5424 = vmatmul.f32.gmra.mxu0 %v5313
    %v5425 = vpop.f32.mrf.mxu0
    %v5426 = vadd.f32 0.0, %v5425
    %5427 = vmatmul.f32.gmra.mxu0 %v5316
    %v5428 = vpop.f32.mrf.mxu0
    %v5429 = vadd.f32 0.0, %v5428
    %5430 = vmatmul.f32.gmra.mxu0 %v5319
    %v5431 = vpop.f32.mrf.mxu0
    %v5432 = vadd.f32 0.0, %v5431
    %5433 = vmatmul.f32.gmra.mxu0 %v5322
    %v5434 = vpop.f32.mrf.mxu0
    %v5435 = vadd.f32 0.0, %v5434
    %5436 = vmatmul.f32.gmra.mxu0 %v5325
    %v5437 = vpop.f32.mrf.mxu0
    %v5438 = vadd.f32 0.0, %v5437
    %5439 = vmatmul.f32.gmra.mxu0 %v5328
    %v5440 = vpop.f32.mrf.mxu0
    %v5441 = vadd.f32 0.0, %v5440
    %5442 = vmatmul.f32.gmra.mxu0 %v5331
    %v5443 = vpop.f32.mrf.mxu0
    %v5444 = vadd.f32 0.0, %v5443
    %5445 = vmatmul.f32.gmra.mxu0 %v5334
    %v5446 = vpop.f32.mrf.mxu0
    %v5447 = vadd.f32 0.0, %v5446
    %5448 = vmatmul.f32.gmra.mxu0 %v5337
    %v5449 = vpop.f32.mrf.mxu0
    %v5450 = vadd.f32 0.0, %v5449
    %5451 = vmatmul.f32.gmra.mxu0 %v5340
    %v5452 = vpop.f32.mrf.mxu0
    %v5453 = vadd.f32 0.0, %v5452
    %5454 = vmatmul.f32.gmra.mxu0 %v5343
    %v5455 = vpop.f32.mrf.mxu0
    %v5456 = vadd.f32 0.0, %v5455
    %5457 = vmatmul.f32.gmra.mxu0 %v5346
    %v5458 = vpop.f32.mrf.mxu0
    %v5459 = vadd.f32 0.0, %v5458
    %5460 = vmatmul.f32.gmra.mxu0 %v5349
    %v5461 = vpop.f32.mrf.mxu0
    %v5462 = vadd.f32 0.0, %v5461
    %5463 = vmatmul.f32.gmra.mxu0 %v5352
    %v5464 = vpop.f32.mrf.mxu0
    %v5465 = vadd.f32 0.0, %v5464
    %5466 = vmatmul.f32.gmra.mxu0 %v5355
    %v5467 = vpop.f32.mrf.mxu0
    %v5468 = vadd.f32 0.0, %v5467
    %5469 = vmatmul.f32.gmra.mxu0 %v5358
    %v5470 = vpop.f32.mrf.mxu0
    %v5471 = vadd.f32 0.0, %v5470
    %5472 = vmatmul.f32.gmra.mxu0 %v5361
    %v5473 = vpop.f32.mrf.mxu0
    %v5474 = vadd.f32 0.0, %v5473
    %5475 = vmatmul.f32.gmra.mxu0 %v5364
    %v5476 = vpop.f32.mrf.mxu0
    %v5477 = vadd.f32 0.0, %v5476
    %5478 = vmatmul.f32.gmra.mxu0 %v5367
    %v5479 = vpop.f32.mrf.mxu0
    %v5480 = vadd.f32 0.0, %v5479
    %5481 = vmatmul.f32.gmra.mxu0 %v5370
    %v5482 = vpop.f32.mrf.mxu0
    %v5483 = vadd.f32 0.0, %v5482
    %5484 = vmatmul.f32.gmra.mxu0 %v5373
    %v5485 = vpop.f32.mrf.mxu0
    %v5486 = vadd.f32 0.0, %v5485
    %5487 = vmatmul.f32.gmra.mxu0 %v5376
    %v5488 = vpop.f32.mrf.mxu0
    %v5489 = vadd.f32 0.0, %v5488
    %5490 = vmatmul.f32.gmra.mxu0 %v5379
    %v5491 = vpop.f32.mrf.mxu0
    %v5492 = vadd.f32 0.0, %v5491
    %5493 = vmatmul.f32.gmra.mxu0 %v5382
    %v5494 = vpop.f32.mrf.mxu0
    %v5495 = vadd.f32 0.0, %v5494
    %5496 = vmatmul.f32.gmra.mxu0 %v5385
    %v5497 = vpop.f32.mrf.mxu0
    %v5498 = vadd.f32 0.0, %v5497
    %5499 = vmatmul.f32.gmra.mxu0 %v5388
    %v5500 = vpop.f32.mrf.mxu0
    %v5501 = vadd.f32 0.0, %v5500
    %5502 = vmatmul.f32.gmra.mxu0 %v5391
    %v5503 = vpop.f32.mrf.mxu0
    %v5504 = vadd.f32 0.0, %v5503
    %5505 = vmatmul.f32.gmra.mxu0 %v5394
    %v5506 = vpop.f32.mrf.mxu0
    %v5507 = vadd.f32 0.0, %v5506
    %5508 = vmatmul.f32.gmra.mxu0 %v5397
    %v5509 = vpop.f32.mrf.mxu0
    %v5510 = vadd.f32 0.0, %v5509
    %5511 = vmatmul.f32.gmra.mxu0 %v5400
    %v5512 = vpop.f32.mrf.mxu0
    %v5513 = vadd.f32 0.0, %v5512
    %5514 = vmatmul.f32.gmra.mxu0 %v5403
    %v5515 = vpop.f32.mrf.mxu0
    %v5516 = vadd.f32 0.0, %v5515
    %5517 = vmatmul.f32.gmra.mxu0 %v5406
    %v5518 = vpop.f32.mrf.mxu0
    %v5519 = vadd.f32 0.0, %v5518
    %5520 = vdwg.mxu0
    %v5521 = vadd.f32 %v5217, %v5426
    %v5522 = vadd.f32 %v5220, %v5429
    %v5523 = vadd.f32 %v5223, %v5432
    %v5524 = vadd.f32 %v5226, %v5435
    %v5525 = vadd.f32 %v5229, %v5438
    %v5526 = vadd.f32 %v5232, %v5441
    %v5527 = vadd.f32 %v5235, %v5444
    %v5528 = vadd.f32 %v5238, %v5447
    %v5529 = vadd.f32 %v5241, %v5450
    %v5530 = vadd.f32 %v5244, %v5453
    %v5531 = vadd.f32 %v5247, %v5456
    %v5532 = vadd.f32 %v5250, %v5459
    %v5533 = vadd.f32 %v5253, %v5462
    %v5534 = vadd.f32 %v5256, %v5465
    %v5535 = vadd.f32 %v5259, %v5468
    %v5536 = vadd.f32 %v5262, %v5471
    %v5537 = vadd.f32 %v5265, %v5474
    %v5538 = vadd.f32 %v5268, %v5477
    %v5539 = vadd.f32 %v5271, %v5480
    %v5540 = vadd.f32 %v5274, %v5483
    %v5541 = vadd.f32 %v5277, %v5486
    %v5542 = vadd.f32 %v5280, %v5489
    %v5543 = vadd.f32 %v5283, %v5492
    %v5544 = vadd.f32 %v5286, %v5495
    %v5545 = vadd.f32 %v5289, %v5498
    %v5546 = vadd.f32 %v5292, %v5501
    %v5547 = vadd.f32 %v5295, %v5504
    %v5548 = vadd.f32 %v5298, %v5507
    %v5549 = vadd.f32 %v5301, %v5510
    %v5550 = vadd.f32 %v5304, %v5513
    %v5551 = vadd.f32 %v5307, %v5516
    %v5552 = vadd.f32 %v5310, %v5519
    %v5553 = vld [vmem:[%s11] sm:$0x1]
    %v5555 = vperm.slane %v5553, 0
    %v5557 = vadd.f32 %v5521, %v5555
    %v5558 = vadd.f32 %v5522, %v5555
    %v5559 = vadd.f32 %v5523, %v5555
    %v5560 = vadd.f32 %v5524, %v5555
    %v5561 = vadd.f32 %v5525, %v5555
    %v5562 = vadd.f32 %v5526, %v5555
    %v5563 = vadd.f32 %v5527, %v5555
    %v5564 = vadd.f32 %v5528, %v5555
    %v5565 = vadd.f32 %v5529, %v5555
    %v5566 = vadd.f32 %v5530, %v5555
    %v5567 = vadd.f32 %v5531, %v5555
    %v5568 = vadd.f32 %v5532, %v5555
    %v5569 = vadd.f32 %v5533, %v5555
    %v5570 = vadd.f32 %v5534, %v5555
    %v5571 = vadd.f32 %v5535, %v5555
    %v5572 = vadd.f32 %v5536, %v5555
    %v5573 = vadd.f32 %v5537, %v5555
    %v5574 = vadd.f32 %v5538, %v5555
    %v5575 = vadd.f32 %v5539, %v5555
    %v5576 = vadd.f32 %v5540, %v5555
    %v5577 = vadd.f32 %v5541, %v5555
    %v5578 = vadd.f32 %v5542, %v5555
    %v5579 = vadd.f32 %v5543, %v5555
    %v5580 = vadd.f32 %v5544, %v5555
    %v5581 = vadd.f32 %v5545, %v5555
    %v5582 = vadd.f32 %v5546, %v5555
    %v5583 = vadd.f32 %v5547, %v5555
    %v5584 = vadd.f32 %v5548, %v5555
    %v5585 = vadd.f32 %v5549, %v5555
    %v5586 = vadd.f32 %v5550, %v5555
    %v5587 = vadd.f32 %v5551, %v5555
    %v5588 = vadd.f32 %v5552, %v5555
    %v5589 = vmax.f32 %v5557, 0.0
    %v5590 = vmax.f32 %v5558, 0.0
    %v5591 = vmax.f32 %v5559, 0.0
    %v5592 = vmax.f32 %v5560, 0.0
    %v5593 = vmax.f32 %v5561, 0.0
    %v5594 = vmax.f32 %v5562, 0.0
    %v5595 = vmax.f32 %v5563, 0.0
    %v5596 = vmax.f32 %v5564, 0.0
    %v5597 = vmax.f32 %v5565, 0.0
    %v5598 = vmax.f32 %v5566, 0.0
    %v5599 = vmax.f32 %v5567, 0.0
    %v5600 = vmax.f32 %v5568, 0.0
    %v5601 = vmax.f32 %v5569, 0.0
    %v5602 = vmax.f32 %v5570, 0.0
    %v5603 = vmax.f32 %v5571, 0.0
    %v5604 = vmax.f32 %v5572, 0.0
    %v5605 = vmax.f32 %v5573, 0.0
    %v5606 = vmax.f32 %v5574, 0.0
    %v5607 = vmax.f32 %v5575, 0.0
    %v5608 = vmax.f32 %v5576, 0.0
    %v5609 = vmax.f32 %v5577, 0.0
    %v5610 = vmax.f32 %v5578, 0.0
    %v5611 = vmax.f32 %v5579, 0.0
    %v5612 = vmax.f32 %v5580, 0.0
    %v5613 = vmax.f32 %v5581, 0.0
    %v5614 = vmax.f32 %v5582, 0.0
    %v5615 = vmax.f32 %v5583, 0.0
    %v5616 = vmax.f32 %v5584, 0.0
    %v5617 = vmax.f32 %v5585, 0.0
    %v5618 = vmax.f32 %v5586, 0.0
    %v5619 = vmax.f32 %v5587, 0.0
    %v5620 = vmax.f32 %v5588, 0.0
    %v5621 = vld [vmem:[%s12] sm:$0xff]
    %v5622 = vld [vmem:[%s12 + $0x8] sm:$0xff]
    %v5623 = vld [vmem:[%s12 + $0x10] sm:$0xff]
    %v5624 = vld [vmem:[%s12 + $0x18] sm:$0xff]
    %v5625 = vld [vmem:[%s12 + $0x20] sm:$0xff]
    %v5626 = vld [vmem:[%s12 + $0x28] sm:$0xff]
    %v5627 = vld [vmem:[%s12 + $0x30] sm:$0xff]
    %v5628 = vld [vmem:[%s12 + $0x38] sm:$0xff]
    %v5629 = vld [vmem:[%s12 + $0x40] sm:$0xff]
    %v5630 = vld [vmem:[%s12 + $0x48] sm:$0xff]
    %v5631 = vld [vmem:[%s12 + $0x50] sm:$0xff]
    %v5632 = vld [vmem:[%s12 + $0x58] sm:$0xff]
    %v5633 = vld [vmem:[%s12 + $0x60] sm:$0xff]
    %v5634 = vld [vmem:[%s12 + $0x68] sm:$0xff]
    %v5635 = vld [vmem:[%s12 + $0x70] sm:$0xff]
    %v5636 = vld [vmem:[%s12 + $0x78] sm:$0xff]
    %v5637 = vld [vmem:[%s12 + $0x80] sm:$0xff]
    %v5638 = vld [vmem:[%s12 + $0x88] sm:$0xff]
    %v5639 = vld [vmem:[%s12 + $0x90] sm:$0xff]
    %v5640 = vld [vmem:[%s12 + $0x98] sm:$0xff]
    %v5641 = vld [vmem:[%s12 + $0xa0] sm:$0xff]
    %v5642 = vld [vmem:[%s12 + $0xa8] sm:$0xff]
    %v5643 = vld [vmem:[%s12 + $0xb0] sm:$0xff]
    %v5644 = vld [vmem:[%s12 + $0xb8] sm:$0xff]
    %v5645 = vsel %vm1718, %v5620, 0.0
    %v5646 = vsel %vm1719, %v5589, 0.0
    %v5647 = vsel %vm1720, %v5590, 0.0
    %v5648 = vsel %vm1721, %v5591, 0.0
    %v5649 = vsel %vm1722, %v5592, 0.0
    %v5650 = vsel %vm1723, %v5593, 0.0
    %v5651 = vsel %vm1724, %v5594, 0.0
    %v5652 = vsel %vm1725, %v5595, 0.0
    %v5653 = vsel %vm1726, %v5596, 0.0
    %v5654 = vsel %vm1727, %v5597, 0.0
    %v5655 = vsel %vm1728, %v5598, 0.0
    %v5656 = vsel %vm1729, %v5599, 0.0
    %v5657 = vsel %vm1730, %v5600, 0.0
    %v5658 = vsel %vm1731, %v5601, 0.0
    %v5659 = vsel %vm1732, %v5602, 0.0
    %v5660 = vsel %vm1733, %v5603, 0.0
    %v5661 = vsel %vm1734, %v5604, 0.0
    %v5662 = vsel %vm1735, %v5605, 0.0
    %v5663 = vsel %vm1736, %v5606, 0.0
    %v5664 = vsel %vm1737, %v5607, 0.0
    %v5665 = vsel %vm1738, %v5608, 0.0
    %v5666 = vsel %vm1739, %v5609, 0.0
    %v5667 = vsel %vm1740, %v5610, 0.0
    %v5668 = vsel %vm1741, %v5611, 0.0
    %v5669 = vsel %vm1742, %v5612, 0.0
    %v5670 = vsel %vm1743, %v5613, 0.0
    %v5671 = vsel %vm1744, %v5614, 0.0
    %v5672 = vsel %vm1745, %v5615, 0.0
    %v5673 = vsel %vm1746, %v5616, 0.0
    %v5674 = vsel %vm1747, %v5617, 0.0
    %v5675 = vsel %vm1748, %v5618, 0.0
    %v5676 = vsel %vm1749, %v5619, 0.0
    %v5677 = vsel %vm4830, %v5590, 0.0
    %v5678 = vsel %vm4831, %v5591, 0.0
    %v5679 = vsel %vm4832, %v5592, 0.0
    %v5680 = vsel %vm4833, %v5593, 0.0
    %v5681 = vsel %vm4834, %v5594, 0.0
    %v5682 = vsel %vm4835, %v5595, 0.0
    %v5683 = vsel %vm4836, %v5596, 0.0
    %v5684 = vsel %vm4837, %v5597, 0.0
    %v5685 = vsel %vm4838, %v5598, 0.0
    %v5686 = vsel %vm4839, %v5599, 0.0
    %v5687 = vsel %vm4840, %v5600, 0.0
    %v5688 = vsel %vm4841, %v5601, 0.0
    %v5689 = vsel %vm4842, %v5602, 0.0
    %v5690 = vsel %vm4843, %v5603, 0.0
    %v5691 = vsel %vm4844, %v5604, 0.0
    %v5692 = vsel %vm4845, %v5605, 0.0
    %v5693 = vsel %vm4846, %v5606, 0.0
    %v5694 = vsel %vm4847, %v5607, 0.0
    %v5695 = vsel %vm4848, %v5608, 0.0
    %v5696 = vsel %vm4849, %v5609, 0.0
    %v5697 = vsel %vm4850, %v5610, 0.0
    %v5698 = vsel %vm4851, %v5611, 0.0
    %v5699 = vsel %vm4852, %v5612, 0.0
    %v5700 = vsel %vm4853, %v5613, 0.0
    %v5701 = vsel %vm4854, %v5614, 0.0
    %v5702 = vsel %vm4855, %v5615, 0.0
    %v5703 = vsel %vm4856, %v5616, 0.0
    %v5704 = vsel %vm4857, %v5617, 0.0
    %v5705 = vsel %vm4858, %v5618, 0.0
    %v5706 = vsel %vm4859, %v5619, 0.0
    %v5707 = vsel %vm4860, %v5620, 0.0
    %v5708 = vsel %vm4861, %v5589, 0.0
    %vm5709 = vcmask 523264
    %v5711 = vsel %vm5709, %v5589, 0
    %v5714 = vsel %vm5709, %v5590, 0
    %v5717 = vsel %vm5709, %v5591, 0
    %v5720 = vsel %vm5709, %v5592, 0
    %v5723 = vsel %vm5709, %v5593, 0
    %v5726 = vsel %vm5709, %v5594, 0
    %v5729 = vsel %vm5709, %v5595, 0
    %v5732 = vsel %vm5709, %v5596, 0
    %v5735 = vsel %vm5709, %v5597, 0
    %v5738 = vsel %vm5709, %v5598, 0
    %v5741 = vsel %vm5709, %v5599, 0
    %v5744 = vsel %vm5709, %v5600, 0
    %v5747 = vsel %vm5709, %v5601, 0
    %v5750 = vsel %vm5709, %v5602, 0
    %v5753 = vsel %vm5709, %v5603, 0
    %v5756 = vsel %vm5709, %v5604, 0
    %v5759 = vsel %vm5709, %v5605, 0
    %v5762 = vsel %vm5709, %v5606, 0
    %v5765 = vsel %vm5709, %v5607, 0
    %v5768 = vsel %vm5709, %v5608, 0
    %v5771 = vsel %vm5709, %v5609, 0
    %v5774 = vsel %vm5709, %v5610, 0
    %v5777 = vsel %vm5709, %v5611, 0
    %v5780 = vsel %vm5709, %v5612, 0
    %v5783 = vsel %vm5709, %v5613, 0
    %v5786 = vsel %vm5709, %v5614, 0
    %v5789 = vsel %vm5709, %v5615, 0
    %v5792 = vsel %vm5709, %v5616, 0
    %v5795 = vsel %vm5709, %v5617, 0
    %v5798 = vsel %vm5709, %v5618, 0
    %v5801 = vsel %vm5709, %v5619, 0
    %v5804 = vsel %vm5709, %v5620, 0
    %5806 = vmatpush.msra.mxu0 0.0
    %5807 = vmatpush.msra.mxu0 0.0
    %5808 = vmatpush.msra.mxu0 0.0
    %5809 = vmatpush.msra.mxu0 0.0
    %5810 = vmatpush.msra.mxu0 0.0
    %5811 = vmatpush.msra.mxu0 0.0
    %5812 = vmatpush.msra.mxu0 0.0
    %5813 = vmatpush.msra.mxu0 0.0
    %5814 = vmatpush.msra.mxu0 %v5636
    %5815 = vmatpush.msra.mxu0 %v5635
    %5816 = vmatpush.msra.mxu0 %v5634
    %5817 = vmatpush.msra.mxu0 %v5633
    %5818 = vmatpush.msra.mxu0 %v5632
    %5819 = vmatpush.msra.mxu0 %v5631
    %5820 = vmatpush.msra.mxu0 %v5630
    %5821 = vmatpush.msra.mxu0 %v5629
    %5822 = vmatmul.f32.gmra.mxu0 %v5711
    %v5823 = vpop.f32.mrf.mxu0
    %v5824 = vadd.f32 0.0, %v5823
    %5825 = vmatmul.f32.gmra.mxu0 %v5714
    %v5826 = vpop.f32.mrf.mxu0
    %v5827 = vadd.f32 0.0, %v5826
    %5828 = vmatmul.f32.gmra.mxu0 %v5717
    %v5829 = vpop.f32.mrf.mxu0
    %v5830 = vadd.f32 0.0, %v5829
    %5831 = vmatmul.f32.gmra.mxu0 %v5720
    %v5832 = vpop.f32.mrf.mxu0
    %v5833 = vadd.f32 0.0, %v5832
    %5834 = vmatmul.f32.gmra.mxu0 %v5723
    %v5835 = vpop.f32.mrf.mxu0
    %v5836 = vadd.f32 0.0, %v5835
    %5837 = vmatmul.f32.gmra.mxu0 %v5726
    %v5838 = vpop.f32.mrf.mxu0
    %v5839 = vadd.f32 0.0, %v5838
    %5840 = vmatmul.f32.gmra.mxu0 %v5729
    %v5841 = vpop.f32.mrf.mxu0
    %v5842 = vadd.f32 0.0, %v5841
    %5843 = vmatmul.f32.gmra.mxu0 %v5732
    %v5844 = vpop.f32.mrf.mxu0
    %v5845 = vadd.f32 0.0, %v5844
    %5846 = vmatmul.f32.gmra.mxu0 %v5735
    %v5847 = vpop.f32.mrf.mxu0
    %v5848 = vadd.f32 0.0, %v5847
    %5849 = vmatmul.f32.gmra.mxu0 %v5738
    %v5850 = vpop.f32.mrf.mxu0
    %v5851 = vadd.f32 0.0, %v5850
    %5852 = vmatmul.f32.gmra.mxu0 %v5741
    %v5853 = vpop.f32.mrf.mxu0
    %v5854 = vadd.f32 0.0, %v5853
    %5855 = vmatmul.f32.gmra.mxu0 %v5744
    %v5856 = vpop.f32.mrf.mxu0
    %v5857 = vadd.f32 0.0, %v5856
    %5858 = vmatmul.f32.gmra.mxu0 %v5747
    %v5859 = vpop.f32.mrf.mxu0
    %v5860 = vadd.f32 0.0, %v5859
    %5861 = vmatmul.f32.gmra.mxu0 %v5750
    %v5862 = vpop.f32.mrf.mxu0
    %v5863 = vadd.f32 0.0, %v5862
    %5864 = vmatmul.f32.gmra.mxu0 %v5753
    %v5865 = vpop.f32.mrf.mxu0
    %v5866 = vadd.f32 0.0, %v5865
    %5867 = vmatmul.f32.gmra.mxu0 %v5756
    %v5868 = vpop.f32.mrf.mxu0
    %v5869 = vadd.f32 0.0, %v5868
    %5870 = vmatmul.f32.gmra.mxu0 %v5759
    %v5871 = vpop.f32.mrf.mxu0
    %v5872 = vadd.f32 0.0, %v5871
    %5873 = vmatmul.f32.gmra.mxu0 %v5762
    %v5874 = vpop.f32.mrf.mxu0
    %v5875 = vadd.f32 0.0, %v5874
    %5876 = vmatmul.f32.gmra.mxu0 %v5765
    %v5877 = vpop.f32.mrf.mxu0
    %v5878 = vadd.f32 0.0, %v5877
    %5879 = vmatmul.f32.gmra.mxu0 %v5768
    %v5880 = vpop.f32.mrf.mxu0
    %v5881 = vadd.f32 0.0, %v5880
    %5882 = vmatmul.f32.gmra.mxu0 %v5771
    %v5883 = vpop.f32.mrf.mxu0
    %v5884 = vadd.f32 0.0, %v5883
    %5885 = vmatmul.f32.gmra.mxu0 %v5774
    %v5886 = vpop.f32.mrf.mxu0
    %v5887 = vadd.f32 0.0, %v5886
    %5888 = vmatmul.f32.gmra.mxu0 %v5777
    %v5889 = vpop.f32.mrf.mxu0
    %v5890 = vadd.f32 0.0, %v5889
    %5891 = vmatmul.f32.gmra.mxu0 %v5780
    %v5892 = vpop.f32.mrf.mxu0
    %v5893 = vadd.f32 0.0, %v5892
    %5894 = vmatmul.f32.gmra.mxu0 %v5783
    %v5895 = vpop.f32.mrf.mxu0
    %v5896 = vadd.f32 0.0, %v5895
    %5897 = vmatmul.f32.gmra.mxu0 %v5786
    %v5898 = vpop.f32.mrf.mxu0
    %v5899 = vadd.f32 0.0, %v5898
    %5900 = vmatmul.f32.gmra.mxu0 %v5789
    %v5901 = vpop.f32.mrf.mxu0
    %v5902 = vadd.f32 0.0, %v5901
    %5903 = vmatmul.f32.gmra.mxu0 %v5792
    %v5904 = vpop.f32.mrf.mxu0
    %v5905 = vadd.f32 0.0, %v5904
    %5906 = vmatmul.f32.gmra.mxu0 %v5795
    %v5907 = vpop.f32.mrf.mxu0
    %v5908 = vadd.f32 0.0, %v5907
    %5909 = vmatmul.f32.gmra.mxu0 %v5798
    %v5910 = vpop.f32.mrf.mxu0
    %v5911 = vadd.f32 0.0, %v5910
    %5912 = vmatmul.f32.gmra.mxu0 %v5801
    %v5913 = vpop.f32.mrf.mxu0
    %v5914 = vadd.f32 0.0, %v5913
    %5915 = vmatmul.f32.gmra.mxu0 %v5804
    %v5916 = vpop.f32.mrf.mxu0
    %v5917 = vadd.f32 0.0, %v5916
    %5918 = vdwg.mxu0
    %v5920 = vsel %vm5709, %v5645, 0
    %v5923 = vsel %vm5709, %v5646, 0
    %v5926 = vsel %vm5709, %v5647, 0
    %v5929 = vsel %vm5709, %v5648, 0
    %v5932 = vsel %vm5709, %v5649, 0
    %v5935 = vsel %vm5709, %v5650, 0
    %v5938 = vsel %vm5709, %v5651, 0
    %v5941 = vsel %vm5709, %v5652, 0
    %v5944 = vsel %vm5709, %v5653, 0
    %v5947 = vsel %vm5709, %v5654, 0
    %v5950 = vsel %vm5709, %v5655, 0
    %v5953 = vsel %vm5709, %v5656, 0
    %v5956 = vsel %vm5709, %v5657, 0
    %v5959 = vsel %vm5709, %v5658, 0
    %v5962 = vsel %vm5709, %v5659, 0
    %v5965 = vsel %vm5709, %v5660, 0
    %v5968 = vsel %vm5709, %v5661, 0
    %v5971 = vsel %vm5709, %v5662, 0
    %v5974 = vsel %vm5709, %v5663, 0
    %v5977 = vsel %vm5709, %v5664, 0
    %v5980 = vsel %vm5709, %v5665, 0
    %v5983 = vsel %vm5709, %v5666, 0
    %v5986 = vsel %vm5709, %v5667, 0
    %v5989 = vsel %vm5709, %v5668, 0
    %v5992 = vsel %vm5709, %v5669, 0
    %v5995 = vsel %vm5709, %v5670, 0
    %v5998 = vsel %vm5709, %v5671, 0
    %v6001 = vsel %vm5709, %v5672, 0
    %v6004 = vsel %vm5709, %v5673, 0
    %v6007 = vsel %vm5709, %v5674, 0
    %v6010 = vsel %vm5709, %v5675, 0
    %v6013 = vsel %vm5709, %v5676, 0
    %6015 = vmatpush.msra.mxu0 0.0
    %6016 = vmatpush.msra.mxu0 0.0
    %6017 = vmatpush.msra.mxu0 0.0
    %6018 = vmatpush.msra.mxu0 0.0
    %6019 = vmatpush.msra.mxu0 0.0
    %6020 = vmatpush.msra.mxu0 0.0
    %6021 = vmatpush.msra.mxu0 0.0
    %6022 = vmatpush.msra.mxu0 0.0
    %6023 = vmatpush.msra.mxu0 %v5628
    %6024 = vmatpush.msra.mxu0 %v5627
    %6025 = vmatpush.msra.mxu0 %v5626
    %6026 = vmatpush.msra.mxu0 %v5625
    %6027 = vmatpush.msra.mxu0 %v5624
    %6028 = vmatpush.msra.mxu0 %v5623
    %6029 = vmatpush.msra.mxu0 %v5622
    %6030 = vmatpush.msra.mxu0 %v5621
    %6031 = vmatmul.f32.gmra.mxu0 %v5920
    %v6032 = vpop.f32.mrf.mxu0
    %v6033 = vadd.f32 %v5824, %v6032
    %6034 = vmatmul.f32.gmra.mxu0 %v5923
    %v6035 = vpop.f32.mrf.mxu0
    %v6036 = vadd.f32 %v5827, %v6035
    %6037 = vmatmul.f32.gmra.mxu0 %v5926
    %v6038 = vpop.f32.mrf.mxu0
    %v6039 = vadd.f32 %v5830, %v6038
    %6040 = vmatmul.f32.gmra.mxu0 %v5929
    %v6041 = vpop.f32.mrf.mxu0
    %v6042 = vadd.f32 %v5833, %v6041
    %6043 = vmatmul.f32.gmra.mxu0 %v5932
    %v6044 = vpop.f32.mrf.mxu0
    %v6045 = vadd.f32 %v5836, %v6044
    %6046 = vmatmul.f32.gmra.mxu0 %v5935
    %v6047 = vpop.f32.mrf.mxu0
    %v6048 = vadd.f32 %v5839, %v6047
    %6049 = vmatmul.f32.gmra.mxu0 %v5938
    %v6050 = vpop.f32.mrf.mxu0
    %v6051 = vadd.f32 %v5842, %v6050
    %6052 = vmatmul.f32.gmra.mxu0 %v5941
    %v6053 = vpop.f32.mrf.mxu0
    %v6054 = vadd.f32 %v5845, %v6053
    %6055 = vmatmul.f32.gmra.mxu0 %v5944
    %v6056 = vpop.f32.mrf.mxu0
    %v6057 = vadd.f32 %v5848, %v6056
    %6058 = vmatmul.f32.gmra.mxu0 %v5947
    %v6059 = vpop.f32.mrf.mxu0
    %v6060 = vadd.f32 %v5851, %v6059
    %6061 = vmatmul.f32.gmra.mxu0 %v5950
    %v6062 = vpop.f32.mrf.mxu0
    %v6063 = vadd.f32 %v5854, %v6062
    %6064 = vmatmul.f32.gmra.mxu0 %v5953
    %v6065 = vpop.f32.mrf.mxu0
    %v6066 = vadd.f32 %v5857, %v6065
    %6067 = vmatmul.f32.gmra.mxu0 %v5956
    %v6068 = vpop.f32.mrf.mxu0
    %v6069 = vadd.f32 %v5860, %v6068
    %6070 = vmatmul.f32.gmra.mxu0 %v5959
    %v6071 = vpop.f32.mrf.mxu0
    %v6072 = vadd.f32 %v5863, %v6071
    %6073 = vmatmul.f32.gmra.mxu0 %v5962
    %v6074 = vpop.f32.mrf.mxu0
    %v6075 = vadd.f32 %v5866, %v6074
    %6076 = vmatmul.f32.gmra.mxu0 %v5965
    %v6077 = vpop.f32.mrf.mxu0
    %v6078 = vadd.f32 %v5869, %v6077
    %6079 = vmatmul.f32.gmra.mxu0 %v5968
    %v6080 = vpop.f32.mrf.mxu0
    %v6081 = vadd.f32 %v5872, %v6080
    %6082 = vmatmul.f32.gmra.mxu0 %v5971
    %v6083 = vpop.f32.mrf.mxu0
    %v6084 = vadd.f32 %v5875, %v6083
    %6085 = vmatmul.f32.gmra.mxu0 %v5974
    %v6086 = vpop.f32.mrf.mxu0
    %v6087 = vadd.f32 %v5878, %v6086
    %6088 = vmatmul.f32.gmra.mxu0 %v5977
    %v6089 = vpop.f32.mrf.mxu0
    %v6090 = vadd.f32 %v5881, %v6089
    %6091 = vmatmul.f32.gmra.mxu0 %v5980
    %v6092 = vpop.f32.mrf.mxu0
    %v6093 = vadd.f32 %v5884, %v6092
    %6094 = vmatmul.f32.gmra.mxu0 %v5983
    %v6095 = vpop.f32.mrf.mxu0
    %v6096 = vadd.f32 %v5887, %v6095
    %6097 = vmatmul.f32.gmra.mxu0 %v5986
    %v6098 = vpop.f32.mrf.mxu0
    %v6099 = vadd.f32 %v5890, %v6098
    %6100 = vmatmul.f32.gmra.mxu0 %v5989
    %v6101 = vpop.f32.mrf.mxu0
    %v6102 = vadd.f32 %v5893, %v6101
    %6103 = vmatmul.f32.gmra.mxu0 %v5992
    %v6104 = vpop.f32.mrf.mxu0
    %v6105 = vadd.f32 %v5896, %v6104
    %6106 = vmatmul.f32.gmra.mxu0 %v5995
    %v6107 = vpop.f32.mrf.mxu0
    %v6108 = vadd.f32 %v5899, %v6107
    %6109 = vmatmul.f32.gmra.mxu0 %v5998
    %v6110 = vpop.f32.mrf.mxu0
    %v6111 = vadd.f32 %v5902, %v6110
    %6112 = vmatmul.f32.gmra.mxu0 %v6001
    %v6113 = vpop.f32.mrf.mxu0
    %v6114 = vadd.f32 %v5905, %v6113
    %6115 = vmatmul.f32.gmra.mxu0 %v6004
    %v6116 = vpop.f32.mrf.mxu0
    %v6117 = vadd.f32 %v5908, %v6116
    %6118 = vmatmul.f32.gmra.mxu0 %v6007
    %v6119 = vpop.f32.mrf.mxu0
    %v6120 = vadd.f32 %v5911, %v6119
    %6121 = vmatmul.f32.gmra.mxu0 %v6010
    %v6122 = vpop.f32.mrf.mxu0
    %v6123 = vadd.f32 %v5914, %v6122
    %6124 = vmatmul.f32.gmra.mxu0 %v6013
    %v6125 = vpop.f32.mrf.mxu0
    %v6126 = vadd.f32 %v5917, %v6125
    %6127 = vdwg.mxu0
    %v6129 = vsel %vm5709, %v5677, 0
    %v6132 = vsel %vm5709, %v5678, 0
    %v6135 = vsel %vm5709, %v5679, 0
    %v6138 = vsel %vm5709, %v5680, 0
    %v6141 = vsel %vm5709, %v5681, 0
    %v6144 = vsel %vm5709, %v5682, 0
    %v6147 = vsel %vm5709, %v5683, 0
    %v6150 = vsel %vm5709, %v5684, 0
    %v6153 = vsel %vm5709, %v5685, 0
    %v6156 = vsel %vm5709, %v5686, 0
    %v6159 = vsel %vm5709, %v5687, 0
    %v6162 = vsel %vm5709, %v5688, 0
    %v6165 = vsel %vm5709, %v5689, 0
    %v6168 = vsel %vm5709, %v5690, 0
    %v6171 = vsel %vm5709, %v5691, 0
    %v6174 = vsel %vm5709, %v5692, 0
    %v6177 = vsel %vm5709, %v5693, 0
    %v6180 = vsel %vm5709, %v5694, 0
    %v6183 = vsel %vm5709, %v5695, 0
    %v6186 = vsel %vm5709, %v5696, 0
    %v6189 = vsel %vm5709, %v5697, 0
    %v6192 = vsel %vm5709, %v5698, 0
    %v6195 = vsel %vm5709, %v5699, 0
    %v6198 = vsel %vm5709, %v5700, 0
    %v6201 = vsel %vm5709, %v5701, 0
    %v6204 = vsel %vm5709, %v5702, 0
    %v6207 = vsel %vm5709, %v5703, 0
    %v6210 = vsel %vm5709, %v5704, 0
    %v6213 = vsel %vm5709, %v5705, 0
    %v6216 = vsel %vm5709, %v5706, 0
    %v6219 = vsel %vm5709, %v5707, 0
    %v6222 = vsel %vm5709, %v5708, 0
    %6224 = vmatpush.msra.mxu0 0.0
    %6225 = vmatpush.msra.mxu0 0.0
    %6226 = vmatpush.msra.mxu0 0.0
    %6227 = vmatpush.msra.mxu0 0.0
    %6228 = vmatpush.msra.mxu0 0.0
    %6229 = vmatpush.msra.mxu0 0.0
    %6230 = vmatpush.msra.mxu0 0.0
    %6231 = vmatpush.msra.mxu0 0.0
    %6232 = vmatpush.msra.mxu0 %v5644
    %6233 = vmatpush.msra.mxu0 %v5643
    %6234 = vmatpush.msra.mxu0 %v5642
    %6235 = vmatpush.msra.mxu0 %v5641
    %6236 = vmatpush.msra.mxu0 %v5640
    %6237 = vmatpush.msra.mxu0 %v5639
    %6238 = vmatpush.msra.mxu0 %v5638
    %6239 = vmatpush.msra.mxu0 %v5637
    %6240 = vmatmul.f32.gmra.mxu0 %v6129
    %v6241 = vpop.f32.mrf.mxu0
    %v6242 = vadd.f32 0.0, %v6241
    %6243 = vmatmul.f32.gmra.mxu0 %v6132
    %v6244 = vpop.f32.mrf.mxu0
    %v6245 = vadd.f32 0.0, %v6244
    %6246 = vmatmul.f32.gmra.mxu0 %v6135
    %v6247 = vpop.f32.mrf.mxu0
    %v6248 = vadd.f32 0.0, %v6247
    %6249 = vmatmul.f32.gmra.mxu0 %v6138
    %v6250 = vpop.f32.mrf.mxu0
    %v6251 = vadd.f32 0.0, %v6250
    %6252 = vmatmul.f32.gmra.mxu0 %v6141
    %v6253 = vpop.f32.mrf.mxu0
    %v6254 = vadd.f32 0.0, %v6253
    %6255 = vmatmul.f32.gmra.mxu0 %v6144
    %v6256 = vpop.f32.mrf.mxu0
    %v6257 = vadd.f32 0.0, %v6256
    %6258 = vmatmul.f32.gmra.mxu0 %v6147
    %v6259 = vpop.f32.mrf.mxu0
    %v6260 = vadd.f32 0.0, %v6259
    %6261 = vmatmul.f32.gmra.mxu0 %v6150
    %v6262 = vpop.f32.mrf.mxu0
    %v6263 = vadd.f32 0.0, %v6262
    %6264 = vmatmul.f32.gmra.mxu0 %v6153
    %v6265 = vpop.f32.mrf.mxu0
    %v6266 = vadd.f32 0.0, %v6265
    %6267 = vmatmul.f32.gmra.mxu0 %v6156
    %v6268 = vpop.f32.mrf.mxu0
    %v6269 = vadd.f32 0.0, %v6268
    %6270 = vmatmul.f32.gmra.mxu0 %v6159
    %v6271 = vpop.f32.mrf.mxu0
    %v6272 = vadd.f32 0.0, %v6271
    %6273 = vmatmul.f32.gmra.mxu0 %v6162
    %v6274 = vpop.f32.mrf.mxu0
    %v6275 = vadd.f32 0.0, %v6274
    %6276 = vmatmul.f32.gmra.mxu0 %v6165
    %v6277 = vpop.f32.mrf.mxu0
    %v6278 = vadd.f32 0.0, %v6277
    %6279 = vmatmul.f32.gmra.mxu0 %v6168
    %v6280 = vpop.f32.mrf.mxu0
    %v6281 = vadd.f32 0.0, %v6280
    %6282 = vmatmul.f32.gmra.mxu0 %v6171
    %v6283 = vpop.f32.mrf.mxu0
    %v6284 = vadd.f32 0.0, %v6283
    %6285 = vmatmul.f32.gmra.mxu0 %v6174
    %v6286 = vpop.f32.mrf.mxu0
    %v6287 = vadd.f32 0.0, %v6286
    %6288 = vmatmul.f32.gmra.mxu0 %v6177
    %v6289 = vpop.f32.mrf.mxu0
    %v6290 = vadd.f32 0.0, %v6289
    %6291 = vmatmul.f32.gmra.mxu0 %v6180
    %v6292 = vpop.f32.mrf.mxu0
    %v6293 = vadd.f32 0.0, %v6292
    %6294 = vmatmul.f32.gmra.mxu0 %v6183
    %v6295 = vpop.f32.mrf.mxu0
    %v6296 = vadd.f32 0.0, %v6295
    %6297 = vmatmul.f32.gmra.mxu0 %v6186
    %v6298 = vpop.f32.mrf.mxu0
    %v6299 = vadd.f32 0.0, %v6298
    %6300 = vmatmul.f32.gmra.mxu0 %v6189
    %v6301 = vpop.f32.mrf.mxu0
    %v6302 = vadd.f32 0.0, %v6301
    %6303 = vmatmul.f32.gmra.mxu0 %v6192
    %v6304 = vpop.f32.mrf.mxu0
    %v6305 = vadd.f32 0.0, %v6304
    %6306 = vmatmul.f32.gmra.mxu0 %v6195
    %v6307 = vpop.f32.mrf.mxu0
    %v6308 = vadd.f32 0.0, %v6307
    %6309 = vmatmul.f32.gmra.mxu0 %v6198
    %v6310 = vpop.f32.mrf.mxu0
    %v6311 = vadd.f32 0.0, %v6310
    %6312 = vmatmul.f32.gmra.mxu0 %v6201
    %v6313 = vpop.f32.mrf.mxu0
    %v6314 = vadd.f32 0.0, %v6313
    %6315 = vmatmul.f32.gmra.mxu0 %v6204
    %v6316 = vpop.f32.mrf.mxu0
    %v6317 = vadd.f32 0.0, %v6316
    %6318 = vmatmul.f32.gmra.mxu0 %v6207
    %v6319 = vpop.f32.mrf.mxu0
    %v6320 = vadd.f32 0.0, %v6319
    %6321 = vmatmul.f32.gmra.mxu0 %v6210
    %v6322 = vpop.f32.mrf.mxu0
    %v6323 = vadd.f32 0.0, %v6322
    %6324 = vmatmul.f32.gmra.mxu0 %v6213
    %v6325 = vpop.f32.mrf.mxu0
    %v6326 = vadd.f32 0.0, %v6325
    %6327 = vmatmul.f32.gmra.mxu0 %v6216
    %v6328 = vpop.f32.mrf.mxu0
    %v6329 = vadd.f32 0.0, %v6328
    %6330 = vmatmul.f32.gmra.mxu0 %v6219
    %v6331 = vpop.f32.mrf.mxu0
    %v6332 = vadd.f32 0.0, %v6331
    %6333 = vmatmul.f32.gmra.mxu0 %v6222
    %v6334 = vpop.f32.mrf.mxu0
    %v6335 = vadd.f32 0.0, %v6334
    %6336 = vdwg.mxu0
    %v6337 = vadd.f32 %v6033, %v6242
    %v6338 = vadd.f32 %v6036, %v6245
    %v6339 = vadd.f32 %v6039, %v6248
    %v6340 = vadd.f32 %v6042, %v6251
    %v6341 = vadd.f32 %v6045, %v6254
    %v6342 = vadd.f32 %v6048, %v6257
    %v6343 = vadd.f32 %v6051, %v6260
    %v6344 = vadd.f32 %v6054, %v6263
    %v6345 = vadd.f32 %v6057, %v6266
    %v6346 = vadd.f32 %v6060, %v6269
    %v6347 = vadd.f32 %v6063, %v6272
    %v6348 = vadd.f32 %v6066, %v6275
    %v6349 = vadd.f32 %v6069, %v6278
    %v6350 = vadd.f32 %v6072, %v6281
    %v6351 = vadd.f32 %v6075, %v6284
    %v6352 = vadd.f32 %v6078, %v6287
    %v6353 = vadd.f32 %v6081, %v6290
    %v6354 = vadd.f32 %v6084, %v6293
    %v6355 = vadd.f32 %v6087, %v6296
    %v6356 = vadd.f32 %v6090, %v6299
    %v6357 = vadd.f32 %v6093, %v6302
    %v6358 = vadd.f32 %v6096, %v6305
    %v6359 = vadd.f32 %v6099, %v6308
    %v6360 = vadd.f32 %v6102, %v6311
    %v6361 = vadd.f32 %v6105, %v6314
    %v6362 = vadd.f32 %v6108, %v6317
    %v6363 = vadd.f32 %v6111, %v6320
    %v6364 = vadd.f32 %v6114, %v6323
    %v6365 = vadd.f32 %v6117, %v6326
    %v6366 = vadd.f32 %v6120, %v6329
    %v6367 = vadd.f32 %v6123, %v6332
    %v6368 = vadd.f32 %v6126, %v6335
    %v6369 = vld [vmem:[%s13] sm:$0x1]
    %v6371 = vperm.slane %v6369, 0
    %v6373 = vadd.f32 %v6337, %v6371
    %v6374 = vadd.f32 %v6338, %v6371
    %v6375 = vadd.f32 %v6339, %v6371
    %v6376 = vadd.f32 %v6340, %v6371
    %v6377 = vadd.f32 %v6341, %v6371
    %v6378 = vadd.f32 %v6342, %v6371
    %v6379 = vadd.f32 %v6343, %v6371
    %v6380 = vadd.f32 %v6344, %v6371
    %v6381 = vadd.f32 %v6345, %v6371
    %v6382 = vadd.f32 %v6346, %v6371
    %v6383 = vadd.f32 %v6347, %v6371
    %v6384 = vadd.f32 %v6348, %v6371
    %v6385 = vadd.f32 %v6349, %v6371
    %v6386 = vadd.f32 %v6350, %v6371
    %v6387 = vadd.f32 %v6351, %v6371
    %v6388 = vadd.f32 %v6352, %v6371
    %v6389 = vadd.f32 %v6353, %v6371
    %v6390 = vadd.f32 %v6354, %v6371
    %v6391 = vadd.f32 %v6355, %v6371
    %v6392 = vadd.f32 %v6356, %v6371
    %v6393 = vadd.f32 %v6357, %v6371
    %v6394 = vadd.f32 %v6358, %v6371
    %v6395 = vadd.f32 %v6359, %v6371
    %v6396 = vadd.f32 %v6360, %v6371
    %v6397 = vadd.f32 %v6361, %v6371
    %v6398 = vadd.f32 %v6362, %v6371
    %v6399 = vadd.f32 %v6363, %v6371
    %v6400 = vadd.f32 %v6364, %v6371
    %v6401 = vadd.f32 %v6365, %v6371
    %v6402 = vadd.f32 %v6366, %v6371
    %v6403 = vadd.f32 %v6367, %v6371
    %v6404 = vadd.f32 %v6368, %v6371
    %v6405 = vmax.f32 %v6373, 0.0
    %v6406 = vmax.f32 %v6374, 0.0
    %v6407 = vmax.f32 %v6375, 0.0
    %v6408 = vmax.f32 %v6376, 0.0
    %v6409 = vmax.f32 %v6377, 0.0
    %v6410 = vmax.f32 %v6378, 0.0
    %v6411 = vmax.f32 %v6379, 0.0
    %v6412 = vmax.f32 %v6380, 0.0
    %v6413 = vmax.f32 %v6381, 0.0
    %v6414 = vmax.f32 %v6382, 0.0
    %v6415 = vmax.f32 %v6383, 0.0
    %v6416 = vmax.f32 %v6384, 0.0
    %v6417 = vmax.f32 %v6385, 0.0
    %v6418 = vmax.f32 %v6386, 0.0
    %v6419 = vmax.f32 %v6387, 0.0
    %v6420 = vmax.f32 %v6388, 0.0
    %v6421 = vmax.f32 %v6389, 0.0
    %v6422 = vmax.f32 %v6390, 0.0
    %v6423 = vmax.f32 %v6391, 0.0
    %v6424 = vmax.f32 %v6392, 0.0
    %v6425 = vmax.f32 %v6393, 0.0
    %v6426 = vmax.f32 %v6394, 0.0
    %v6427 = vmax.f32 %v6395, 0.0
    %v6428 = vmax.f32 %v6396, 0.0
    %v6429 = vmax.f32 %v6397, 0.0
    %v6430 = vmax.f32 %v6398, 0.0
    %v6431 = vmax.f32 %v6399, 0.0
    %v6432 = vmax.f32 %v6400, 0.0
    %v6433 = vmax.f32 %v6401, 0.0
    %v6434 = vmax.f32 %v6402, 0.0
    %v6435 = vmax.f32 %v6403, 0.0
    %v6436 = vmax.f32 %v6404, 0.0
    %v6437 = vmax.f32 %v6405, %v6406
    %v6438 = vmax.f32 %v6406, %v6407
    %v6439 = vmax.f32 %v6407, %v6408
    %v6440 = vmax.f32 %v6408, %v6409
    %v6441 = vmax.f32 %v6409, %v6410
    %v6442 = vmax.f32 %v6410, %v6411
    %v6443 = vmax.f32 %v6411, %v6412
    %v6444 = vmax.f32 %v6412, %v6413
    %v6445 = vmax.f32 %v6413, %v6414
    %v6446 = vmax.f32 %v6414, %v6415
    %v6447 = vmax.f32 %v6415, %v6416
    %v6448 = vmax.f32 %v6416, %v6417
    %v6449 = vmax.f32 %v6417, %v6418
    %v6450 = vmax.f32 %v6418, %v6419
    %v6451 = vmax.f32 %v6419, %v6420
    %v6452 = vmax.f32 %v6420, %v6421
    %v6453 = vmax.f32 %v6421, %v6422
    %v6454 = vmax.f32 %v6422, %v6423
    %v6455 = vmax.f32 %v6423, %v6424
    %v6456 = vmax.f32 %v6424, %v6425
    %v6457 = vmax.f32 %v6425, %v6426
    %v6458 = vmax.f32 %v6426, %v6427
    %v6459 = vmax.f32 %v6427, %v6428
    %v6460 = vmax.f32 %v6428, %v6429
    %v6461 = vmax.f32 %v6429, %v6430
    %v6462 = vmax.f32 %v6430, %v6431
    %v6463 = vmax.f32 %v6431, %v6432
    %v6464 = vmax.f32 %v6432, %v6433
    %v6465 = vmax.f32 %v6433, %v6434
    %v6466 = vmax.f32 %v6434, %v6435
    %v6467 = vmax.f32 %v6435, %v6436
    %v6468 = vmax.f32 %v6436, %v6405
    %v6469 = vld [vmem:[%s14] sm:$0xff]
    %v6470 = vld [vmem:[%s14 + $0x8] sm:$0xff]
    %v6471 = vld [vmem:[%s14 + $0x10] sm:$0xff]
    %v6472 = vld [vmem:[%s14 + $0x18] sm:$0xff]
    %v6473 = vld [vmem:[%s14 + $0x20] sm:$0xff]
    %v6474 = vld [vmem:[%s14 + $0x28] sm:$0xff]
    %v6475 = vld [vmem:[%s14 + $0x30] sm:$0xff]
    %v6476 = vld [vmem:[%s14 + $0x38] sm:$0xff]
    %v6477 = vld [vmem:[%s14 + $0x40] sm:$0xff]
    %v6478 = vld [vmem:[%s14 + $0x48] sm:$0xff]
    %v6479 = vld [vmem:[%s14 + $0x50] sm:$0xff]
    %v6480 = vld [vmem:[%s14 + $0x58] sm:$0xff]
    %v6481 = vld [vmem:[%s14 + $0x60] sm:$0xff]
    %v6482 = vld [vmem:[%s14 + $0x68] sm:$0xff]
    %v6483 = vld [vmem:[%s14 + $0x70] sm:$0xff]
    %v6484 = vld [vmem:[%s14 + $0x78] sm:$0xff]
    %v6485 = vld [vmem:[%s14 + $0x80] sm:$0xff]
    %v6486 = vld [vmem:[%s14 + $0x88] sm:$0xff]
    %v6487 = vld [vmem:[%s14 + $0x90] sm:$0xff]
    %v6488 = vld [vmem:[%s14 + $0x98] sm:$0xff]
    %v6489 = vld [vmem:[%s14 + $0xa0] sm:$0xff]
    %v6490 = vld [vmem:[%s14 + $0xa8] sm:$0xff]
    %v6491 = vld [vmem:[%s14 + $0xb0] sm:$0xff]
    %v6492 = vld [vmem:[%s14 + $0xb8] sm:$0xff]
    %v6493 = vld [vmem:[%s14 + $0xc0] sm:$0xff]
    %v6494 = vld [vmem:[%s14 + $0xc8] sm:$0x1]
    %v6495 = vld [vmem:[%s15] sm:$0x1]
    %v6497 = vperm.slane %v6495, 0
    %vm6499 = vcmask 72704
    %v6501 = vsel %vm6499, %v107, 0
    %v6504 = vsel %vm883, %v6494, 0
    %6506 = vmatpush.msra.mxu0 0.0
    %6507 = vmatpush.msra.mxu0 0.0
    %6508 = vmatpush.msra.mxu0 0.0
    %6509 = vmatpush.msra.mxu0 0.0
    %6510 = vmatpush.msra.mxu0 0.0
    %6511 = vmatpush.msra.mxu0 0.0
    %6512 = vmatpush.msra.mxu0 0.0
    %6513 = vmatpush.msra.mxu0 0.0
    %6514 = vmatpush.msra.mxu0 0.0
    %6515 = vmatpush.msra.mxu0 0.0
    %6516 = vmatpush.msra.mxu0 0.0
    %6517 = vmatpush.msra.mxu0 0.0
    %6518 = vmatpush.msra.mxu0 0.0
    %6519 = vmatpush.msra.mxu0 0.0
    %6520 = vmatpush.msra.mxu0 %v6504
    %6521 = vmatpush.msra.mxu0 %v6493
    %6522 = vmatmul.f32.gmra.mxu0 %v6501
    %v6523 = vpop.f32.mrf.mxu0
    %v6524 = vadd.f32 %v6497, %v6523
    %6525 = vdwg.mxu0
    %v6526 = vlaneseq
    %v6527 = vand.u32 %v6526, 127
    %v6528 = vadd.s32 %v6527, 128
    %v6529 = vmul.u32 %v109, 64
    %vm6530 = vcmp.eq.s32.totalorder %v6527, %v6529
    %vm6531 = vcmp.eq.s32.totalorder %v6528, %v6529
    %v6532 = vsel %vm6530, 1, 0
    %v6533 = vsel %vm6531, 1, 0
    %v6534 = vcvt.s32.f32 %v6532
    %v6535 = vcvt.s32.f32 %v6533
    %v6536 = vand.u32 %v6452, 4294901760
    %6537 = vmatpush.msra.mxu0 %v6536
    %v6538 = vand.u32 %v6451, 4294901760
    %6539 = vmatpush.msra.mxu0 %v6538
    %v6540 = vand.u32 %v6450, 4294901760
    %6541 = vmatpush.msra.mxu0 %v6540
    %v6542 = vand.u32 %v6449, 4294901760
    %6543 = vmatpush.msra.mxu0 %v6542
    %v6544 = vand.u32 %v6448, 4294901760
    %6545 = vmatpush.msra.mxu0 %v6544
    %v6546 = vand.u32 %v6447, 4294901760
    %6547 = vmatpush.msra.mxu0 %v6546
    %v6548 = vand.u32 %v6446, 4294901760
    %6549 = vmatpush.msra.mxu0 %v6548
    %v6550 = vand.u32 %v6445, 4294901760
    %6551 = vmatpush.msra.mxu0 %v6550
    %v6552 = vand.u32 %v6444, 4294901760
    %6553 = vmatpush.msra.mxu0 %v6552
    %v6554 = vand.u32 %v6443, 4294901760
    %6555 = vmatpush.msra.mxu0 %v6554
    %v6556 = vand.u32 %v6442, 4294901760
    %6557 = vmatpush.msra.mxu0 %v6556
    %v6558 = vand.u32 %v6441, 4294901760
    %6559 = vmatpush.msra.mxu0 %v6558
    %v6560 = vand.u32 %v6440, 4294901760
    %6561 = vmatpush.msra.mxu0 %v6560
    %v6562 = vand.u32 %v6439, 4294901760
    %6563 = vmatpush.msra.mxu0 %v6562
    %v6564 = vand.u32 %v6438, 4294901760
    %6565 = vmatpush.msra.mxu0 %v6564
    %v6566 = vand.u32 %v6437, 4294901760
    %6567 = vmatpush.msra.mxu0 %v6566
    %v6568 = vand.u32 %v6534, 4294901760
    %v6569 = vsub.f32 %v6534, %v6568
    %v6570 = vand.u32 %v6569, 4294901760
    %v6571 = vsub.f32 %v6569, %v6570
    %v6572 = vand.u32 %v6571, 4294901760
    %6573 = vmatmul.f32.gmra.mxu0 %v6572
    %v6574 = vpop.f32.mrf.mxu0
    %v6575 = vadd.f32 0.0, %v6574
    %6576 = vdwg.mxu0
    %v6577 = vand.u32 %v6452, 4294901760
    %v6578 = vsub.f32 %v6452, %v6577
    %v6579 = vand.u32 %v6578, 4294901760
    %v6580 = vsub.f32 %v6578, %v6579
    %v6581 = vand.u32 %v6580, 4294901760
    %6582 = vmatpush.msra.mxu0 %v6581
    %v6583 = vand.u32 %v6451, 4294901760
    %v6584 = vsub.f32 %v6451, %v6583
    %v6585 = vand.u32 %v6584, 4294901760
    %v6586 = vsub.f32 %v6584, %v6585
    %v6587 = vand.u32 %v6586, 4294901760
    %6588 = vmatpush.msra.mxu0 %v6587
    %v6589 = vand.u32 %v6450, 4294901760
    %v6590 = vsub.f32 %v6450, %v6589
    %v6591 = vand.u32 %v6590, 4294901760
    %v6592 = vsub.f32 %v6590, %v6591
    %v6593 = vand.u32 %v6592, 4294901760
    %6594 = vmatpush.msra.mxu0 %v6593
    %v6595 = vand.u32 %v6449, 4294901760
    %v6596 = vsub.f32 %v6449, %v6595
    %v6597 = vand.u32 %v6596, 4294901760
    %v6598 = vsub.f32 %v6596, %v6597
    %v6599 = vand.u32 %v6598, 4294901760
    %6600 = vmatpush.msra.mxu0 %v6599
    %v6601 = vand.u32 %v6448, 4294901760
    %v6602 = vsub.f32 %v6448, %v6601
    %v6603 = vand.u32 %v6602, 4294901760
    %v6604 = vsub.f32 %v6602, %v6603
    %v6605 = vand.u32 %v6604, 4294901760
    %6606 = vmatpush.msra.mxu0 %v6605
    %v6607 = vand.u32 %v6447, 4294901760
    %v6608 = vsub.f32 %v6447, %v6607
    %v6609 = vand.u32 %v6608, 4294901760
    %v6610 = vsub.f32 %v6608, %v6609
    %v6611 = vand.u32 %v6610, 4294901760
    %6612 = vmatpush.msra.mxu0 %v6611
    %v6613 = vand.u32 %v6446, 4294901760
    %v6614 = vsub.f32 %v6446, %v6613
    %v6615 = vand.u32 %v6614, 4294901760
    %v6616 = vsub.f32 %v6614, %v6615
    %v6617 = vand.u32 %v6616, 4294901760
    %6618 = vmatpush.msra.mxu0 %v6617
    %v6619 = vand.u32 %v6445, 4294901760
    %v6620 = vsub.f32 %v6445, %v6619
    %v6621 = vand.u32 %v6620, 4294901760
    %v6622 = vsub.f32 %v6620, %v6621
    %v6623 = vand.u32 %v6622, 4294901760
    %6624 = vmatpush.msra.mxu0 %v6623
    %v6625 = vand.u32 %v6444, 4294901760
    %v6626 = vsub.f32 %v6444, %v6625
    %v6627 = vand.u32 %v6626, 4294901760
    %v6628 = vsub.f32 %v6626, %v6627
    %v6629 = vand.u32 %v6628, 4294901760
    %6630 = vmatpush.msra.mxu0 %v6629
    %v6631 = vand.u32 %v6443, 4294901760
    %v6632 = vsub.f32 %v6443, %v6631
    %v6633 = vand.u32 %v6632, 4294901760
    %v6634 = vsub.f32 %v6632, %v6633
    %v6635 = vand.u32 %v6634, 4294901760
    %6636 = vmatpush.msra.mxu0 %v6635
    %v6637 = vand.u32 %v6442, 4294901760
    %v6638 = vsub.f32 %v6442, %v6637
    %v6639 = vand.u32 %v6638, 4294901760
    %v6640 = vsub.f32 %v6638, %v6639
    %v6641 = vand.u32 %v6640, 4294901760
    %6642 = vmatpush.msra.mxu0 %v6641
    %v6643 = vand.u32 %v6441, 4294901760
    %v6644 = vsub.f32 %v6441, %v6643
    %v6645 = vand.u32 %v6644, 4294901760
    %v6646 = vsub.f32 %v6644, %v6645
    %v6647 = vand.u32 %v6646, 4294901760
    %6648 = vmatpush.msra.mxu0 %v6647
    %v6649 = vand.u32 %v6440, 4294901760
    %v6650 = vsub.f32 %v6440, %v6649
    %v6651 = vand.u32 %v6650, 4294901760
    %v6652 = vsub.f32 %v6650, %v6651
    %v6653 = vand.u32 %v6652, 4294901760
    %6654 = vmatpush.msra.mxu0 %v6653
    %v6655 = vand.u32 %v6439, 4294901760
    %v6656 = vsub.f32 %v6439, %v6655
    %v6657 = vand.u32 %v6656, 4294901760
    %v6658 = vsub.f32 %v6656, %v6657
    %v6659 = vand.u32 %v6658, 4294901760
    %6660 = vmatpush.msra.mxu0 %v6659
    %v6661 = vand.u32 %v6438, 4294901760
    %v6662 = vsub.f32 %v6438, %v6661
    %v6663 = vand.u32 %v6662, 4294901760
    %v6664 = vsub.f32 %v6662, %v6663
    %v6665 = vand.u32 %v6664, 4294901760
    %6666 = vmatpush.msra.mxu0 %v6665
    %v6667 = vand.u32 %v6437, 4294901760
    %v6668 = vsub.f32 %v6437, %v6667
    %v6669 = vand.u32 %v6668, 4294901760
    %v6670 = vsub.f32 %v6668, %v6669
    %v6671 = vand.u32 %v6670, 4294901760
    %6672 = vmatpush.msra.mxu0 %v6671
    %v6673 = vand.u32 %v6534, 4294901760
    %6674 = vmatmul.f32.gmra.mxu0 %v6673
    %v6675 = vpop.f32.mrf.mxu0
    %v6676 = vadd.f32 %v6575, %v6675
    %6677 = vdwg.mxu0
    %v6678 = vand.u32 %v6452, 4294901760
    %v6679 = vsub.f32 %v6452, %v6678
    %6680 = vmatpush.msra.mxu0 %v6679
    %v6681 = vand.u32 %v6451, 4294901760
    %v6682 = vsub.f32 %v6451, %v6681
    %6683 = vmatpush.msra.mxu0 %v6682
    %v6684 = vand.u32 %v6450, 4294901760
    %v6685 = vsub.f32 %v6450, %v6684
    %6686 = vmatpush.msra.mxu0 %v6685
    %v6687 = vand.u32 %v6449, 4294901760
    %v6688 = vsub.f32 %v6449, %v6687
    %6689 = vmatpush.msra.mxu0 %v6688
    %v6690 = vand.u32 %v6448, 4294901760
    %v6691 = vsub.f32 %v6448, %v6690
    %6692 = vmatpush.msra.mxu0 %v6691
    %v6693 = vand.u32 %v6447, 4294901760
    %v6694 = vsub.f32 %v6447, %v6693
    %6695 = vmatpush.msra.mxu0 %v6694
    %v6696 = vand.u32 %v6446, 4294901760
    %v6697 = vsub.f32 %v6446, %v6696
    %6698 = vmatpush.msra.mxu0 %v6697
    %v6699 = vand.u32 %v6445, 4294901760
    %v6700 = vsub.f32 %v6445, %v6699
    %6701 = vmatpush.msra.mxu0 %v6700
    %v6702 = vand.u32 %v6444, 4294901760
    %v6703 = vsub.f32 %v6444, %v6702
    %6704 = vmatpush.msra.mxu0 %v6703
    %v6705 = vand.u32 %v6443, 4294901760
    %v6706 = vsub.f32 %v6443, %v6705
    %6707 = vmatpush.msra.mxu0 %v6706
    %v6708 = vand.u32 %v6442, 4294901760
    %v6709 = vsub.f32 %v6442, %v6708
    %6710 = vmatpush.msra.mxu0 %v6709
    %v6711 = vand.u32 %v6441, 4294901760
    %v6712 = vsub.f32 %v6441, %v6711
    %6713 = vmatpush.msra.mxu0 %v6712
    %v6714 = vand.u32 %v6440, 4294901760
    %v6715 = vsub.f32 %v6440, %v6714
    %6716 = vmatpush.msra.mxu0 %v6715
    %v6717 = vand.u32 %v6439, 4294901760
    %v6718 = vsub.f32 %v6439, %v6717
    %6719 = vmatpush.msra.mxu0 %v6718
    %v6720 = vand.u32 %v6438, 4294901760
    %v6721 = vsub.f32 %v6438, %v6720
    %6722 = vmatpush.msra.mxu0 %v6721
    %v6723 = vand.u32 %v6437, 4294901760
    %v6724 = vsub.f32 %v6437, %v6723
    %6725 = vmatpush.msra.mxu0 %v6724
    %v6726 = vand.u32 %v6534, 4294901760
    %v6727 = vsub.f32 %v6534, %v6726
    %6728 = vmatmul.f32.gmra.mxu0 %v6727
    %v6729 = vpop.f32.mrf.mxu0
    %v6730 = vadd.f32 %v6676, %v6729
    %6731 = vdwg.mxu0
    %v6732 = vand.u32 %v6452, 4294901760
    %6733 = vmatpush.msra.mxu0 %v6732
    %v6734 = vand.u32 %v6451, 4294901760
    %6735 = vmatpush.msra.mxu0 %v6734
    %v6736 = vand.u32 %v6450, 4294901760
    %6737 = vmatpush.msra.mxu0 %v6736
    %v6738 = vand.u32 %v6449, 4294901760
    %6739 = vmatpush.msra.mxu0 %v6738
    %v6740 = vand.u32 %v6448, 4294901760
    %6741 = vmatpush.msra.mxu0 %v6740
    %v6742 = vand.u32 %v6447, 4294901760
    %6743 = vmatpush.msra.mxu0 %v6742
    %v6744 = vand.u32 %v6446, 4294901760
    %6745 = vmatpush.msra.mxu0 %v6744
    %v6746 = vand.u32 %v6445, 4294901760
    %6747 = vmatpush.msra.mxu0 %v6746
    %v6748 = vand.u32 %v6444, 4294901760
    %6749 = vmatpush.msra.mxu0 %v6748
    %v6750 = vand.u32 %v6443, 4294901760
    %6751 = vmatpush.msra.mxu0 %v6750
    %v6752 = vand.u32 %v6442, 4294901760
    %6753 = vmatpush.msra.mxu0 %v6752
    %v6754 = vand.u32 %v6441, 4294901760
    %6755 = vmatpush.msra.mxu0 %v6754
    %v6756 = vand.u32 %v6440, 4294901760
    %6757 = vmatpush.msra.mxu0 %v6756
    %v6758 = vand.u32 %v6439, 4294901760
    %6759 = vmatpush.msra.mxu0 %v6758
    %v6760 = vand.u32 %v6438, 4294901760
    %6761 = vmatpush.msra.mxu0 %v6760
    %v6762 = vand.u32 %v6437, 4294901760
    %6763 = vmatpush.msra.mxu0 %v6762
    %v6764 = vand.u32 %v6534, 4294901760
    %v6765 = vsub.f32 %v6534, %v6764
    %v6766 = vand.u32 %v6765, 4294901760
    %6767 = vmatmul.f32.gmra.mxu0 %v6766
    %v6768 = vpop.f32.mrf.mxu0
    %v6769 = vadd.f32 %v6730, %v6768
    %6770 = vdwg.mxu0
    %v6771 = vand.u32 %v6452, 4294901760
    %v6772 = vsub.f32 %v6452, %v6771
    %v6773 = vand.u32 %v6772, 4294901760
    %6774 = vmatpush.msra.mxu0 %v6773
    %v6775 = vand.u32 %v6451, 4294901760
    %v6776 = vsub.f32 %v6451, %v6775
    %v6777 = vand.u32 %v6776, 4294901760
    %6778 = vmatpush.msra.mxu0 %v6777
    %v6779 = vand.u32 %v6450, 4294901760
    %v6780 = vsub.f32 %v6450, %v6779
    %v6781 = vand.u32 %v6780, 4294901760
    %6782 = vmatpush.msra.mxu0 %v6781
    %v6783 = vand.u32 %v6449, 4294901760
    %v6784 = vsub.f32 %v6449, %v6783
    %v6785 = vand.u32 %v6784, 4294901760
    %6786 = vmatpush.msra.mxu0 %v6785
    %v6787 = vand.u32 %v6448, 4294901760
    %v6788 = vsub.f32 %v6448, %v6787
    %v6789 = vand.u32 %v6788, 4294901760
    %6790 = vmatpush.msra.mxu0 %v6789
    %v6791 = vand.u32 %v6447, 4294901760
    %v6792 = vsub.f32 %v6447, %v6791
    %v6793 = vand.u32 %v6792, 4294901760
    %6794 = vmatpush.msra.mxu0 %v6793
    %v6795 = vand.u32 %v6446, 4294901760
    %v6796 = vsub.f32 %v6446, %v6795
    %v6797 = vand.u32 %v6796, 4294901760
    %6798 = vmatpush.msra.mxu0 %v6797
    %v6799 = vand.u32 %v6445, 4294901760
    %v6800 = vsub.f32 %v6445, %v6799
    %v6801 = vand.u32 %v6800, 4294901760
    %6802 = vmatpush.msra.mxu0 %v6801
    %v6803 = vand.u32 %v6444, 4294901760
    %v6804 = vsub.f32 %v6444, %v6803
    %v6805 = vand.u32 %v6804, 4294901760
    %6806 = vmatpush.msra.mxu0 %v6805
    %v6807 = vand.u32 %v6443, 4294901760
    %v6808 = vsub.f32 %v6443, %v6807
    %v6809 = vand.u32 %v6808, 4294901760
    %6810 = vmatpush.msra.mxu0 %v6809
    %v6811 = vand.u32 %v6442, 4294901760
    %v6812 = vsub.f32 %v6442, %v6811
    %v6813 = vand.u32 %v6812, 4294901760
    %6814 = vmatpush.msra.mxu0 %v6813
    %v6815 = vand.u32 %v6441, 4294901760
    %v6816 = vsub.f32 %v6441, %v6815
    %v6817 = vand.u32 %v6816, 4294901760
    %6818 = vmatpush.msra.mxu0 %v6817
    %v6819 = vand.u32 %v6440, 4294901760
    %v6820 = vsub.f32 %v6440, %v6819
    %v6821 = vand.u32 %v6820, 4294901760
    %6822 = vmatpush.msra.mxu0 %v6821
    %v6823 = vand.u32 %v6439, 4294901760
    %v6824 = vsub.f32 %v6439, %v6823
    %v6825 = vand.u32 %v6824, 4294901760
    %6826 = vmatpush.msra.mxu0 %v6825
    %v6827 = vand.u32 %v6438, 4294901760
    %v6828 = vsub.f32 %v6438, %v6827
    %v6829 = vand.u32 %v6828, 4294901760
    %6830 = vmatpush.msra.mxu0 %v6829
    %v6831 = vand.u32 %v6437, 4294901760
    %v6832 = vsub.f32 %v6437, %v6831
    %v6833 = vand.u32 %v6832, 4294901760
    %6834 = vmatpush.msra.mxu0 %v6833
    %v6835 = vand.u32 %v6534, 4294901760
    %6836 = vmatmul.f32.gmra.mxu0 %v6835
    %v6837 = vpop.f32.mrf.mxu0
    %v6838 = vadd.f32 %v6769, %v6837
    %6839 = vdwg.mxu0
    %v6840 = vand.u32 %v6452, 4294901760
    %6841 = vmatpush.msra.mxu0 %v6840
    %v6842 = vand.u32 %v6451, 4294901760
    %6843 = vmatpush.msra.mxu0 %v6842
    %v6844 = vand.u32 %v6450, 4294901760
    %6845 = vmatpush.msra.mxu0 %v6844
    %v6846 = vand.u32 %v6449, 4294901760
    %6847 = vmatpush.msra.mxu0 %v6846
    %v6848 = vand.u32 %v6448, 4294901760
    %6849 = vmatpush.msra.mxu0 %v6848
    %v6850 = vand.u32 %v6447, 4294901760
    %6851 = vmatpush.msra.mxu0 %v6850
    %v6852 = vand.u32 %v6446, 4294901760
    %6853 = vmatpush.msra.mxu0 %v6852
    %v6854 = vand.u32 %v6445, 4294901760
    %6855 = vmatpush.msra.mxu0 %v6854
    %v6856 = vand.u32 %v6444, 4294901760
    %6857 = vmatpush.msra.mxu0 %v6856
    %v6858 = vand.u32 %v6443, 4294901760
    %6859 = vmatpush.msra.mxu0 %v6858
    %v6860 = vand.u32 %v6442, 4294901760
    %6861 = vmatpush.msra.mxu0 %v6860
    %v6862 = vand.u32 %v6441, 4294901760
    %6863 = vmatpush.msra.mxu0 %v6862
    %v6864 = vand.u32 %v6440, 4294901760
    %6865 = vmatpush.msra.mxu0 %v6864
    %v6866 = vand.u32 %v6439, 4294901760
    %6867 = vmatpush.msra.mxu0 %v6866
    %v6868 = vand.u32 %v6438, 4294901760
    %6869 = vmatpush.msra.mxu0 %v6868
    %v6870 = vand.u32 %v6437, 4294901760
    %6871 = vmatpush.msra.mxu0 %v6870
    %v6872 = vand.u32 %v6534, 4294901760
    %6873 = vmatmul.f32.gmra.mxu0 %v6872
    %v6874 = vpop.f32.mrf.mxu0
    %v6875 = vadd.f32 %v6838, %v6874
    %6876 = vdwg.mxu0
    %v6877 = vand.u32 %v6468, 4294901760
    %6878 = vmatpush.msra.mxu0 %v6877
    %v6879 = vand.u32 %v6467, 4294901760
    %6880 = vmatpush.msra.mxu0 %v6879
    %v6881 = vand.u32 %v6466, 4294901760
    %6882 = vmatpush.msra.mxu0 %v6881
    %v6883 = vand.u32 %v6465, 4294901760
    %6884 = vmatpush.msra.mxu0 %v6883
    %v6885 = vand.u32 %v6464, 4294901760
    %6886 = vmatpush.msra.mxu0 %v6885
    %v6887 = vand.u32 %v6463, 4294901760
    %6888 = vmatpush.msra.mxu0 %v6887
    %v6889 = vand.u32 %v6462, 4294901760
    %6890 = vmatpush.msra.mxu0 %v6889
    %v6891 = vand.u32 %v6461, 4294901760
    %6892 = vmatpush.msra.mxu0 %v6891
    %v6893 = vand.u32 %v6460, 4294901760
    %6894 = vmatpush.msra.mxu0 %v6893
    %v6895 = vand.u32 %v6459, 4294901760
    %6896 = vmatpush.msra.mxu0 %v6895
    %v6897 = vand.u32 %v6458, 4294901760
    %6898 = vmatpush.msra.mxu0 %v6897
    %v6899 = vand.u32 %v6457, 4294901760
    %6900 = vmatpush.msra.mxu0 %v6899
    %v6901 = vand.u32 %v6456, 4294901760
    %6902 = vmatpush.msra.mxu0 %v6901
    %v6903 = vand.u32 %v6455, 4294901760
    %6904 = vmatpush.msra.mxu0 %v6903
    %v6905 = vand.u32 %v6454, 4294901760
    %6906 = vmatpush.msra.mxu0 %v6905
    %v6907 = vand.u32 %v6453, 4294901760
    %6908 = vmatpush.msra.mxu0 %v6907
    %v6909 = vand.u32 %v6535, 4294901760
    %v6910 = vsub.f32 %v6535, %v6909
    %v6911 = vand.u32 %v6910, 4294901760
    %v6912 = vsub.f32 %v6910, %v6911
    %v6913 = vand.u32 %v6912, 4294901760
    %6914 = vmatmul.f32.gmra.mxu0 %v6913
    %v6915 = vpop.f32.mrf.mxu0
    %v6916 = vadd.f32 %v6875, %v6915
    %6917 = vdwg.mxu0
    %v6918 = vand.u32 %v6468, 4294901760
    %v6919 = vsub.f32 %v6468, %v6918
    %v6920 = vand.u32 %v6919, 4294901760
    %v6921 = vsub.f32 %v6919, %v6920
    %v6922 = vand.u32 %v6921, 4294901760
    %6923 = vmatpush.msra.mxu0 %v6922
    %v6924 = vand.u32 %v6467, 4294901760
    %v6925 = vsub.f32 %v6467, %v6924
    %v6926 = vand.u32 %v6925, 4294901760
    %v6927 = vsub.f32 %v6925, %v6926
    %v6928 = vand.u32 %v6927, 4294901760
    %6929 = vmatpush.msra.mxu0 %v6928
    %v6930 = vand.u32 %v6466, 4294901760
    %v6931 = vsub.f32 %v6466, %v6930
    %v6932 = vand.u32 %v6931, 4294901760
    %v6933 = vsub.f32 %v6931, %v6932
    %v6934 = vand.u32 %v6933, 4294901760
    %6935 = vmatpush.msra.mxu0 %v6934
    %v6936 = vand.u32 %v6465, 4294901760
    %v6937 = vsub.f32 %v6465, %v6936
    %v6938 = vand.u32 %v6937, 4294901760
    %v6939 = vsub.f32 %v6937, %v6938
    %v6940 = vand.u32 %v6939, 4294901760
    %6941 = vmatpush.msra.mxu0 %v6940
    %v6942 = vand.u32 %v6464, 4294901760
    %v6943 = vsub.f32 %v6464, %v6942
    %v6944 = vand.u32 %v6943, 4294901760
    %v6945 = vsub.f32 %v6943, %v6944
    %v6946 = vand.u32 %v6945, 4294901760
    %6947 = vmatpush.msra.mxu0 %v6946
    %v6948 = vand.u32 %v6463, 4294901760
    %v6949 = vsub.f32 %v6463, %v6948
    %v6950 = vand.u32 %v6949, 4294901760
    %v6951 = vsub.f32 %v6949, %v6950
    %v6952 = vand.u32 %v6951, 4294901760
    %6953 = vmatpush.msra.mxu0 %v6952
    %v6954 = vand.u32 %v6462, 4294901760
    %v6955 = vsub.f32 %v6462, %v6954
    %v6956 = vand.u32 %v6955, 4294901760
    %v6957 = vsub.f32 %v6955, %v6956
    %v6958 = vand.u32 %v6957, 4294901760
    %6959 = vmatpush.msra.mxu0 %v6958
    %v6960 = vand.u32 %v6461, 4294901760
    %v6961 = vsub.f32 %v6461, %v6960
    %v6962 = vand.u32 %v6961, 4294901760
    %v6963 = vsub.f32 %v6961, %v6962
    %v6964 = vand.u32 %v6963, 4294901760
    %6965 = vmatpush.msra.mxu0 %v6964
    %v6966 = vand.u32 %v6460, 4294901760
    %v6967 = vsub.f32 %v6460, %v6966
    %v6968 = vand.u32 %v6967, 4294901760
    %v6969 = vsub.f32 %v6967, %v6968
    %v6970 = vand.u32 %v6969, 4294901760
    %6971 = vmatpush.msra.mxu0 %v6970
    %v6972 = vand.u32 %v6459, 4294901760
    %v6973 = vsub.f32 %v6459, %v6972
    %v6974 = vand.u32 %v6973, 4294901760
    %v6975 = vsub.f32 %v6973, %v6974
    %v6976 = vand.u32 %v6975, 4294901760
    %6977 = vmatpush.msra.mxu0 %v6976
    %v6978 = vand.u32 %v6458, 4294901760
    %v6979 = vsub.f32 %v6458, %v6978
    %v6980 = vand.u32 %v6979, 4294901760
    %v6981 = vsub.f32 %v6979, %v6980
    %v6982 = vand.u32 %v6981, 4294901760
    %6983 = vmatpush.msra.mxu0 %v6982
    %v6984 = vand.u32 %v6457, 4294901760
    %v6985 = vsub.f32 %v6457, %v6984
    %v6986 = vand.u32 %v6985, 4294901760
    %v6987 = vsub.f32 %v6985, %v6986
    %v6988 = vand.u32 %v6987, 4294901760
    %6989 = vmatpush.msra.mxu0 %v6988
    %v6990 = vand.u32 %v6456, 4294901760
    %v6991 = vsub.f32 %v6456, %v6990
    %v6992 = vand.u32 %v6991, 4294901760
    %v6993 = vsub.f32 %v6991, %v6992
    %v6994 = vand.u32 %v6993, 4294901760
    %6995 = vmatpush.msra.mxu0 %v6994
    %v6996 = vand.u32 %v6455, 4294901760
    %v6997 = vsub.f32 %v6455, %v6996
    %v6998 = vand.u32 %v6997, 4294901760
    %v6999 = vsub.f32 %v6997, %v6998
    %v7000 = vand.u32 %v6999, 4294901760
    %7001 = vmatpush.msra.mxu0 %v7000
    %v7002 = vand.u32 %v6454, 4294901760
    %v7003 = vsub.f32 %v6454, %v7002
    %v7004 = vand.u32 %v7003, 4294901760
    %v7005 = vsub.f32 %v7003, %v7004
    %v7006 = vand.u32 %v7005, 4294901760
    %7007 = vmatpush.msra.mxu0 %v7006
    %v7008 = vand.u32 %v6453, 4294901760
    %v7009 = vsub.f32 %v6453, %v7008
    %v7010 = vand.u32 %v7009, 4294901760
    %v7011 = vsub.f32 %v7009, %v7010
    %v7012 = vand.u32 %v7011, 4294901760
    %7013 = vmatpush.msra.mxu0 %v7012
    %v7014 = vand.u32 %v6535, 4294901760
    %7015 = vmatmul.f32.gmra.mxu0 %v7014
    %v7016 = vpop.f32.mrf.mxu0
    %v7017 = vadd.f32 %v6916, %v7016
    %7018 = vdwg.mxu0
    %v7019 = vand.u32 %v6468, 4294901760
    %v7020 = vsub.f32 %v6468, %v7019
    %7021 = vmatpush.msra.mxu0 %v7020
    %v7022 = vand.u32 %v6467, 4294901760
    %v7023 = vsub.f32 %v6467, %v7022
    %7024 = vmatpush.msra.mxu0 %v7023
    %v7025 = vand.u32 %v6466, 4294901760
    %v7026 = vsub.f32 %v6466, %v7025
    %7027 = vmatpush.msra.mxu0 %v7026
    %v7028 = vand.u32 %v6465, 4294901760
    %v7029 = vsub.f32 %v6465, %v7028
    %7030 = vmatpush.msra.mxu0 %v7029
    %v7031 = vand.u32 %v6464, 4294901760
    %v7032 = vsub.f32 %v6464, %v7031
    %7033 = vmatpush.msra.mxu0 %v7032
    %v7034 = vand.u32 %v6463, 4294901760
    %v7035 = vsub.f32 %v6463, %v7034
    %7036 = vmatpush.msra.mxu0 %v7035
    %v7037 = vand.u32 %v6462, 4294901760
    %v7038 = vsub.f32 %v6462, %v7037
    %7039 = vmatpush.msra.mxu0 %v7038
    %v7040 = vand.u32 %v6461, 4294901760
    %v7041 = vsub.f32 %v6461, %v7040
    %7042 = vmatpush.msra.mxu0 %v7041
    %v7043 = vand.u32 %v6460, 4294901760
    %v7044 = vsub.f32 %v6460, %v7043
    %7045 = vmatpush.msra.mxu0 %v7044
    %v7046 = vand.u32 %v6459, 4294901760
    %v7047 = vsub.f32 %v6459, %v7046
    %7048 = vmatpush.msra.mxu0 %v7047
    %v7049 = vand.u32 %v6458, 4294901760
    %v7050 = vsub.f32 %v6458, %v7049
    %7051 = vmatpush.msra.mxu0 %v7050
    %v7052 = vand.u32 %v6457, 4294901760
    %v7053 = vsub.f32 %v6457, %v7052
    %7054 = vmatpush.msra.mxu0 %v7053
    %v7055 = vand.u32 %v6456, 4294901760
    %v7056 = vsub.f32 %v6456, %v7055
    %7057 = vmatpush.msra.mxu0 %v7056
    %v7058 = vand.u32 %v6455, 4294901760
    %v7059 = vsub.f32 %v6455, %v7058
    %7060 = vmatpush.msra.mxu0 %v7059
    %v7061 = vand.u32 %v6454, 4294901760
    %v7062 = vsub.f32 %v6454, %v7061
    %7063 = vmatpush.msra.mxu0 %v7062
    %v7064 = vand.u32 %v6453, 4294901760
    %v7065 = vsub.f32 %v6453, %v7064
    %7066 = vmatpush.msra.mxu0 %v7065
    %v7067 = vand.u32 %v6535, 4294901760
    %v7068 = vsub.f32 %v6535, %v7067
    %7069 = vmatmul.f32.gmra.mxu0 %v7068
    %v7070 = vpop.f32.mrf.mxu0
    %v7071 = vadd.f32 %v7017, %v7070
    %7072 = vdwg.mxu0
    %v7073 = vand.u32 %v6468, 4294901760
    %7074 = vmatpush.msra.mxu0 %v7073
    %v7075 = vand.u32 %v6467, 4294901760
    %7076 = vmatpush.msra.mxu0 %v7075
    %v7077 = vand.u32 %v6466, 4294901760
    %7078 = vmatpush.msra.mxu0 %v7077
    %v7079 = vand.u32 %v6465, 4294901760
    %7080 = vmatpush.msra.mxu0 %v7079
    %v7081 = vand.u32 %v6464, 4294901760
    %7082 = vmatpush.msra.mxu0 %v7081
    %v7083 = vand.u32 %v6463, 4294901760
    %7084 = vmatpush.msra.mxu0 %v7083
    %v7085 = vand.u32 %v6462, 4294901760
    %7086 = vmatpush.msra.mxu0 %v7085
    %v7087 = vand.u32 %v6461, 4294901760
    %7088 = vmatpush.msra.mxu0 %v7087
    %v7089 = vand.u32 %v6460, 4294901760
    %7090 = vmatpush.msra.mxu0 %v7089
    %v7091 = vand.u32 %v6459, 4294901760
    %7092 = vmatpush.msra.mxu0 %v7091
    %v7093 = vand.u32 %v6458, 4294901760
    %7094 = vmatpush.msra.mxu0 %v7093
    %v7095 = vand.u32 %v6457, 4294901760
    %7096 = vmatpush.msra.mxu0 %v7095
    %v7097 = vand.u32 %v6456, 4294901760
    %7098 = vmatpush.msra.mxu0 %v7097
    %v7099 = vand.u32 %v6455, 4294901760
    %7100 = vmatpush.msra.mxu0 %v7099
    %v7101 = vand.u32 %v6454, 4294901760
    %7102 = vmatpush.msra.mxu0 %v7101
    %v7103 = vand.u32 %v6453, 4294901760
    %7104 = vmatpush.msra.mxu0 %v7103
    %v7105 = vand.u32 %v6535, 4294901760
    %v7106 = vsub.f32 %v6535, %v7105
    %v7107 = vand.u32 %v7106, 4294901760
    %7108 = vmatmul.f32.gmra.mxu0 %v7107
    %v7109 = vpop.f32.mrf.mxu0
    %v7110 = vadd.f32 %v7071, %v7109
    %7111 = vdwg.mxu0
    %v7112 = vand.u32 %v6468, 4294901760
    %v7113 = vsub.f32 %v6468, %v7112
    %v7114 = vand.u32 %v7113, 4294901760
    %7115 = vmatpush.msra.mxu0 %v7114
    %v7116 = vand.u32 %v6467, 4294901760
    %v7117 = vsub.f32 %v6467, %v7116
    %v7118 = vand.u32 %v7117, 4294901760
    %7119 = vmatpush.msra.mxu0 %v7118
    %v7120 = vand.u32 %v6466, 4294901760
    %v7121 = vsub.f32 %v6466, %v7120
    %v7122 = vand.u32 %v7121, 4294901760
    %7123 = vmatpush.msra.mxu0 %v7122
    %v7124 = vand.u32 %v6465, 4294901760
    %v7125 = vsub.f32 %v6465, %v7124
    %v7126 = vand.u32 %v7125, 4294901760
    %7127 = vmatpush.msra.mxu0 %v7126
    %v7128 = vand.u32 %v6464, 4294901760
    %v7129 = vsub.f32 %v6464, %v7128
    %v7130 = vand.u32 %v7129, 4294901760
    %7131 = vmatpush.msra.mxu0 %v7130
    %v7132 = vand.u32 %v6463, 4294901760
    %v7133 = vsub.f32 %v6463, %v7132
    %v7134 = vand.u32 %v7133, 4294901760
    %7135 = vmatpush.msra.mxu0 %v7134
    %v7136 = vand.u32 %v6462, 4294901760
    %v7137 = vsub.f32 %v6462, %v7136
    %v7138 = vand.u32 %v7137, 4294901760
    %7139 = vmatpush.msra.mxu0 %v7138
    %v7140 = vand.u32 %v6461, 4294901760
    %v7141 = vsub.f32 %v6461, %v7140
    %v7142 = vand.u32 %v7141, 4294901760
    %7143 = vmatpush.msra.mxu0 %v7142
    %v7144 = vand.u32 %v6460, 4294901760
    %v7145 = vsub.f32 %v6460, %v7144
    %v7146 = vand.u32 %v7145, 4294901760
    %7147 = vmatpush.msra.mxu0 %v7146
    %v7148 = vand.u32 %v6459, 4294901760
    %v7149 = vsub.f32 %v6459, %v7148
    %v7150 = vand.u32 %v7149, 4294901760
    %7151 = vmatpush.msra.mxu0 %v7150
    %v7152 = vand.u32 %v6458, 4294901760
    %v7153 = vsub.f32 %v6458, %v7152
    %v7154 = vand.u32 %v7153, 4294901760
    %7155 = vmatpush.msra.mxu0 %v7154
    %v7156 = vand.u32 %v6457, 4294901760
    %v7157 = vsub.f32 %v6457, %v7156
    %v7158 = vand.u32 %v7157, 4294901760
    %7159 = vmatpush.msra.mxu0 %v7158
    %v7160 = vand.u32 %v6456, 4294901760
    %v7161 = vsub.f32 %v6456, %v7160
    %v7162 = vand.u32 %v7161, 4294901760
    %7163 = vmatpush.msra.mxu0 %v7162
    %v7164 = vand.u32 %v6455, 4294901760
    %v7165 = vsub.f32 %v6455, %v7164
    %v7166 = vand.u32 %v7165, 4294901760
    %7167 = vmatpush.msra.mxu0 %v7166
    %v7168 = vand.u32 %v6454, 4294901760
    %v7169 = vsub.f32 %v6454, %v7168
    %v7170 = vand.u32 %v7169, 4294901760
    %7171 = vmatpush.msra.mxu0 %v7170
    %v7172 = vand.u32 %v6453, 4294901760
    %v7173 = vsub.f32 %v6453, %v7172
    %v7174 = vand.u32 %v7173, 4294901760
    %7175 = vmatpush.msra.mxu0 %v7174
    %v7176 = vand.u32 %v6535, 4294901760
    %7177 = vmatmul.f32.gmra.mxu0 %v7176
    %v7178 = vpop.f32.mrf.mxu0
    %v7179 = vadd.f32 %v7110, %v7178
    %7180 = vdwg.mxu0
    %v7181 = vand.u32 %v6468, 4294901760
    %7182 = vmatpush.msra.mxu0 %v7181
    %v7183 = vand.u32 %v6467, 4294901760
    %7184 = vmatpush.msra.mxu0 %v7183
    %v7185 = vand.u32 %v6466, 4294901760
    %7186 = vmatpush.msra.mxu0 %v7185
    %v7187 = vand.u32 %v6465, 4294901760
    %7188 = vmatpush.msra.mxu0 %v7187
    %v7189 = vand.u32 %v6464, 4294901760
    %7190 = vmatpush.msra.mxu0 %v7189
    %v7191 = vand.u32 %v6463, 4294901760
    %7192 = vmatpush.msra.mxu0 %v7191
    %v7193 = vand.u32 %v6462, 4294901760
    %7194 = vmatpush.msra.mxu0 %v7193
    %v7195 = vand.u32 %v6461, 4294901760
    %7196 = vmatpush.msra.mxu0 %v7195
    %v7197 = vand.u32 %v6460, 4294901760
    %7198 = vmatpush.msra.mxu0 %v7197
    %v7199 = vand.u32 %v6459, 4294901760
    %7200 = vmatpush.msra.mxu0 %v7199
    %v7201 = vand.u32 %v6458, 4294901760
    %7202 = vmatpush.msra.mxu0 %v7201
    %v7203 = vand.u32 %v6457, 4294901760
    %7204 = vmatpush.msra.mxu0 %v7203
    %v7205 = vand.u32 %v6456, 4294901760
    %7206 = vmatpush.msra.mxu0 %v7205
    %v7207 = vand.u32 %v6455, 4294901760
    %7208 = vmatpush.msra.mxu0 %v7207
    %v7209 = vand.u32 %v6454, 4294901760
    %7210 = vmatpush.msra.mxu0 %v7209
    %v7211 = vand.u32 %v6453, 4294901760
    %7212 = vmatpush.msra.mxu0 %v7211
    %v7213 = vand.u32 %v6535, 4294901760
    %7214 = vmatmul.f32.gmra.mxu0 %v7213
    %v7215 = vpop.f32.mrf.mxu0
    %v7216 = vadd.f32 %v7179, %v7215
    %7217 = vdwg.mxu0
    %v7219 = vsel %vm5709, %v7216, 0
    %7221 = vmatpush.msra.mxu0 0.0
    %7222 = vmatpush.msra.mxu0 0.0
    %7223 = vmatpush.msra.mxu0 0.0
    %7224 = vmatpush.msra.mxu0 0.0
    %7225 = vmatpush.msra.mxu0 0.0
    %7226 = vmatpush.msra.mxu0 0.0
    %7227 = vmatpush.msra.mxu0 0.0
    %7228 = vmatpush.msra.mxu0 0.0
    %7229 = vmatpush.msra.mxu0 %v6476
    %7230 = vmatpush.msra.mxu0 %v6475
    %7231 = vmatpush.msra.mxu0 %v6474
    %7232 = vmatpush.msra.mxu0 %v6473
    %7233 = vmatpush.msra.mxu0 %v6472
    %7234 = vmatpush.msra.mxu0 %v6471
    %7235 = vmatpush.msra.mxu0 %v6470
    %7236 = vmatpush.msra.mxu0 %v6469
    %7237 = vmatmul.f32.gmra.mxu0 %v7219
    %v7238 = vpop.f32.mrf.mxu0
    %v7239 = vadd.f32 0.0, %v7238
    %7240 = vdwg.mxu0
    %v7241 = vadd.f32 %v6524, %v7239
    %v7242 = vadd.s32 %v6529, 16
    %vm7243 = vcmp.eq.s32.totalorder %v6527, %v7242
    %vm7244 = vcmp.eq.s32.totalorder %v6528, %v7242
    %v7245 = vsel %vm7243, 1, 0
    %v7246 = vsel %vm7244, 1, 0
    %v7247 = vcvt.s32.f32 %v7245
    %v7248 = vcvt.s32.f32 %v7246
    %v7249 = vand.u32 %v6452, 4294901760
    %7250 = vmatpush.msra.mxu0 %v7249
    %v7251 = vand.u32 %v6451, 4294901760
    %7252 = vmatpush.msra.mxu0 %v7251
    %v7253 = vand.u32 %v6450, 4294901760
    %7254 = vmatpush.msra.mxu0 %v7253
    %v7255 = vand.u32 %v6449, 4294901760
    %7256 = vmatpush.msra.mxu0 %v7255
    %v7257 = vand.u32 %v6448, 4294901760
    %7258 = vmatpush.msra.mxu0 %v7257
    %v7259 = vand.u32 %v6447, 4294901760
    %7260 = vmatpush.msra.mxu0 %v7259
    %v7261 = vand.u32 %v6446, 4294901760
    %7262 = vmatpush.msra.mxu0 %v7261
    %v7263 = vand.u32 %v6445, 4294901760
    %7264 = vmatpush.msra.mxu0 %v7263
    %v7265 = vand.u32 %v6444, 4294901760
    %7266 = vmatpush.msra.mxu0 %v7265
    %v7267 = vand.u32 %v6443, 4294901760
    %7268 = vmatpush.msra.mxu0 %v7267
    %v7269 = vand.u32 %v6442, 4294901760
    %7270 = vmatpush.msra.mxu0 %v7269
    %v7271 = vand.u32 %v6441, 4294901760
    %7272 = vmatpush.msra.mxu0 %v7271
    %v7273 = vand.u32 %v6440, 4294901760
    %7274 = vmatpush.msra.mxu0 %v7273
    %v7275 = vand.u32 %v6439, 4294901760
    %7276 = vmatpush.msra.mxu0 %v7275
    %v7277 = vand.u32 %v6438, 4294901760
    %7278 = vmatpush.msra.mxu0 %v7277
    %v7279 = vand.u32 %v6437, 4294901760
    %7280 = vmatpush.msra.mxu0 %v7279
    %v7281 = vand.u32 %v7247, 4294901760
    %v7282 = vsub.f32 %v7247, %v7281
    %v7283 = vand.u32 %v7282, 4294901760
    %v7284 = vsub.f32 %v7282, %v7283
    %v7285 = vand.u32 %v7284, 4294901760
    %7286 = vmatmul.f32.gmra.mxu0 %v7285
    %v7287 = vpop.f32.mrf.mxu0
    %v7288 = vadd.f32 0.0, %v7287
    %7289 = vdwg.mxu0
    %v7290 = vand.u32 %v6452, 4294901760
    %v7291 = vsub.f32 %v6452, %v7290
    %v7292 = vand.u32 %v7291, 4294901760
    %v7293 = vsub.f32 %v7291, %v7292
    %v7294 = vand.u32 %v7293, 4294901760
    %7295 = vmatpush.msra.mxu0 %v7294
    %v7296 = vand.u32 %v6451, 4294901760
    %v7297 = vsub.f32 %v6451, %v7296
    %v7298 = vand.u32 %v7297, 4294901760
    %v7299 = vsub.f32 %v7297, %v7298
    %v7300 = vand.u32 %v7299, 4294901760
    %7301 = vmatpush.msra.mxu0 %v7300
    %v7302 = vand.u32 %v6450, 4294901760
    %v7303 = vsub.f32 %v6450, %v7302
    %v7304 = vand.u32 %v7303, 4294901760
    %v7305 = vsub.f32 %v7303, %v7304
    %v7306 = vand.u32 %v7305, 4294901760
    %7307 = vmatpush.msra.mxu0 %v7306
    %v7308 = vand.u32 %v6449, 4294901760
    %v7309 = vsub.f32 %v6449, %v7308
    %v7310 = vand.u32 %v7309, 4294901760
    %v7311 = vsub.f32 %v7309, %v7310
    %v7312 = vand.u32 %v7311, 4294901760
    %7313 = vmatpush.msra.mxu0 %v7312
    %v7314 = vand.u32 %v6448, 4294901760
    %v7315 = vsub.f32 %v6448, %v7314
    %v7316 = vand.u32 %v7315, 4294901760
    %v7317 = vsub.f32 %v7315, %v7316
    %v7318 = vand.u32 %v7317, 4294901760
    %7319 = vmatpush.msra.mxu0 %v7318
    %v7320 = vand.u32 %v6447, 4294901760
    %v7321 = vsub.f32 %v6447, %v7320
    %v7322 = vand.u32 %v7321, 4294901760
    %v7323 = vsub.f32 %v7321, %v7322
    %v7324 = vand.u32 %v7323, 4294901760
    %7325 = vmatpush.msra.mxu0 %v7324
    %v7326 = vand.u32 %v6446, 4294901760
    %v7327 = vsub.f32 %v6446, %v7326
    %v7328 = vand.u32 %v7327, 4294901760
    %v7329 = vsub.f32 %v7327, %v7328
    %v7330 = vand.u32 %v7329, 4294901760
    %7331 = vmatpush.msra.mxu0 %v7330
    %v7332 = vand.u32 %v6445, 4294901760
    %v7333 = vsub.f32 %v6445, %v7332
    %v7334 = vand.u32 %v7333, 4294901760
    %v7335 = vsub.f32 %v7333, %v7334
    %v7336 = vand.u32 %v7335, 4294901760
    %7337 = vmatpush.msra.mxu0 %v7336
    %v7338 = vand.u32 %v6444, 4294901760
    %v7339 = vsub.f32 %v6444, %v7338
    %v7340 = vand.u32 %v7339, 4294901760
    %v7341 = vsub.f32 %v7339, %v7340
    %v7342 = vand.u32 %v7341, 4294901760
    %7343 = vmatpush.msra.mxu0 %v7342
    %v7344 = vand.u32 %v6443, 4294901760
    %v7345 = vsub.f32 %v6443, %v7344
    %v7346 = vand.u32 %v7345, 4294901760
    %v7347 = vsub.f32 %v7345, %v7346
    %v7348 = vand.u32 %v7347, 4294901760
    %7349 = vmatpush.msra.mxu0 %v7348
    %v7350 = vand.u32 %v6442, 4294901760
    %v7351 = vsub.f32 %v6442, %v7350
    %v7352 = vand.u32 %v7351, 4294901760
    %v7353 = vsub.f32 %v7351, %v7352
    %v7354 = vand.u32 %v7353, 4294901760
    %7355 = vmatpush.msra.mxu0 %v7354
    %v7356 = vand.u32 %v6441, 4294901760
    %v7357 = vsub.f32 %v6441, %v7356
    %v7358 = vand.u32 %v7357, 4294901760
    %v7359 = vsub.f32 %v7357, %v7358
    %v7360 = vand.u32 %v7359, 4294901760
    %7361 = vmatpush.msra.mxu0 %v7360
    %v7362 = vand.u32 %v6440, 4294901760
    %v7363 = vsub.f32 %v6440, %v7362
    %v7364 = vand.u32 %v7363, 4294901760
    %v7365 = vsub.f32 %v7363, %v7364
    %v7366 = vand.u32 %v7365, 4294901760
    %7367 = vmatpush.msra.mxu0 %v7366
    %v7368 = vand.u32 %v6439, 4294901760
    %v7369 = vsub.f32 %v6439, %v7368
    %v7370 = vand.u32 %v7369, 4294901760
    %v7371 = vsub.f32 %v7369, %v7370
    %v7372 = vand.u32 %v7371, 4294901760
    %7373 = vmatpush.msra.mxu0 %v7372
    %v7374 = vand.u32 %v6438, 4294901760
    %v7375 = vsub.f32 %v6438, %v7374
    %v7376 = vand.u32 %v7375, 4294901760
    %v7377 = vsub.f32 %v7375, %v7376
    %v7378 = vand.u32 %v7377, 4294901760
    %7379 = vmatpush.msra.mxu0 %v7378
    %v7380 = vand.u32 %v6437, 4294901760
    %v7381 = vsub.f32 %v6437, %v7380
    %v7382 = vand.u32 %v7381, 4294901760
    %v7383 = vsub.f32 %v7381, %v7382
    %v7384 = vand.u32 %v7383, 4294901760
    %7385 = vmatpush.msra.mxu0 %v7384
    %v7386 = vand.u32 %v7247, 4294901760
    %7387 = vmatmul.f32.gmra.mxu0 %v7386
    %v7388 = vpop.f32.mrf.mxu0
    %v7389 = vadd.f32 %v7288, %v7388
    %7390 = vdwg.mxu0
    %v7391 = vand.u32 %v6452, 4294901760
    %v7392 = vsub.f32 %v6452, %v7391
    %7393 = vmatpush.msra.mxu0 %v7392
    %v7394 = vand.u32 %v6451, 4294901760
    %v7395 = vsub.f32 %v6451, %v7394
    %7396 = vmatpush.msra.mxu0 %v7395
    %v7397 = vand.u32 %v6450, 4294901760
    %v7398 = vsub.f32 %v6450, %v7397
    %7399 = vmatpush.msra.mxu0 %v7398
    %v7400 = vand.u32 %v6449, 4294901760
    %v7401 = vsub.f32 %v6449, %v7400
    %7402 = vmatpush.msra.mxu0 %v7401
    %v7403 = vand.u32 %v6448, 4294901760
    %v7404 = vsub.f32 %v6448, %v7403
    %7405 = vmatpush.msra.mxu0 %v7404
    %v7406 = vand.u32 %v6447, 4294901760
    %v7407 = vsub.f32 %v6447, %v7406
    %7408 = vmatpush.msra.mxu0 %v7407
    %v7409 = vand.u32 %v6446, 4294901760
    %v7410 = vsub.f32 %v6446, %v7409
    %7411 = vmatpush.msra.mxu0 %v7410
    %v7412 = vand.u32 %v6445, 4294901760
    %v7413 = vsub.f32 %v6445, %v7412
    %7414 = vmatpush.msra.mxu0 %v7413
    %v7415 = vand.u32 %v6444, 4294901760
    %v7416 = vsub.f32 %v6444, %v7415
    %7417 = vmatpush.msra.mxu0 %v7416
    %v7418 = vand.u32 %v6443, 4294901760
    %v7419 = vsub.f32 %v6443, %v7418
    %7420 = vmatpush.msra.mxu0 %v7419
    %v7421 = vand.u32 %v6442, 4294901760
    %v7422 = vsub.f32 %v6442, %v7421
    %7423 = vmatpush.msra.mxu0 %v7422
    %v7424 = vand.u32 %v6441, 4294901760
    %v7425 = vsub.f32 %v6441, %v7424
    %7426 = vmatpush.msra.mxu0 %v7425
    %v7427 = vand.u32 %v6440, 4294901760
    %v7428 = vsub.f32 %v6440, %v7427
    %7429 = vmatpush.msra.mxu0 %v7428
    %v7430 = vand.u32 %v6439, 4294901760
    %v7431 = vsub.f32 %v6439, %v7430
    %7432 = vmatpush.msra.mxu0 %v7431
    %v7433 = vand.u32 %v6438, 4294901760
    %v7434 = vsub.f32 %v6438, %v7433
    %7435 = vmatpush.msra.mxu0 %v7434
    %v7436 = vand.u32 %v6437, 4294901760
    %v7437 = vsub.f32 %v6437, %v7436
    %7438 = vmatpush.msra.mxu0 %v7437
    %v7439 = vand.u32 %v7247, 4294901760
    %v7440 = vsub.f32 %v7247, %v7439
    %7441 = vmatmul.f32.gmra.mxu0 %v7440
    %v7442 = vpop.f32.mrf.mxu0
    %v7443 = vadd.f32 %v7389, %v7442
    %7444 = vdwg.mxu0
    %v7445 = vand.u32 %v6452, 4294901760
    %7446 = vmatpush.msra.mxu0 %v7445
    %v7447 = vand.u32 %v6451, 4294901760
    %7448 = vmatpush.msra.mxu0 %v7447
    %v7449 = vand.u32 %v6450, 4294901760
    %7450 = vmatpush.msra.mxu0 %v7449
    %v7451 = vand.u32 %v6449, 4294901760
    %7452 = vmatpush.msra.mxu0 %v7451
    %v7453 = vand.u32 %v6448, 4294901760
    %7454 = vmatpush.msra.mxu0 %v7453
    %v7455 = vand.u32 %v6447, 4294901760
    %7456 = vmatpush.msra.mxu0 %v7455
    %v7457 = vand.u32 %v6446, 4294901760
    %7458 = vmatpush.msra.mxu0 %v7457
    %v7459 = vand.u32 %v6445, 4294901760
    %7460 = vmatpush.msra.mxu0 %v7459
    %v7461 = vand.u32 %v6444, 4294901760
    %7462 = vmatpush.msra.mxu0 %v7461
    %v7463 = vand.u32 %v6443, 4294901760
    %7464 = vmatpush.msra.mxu0 %v7463
    %v7465 = vand.u32 %v6442, 4294901760
    %7466 = vmatpush.msra.mxu0 %v7465
    %v7467 = vand.u32 %v6441, 4294901760
    %7468 = vmatpush.msra.mxu0 %v7467
    %v7469 = vand.u32 %v6440, 4294901760
    %7470 = vmatpush.msra.mxu0 %v7469
    %v7471 = vand.u32 %v6439, 4294901760
    %7472 = vmatpush.msra.mxu0 %v7471
    %v7473 = vand.u32 %v6438, 4294901760
    %7474 = vmatpush.msra.mxu0 %v7473
    %v7475 = vand.u32 %v6437, 4294901760
    %7476 = vmatpush.msra.mxu0 %v7475
    %v7477 = vand.u32 %v7247, 4294901760
    %v7478 = vsub.f32 %v7247, %v7477
    %v7479 = vand.u32 %v7478, 4294901760
    %7480 = vmatmul.f32.gmra.mxu0 %v7479
    %v7481 = vpop.f32.mrf.mxu0
    %v7482 = vadd.f32 %v7443, %v7481
    %7483 = vdwg.mxu0
    %v7484 = vand.u32 %v6452, 4294901760
    %v7485 = vsub.f32 %v6452, %v7484
    %v7486 = vand.u32 %v7485, 4294901760
    %7487 = vmatpush.msra.mxu0 %v7486
    %v7488 = vand.u32 %v6451, 4294901760
    %v7489 = vsub.f32 %v6451, %v7488
    %v7490 = vand.u32 %v7489, 4294901760
    %7491 = vmatpush.msra.mxu0 %v7490
    %v7492 = vand.u32 %v6450, 4294901760
    %v7493 = vsub.f32 %v6450, %v7492
    %v7494 = vand.u32 %v7493, 4294901760
    %7495 = vmatpush.msra.mxu0 %v7494
    %v7496 = vand.u32 %v6449, 4294901760
    %v7497 = vsub.f32 %v6449, %v7496
    %v7498 = vand.u32 %v7497, 4294901760
    %7499 = vmatpush.msra.mxu0 %v7498
    %v7500 = vand.u32 %v6448, 4294901760
    %v7501 = vsub.f32 %v6448, %v7500
    %v7502 = vand.u32 %v7501, 4294901760
    %7503 = vmatpush.msra.mxu0 %v7502
    %v7504 = vand.u32 %v6447, 4294901760
    %v7505 = vsub.f32 %v6447, %v7504
    %v7506 = vand.u32 %v7505, 4294901760
    %7507 = vmatpush.msra.mxu0 %v7506
    %v7508 = vand.u32 %v6446, 4294901760
    %v7509 = vsub.f32 %v6446, %v7508
    %v7510 = vand.u32 %v7509, 4294901760
    %7511 = vmatpush.msra.mxu0 %v7510
    %v7512 = vand.u32 %v6445, 4294901760
    %v7513 = vsub.f32 %v6445, %v7512
    %v7514 = vand.u32 %v7513, 4294901760
    %7515 = vmatpush.msra.mxu0 %v7514
    %v7516 = vand.u32 %v6444, 4294901760
    %v7517 = vsub.f32 %v6444, %v7516
    %v7518 = vand.u32 %v7517, 4294901760
    %7519 = vmatpush.msra.mxu0 %v7518
    %v7520 = vand.u32 %v6443, 4294901760
    %v7521 = vsub.f32 %v6443, %v7520
    %v7522 = vand.u32 %v7521, 4294901760
    %7523 = vmatpush.msra.mxu0 %v7522
    %v7524 = vand.u32 %v6442, 4294901760
    %v7525 = vsub.f32 %v6442, %v7524
    %v7526 = vand.u32 %v7525, 4294901760
    %7527 = vmatpush.msra.mxu0 %v7526
    %v7528 = vand.u32 %v6441, 4294901760
    %v7529 = vsub.f32 %v6441, %v7528
    %v7530 = vand.u32 %v7529, 4294901760
    %7531 = vmatpush.msra.mxu0 %v7530
    %v7532 = vand.u32 %v6440, 4294901760
    %v7533 = vsub.f32 %v6440, %v7532
    %v7534 = vand.u32 %v7533, 4294901760
    %7535 = vmatpush.msra.mxu0 %v7534
    %v7536 = vand.u32 %v6439, 4294901760
    %v7537 = vsub.f32 %v6439, %v7536
    %v7538 = vand.u32 %v7537, 4294901760
    %7539 = vmatpush.msra.mxu0 %v7538
    %v7540 = vand.u32 %v6438, 4294901760
    %v7541 = vsub.f32 %v6438, %v7540
    %v7542 = vand.u32 %v7541, 4294901760
    %7543 = vmatpush.msra.mxu0 %v7542
    %v7544 = vand.u32 %v6437, 4294901760
    %v7545 = vsub.f32 %v6437, %v7544
    %v7546 = vand.u32 %v7545, 4294901760
    %7547 = vmatpush.msra.mxu0 %v7546
    %v7548 = vand.u32 %v7247, 4294901760
    %7549 = vmatmul.f32.gmra.mxu0 %v7548
    %v7550 = vpop.f32.mrf.mxu0
    %v7551 = vadd.f32 %v7482, %v7550
    %7552 = vdwg.mxu0
    %v7553 = vand.u32 %v6452, 4294901760
    %7554 = vmatpush.msra.mxu0 %v7553
    %v7555 = vand.u32 %v6451, 4294901760
    %7556 = vmatpush.msra.mxu0 %v7555
    %v7557 = vand.u32 %v6450, 4294901760
    %7558 = vmatpush.msra.mxu0 %v7557
    %v7559 = vand.u32 %v6449, 4294901760
    %7560 = vmatpush.msra.mxu0 %v7559
    %v7561 = vand.u32 %v6448, 4294901760
    %7562 = vmatpush.msra.mxu0 %v7561
    %v7563 = vand.u32 %v6447, 4294901760
    %7564 = vmatpush.msra.mxu0 %v7563
    %v7565 = vand.u32 %v6446, 4294901760
    %7566 = vmatpush.msra.mxu0 %v7565
    %v7567 = vand.u32 %v6445, 4294901760
    %7568 = vmatpush.msra.mxu0 %v7567
    %v7569 = vand.u32 %v6444, 4294901760
    %7570 = vmatpush.msra.mxu0 %v7569
    %v7571 = vand.u32 %v6443, 4294901760
    %7572 = vmatpush.msra.mxu0 %v7571
    %v7573 = vand.u32 %v6442, 4294901760
    %7574 = vmatpush.msra.mxu0 %v7573
    %v7575 = vand.u32 %v6441, 4294901760
    %7576 = vmatpush.msra.mxu0 %v7575
    %v7577 = vand.u32 %v6440, 4294901760
    %7578 = vmatpush.msra.mxu0 %v7577
    %v7579 = vand.u32 %v6439, 4294901760
    %7580 = vmatpush.msra.mxu0 %v7579
    %v7581 = vand.u32 %v6438, 4294901760
    %7582 = vmatpush.msra.mxu0 %v7581
    %v7583 = vand.u32 %v6437, 4294901760
    %7584 = vmatpush.msra.mxu0 %v7583
    %v7585 = vand.u32 %v7247, 4294901760
    %7586 = vmatmul.f32.gmra.mxu0 %v7585
    %v7587 = vpop.f32.mrf.mxu0
    %v7588 = vadd.f32 %v7551, %v7587
    %7589 = vdwg.mxu0
    %v7590 = vand.u32 %v6468, 4294901760
    %7591 = vmatpush.msra.mxu0 %v7590
    %v7592 = vand.u32 %v6467, 4294901760
    %7593 = vmatpush.msra.mxu0 %v7592
    %v7594 = vand.u32 %v6466, 4294901760
    %7595 = vmatpush.msra.mxu0 %v7594
    %v7596 = vand.u32 %v6465, 4294901760
    %7597 = vmatpush.msra.mxu0 %v7596
    %v7598 = vand.u32 %v6464, 4294901760
    %7599 = vmatpush.msra.mxu0 %v7598
    %v7600 = vand.u32 %v6463, 4294901760
    %7601 = vmatpush.msra.mxu0 %v7600
    %v7602 = vand.u32 %v6462, 4294901760
    %7603 = vmatpush.msra.mxu0 %v7602
    %v7604 = vand.u32 %v6461, 4294901760
    %7605 = vmatpush.msra.mxu0 %v7604
    %v7606 = vand.u32 %v6460, 4294901760
    %7607 = vmatpush.msra.mxu0 %v7606
    %v7608 = vand.u32 %v6459, 4294901760
    %7609 = vmatpush.msra.mxu0 %v7608
    %v7610 = vand.u32 %v6458, 4294901760
    %7611 = vmatpush.msra.mxu0 %v7610
    %v7612 = vand.u32 %v6457, 4294901760
    %7613 = vmatpush.msra.mxu0 %v7612
    %v7614 = vand.u32 %v6456, 4294901760
    %7615 = vmatpush.msra.mxu0 %v7614
    %v7616 = vand.u32 %v6455, 4294901760
    %7617 = vmatpush.msra.mxu0 %v7616
    %v7618 = vand.u32 %v6454, 4294901760
    %7619 = vmatpush.msra.mxu0 %v7618
    %v7620 = vand.u32 %v6453, 4294901760
    %7621 = vmatpush.msra.mxu0 %v7620
    %v7622 = vand.u32 %v7248, 4294901760
    %v7623 = vsub.f32 %v7248, %v7622
    %v7624 = vand.u32 %v7623, 4294901760
    %v7625 = vsub.f32 %v7623, %v7624
    %v7626 = vand.u32 %v7625, 4294901760
    %7627 = vmatmul.f32.gmra.mxu0 %v7626
    %v7628 = vpop.f32.mrf.mxu0
    %v7629 = vadd.f32 %v7588, %v7628
    %7630 = vdwg.mxu0
    %v7631 = vand.u32 %v6468, 4294901760
    %v7632 = vsub.f32 %v6468, %v7631
    %v7633 = vand.u32 %v7632, 4294901760
    %v7634 = vsub.f32 %v7632, %v7633
    %v7635 = vand.u32 %v7634, 4294901760
    %7636 = vmatpush.msra.mxu0 %v7635
    %v7637 = vand.u32 %v6467, 4294901760
    %v7638 = vsub.f32 %v6467, %v7637
    %v7639 = vand.u32 %v7638, 4294901760
    %v7640 = vsub.f32 %v7638, %v7639
    %v7641 = vand.u32 %v7640, 4294901760
    %7642 = vmatpush.msra.mxu0 %v7641
    %v7643 = vand.u32 %v6466, 4294901760
    %v7644 = vsub.f32 %v6466, %v7643
    %v7645 = vand.u32 %v7644, 4294901760
    %v7646 = vsub.f32 %v7644, %v7645
    %v7647 = vand.u32 %v7646, 4294901760
    %7648 = vmatpush.msra.mxu0 %v7647
    %v7649 = vand.u32 %v6465, 4294901760
    %v7650 = vsub.f32 %v6465, %v7649
    %v7651 = vand.u32 %v7650, 4294901760
    %v7652 = vsub.f32 %v7650, %v7651
    %v7653 = vand.u32 %v7652, 4294901760
    %7654 = vmatpush.msra.mxu0 %v7653
    %v7655 = vand.u32 %v6464, 4294901760
    %v7656 = vsub.f32 %v6464, %v7655
    %v7657 = vand.u32 %v7656, 4294901760
    %v7658 = vsub.f32 %v7656, %v7657
    %v7659 = vand.u32 %v7658, 4294901760
    %7660 = vmatpush.msra.mxu0 %v7659
    %v7661 = vand.u32 %v6463, 4294901760
    %v7662 = vsub.f32 %v6463, %v7661
    %v7663 = vand.u32 %v7662, 4294901760
    %v7664 = vsub.f32 %v7662, %v7663
    %v7665 = vand.u32 %v7664, 4294901760
    %7666 = vmatpush.msra.mxu0 %v7665
    %v7667 = vand.u32 %v6462, 4294901760
    %v7668 = vsub.f32 %v6462, %v7667
    %v7669 = vand.u32 %v7668, 4294901760
    %v7670 = vsub.f32 %v7668, %v7669
    %v7671 = vand.u32 %v7670, 4294901760
    %7672 = vmatpush.msra.mxu0 %v7671
    %v7673 = vand.u32 %v6461, 4294901760
    %v7674 = vsub.f32 %v6461, %v7673
    %v7675 = vand.u32 %v7674, 4294901760
    %v7676 = vsub.f32 %v7674, %v7675
    %v7677 = vand.u32 %v7676, 4294901760
    %7678 = vmatpush.msra.mxu0 %v7677
    %v7679 = vand.u32 %v6460, 4294901760
    %v7680 = vsub.f32 %v6460, %v7679
    %v7681 = vand.u32 %v7680, 4294901760
    %v7682 = vsub.f32 %v7680, %v7681
    %v7683 = vand.u32 %v7682, 4294901760
    %7684 = vmatpush.msra.mxu0 %v7683
    %v7685 = vand.u32 %v6459, 4294901760
    %v7686 = vsub.f32 %v6459, %v7685
    %v7687 = vand.u32 %v7686, 4294901760
    %v7688 = vsub.f32 %v7686, %v7687
    %v7689 = vand.u32 %v7688, 4294901760
    %7690 = vmatpush.msra.mxu0 %v7689
    %v7691 = vand.u32 %v6458, 4294901760
    %v7692 = vsub.f32 %v6458, %v7691
    %v7693 = vand.u32 %v7692, 4294901760
    %v7694 = vsub.f32 %v7692, %v7693
    %v7695 = vand.u32 %v7694, 4294901760
    %7696 = vmatpush.msra.mxu0 %v7695
    %v7697 = vand.u32 %v6457, 4294901760
    %v7698 = vsub.f32 %v6457, %v7697
    %v7699 = vand.u32 %v7698, 4294901760
    %v7700 = vsub.f32 %v7698, %v7699
    %v7701 = vand.u32 %v7700, 4294901760
    %7702 = vmatpush.msra.mxu0 %v7701
    %v7703 = vand.u32 %v6456, 4294901760
    %v7704 = vsub.f32 %v6456, %v7703
    %v7705 = vand.u32 %v7704, 4294901760
    %v7706 = vsub.f32 %v7704, %v7705
    %v7707 = vand.u32 %v7706, 4294901760
    %7708 = vmatpush.msra.mxu0 %v7707
    %v7709 = vand.u32 %v6455, 4294901760
    %v7710 = vsub.f32 %v6455, %v7709
    %v7711 = vand.u32 %v7710, 4294901760
    %v7712 = vsub.f32 %v7710, %v7711
    %v7713 = vand.u32 %v7712, 4294901760
    %7714 = vmatpush.msra.mxu0 %v7713
    %v7715 = vand.u32 %v6454, 4294901760
    %v7716 = vsub.f32 %v6454, %v7715
    %v7717 = vand.u32 %v7716, 4294901760
    %v7718 = vsub.f32 %v7716, %v7717
    %v7719 = vand.u32 %v7718, 4294901760
    %7720 = vmatpush.msra.mxu0 %v7719
    %v7721 = vand.u32 %v6453, 4294901760
    %v7722 = vsub.f32 %v6453, %v7721
    %v7723 = vand.u32 %v7722, 4294901760
    %v7724 = vsub.f32 %v7722, %v7723
    %v7725 = vand.u32 %v7724, 4294901760
    %7726 = vmatpush.msra.mxu0 %v7725
    %v7727 = vand.u32 %v7248, 4294901760
    %7728 = vmatmul.f32.gmra.mxu0 %v7727
    %v7729 = vpop.f32.mrf.mxu0
    %v7730 = vadd.f32 %v7629, %v7729
    %7731 = vdwg.mxu0
    %v7732 = vand.u32 %v6468, 4294901760
    %v7733 = vsub.f32 %v6468, %v7732
    %7734 = vmatpush.msra.mxu0 %v7733
    %v7735 = vand.u32 %v6467, 4294901760
    %v7736 = vsub.f32 %v6467, %v7735
    %7737 = vmatpush.msra.mxu0 %v7736
    %v7738 = vand.u32 %v6466, 4294901760
    %v7739 = vsub.f32 %v6466, %v7738
    %7740 = vmatpush.msra.mxu0 %v7739
    %v7741 = vand.u32 %v6465, 4294901760
    %v7742 = vsub.f32 %v6465, %v7741
    %7743 = vmatpush.msra.mxu0 %v7742
    %v7744 = vand.u32 %v6464, 4294901760
    %v7745 = vsub.f32 %v6464, %v7744
    %7746 = vmatpush.msra.mxu0 %v7745
    %v7747 = vand.u32 %v6463, 4294901760
    %v7748 = vsub.f32 %v6463, %v7747
    %7749 = vmatpush.msra.mxu0 %v7748
    %v7750 = vand.u32 %v6462, 4294901760
    %v7751 = vsub.f32 %v6462, %v7750
    %7752 = vmatpush.msra.mxu0 %v7751
    %v7753 = vand.u32 %v6461, 4294901760
    %v7754 = vsub.f32 %v6461, %v7753
    %7755 = vmatpush.msra.mxu0 %v7754
    %v7756 = vand.u32 %v6460, 4294901760
    %v7757 = vsub.f32 %v6460, %v7756
    %7758 = vmatpush.msra.mxu0 %v7757
    %v7759 = vand.u32 %v6459, 4294901760
    %v7760 = vsub.f32 %v6459, %v7759
    %7761 = vmatpush.msra.mxu0 %v7760
    %v7762 = vand.u32 %v6458, 4294901760
    %v7763 = vsub.f32 %v6458, %v7762
    %7764 = vmatpush.msra.mxu0 %v7763
    %v7765 = vand.u32 %v6457, 4294901760
    %v7766 = vsub.f32 %v6457, %v7765
    %7767 = vmatpush.msra.mxu0 %v7766
    %v7768 = vand.u32 %v6456, 4294901760
    %v7769 = vsub.f32 %v6456, %v7768
    %7770 = vmatpush.msra.mxu0 %v7769
    %v7771 = vand.u32 %v6455, 4294901760
    %v7772 = vsub.f32 %v6455, %v7771
    %7773 = vmatpush.msra.mxu0 %v7772
    %v7774 = vand.u32 %v6454, 4294901760
    %v7775 = vsub.f32 %v6454, %v7774
    %7776 = vmatpush.msra.mxu0 %v7775
    %v7777 = vand.u32 %v6453, 4294901760
    %v7778 = vsub.f32 %v6453, %v7777
    %7779 = vmatpush.msra.mxu0 %v7778
    %v7780 = vand.u32 %v7248, 4294901760
    %v7781 = vsub.f32 %v7248, %v7780
    %7782 = vmatmul.f32.gmra.mxu0 %v7781
    %v7783 = vpop.f32.mrf.mxu0
    %v7784 = vadd.f32 %v7730, %v7783
    %7785 = vdwg.mxu0
    %v7786 = vand.u32 %v6468, 4294901760
    %7787 = vmatpush.msra.mxu0 %v7786
    %v7788 = vand.u32 %v6467, 4294901760
    %7789 = vmatpush.msra.mxu0 %v7788
    %v7790 = vand.u32 %v6466, 4294901760
    %7791 = vmatpush.msra.mxu0 %v7790
    %v7792 = vand.u32 %v6465, 4294901760
    %7793 = vmatpush.msra.mxu0 %v7792
    %v7794 = vand.u32 %v6464, 4294901760
    %7795 = vmatpush.msra.mxu0 %v7794
    %v7796 = vand.u32 %v6463, 4294901760
    %7797 = vmatpush.msra.mxu0 %v7796
    %v7798 = vand.u32 %v6462, 4294901760
    %7799 = vmatpush.msra.mxu0 %v7798
    %v7800 = vand.u32 %v6461, 4294901760
    %7801 = vmatpush.msra.mxu0 %v7800
    %v7802 = vand.u32 %v6460, 4294901760
    %7803 = vmatpush.msra.mxu0 %v7802
    %v7804 = vand.u32 %v6459, 4294901760
    %7805 = vmatpush.msra.mxu0 %v7804
    %v7806 = vand.u32 %v6458, 4294901760
    %7807 = vmatpush.msra.mxu0 %v7806
    %v7808 = vand.u32 %v6457, 4294901760
    %7809 = vmatpush.msra.mxu0 %v7808
    %v7810 = vand.u32 %v6456, 4294901760
    %7811 = vmatpush.msra.mxu0 %v7810
    %v7812 = vand.u32 %v6455, 4294901760
    %7813 = vmatpush.msra.mxu0 %v7812
    %v7814 = vand.u32 %v6454, 4294901760
    %7815 = vmatpush.msra.mxu0 %v7814
    %v7816 = vand.u32 %v6453, 4294901760
    %7817 = vmatpush.msra.mxu0 %v7816
    %v7818 = vand.u32 %v7248, 4294901760
    %v7819 = vsub.f32 %v7248, %v7818
    %v7820 = vand.u32 %v7819, 4294901760
    %7821 = vmatmul.f32.gmra.mxu0 %v7820
    %v7822 = vpop.f32.mrf.mxu0
    %v7823 = vadd.f32 %v7784, %v7822
    %7824 = vdwg.mxu0
    %v7825 = vand.u32 %v6468, 4294901760
    %v7826 = vsub.f32 %v6468, %v7825
    %v7827 = vand.u32 %v7826, 4294901760
    %7828 = vmatpush.msra.mxu0 %v7827
    %v7829 = vand.u32 %v6467, 4294901760
    %v7830 = vsub.f32 %v6467, %v7829
    %v7831 = vand.u32 %v7830, 4294901760
    %7832 = vmatpush.msra.mxu0 %v7831
    %v7833 = vand.u32 %v6466, 4294901760
    %v7834 = vsub.f32 %v6466, %v7833
    %v7835 = vand.u32 %v7834, 4294901760
    %7836 = vmatpush.msra.mxu0 %v7835
    %v7837 = vand.u32 %v6465, 4294901760
    %v7838 = vsub.f32 %v6465, %v7837
    %v7839 = vand.u32 %v7838, 4294901760
    %7840 = vmatpush.msra.mxu0 %v7839
    %v7841 = vand.u32 %v6464, 4294901760
    %v7842 = vsub.f32 %v6464, %v7841
    %v7843 = vand.u32 %v7842, 4294901760
    %7844 = vmatpush.msra.mxu0 %v7843
    %v7845 = vand.u32 %v6463, 4294901760
    %v7846 = vsub.f32 %v6463, %v7845
    %v7847 = vand.u32 %v7846, 4294901760
    %7848 = vmatpush.msra.mxu0 %v7847
    %v7849 = vand.u32 %v6462, 4294901760
    %v7850 = vsub.f32 %v6462, %v7849
    %v7851 = vand.u32 %v7850, 4294901760
    %7852 = vmatpush.msra.mxu0 %v7851
    %v7853 = vand.u32 %v6461, 4294901760
    %v7854 = vsub.f32 %v6461, %v7853
    %v7855 = vand.u32 %v7854, 4294901760
    %7856 = vmatpush.msra.mxu0 %v7855
    %v7857 = vand.u32 %v6460, 4294901760
    %v7858 = vsub.f32 %v6460, %v7857
    %v7859 = vand.u32 %v7858, 4294901760
    %7860 = vmatpush.msra.mxu0 %v7859
    %v7861 = vand.u32 %v6459, 4294901760
    %v7862 = vsub.f32 %v6459, %v7861
    %v7863 = vand.u32 %v7862, 4294901760
    %7864 = vmatpush.msra.mxu0 %v7863
    %v7865 = vand.u32 %v6458, 4294901760
    %v7866 = vsub.f32 %v6458, %v7865
    %v7867 = vand.u32 %v7866, 4294901760
    %7868 = vmatpush.msra.mxu0 %v7867
    %v7869 = vand.u32 %v6457, 4294901760
    %v7870 = vsub.f32 %v6457, %v7869
    %v7871 = vand.u32 %v7870, 4294901760
    %7872 = vmatpush.msra.mxu0 %v7871
    %v7873 = vand.u32 %v6456, 4294901760
    %v7874 = vsub.f32 %v6456, %v7873
    %v7875 = vand.u32 %v7874, 4294901760
    %7876 = vmatpush.msra.mxu0 %v7875
    %v7877 = vand.u32 %v6455, 4294901760
    %v7878 = vsub.f32 %v6455, %v7877
    %v7879 = vand.u32 %v7878, 4294901760
    %7880 = vmatpush.msra.mxu0 %v7879
    %v7881 = vand.u32 %v6454, 4294901760
    %v7882 = vsub.f32 %v6454, %v7881
    %v7883 = vand.u32 %v7882, 4294901760
    %7884 = vmatpush.msra.mxu0 %v7883
    %v7885 = vand.u32 %v6453, 4294901760
    %v7886 = vsub.f32 %v6453, %v7885
    %v7887 = vand.u32 %v7886, 4294901760
    %7888 = vmatpush.msra.mxu0 %v7887
    %v7889 = vand.u32 %v7248, 4294901760
    %7890 = vmatmul.f32.gmra.mxu0 %v7889
    %v7891 = vpop.f32.mrf.mxu0
    %v7892 = vadd.f32 %v7823, %v7891
    %7893 = vdwg.mxu0
    %v7894 = vand.u32 %v6468, 4294901760
    %7895 = vmatpush.msra.mxu0 %v7894
    %v7896 = vand.u32 %v6467, 4294901760
    %7897 = vmatpush.msra.mxu0 %v7896
    %v7898 = vand.u32 %v6466, 4294901760
    %7899 = vmatpush.msra.mxu0 %v7898
    %v7900 = vand.u32 %v6465, 4294901760
    %7901 = vmatpush.msra.mxu0 %v7900
    %v7902 = vand.u32 %v6464, 4294901760
    %7903 = vmatpush.msra.mxu0 %v7902
    %v7904 = vand.u32 %v6463, 4294901760
    %7905 = vmatpush.msra.mxu0 %v7904
    %v7906 = vand.u32 %v6462, 4294901760
    %7907 = vmatpush.msra.mxu0 %v7906
    %v7908 = vand.u32 %v6461, 4294901760
    %7909 = vmatpush.msra.mxu0 %v7908
    %v7910 = vand.u32 %v6460, 4294901760
    %7911 = vmatpush.msra.mxu0 %v7910
    %v7912 = vand.u32 %v6459, 4294901760
    %7913 = vmatpush.msra.mxu0 %v7912
    %v7914 = vand.u32 %v6458, 4294901760
    %7915 = vmatpush.msra.mxu0 %v7914
    %v7916 = vand.u32 %v6457, 4294901760
    %7917 = vmatpush.msra.mxu0 %v7916
    %v7918 = vand.u32 %v6456, 4294901760
    %7919 = vmatpush.msra.mxu0 %v7918
    %v7920 = vand.u32 %v6455, 4294901760
    %7921 = vmatpush.msra.mxu0 %v7920
    %v7922 = vand.u32 %v6454, 4294901760
    %7923 = vmatpush.msra.mxu0 %v7922
    %v7924 = vand.u32 %v6453, 4294901760
    %7925 = vmatpush.msra.mxu0 %v7924
    %v7926 = vand.u32 %v7248, 4294901760
    %7927 = vmatmul.f32.gmra.mxu0 %v7926
    %v7928 = vpop.f32.mrf.mxu0
    %v7929 = vadd.f32 %v7892, %v7928
    %7930 = vdwg.mxu0
    %v7932 = vsel %vm5709, %v7929, 0
    %7934 = vmatpush.msra.mxu0 0.0
    %7935 = vmatpush.msra.mxu0 0.0
    %7936 = vmatpush.msra.mxu0 0.0
    %7937 = vmatpush.msra.mxu0 0.0
    %7938 = vmatpush.msra.mxu0 0.0
    %7939 = vmatpush.msra.mxu0 0.0
    %7940 = vmatpush.msra.mxu0 0.0
    %7941 = vmatpush.msra.mxu0 0.0
    %7942 = vmatpush.msra.mxu0 %v6484
    %7943 = vmatpush.msra.mxu0 %v6483
    %7944 = vmatpush.msra.mxu0 %v6482
    %7945 = vmatpush.msra.mxu0 %v6481
    %7946 = vmatpush.msra.mxu0 %v6480
    %7947 = vmatpush.msra.mxu0 %v6479
    %7948 = vmatpush.msra.mxu0 %v6478
    %7949 = vmatpush.msra.mxu0 %v6477
    %7950 = vmatmul.f32.gmra.mxu0 %v7932
    %v7951 = vpop.f32.mrf.mxu0
    %v7952 = vadd.f32 0.0, %v7951
    %7953 = vdwg.mxu0
    %v7954 = vadd.f32 %v7241, %v7952
    %v7955 = vadd.s32 %v6529, 32
    %vm7956 = vcmp.eq.s32.totalorder %v6527, %v7955
    %vm7957 = vcmp.eq.s32.totalorder %v6528, %v7955
    %v7958 = vsel %vm7956, 1, 0
    %v7959 = vsel %vm7957, 1, 0
    %v7960 = vcvt.s32.f32 %v7958
    %v7961 = vcvt.s32.f32 %v7959
    %v7962 = vand.u32 %v6452, 4294901760
    %7963 = vmatpush.msra.mxu0 %v7962
    %v7964 = vand.u32 %v6451, 4294901760
    %7965 = vmatpush.msra.mxu0 %v7964
    %v7966 = vand.u32 %v6450, 4294901760
    %7967 = vmatpush.msra.mxu0 %v7966
    %v7968 = vand.u32 %v6449, 4294901760
    %7969 = vmatpush.msra.mxu0 %v7968
    %v7970 = vand.u32 %v6448, 4294901760
    %7971 = vmatpush.msra.mxu0 %v7970
    %v7972 = vand.u32 %v6447, 4294901760
    %7973 = vmatpush.msra.mxu0 %v7972
    %v7974 = vand.u32 %v6446, 4294901760
    %7975 = vmatpush.msra.mxu0 %v7974
    %v7976 = vand.u32 %v6445, 4294901760
    %7977 = vmatpush.msra.mxu0 %v7976
    %v7978 = vand.u32 %v6444, 4294901760
    %7979 = vmatpush.msra.mxu0 %v7978
    %v7980 = vand.u32 %v6443, 4294901760
    %7981 = vmatpush.msra.mxu0 %v7980
    %v7982 = vand.u32 %v6442, 4294901760
    %7983 = vmatpush.msra.mxu0 %v7982
    %v7984 = vand.u32 %v6441, 4294901760
    %7985 = vmatpush.msra.mxu0 %v7984
    %v7986 = vand.u32 %v6440, 4294901760
    %7987 = vmatpush.msra.mxu0 %v7986
    %v7988 = vand.u32 %v6439, 4294901760
    %7989 = vmatpush.msra.mxu0 %v7988
    %v7990 = vand.u32 %v6438, 4294901760
    %7991 = vmatpush.msra.mxu0 %v7990
    %v7992 = vand.u32 %v6437, 4294901760
    %7993 = vmatpush.msra.mxu0 %v7992
    %v7994 = vand.u32 %v7960, 4294901760
    %v7995 = vsub.f32 %v7960, %v7994
    %v7996 = vand.u32 %v7995, 4294901760
    %v7997 = vsub.f32 %v7995, %v7996
    %v7998 = vand.u32 %v7997, 4294901760
    %7999 = vmatmul.f32.gmra.mxu0 %v7998
    %v8000 = vpop.f32.mrf.mxu0
    %v8001 = vadd.f32 0.0, %v8000
    %8002 = vdwg.mxu0
    %v8003 = vand.u32 %v6452, 4294901760
    %v8004 = vsub.f32 %v6452, %v8003
    %v8005 = vand.u32 %v8004, 4294901760
    %v8006 = vsub.f32 %v8004, %v8005
    %v8007 = vand.u32 %v8006, 4294901760
    %8008 = vmatpush.msra.mxu0 %v8007
    %v8009 = vand.u32 %v6451, 4294901760
    %v8010 = vsub.f32 %v6451, %v8009
    %v8011 = vand.u32 %v8010, 4294901760
    %v8012 = vsub.f32 %v8010, %v8011
    %v8013 = vand.u32 %v8012, 4294901760
    %8014 = vmatpush.msra.mxu0 %v8013
    %v8015 = vand.u32 %v6450, 4294901760
    %v8016 = vsub.f32 %v6450, %v8015
    %v8017 = vand.u32 %v8016, 4294901760
    %v8018 = vsub.f32 %v8016, %v8017
    %v8019 = vand.u32 %v8018, 4294901760
    %8020 = vmatpush.msra.mxu0 %v8019
    %v8021 = vand.u32 %v6449, 4294901760
    %v8022 = vsub.f32 %v6449, %v8021
    %v8023 = vand.u32 %v8022, 4294901760
    %v8024 = vsub.f32 %v8022, %v8023
    %v8025 = vand.u32 %v8024, 4294901760
    %8026 = vmatpush.msra.mxu0 %v8025
    %v8027 = vand.u32 %v6448, 4294901760
    %v8028 = vsub.f32 %v6448, %v8027
    %v8029 = vand.u32 %v8028, 4294901760
    %v8030 = vsub.f32 %v8028, %v8029
    %v8031 = vand.u32 %v8030, 4294901760
    %8032 = vmatpush.msra.mxu0 %v8031
    %v8033 = vand.u32 %v6447, 4294901760
    %v8034 = vsub.f32 %v6447, %v8033
    %v8035 = vand.u32 %v8034, 4294901760
    %v8036 = vsub.f32 %v8034, %v8035
    %v8037 = vand.u32 %v8036, 4294901760
    %8038 = vmatpush.msra.mxu0 %v8037
    %v8039 = vand.u32 %v6446, 4294901760
    %v8040 = vsub.f32 %v6446, %v8039
    %v8041 = vand.u32 %v8040, 4294901760
    %v8042 = vsub.f32 %v8040, %v8041
    %v8043 = vand.u32 %v8042, 4294901760
    %8044 = vmatpush.msra.mxu0 %v8043
    %v8045 = vand.u32 %v6445, 4294901760
    %v8046 = vsub.f32 %v6445, %v8045
    %v8047 = vand.u32 %v8046, 4294901760
    %v8048 = vsub.f32 %v8046, %v8047
    %v8049 = vand.u32 %v8048, 4294901760
    %8050 = vmatpush.msra.mxu0 %v8049
    %v8051 = vand.u32 %v6444, 4294901760
    %v8052 = vsub.f32 %v6444, %v8051
    %v8053 = vand.u32 %v8052, 4294901760
    %v8054 = vsub.f32 %v8052, %v8053
    %v8055 = vand.u32 %v8054, 4294901760
    %8056 = vmatpush.msra.mxu0 %v8055
    %v8057 = vand.u32 %v6443, 4294901760
    %v8058 = vsub.f32 %v6443, %v8057
    %v8059 = vand.u32 %v8058, 4294901760
    %v8060 = vsub.f32 %v8058, %v8059
    %v8061 = vand.u32 %v8060, 4294901760
    %8062 = vmatpush.msra.mxu0 %v8061
    %v8063 = vand.u32 %v6442, 4294901760
    %v8064 = vsub.f32 %v6442, %v8063
    %v8065 = vand.u32 %v8064, 4294901760
    %v8066 = vsub.f32 %v8064, %v8065
    %v8067 = vand.u32 %v8066, 4294901760
    %8068 = vmatpush.msra.mxu0 %v8067
    %v8069 = vand.u32 %v6441, 4294901760
    %v8070 = vsub.f32 %v6441, %v8069
    %v8071 = vand.u32 %v8070, 4294901760
    %v8072 = vsub.f32 %v8070, %v8071
    %v8073 = vand.u32 %v8072, 4294901760
    %8074 = vmatpush.msra.mxu0 %v8073
    %v8075 = vand.u32 %v6440, 4294901760
    %v8076 = vsub.f32 %v6440, %v8075
    %v8077 = vand.u32 %v8076, 4294901760
    %v8078 = vsub.f32 %v8076, %v8077
    %v8079 = vand.u32 %v8078, 4294901760
    %8080 = vmatpush.msra.mxu0 %v8079
    %v8081 = vand.u32 %v6439, 4294901760
    %v8082 = vsub.f32 %v6439, %v8081
    %v8083 = vand.u32 %v8082, 4294901760
    %v8084 = vsub.f32 %v8082, %v8083
    %v8085 = vand.u32 %v8084, 4294901760
    %8086 = vmatpush.msra.mxu0 %v8085
    %v8087 = vand.u32 %v6438, 4294901760
    %v8088 = vsub.f32 %v6438, %v8087
    %v8089 = vand.u32 %v8088, 4294901760
    %v8090 = vsub.f32 %v8088, %v8089
    %v8091 = vand.u32 %v8090, 4294901760
    %8092 = vmatpush.msra.mxu0 %v8091
    %v8093 = vand.u32 %v6437, 4294901760
    %v8094 = vsub.f32 %v6437, %v8093
    %v8095 = vand.u32 %v8094, 4294901760
    %v8096 = vsub.f32 %v8094, %v8095
    %v8097 = vand.u32 %v8096, 4294901760
    %8098 = vmatpush.msra.mxu0 %v8097
    %v8099 = vand.u32 %v7960, 4294901760
    %8100 = vmatmul.f32.gmra.mxu0 %v8099
    %v8101 = vpop.f32.mrf.mxu0
    %v8102 = vadd.f32 %v8001, %v8101
    %8103 = vdwg.mxu0
    %v8104 = vand.u32 %v6452, 4294901760
    %v8105 = vsub.f32 %v6452, %v8104
    %8106 = vmatpush.msra.mxu0 %v8105
    %v8107 = vand.u32 %v6451, 4294901760
    %v8108 = vsub.f32 %v6451, %v8107
    %8109 = vmatpush.msra.mxu0 %v8108
    %v8110 = vand.u32 %v6450, 4294901760
    %v8111 = vsub.f32 %v6450, %v8110
    %8112 = vmatpush.msra.mxu0 %v8111
    %v8113 = vand.u32 %v6449, 4294901760
    %v8114 = vsub.f32 %v6449, %v8113
    %8115 = vmatpush.msra.mxu0 %v8114
    %v8116 = vand.u32 %v6448, 4294901760
    %v8117 = vsub.f32 %v6448, %v8116
    %8118 = vmatpush.msra.mxu0 %v8117
    %v8119 = vand.u32 %v6447, 4294901760
    %v8120 = vsub.f32 %v6447, %v8119
    %8121 = vmatpush.msra.mxu0 %v8120
    %v8122 = vand.u32 %v6446, 4294901760
    %v8123 = vsub.f32 %v6446, %v8122
    %8124 = vmatpush.msra.mxu0 %v8123
    %v8125 = vand.u32 %v6445, 4294901760
    %v8126 = vsub.f32 %v6445, %v8125
    %8127 = vmatpush.msra.mxu0 %v8126
    %v8128 = vand.u32 %v6444, 4294901760
    %v8129 = vsub.f32 %v6444, %v8128
    %8130 = vmatpush.msra.mxu0 %v8129
    %v8131 = vand.u32 %v6443, 4294901760
    %v8132 = vsub.f32 %v6443, %v8131
    %8133 = vmatpush.msra.mxu0 %v8132
    %v8134 = vand.u32 %v6442, 4294901760
    %v8135 = vsub.f32 %v6442, %v8134
    %8136 = vmatpush.msra.mxu0 %v8135
    %v8137 = vand.u32 %v6441, 4294901760
    %v8138 = vsub.f32 %v6441, %v8137
    %8139 = vmatpush.msra.mxu0 %v8138
    %v8140 = vand.u32 %v6440, 4294901760
    %v8141 = vsub.f32 %v6440, %v8140
    %8142 = vmatpush.msra.mxu0 %v8141
    %v8143 = vand.u32 %v6439, 4294901760
    %v8144 = vsub.f32 %v6439, %v8143
    %8145 = vmatpush.msra.mxu0 %v8144
    %v8146 = vand.u32 %v6438, 4294901760
    %v8147 = vsub.f32 %v6438, %v8146
    %8148 = vmatpush.msra.mxu0 %v8147
    %v8149 = vand.u32 %v6437, 4294901760
    %v8150 = vsub.f32 %v6437, %v8149
    %8151 = vmatpush.msra.mxu0 %v8150
    %v8152 = vand.u32 %v7960, 4294901760
    %v8153 = vsub.f32 %v7960, %v8152
    %8154 = vmatmul.f32.gmra.mxu0 %v8153
    %v8155 = vpop.f32.mrf.mxu0
    %v8156 = vadd.f32 %v8102, %v8155
    %8157 = vdwg.mxu0
    %v8158 = vand.u32 %v6452, 4294901760
    %8159 = vmatpush.msra.mxu0 %v8158
    %v8160 = vand.u32 %v6451, 4294901760
    %8161 = vmatpush.msra.mxu0 %v8160
    %v8162 = vand.u32 %v6450, 4294901760
    %8163 = vmatpush.msra.mxu0 %v8162
    %v8164 = vand.u32 %v6449, 4294901760
    %8165 = vmatpush.msra.mxu0 %v8164
    %v8166 = vand.u32 %v6448, 4294901760
    %8167 = vmatpush.msra.mxu0 %v8166
    %v8168 = vand.u32 %v6447, 4294901760
    %8169 = vmatpush.msra.mxu0 %v8168
    %v8170 = vand.u32 %v6446, 4294901760
    %8171 = vmatpush.msra.mxu0 %v8170
    %v8172 = vand.u32 %v6445, 4294901760
    %8173 = vmatpush.msra.mxu0 %v8172
    %v8174 = vand.u32 %v6444, 4294901760
    %8175 = vmatpush.msra.mxu0 %v8174
    %v8176 = vand.u32 %v6443, 4294901760
    %8177 = vmatpush.msra.mxu0 %v8176
    %v8178 = vand.u32 %v6442, 4294901760
    %8179 = vmatpush.msra.mxu0 %v8178
    %v8180 = vand.u32 %v6441, 4294901760
    %8181 = vmatpush.msra.mxu0 %v8180
    %v8182 = vand.u32 %v6440, 4294901760
    %8183 = vmatpush.msra.mxu0 %v8182
    %v8184 = vand.u32 %v6439, 4294901760
    %8185 = vmatpush.msra.mxu0 %v8184
    %v8186 = vand.u32 %v6438, 4294901760
    %8187 = vmatpush.msra.mxu0 %v8186
    %v8188 = vand.u32 %v6437, 4294901760
    %8189 = vmatpush.msra.mxu0 %v8188
    %v8190 = vand.u32 %v7960, 4294901760
    %v8191 = vsub.f32 %v7960, %v8190
    %v8192 = vand.u32 %v8191, 4294901760
    %8193 = vmatmul.f32.gmra.mxu0 %v8192
    %v8194 = vpop.f32.mrf.mxu0
    %v8195 = vadd.f32 %v8156, %v8194
    %8196 = vdwg.mxu0
    %v8197 = vand.u32 %v6452, 4294901760
    %v8198 = vsub.f32 %v6452, %v8197
    %v8199 = vand.u32 %v8198, 4294901760
    %8200 = vmatpush.msra.mxu0 %v8199
    %v8201 = vand.u32 %v6451, 4294901760
    %v8202 = vsub.f32 %v6451, %v8201
    %v8203 = vand.u32 %v8202, 4294901760
    %8204 = vmatpush.msra.mxu0 %v8203
    %v8205 = vand.u32 %v6450, 4294901760
    %v8206 = vsub.f32 %v6450, %v8205
    %v8207 = vand.u32 %v8206, 4294901760
    %8208 = vmatpush.msra.mxu0 %v8207
    %v8209 = vand.u32 %v6449, 4294901760
    %v8210 = vsub.f32 %v6449, %v8209
    %v8211 = vand.u32 %v8210, 4294901760
    %8212 = vmatpush.msra.mxu0 %v8211
    %v8213 = vand.u32 %v6448, 4294901760
    %v8214 = vsub.f32 %v6448, %v8213
    %v8215 = vand.u32 %v8214, 4294901760
    %8216 = vmatpush.msra.mxu0 %v8215
    %v8217 = vand.u32 %v6447, 4294901760
    %v8218 = vsub.f32 %v6447, %v8217
    %v8219 = vand.u32 %v8218, 4294901760
    %8220 = vmatpush.msra.mxu0 %v8219
    %v8221 = vand.u32 %v6446, 4294901760
    %v8222 = vsub.f32 %v6446, %v8221
    %v8223 = vand.u32 %v8222, 4294901760
    %8224 = vmatpush.msra.mxu0 %v8223
    %v8225 = vand.u32 %v6445, 4294901760
    %v8226 = vsub.f32 %v6445, %v8225
    %v8227 = vand.u32 %v8226, 4294901760
    %8228 = vmatpush.msra.mxu0 %v8227
    %v8229 = vand.u32 %v6444, 4294901760
    %v8230 = vsub.f32 %v6444, %v8229
    %v8231 = vand.u32 %v8230, 4294901760
    %8232 = vmatpush.msra.mxu0 %v8231
    %v8233 = vand.u32 %v6443, 4294901760
    %v8234 = vsub.f32 %v6443, %v8233
    %v8235 = vand.u32 %v8234, 4294901760
    %8236 = vmatpush.msra.mxu0 %v8235
    %v8237 = vand.u32 %v6442, 4294901760
    %v8238 = vsub.f32 %v6442, %v8237
    %v8239 = vand.u32 %v8238, 4294901760
    %8240 = vmatpush.msra.mxu0 %v8239
    %v8241 = vand.u32 %v6441, 4294901760
    %v8242 = vsub.f32 %v6441, %v8241
    %v8243 = vand.u32 %v8242, 4294901760
    %8244 = vmatpush.msra.mxu0 %v8243
    %v8245 = vand.u32 %v6440, 4294901760
    %v8246 = vsub.f32 %v6440, %v8245
    %v8247 = vand.u32 %v8246, 4294901760
    %8248 = vmatpush.msra.mxu0 %v8247
    %v8249 = vand.u32 %v6439, 4294901760
    %v8250 = vsub.f32 %v6439, %v8249
    %v8251 = vand.u32 %v8250, 4294901760
    %8252 = vmatpush.msra.mxu0 %v8251
    %v8253 = vand.u32 %v6438, 4294901760
    %v8254 = vsub.f32 %v6438, %v8253
    %v8255 = vand.u32 %v8254, 4294901760
    %8256 = vmatpush.msra.mxu0 %v8255
    %v8257 = vand.u32 %v6437, 4294901760
    %v8258 = vsub.f32 %v6437, %v8257
    %v8259 = vand.u32 %v8258, 4294901760
    %8260 = vmatpush.msra.mxu0 %v8259
    %v8261 = vand.u32 %v7960, 4294901760
    %8262 = vmatmul.f32.gmra.mxu0 %v8261
    %v8263 = vpop.f32.mrf.mxu0
    %v8264 = vadd.f32 %v8195, %v8263
    %8265 = vdwg.mxu0
    %v8266 = vand.u32 %v6452, 4294901760
    %8267 = vmatpush.msra.mxu0 %v8266
    %v8268 = vand.u32 %v6451, 4294901760
    %8269 = vmatpush.msra.mxu0 %v8268
    %v8270 = vand.u32 %v6450, 4294901760
    %8271 = vmatpush.msra.mxu0 %v8270
    %v8272 = vand.u32 %v6449, 4294901760
    %8273 = vmatpush.msra.mxu0 %v8272
    %v8274 = vand.u32 %v6448, 4294901760
    %8275 = vmatpush.msra.mxu0 %v8274
    %v8276 = vand.u32 %v6447, 4294901760
    %8277 = vmatpush.msra.mxu0 %v8276
    %v8278 = vand.u32 %v6446, 4294901760
    %8279 = vmatpush.msra.mxu0 %v8278
    %v8280 = vand.u32 %v6445, 4294901760
    %8281 = vmatpush.msra.mxu0 %v8280
    %v8282 = vand.u32 %v6444, 4294901760
    %8283 = vmatpush.msra.mxu0 %v8282
    %v8284 = vand.u32 %v6443, 4294901760
    %8285 = vmatpush.msra.mxu0 %v8284
    %v8286 = vand.u32 %v6442, 4294901760
    %8287 = vmatpush.msra.mxu0 %v8286
    %v8288 = vand.u32 %v6441, 4294901760
    %8289 = vmatpush.msra.mxu0 %v8288
    %v8290 = vand.u32 %v6440, 4294901760
    %8291 = vmatpush.msra.mxu0 %v8290
    %v8292 = vand.u32 %v6439, 4294901760
    %8293 = vmatpush.msra.mxu0 %v8292
    %v8294 = vand.u32 %v6438, 4294901760
    %8295 = vmatpush.msra.mxu0 %v8294
    %v8296 = vand.u32 %v6437, 4294901760
    %8297 = vmatpush.msra.mxu0 %v8296
    %v8298 = vand.u32 %v7960, 4294901760
    %8299 = vmatmul.f32.gmra.mxu0 %v8298
    %v8300 = vpop.f32.mrf.mxu0
    %v8301 = vadd.f32 %v8264, %v8300
    %8302 = vdwg.mxu0
    %v8303 = vand.u32 %v6468, 4294901760
    %8304 = vmatpush.msra.mxu0 %v8303
    %v8305 = vand.u32 %v6467, 4294901760
    %8306 = vmatpush.msra.mxu0 %v8305
    %v8307 = vand.u32 %v6466, 4294901760
    %8308 = vmatpush.msra.mxu0 %v8307
    %v8309 = vand.u32 %v6465, 4294901760
    %8310 = vmatpush.msra.mxu0 %v8309
    %v8311 = vand.u32 %v6464, 4294901760
    %8312 = vmatpush.msra.mxu0 %v8311
    %v8313 = vand.u32 %v6463, 4294901760
    %8314 = vmatpush.msra.mxu0 %v8313
    %v8315 = vand.u32 %v6462, 4294901760
    %8316 = vmatpush.msra.mxu0 %v8315
    %v8317 = vand.u32 %v6461, 4294901760
    %8318 = vmatpush.msra.mxu0 %v8317
    %v8319 = vand.u32 %v6460, 4294901760
    %8320 = vmatpush.msra.mxu0 %v8319
    %v8321 = vand.u32 %v6459, 4294901760
    %8322 = vmatpush.msra.mxu0 %v8321
    %v8323 = vand.u32 %v6458, 4294901760
    %8324 = vmatpush.msra.mxu0 %v8323
    %v8325 = vand.u32 %v6457, 4294901760
    %8326 = vmatpush.msra.mxu0 %v8325
    %v8327 = vand.u32 %v6456, 4294901760
    %8328 = vmatpush.msra.mxu0 %v8327
    %v8329 = vand.u32 %v6455, 4294901760
    %8330 = vmatpush.msra.mxu0 %v8329
    %v8331 = vand.u32 %v6454, 4294901760
    %8332 = vmatpush.msra.mxu0 %v8331
    %v8333 = vand.u32 %v6453, 4294901760
    %8334 = vmatpush.msra.mxu0 %v8333
    %v8335 = vand.u32 %v7961, 4294901760
    %v8336 = vsub.f32 %v7961, %v8335
    %v8337 = vand.u32 %v8336, 4294901760
    %v8338 = vsub.f32 %v8336, %v8337
    %v8339 = vand.u32 %v8338, 4294901760
    %8340 = vmatmul.f32.gmra.mxu0 %v8339
    %v8341 = vpop.f32.mrf.mxu0
    %v8342 = vadd.f32 %v8301, %v8341
    %8343 = vdwg.mxu0
    %v8344 = vand.u32 %v6468, 4294901760
    %v8345 = vsub.f32 %v6468, %v8344
    %v8346 = vand.u32 %v8345, 4294901760
    %v8347 = vsub.f32 %v8345, %v8346
    %v8348 = vand.u32 %v8347, 4294901760
    %8349 = vmatpush.msra.mxu0 %v8348
    %v8350 = vand.u32 %v6467, 4294901760
    %v8351 = vsub.f32 %v6467, %v8350
    %v8352 = vand.u32 %v8351, 4294901760
    %v8353 = vsub.f32 %v8351, %v8352
    %v8354 = vand.u32 %v8353, 4294901760
    %8355 = vmatpush.msra.mxu0 %v8354
    %v8356 = vand.u32 %v6466, 4294901760
    %v8357 = vsub.f32 %v6466, %v8356
    %v8358 = vand.u32 %v8357, 4294901760
    %v8359 = vsub.f32 %v8357, %v8358
    %v8360 = vand.u32 %v8359, 4294901760
    %8361 = vmatpush.msra.mxu0 %v8360
    %v8362 = vand.u32 %v6465, 4294901760
    %v8363 = vsub.f32 %v6465, %v8362
    %v8364 = vand.u32 %v8363, 4294901760
    %v8365 = vsub.f32 %v8363, %v8364
    %v8366 = vand.u32 %v8365, 4294901760
    %8367 = vmatpush.msra.mxu0 %v8366
    %v8368 = vand.u32 %v6464, 4294901760
    %v8369 = vsub.f32 %v6464, %v8368
    %v8370 = vand.u32 %v8369, 4294901760
    %v8371 = vsub.f32 %v8369, %v8370
    %v8372 = vand.u32 %v8371, 4294901760
    %8373 = vmatpush.msra.mxu0 %v8372
    %v8374 = vand.u32 %v6463, 4294901760
    %v8375 = vsub.f32 %v6463, %v8374
    %v8376 = vand.u32 %v8375, 4294901760
    %v8377 = vsub.f32 %v8375, %v8376
    %v8378 = vand.u32 %v8377, 4294901760
    %8379 = vmatpush.msra.mxu0 %v8378
    %v8380 = vand.u32 %v6462, 4294901760
    %v8381 = vsub.f32 %v6462, %v8380
    %v8382 = vand.u32 %v8381, 4294901760
    %v8383 = vsub.f32 %v8381, %v8382
    %v8384 = vand.u32 %v8383, 4294901760
    %8385 = vmatpush.msra.mxu0 %v8384
    %v8386 = vand.u32 %v6461, 4294901760
    %v8387 = vsub.f32 %v6461, %v8386
    %v8388 = vand.u32 %v8387, 4294901760
    %v8389 = vsub.f32 %v8387, %v8388
    %v8390 = vand.u32 %v8389, 4294901760
    %8391 = vmatpush.msra.mxu0 %v8390
    %v8392 = vand.u32 %v6460, 4294901760
    %v8393 = vsub.f32 %v6460, %v8392
    %v8394 = vand.u32 %v8393, 4294901760
    %v8395 = vsub.f32 %v8393, %v8394
    %v8396 = vand.u32 %v8395, 4294901760
    %8397 = vmatpush.msra.mxu0 %v8396
    %v8398 = vand.u32 %v6459, 4294901760
    %v8399 = vsub.f32 %v6459, %v8398
    %v8400 = vand.u32 %v8399, 4294901760
    %v8401 = vsub.f32 %v8399, %v8400
    %v8402 = vand.u32 %v8401, 4294901760
    %8403 = vmatpush.msra.mxu0 %v8402
    %v8404 = vand.u32 %v6458, 4294901760
    %v8405 = vsub.f32 %v6458, %v8404
    %v8406 = vand.u32 %v8405, 4294901760
    %v8407 = vsub.f32 %v8405, %v8406
    %v8408 = vand.u32 %v8407, 4294901760
    %8409 = vmatpush.msra.mxu0 %v8408
    %v8410 = vand.u32 %v6457, 4294901760
    %v8411 = vsub.f32 %v6457, %v8410
    %v8412 = vand.u32 %v8411, 4294901760
    %v8413 = vsub.f32 %v8411, %v8412
    %v8414 = vand.u32 %v8413, 4294901760
    %8415 = vmatpush.msra.mxu0 %v8414
    %v8416 = vand.u32 %v6456, 4294901760
    %v8417 = vsub.f32 %v6456, %v8416
    %v8418 = vand.u32 %v8417, 4294901760
    %v8419 = vsub.f32 %v8417, %v8418
    %v8420 = vand.u32 %v8419, 4294901760
    %8421 = vmatpush.msra.mxu0 %v8420
    %v8422 = vand.u32 %v6455, 4294901760
    %v8423 = vsub.f32 %v6455, %v8422
    %v8424 = vand.u32 %v8423, 4294901760
    %v8425 = vsub.f32 %v8423, %v8424
    %v8426 = vand.u32 %v8425, 4294901760
    %8427 = vmatpush.msra.mxu0 %v8426
    %v8428 = vand.u32 %v6454, 4294901760
    %v8429 = vsub.f32 %v6454, %v8428
    %v8430 = vand.u32 %v8429, 4294901760
    %v8431 = vsub.f32 %v8429, %v8430
    %v8432 = vand.u32 %v8431, 4294901760
    %8433 = vmatpush.msra.mxu0 %v8432
    %v8434 = vand.u32 %v6453, 4294901760
    %v8435 = vsub.f32 %v6453, %v8434
    %v8436 = vand.u32 %v8435, 4294901760
    %v8437 = vsub.f32 %v8435, %v8436
    %v8438 = vand.u32 %v8437, 4294901760
    %8439 = vmatpush.msra.mxu0 %v8438
    %v8440 = vand.u32 %v7961, 4294901760
    %8441 = vmatmul.f32.gmra.mxu0 %v8440
    %v8442 = vpop.f32.mrf.mxu0
    %v8443 = vadd.f32 %v8342, %v8442
    %8444 = vdwg.mxu0
    %v8445 = vand.u32 %v6468, 4294901760
    %v8446 = vsub.f32 %v6468, %v8445
    %8447 = vmatpush.msra.mxu0 %v8446
    %v8448 = vand.u32 %v6467, 4294901760
    %v8449 = vsub.f32 %v6467, %v8448
    %8450 = vmatpush.msra.mxu0 %v8449
    %v8451 = vand.u32 %v6466, 4294901760
    %v8452 = vsub.f32 %v6466, %v8451
    %8453 = vmatpush.msra.mxu0 %v8452
    %v8454 = vand.u32 %v6465, 4294901760
    %v8455 = vsub.f32 %v6465, %v8454
    %8456 = vmatpush.msra.mxu0 %v8455
    %v8457 = vand.u32 %v6464, 4294901760
    %v8458 = vsub.f32 %v6464, %v8457
    %8459 = vmatpush.msra.mxu0 %v8458
    %v8460 = vand.u32 %v6463, 4294901760
    %v8461 = vsub.f32 %v6463, %v8460
    %8462 = vmatpush.msra.mxu0 %v8461
    %v8463 = vand.u32 %v6462, 4294901760
    %v8464 = vsub.f32 %v6462, %v8463
    %8465 = vmatpush.msra.mxu0 %v8464
    %v8466 = vand.u32 %v6461, 4294901760
    %v8467 = vsub.f32 %v6461, %v8466
    %8468 = vmatpush.msra.mxu0 %v8467
    %v8469 = vand.u32 %v6460, 4294901760
    %v8470 = vsub.f32 %v6460, %v8469
    %8471 = vmatpush.msra.mxu0 %v8470
    %v8472 = vand.u32 %v6459, 4294901760
    %v8473 = vsub.f32 %v6459, %v8472
    %8474 = vmatpush.msra.mxu0 %v8473
    %v8475 = vand.u32 %v6458, 4294901760
    %v8476 = vsub.f32 %v6458, %v8475
    %8477 = vmatpush.msra.mxu0 %v8476
    %v8478 = vand.u32 %v6457, 4294901760
    %v8479 = vsub.f32 %v6457, %v8478
    %8480 = vmatpush.msra.mxu0 %v8479
    %v8481 = vand.u32 %v6456, 4294901760
    %v8482 = vsub.f32 %v6456, %v8481
    %8483 = vmatpush.msra.mxu0 %v8482
    %v8484 = vand.u32 %v6455, 4294901760
    %v8485 = vsub.f32 %v6455, %v8484
    %8486 = vmatpush.msra.mxu0 %v8485
    %v8487 = vand.u32 %v6454, 4294901760
    %v8488 = vsub.f32 %v6454, %v8487
    %8489 = vmatpush.msra.mxu0 %v8488
    %v8490 = vand.u32 %v6453, 4294901760
    %v8491 = vsub.f32 %v6453, %v8490
    %8492 = vmatpush.msra.mxu0 %v8491
    %v8493 = vand.u32 %v7961, 4294901760
    %v8494 = vsub.f32 %v7961, %v8493
    %8495 = vmatmul.f32.gmra.mxu0 %v8494
    %v8496 = vpop.f32.mrf.mxu0
    %v8497 = vadd.f32 %v8443, %v8496
    %8498 = vdwg.mxu0
    %v8499 = vand.u32 %v6468, 4294901760
    %8500 = vmatpush.msra.mxu0 %v8499
    %v8501 = vand.u32 %v6467, 4294901760
    %8502 = vmatpush.msra.mxu0 %v8501
    %v8503 = vand.u32 %v6466, 4294901760
    %8504 = vmatpush.msra.mxu0 %v8503
    %v8505 = vand.u32 %v6465, 4294901760
    %8506 = vmatpush.msra.mxu0 %v8505
    %v8507 = vand.u32 %v6464, 4294901760
    %8508 = vmatpush.msra.mxu0 %v8507
    %v8509 = vand.u32 %v6463, 4294901760
    %8510 = vmatpush.msra.mxu0 %v8509
    %v8511 = vand.u32 %v6462, 4294901760
    %8512 = vmatpush.msra.mxu0 %v8511
    %v8513 = vand.u32 %v6461, 4294901760
    %8514 = vmatpush.msra.mxu0 %v8513
    %v8515 = vand.u32 %v6460, 4294901760
    %8516 = vmatpush.msra.mxu0 %v8515
    %v8517 = vand.u32 %v6459, 4294901760
    %8518 = vmatpush.msra.mxu0 %v8517
    %v8519 = vand.u32 %v6458, 4294901760
    %8520 = vmatpush.msra.mxu0 %v8519
    %v8521 = vand.u32 %v6457, 4294901760
    %8522 = vmatpush.msra.mxu0 %v8521
    %v8523 = vand.u32 %v6456, 4294901760
    %8524 = vmatpush.msra.mxu0 %v8523
    %v8525 = vand.u32 %v6455, 4294901760
    %8526 = vmatpush.msra.mxu0 %v8525
    %v8527 = vand.u32 %v6454, 4294901760
    %8528 = vmatpush.msra.mxu0 %v8527
    %v8529 = vand.u32 %v6453, 4294901760
    %8530 = vmatpush.msra.mxu0 %v8529
    %v8531 = vand.u32 %v7961, 4294901760
    %v8532 = vsub.f32 %v7961, %v8531
    %v8533 = vand.u32 %v8532, 4294901760
    %8534 = vmatmul.f32.gmra.mxu0 %v8533
    %v8535 = vpop.f32.mrf.mxu0
    %v8536 = vadd.f32 %v8497, %v8535
    %8537 = vdwg.mxu0
    %v8538 = vand.u32 %v6468, 4294901760
    %v8539 = vsub.f32 %v6468, %v8538
    %v8540 = vand.u32 %v8539, 4294901760
    %8541 = vmatpush.msra.mxu0 %v8540
    %v8542 = vand.u32 %v6467, 4294901760
    %v8543 = vsub.f32 %v6467, %v8542
    %v8544 = vand.u32 %v8543, 4294901760
    %8545 = vmatpush.msra.mxu0 %v8544
    %v8546 = vand.u32 %v6466, 4294901760
    %v8547 = vsub.f32 %v6466, %v8546
    %v8548 = vand.u32 %v8547, 4294901760
    %8549 = vmatpush.msra.mxu0 %v8548
    %v8550 = vand.u32 %v6465, 4294901760
    %v8551 = vsub.f32 %v6465, %v8550
    %v8552 = vand.u32 %v8551, 4294901760
    %8553 = vmatpush.msra.mxu0 %v8552
    %v8554 = vand.u32 %v6464, 4294901760
    %v8555 = vsub.f32 %v6464, %v8554
    %v8556 = vand.u32 %v8555, 4294901760
    %8557 = vmatpush.msra.mxu0 %v8556
    %v8558 = vand.u32 %v6463, 4294901760
    %v8559 = vsub.f32 %v6463, %v8558
    %v8560 = vand.u32 %v8559, 4294901760
    %8561 = vmatpush.msra.mxu0 %v8560
    %v8562 = vand.u32 %v6462, 4294901760
    %v8563 = vsub.f32 %v6462, %v8562
    %v8564 = vand.u32 %v8563, 4294901760
    %8565 = vmatpush.msra.mxu0 %v8564
    %v8566 = vand.u32 %v6461, 4294901760
    %v8567 = vsub.f32 %v6461, %v8566
    %v8568 = vand.u32 %v8567, 4294901760
    %8569 = vmatpush.msra.mxu0 %v8568
    %v8570 = vand.u32 %v6460, 4294901760
    %v8571 = vsub.f32 %v6460, %v8570
    %v8572 = vand.u32 %v8571, 4294901760
    %8573 = vmatpush.msra.mxu0 %v8572
    %v8574 = vand.u32 %v6459, 4294901760
    %v8575 = vsub.f32 %v6459, %v8574
    %v8576 = vand.u32 %v8575, 4294901760
    %8577 = vmatpush.msra.mxu0 %v8576
    %v8578 = vand.u32 %v6458, 4294901760
    %v8579 = vsub.f32 %v6458, %v8578
    %v8580 = vand.u32 %v8579, 4294901760
    %8581 = vmatpush.msra.mxu0 %v8580
    %v8582 = vand.u32 %v6457, 4294901760
    %v8583 = vsub.f32 %v6457, %v8582
    %v8584 = vand.u32 %v8583, 4294901760
    %8585 = vmatpush.msra.mxu0 %v8584
    %v8586 = vand.u32 %v6456, 4294901760
    %v8587 = vsub.f32 %v6456, %v8586
    %v8588 = vand.u32 %v8587, 4294901760
    %8589 = vmatpush.msra.mxu0 %v8588
    %v8590 = vand.u32 %v6455, 4294901760
    %v8591 = vsub.f32 %v6455, %v8590
    %v8592 = vand.u32 %v8591, 4294901760
    %8593 = vmatpush.msra.mxu0 %v8592
    %v8594 = vand.u32 %v6454, 4294901760
    %v8595 = vsub.f32 %v6454, %v8594
    %v8596 = vand.u32 %v8595, 4294901760
    %8597 = vmatpush.msra.mxu0 %v8596
    %v8598 = vand.u32 %v6453, 4294901760
    %v8599 = vsub.f32 %v6453, %v8598
    %v8600 = vand.u32 %v8599, 4294901760
    %8601 = vmatpush.msra.mxu0 %v8600
    %v8602 = vand.u32 %v7961, 4294901760
    %8603 = vmatmul.f32.gmra.mxu0 %v8602
    %v8604 = vpop.f32.mrf.mxu0
    %v8605 = vadd.f32 %v8536, %v8604
    %8606 = vdwg.mxu0
    %v8607 = vand.u32 %v6468, 4294901760
    %8608 = vmatpush.msra.mxu0 %v8607
    %v8609 = vand.u32 %v6467, 4294901760
    %8610 = vmatpush.msra.mxu0 %v8609
    %v8611 = vand.u32 %v6466, 4294901760
    %8612 = vmatpush.msra.mxu0 %v8611
    %v8613 = vand.u32 %v6465, 4294901760
    %8614 = vmatpush.msra.mxu0 %v8613
    %v8615 = vand.u32 %v6464, 4294901760
    %8616 = vmatpush.msra.mxu0 %v8615
    %v8617 = vand.u32 %v6463, 4294901760
    %8618 = vmatpush.msra.mxu0 %v8617
    %v8619 = vand.u32 %v6462, 4294901760
    %8620 = vmatpush.msra.mxu0 %v8619
    %v8621 = vand.u32 %v6461, 4294901760
    %8622 = vmatpush.msra.mxu0 %v8621
    %v8623 = vand.u32 %v6460, 4294901760
    %8624 = vmatpush.msra.mxu0 %v8623
    %v8625 = vand.u32 %v6459, 4294901760
    %8626 = vmatpush.msra.mxu0 %v8625
    %v8627 = vand.u32 %v6458, 4294901760
    %8628 = vmatpush.msra.mxu0 %v8627
    %v8629 = vand.u32 %v6457, 4294901760
    %8630 = vmatpush.msra.mxu0 %v8629
    %v8631 = vand.u32 %v6456, 4294901760
    %8632 = vmatpush.msra.mxu0 %v8631
    %v8633 = vand.u32 %v6455, 4294901760
    %8634 = vmatpush.msra.mxu0 %v8633
    %v8635 = vand.u32 %v6454, 4294901760
    %8636 = vmatpush.msra.mxu0 %v8635
    %v8637 = vand.u32 %v6453, 4294901760
    %8638 = vmatpush.msra.mxu0 %v8637
    %v8639 = vand.u32 %v7961, 4294901760
    %8640 = vmatmul.f32.gmra.mxu0 %v8639
    %v8641 = vpop.f32.mrf.mxu0
    %v8642 = vadd.f32 %v8605, %v8641
    %8643 = vdwg.mxu0
    %v8645 = vsel %vm5709, %v8642, 0
    %8647 = vmatpush.msra.mxu0 0.0
    %8648 = vmatpush.msra.mxu0 0.0
    %8649 = vmatpush.msra.mxu0 0.0
    %8650 = vmatpush.msra.mxu0 0.0
    %8651 = vmatpush.msra.mxu0 0.0
    %8652 = vmatpush.msra.mxu0 0.0
    %8653 = vmatpush.msra.mxu0 0.0
    %8654 = vmatpush.msra.mxu0 0.0
    %8655 = vmatpush.msra.mxu0 %v6492
    %8656 = vmatpush.msra.mxu0 %v6491
    %8657 = vmatpush.msra.mxu0 %v6490
    %8658 = vmatpush.msra.mxu0 %v6489
    %8659 = vmatpush.msra.mxu0 %v6488
    %8660 = vmatpush.msra.mxu0 %v6487
    %8661 = vmatpush.msra.mxu0 %v6486
    %8662 = vmatpush.msra.mxu0 %v6485
    %8663 = vmatmul.f32.gmra.mxu0 %v8645
    %v8664 = vpop.f32.mrf.mxu0
    %v8665 = vadd.f32 0.0, %v8664
    %8666 = vdwg.mxu0
    %v8667 = vadd.f32 %v7954, %v8665
    %v8668 = vmax.f32 %v8667, 0.0
    %v8669 = vld [vmem:[%s16] sm:$0xff]
    %v8670 = vld [vmem:[%s16 + $0x8] sm:$0xff]
    %v8671 = vld [vmem:[%s16 + $0x10] sm:$0xff]
    %v8672 = vld [vmem:[%s16 + $0x18] sm:$0xff]
    %v8673 = vld [vmem:[%s16 + $0x20] sm:$0xff]
    %v8674 = vld [vmem:[%s16 + $0x28] sm:$0xff]
    %v8675 = vld [vmem:[%s16 + $0x30] sm:$0xff]
    %v8676 = vld [vmem:[%s16 + $0x38] sm:$0xff]
    %v8677 = vld [vmem:[%s17] sm:$0x1]
    %v8679 = vperm.slane %v8677, 0
    %v8682 = vsel %vm5709, %v8668, 0
    %8684 = vmatpush.msra.mxu0 0.0
    %8685 = vmatpush.msra.mxu0 0.0
    %8686 = vmatpush.msra.mxu0 0.0
    %8687 = vmatpush.msra.mxu0 0.0
    %8688 = vmatpush.msra.mxu0 0.0
    %8689 = vmatpush.msra.mxu0 0.0
    %8690 = vmatpush.msra.mxu0 0.0
    %8691 = vmatpush.msra.mxu0 0.0
    %8692 = vmatpush.msra.mxu0 %v8676
    %8693 = vmatpush.msra.mxu0 %v8675
    %8694 = vmatpush.msra.mxu0 %v8674
    %8695 = vmatpush.msra.mxu0 %v8673
    %8696 = vmatpush.msra.mxu0 %v8672
    %8697 = vmatpush.msra.mxu0 %v8671
    %8698 = vmatpush.msra.mxu0 %v8670
    %8699 = vmatpush.msra.mxu0 %v8669
    %8700 = vmatmul.f32.gmra.mxu0 %v8682
    %v8701 = vpop.f32.mrf.mxu0
    %v8702 = vadd.f32 %v8679, %v8701
    %8703 = vdwg.mxu0
    %v8704 = vmax.f32 %v8702, 0.0
    %v8705 = vld [vmem:[%s18] sm:$0xff]
    %v8706 = vld [vmem:[%s18 + $0x8] sm:$0xff]
    %v8707 = vld [vmem:[%s18 + $0x10] sm:$0xff]
    %v8708 = vld [vmem:[%s18 + $0x18] sm:$0xff]
    %v8709 = vld [vmem:[%s18 + $0x20] sm:$0xff]
    %v8710 = vld [vmem:[%s18 + $0x28] sm:$0xff]
    %v8711 = vld [vmem:[%s18 + $0x30] sm:$0xff]
    %v8712 = vld [vmem:[%s18 + $0x38] sm:$0xff]
    %v8713 = vld [vmem:[%s19] sm:$0x1]
    %v8715 = vperm.slane %v8713, 0
    %v8718 = vsel %vm5709, %v8704, 0
    %8720 = vmatpush.msra.mxu0 0.0
    %8721 = vmatpush.msra.mxu0 0.0
    %8722 = vmatpush.msra.mxu0 0.0
    %8723 = vmatpush.msra.mxu0 0.0
    %8724 = vmatpush.msra.mxu0 0.0
    %8725 = vmatpush.msra.mxu0 0.0
    %8726 = vmatpush.msra.mxu0 0.0
    %8727 = vmatpush.msra.mxu0 0.0
    %8728 = vmatpush.msra.mxu0 %v8712
    %8729 = vmatpush.msra.mxu0 %v8711
    %8730 = vmatpush.msra.mxu0 %v8710
    %8731 = vmatpush.msra.mxu0 %v8709
    %8732 = vmatpush.msra.mxu0 %v8708
    %8733 = vmatpush.msra.mxu0 %v8707
    %8734 = vmatpush.msra.mxu0 %v8706
    %8735 = vmatpush.msra.mxu0 %v8705
    %8736 = vmatmul.f32.gmra.mxu0 %v8718
    %v8737 = vpop.f32.mrf.mxu0
    %v8738 = vadd.f32 %v8715, %v8737
    %8739 = vdwg.mxu0
    %v8740 = vmax.f32 %v8738, 0.0
    %v8741 = vld [vmem:[%s20] sm:$0xff]
    %v8742 = vld [vmem:[%s20 + $0x8] sm:$0xff]
    %v8743 = vld [vmem:[%s20 + $0x10] sm:$0xff]
    %v8744 = vld [vmem:[%s20 + $0x18] sm:$0xff]
    %v8745 = vld [vmem:[%s20 + $0x20] sm:$0xff]
    %v8746 = vld [vmem:[%s20 + $0x28] sm:$0xff]
    %v8747 = vld [vmem:[%s20 + $0x30] sm:$0xff]
    %v8748 = vld [vmem:[%s20 + $0x38] sm:$0xff]
    %v8749 = vld [vmem:[%s21] sm:$0x1]
    %v8751 = vperm.slane %v8749, 0
    %v8754 = vsel %vm5709, %v8740, 0
    %8756 = vmatpush.msra.mxu0 0.0
    %8757 = vmatpush.msra.mxu0 0.0
    %8758 = vmatpush.msra.mxu0 0.0
    %8759 = vmatpush.msra.mxu0 0.0
    %8760 = vmatpush.msra.mxu0 0.0
    %8761 = vmatpush.msra.mxu0 0.0
    %8762 = vmatpush.msra.mxu0 0.0
    %8763 = vmatpush.msra.mxu0 0.0
    %8764 = vmatpush.msra.mxu0 %v8748
    %8765 = vmatpush.msra.mxu0 %v8747
    %8766 = vmatpush.msra.mxu0 %v8746
    %8767 = vmatpush.msra.mxu0 %v8745
    %8768 = vmatpush.msra.mxu0 %v8744
    %8769 = vmatpush.msra.mxu0 %v8743
    %8770 = vmatpush.msra.mxu0 %v8742
    %8771 = vmatpush.msra.mxu0 %v8741
    %8772 = vmatmul.f32.gmra.mxu0 %v8754
    %v8773 = vpop.f32.mrf.mxu0
    %v8774 = vadd.f32 %v8751, %v8773
    %8775 = vdwg.mxu0
    %vm8776 = vcmask 44032
    %8777 = vst.msk [vmem:[#allocation2] sm:$0xf] %vm8776, %v8774
    %v8778 = vmax.f32 %v8774, 0.0
    %v8779 = vand.u32 2147483647, %v8774
    %v8780 = vsub.f32 0.0, %v8779
    %v8781 = vmul.f32 %v8780, 1.442695
    %v8782 = vpow.pop %v8781
    %v8783 = vadd.f32 %v8782, 1.0
    %v8784 = vlog2.pop %v8783
    %v8785 = vmul.f32 %v8784, 0.6931472
    %v8786 = vadd.f32 %v8778, %v8785
    %v8787 = vadd.f32 %v8786, 1e-06
    %8789 = vrot.lane.b32.xlu0 %v8787, 122
    %v8790 = vpop.permute.xlu0 %8789
    %8792 = vst.msk [vmem:[#allocation4] sm:$0xf] %vm8776, %v8790
    // Predicated region
    $region90: #{tpu_custom_call.1} parent=1 // pred_check
      _
    $region91: #{tpu_custom_call.1} parent=1 // pred_check_branch
      %8794 = sbr.rel (0) target = $region93
    $region92: #{tpu_custom_call.1} parent=1 // pred_region
      %8796 = vsyncadd [#allocation3], 0
      %s8798 = sshll.u32 [#allocation2], 4
      %s8799 = int_to_ptr.vmem [resolvable:$true] %s8798
      %s8800 = sshll.u32 %s22, 4
      %s8801 = int_to_ptr.hbm [resolvable:$true] %s8800
      %8803 = dma.vmem_to_hbm [thread:$0]  %s8799, 64, %s8801, [#allocation3]
    $region93: #{tpu_custom_call.1} parent=1 // pred_fallthru
      _
    // Predicated region
    $region94: #{tpu_custom_call.1} parent=1 // pred_check
      _
    $region95: #{tpu_custom_call.1} parent=1 // pred_check_branch
      %8805 = sbr.rel (0) target = $region97
    $region96: #{tpu_custom_call.1} parent=1 // pred_region
      %8807 = vsyncadd [#allocation5], 0
      %s8809 = sshll.u32 [#allocation4], 4
      %s8810 = int_to_ptr.vmem [resolvable:$true] %s8809
      %s8811 = sshll.u32 %s23, 4
      %s8812 = int_to_ptr.hbm [resolvable:$true] %s8811
      %8814 = dma.vmem_to_hbm [thread:$0]  %s8810, 64, %s8812, [#allocation5]
    $region97: #{tpu_custom_call.1} parent=1 // pred_fallthru
      _
    // Predicated region
    $region98: #{tpu_custom_call.1} parent=1 // pred_check
      _
    $region99: #{tpu_custom_call.1} parent=1 // pred_check_branch
      %8816 = sbr.rel (0) target = $region101
    $region100: #{tpu_custom_call.1} parent=1 // pred_region
      %8818 = dma.done [#allocation3], 64
    $region101: #{tpu_custom_call.1} parent=1 // pred_fallthru
      _
    // Predicated region
    $region102: #{tpu_custom_call.1} parent=1 // pred_check
      _
    $region103: #{tpu_custom_call.1} parent=1 // pred_check_branch
      %8820 = sbr.rel (0) target = $region105
    $region104: #{tpu_custom_call.1} parent=1 // pred_region
      %8822 = dma.done [#allocation5], 64
    $region105: #{tpu_custom_call.1} parent=1 // pred_fallthru
      _
    %8823 = vsyncpa [#allocation3], 1
    %8824 = vsyncpa [#allocation5], 1

</llo_original>
